<compile_context>
chip_gen: v7x
topology: tpu7x:2x2x1
jax: 0.10.0
libtpu: 0.0.40
codegen_flags: <defaults>
</compile_context>

<pallas_src>
import functools

import jax
import jax.numpy as jnp
from jax.experimental import pallas as pl
from jax.experimental.pallas import tpu as pltpu

EPS = 1e-5            # PyTorch BatchNorm default eps
MAX_TILE_M = 512      # conv-output rows per grid step (multiple of 8)
VMEM_LIMIT = 48 * 1024 * 1024


def _round_up(x, m):
    return (x + m - 1) // m * m


def _pick_tile(m):
    m8 = _round_up(max(m, 8), 8)
    return m8 if m8 <= MAX_TILE_M else MAX_TILE_M


def _cparams(semantics):
    return pltpu.CompilerParams(dimension_semantics=semantics,
                                vmem_limit_bytes=VMEM_LIMIT)


# ----------------------------- Pallas kernels -----------------------------

def _conv_taps_kernel(x_ref, w_ref, mask_ref, o_ref, sum_ref, ssq_ref,
                      *, tap_offsets, tm, max_off):
    """One M-tile of a 3x3 conv expressed as 9 row-shifted matmuls over the
    flattened padded activation (resident in VMEM), plus masked BN-statistic
    accumulation across the ("arbitrary") grid axis."""
    m = pl.program_id(0)

    @pl.when(m == 0)
    def _init():
        sum_ref[...] = jnp.zeros_like(sum_ref)
        ssq_ref[...] = jnp.zeros_like(ssq_ref)

    base = pl.multiple_of(m * tm, 8)
    # one aligned dynamic load of (tile + halo); the 9 taps are static slices.
    window = x_ref[pl.ds(base, tm + max_off), :]

    cout = o_ref.shape[-1]
    acc = jnp.zeros((tm, cout), jnp.float32)
    for t, off in enumerate(tap_offsets):
        xt = window[off:off + tm, :].astype(jnp.bfloat16)   # bf16 MXU operand
        acc = acc + jnp.dot(xt, w_ref[t], preferred_element_type=jnp.float32)

    acc = acc * mask_ref[...]        # zero rows that are not real conv outputs
    o_ref[...] = acc
    sum_ref[...] = sum_ref[...] + jnp.sum(acc, axis=0, keepdims=True)
    ssq_ref[...] = ssq_ref[...] + jnp.sum(acc * acc, axis=0, keepdims=True)


def _bn_apply_kernel(*refs, count, relu, has_residual):
    """Training-mode BN normalize (+ residual) (+ ReLU) for one M-tile."""
    if has_residual:
        x_ref, sum_ref, ssq_ref, g_ref, b_ref, r_ref, o_ref = refs
    else:
        x_ref, sum_ref, ssq_ref, g_ref, b_ref, o_ref = refs
    inv_n = 1.0 / count
    mean = sum_ref[...] * inv_n
    var = jnp.maximum(ssq_ref[...] * inv_n - mean * mean, 0.0)
    scale = g_ref[...] * jax.lax.rsqrt(var + EPS)
    shift = b_ref[...] - mean * scale
    y = x_ref[...] * scale + shift
    if has_residual:
        y = y + r_ref[...]
    if relu:
        y = jnp.maximum(y, 0.0)
    o_ref[...] = y


def _maxpool_taps_kernel(x_ref, o_ref, *, tap_offsets, tm, max_off):
    """3x3 max over row-shifted slices of the flattened (-inf padded) input."""
    base = pl.multiple_of(pl.program_id(0) * tm, 8)
    window = x_ref[pl.ds(base, tm + max_off), :]
    r = window[0:tm, :]
    for off in tap_offsets:
        if off == 0:
            continue
        r = jnp.maximum(r, window[off:off + tm, :])
    o_ref[...] = r


def _head_kernel(x_ref, w1_ref, g_ref, b_ref, w2_ref, b2_ref, o_ref):
    """Fused head: AdaptiveAvgPool2d(1) + Flatten + Linear(32,16) + BN1d(16)
    (training mode) + ReLU + Linear(16,2).  fc1 bias is omitted (cancelled
    exactly by the training-mode BN1d)."""
    pooled = jnp.mean(x_ref[...], axis=1)                             # (N, 32)
    h = jnp.dot(pooled, w1_ref[...], preferred_element_type=jnp.float32)
    mean = jnp.mean(h, axis=0, keepdims=True)
    var = jnp.maximum(jnp.mean(h * h, axis=0, keepdims=True) - mean * mean, 0.0)
    h = (h - mean) * jax.lax.rsqrt(var + EPS) * g_ref[...] + b_ref[...]
    h = jnp.maximum(h, 0.0)
    o_ref[...] = (jnp.dot(h, w2_ref[...], preferred_element_type=jnp.float32)
                  + b2_ref[...])


# ----------------------------- kernel wrappers -----------------------------

def conv3x3_stats(x, w, *, stride):
    """'Same' 3x3 conv (pad=1) of NHWC `x` with HWIO weights `w`, evaluated at
    `stride`, plus per-channel batch sum / sum-of-squares of the conv output
    (the training-mode BN statistics).  Conv bias is intentionally omitted:
    it is cancelled exactly by the following training-mode BatchNorm."""
    n, h, wd, cin = x.shape
    cout = w.shape[-1]
    hp, wp = h + 2, wd + 2
    ho, wo = h // stride, wd // stride

    xp = jnp.pad(x, ((0, 0), (1, 1), (1, 1), (0, 0)))
    m_rows = n * hp * wp
    tm = _pick_tile(m_rows)
    m_pad = _round_up(m_rows, tm)
    max_off = 2 * wp + 2                                  # largest tap offset
    x_flat = jnp.pad(xp.reshape(m_rows, cin),
                     ((0, m_pad + max_off - m_rows), (0, 0)))

    # rows (in padded coordinates) that are real stride-`stride` conv outputs;
    # everything else is zeroed, excluded from the stats and never extracted.
    ii = jax.lax.broadcasted_iota(jnp.int32, (n, hp, wp), 1)
    jj = jax.lax.broadcasted_iota(jnp.int32, (n, hp, wp), 2)
    sel = (ii < h) & (jj < wd) & (ii % stride == 0) & (jj % stride == 0)
    mask = jnp.pad(sel.reshape(m_rows, 1).astype(jnp.float32),
                   ((0, m_pad - m_rows), (0, 0)))

    w_taps = w.reshape(9, cin, cout).astype(jnp.bfloat16)
    tap_offsets = tuple(kh * wp + kw for kh in range(3) for kw in range(3))
    n_tiles = m_pad // tm

    kern = functools.partial(_conv_taps_kernel, tap_offsets=tap_offsets,
                             tm=tm, max_off=max_off)
    pre_flat, csum, cssq = pl.pallas_call(
        kern,
        grid=(n_tiles,),
        in_specs=[
            pl.BlockSpec(x_flat.shape, lambda i: (0, 0)),      # resident input
            pl.BlockSpec(w_taps.shape, lambda i: (0, 0, 0)),   # resident weights
            pl.BlockSpec((tm, 1), lambda i: (i, 0)),           # per-tile mask
        ],
        out_specs=[
            pl.BlockSpec((tm, cout), lambda i: (i, 0)),        # pre-activation
            pl.BlockSpec((1, cout), lambda i: (0, 0)),         # sum accumulator
            pl.BlockSpec((1, cout), lambda i: (0, 0)),         # sumsq accumulator
        ],
        out_shape=[
            jax.ShapeDtypeStruct((m_pad, cout), jnp.float32),
            jax.ShapeDtypeStruct((1, cout), jnp.float32),
            jax.ShapeDtypeStruct((1, cout), jnp.float32),
        ],
        compiler_params=_cparams(("arbitrary",)),
    )(x_flat, w_taps, mask)

    pre = pre_flat[:m_rows].reshape(n, hp, wp, cout)
    pre = pre[:, 0:h:stride, 0:wd:stride, :]
    return pre, csum, cssq, n * ho * wo


def bn_apply(pre, csum, cssq, gamma, beta, count, *, relu, residual=None):
    """Training-mode BN (from pre-accumulated sums) + optional residual + ReLU,
    gridded over M-row tiles ("parallel" axis)."""
    n, h, wd, c = pre.shape
    m = n * h * wd
    tm = _pick_tile(m)
    m_pad = _round_up(m, tm)
    x2 = jnp.pad(pre.reshape(m, c), ((0, m_pad - m), (0, 0)))

    ins = [x2, csum, cssq, gamma.reshape(1, c), beta.reshape(1, c)]
    in_specs = [
        pl.BlockSpec((tm, c), lambda i: (i, 0)),
        pl.BlockSpec((1, c), lambda i: (0, 0)),
        pl.BlockSpec((1, c), lambda i: (0, 0)),
        pl.BlockSpec((1, c), lambda i: (0, 0)),
        pl.BlockSpec((1, c), lambda i: (0, 0)),
    ]
    if residual is not None:
        ins.append(jnp.pad(residual.reshape(m, c), ((0, m_pad - m), (0, 0))))
        in_specs.append(pl.BlockSpec((tm, c), lambda i: (i, 0)))

    kern = functools.partial(_bn_apply_kernel, count=float(count), relu=relu,
                             has_residual=residual is not None)
    out = pl.pallas_call(
        kern,
        grid=(m_pad // tm,),
        in_specs=in_specs,
        out_specs=pl.BlockSpec((tm, c), lambda i: (i, 0)),
        out_shape=jax.ShapeDtypeStruct((m_pad, c), jnp.float32),
        compiler_params=_cparams(("parallel",)),
    )(*ins)
    return out[:m].reshape(n, h, wd, c)


def maxpool3x3_s2(x):
    """MaxPool2d(kernel_size=3, stride=2, padding=1) on NHWC `x`."""
    n, h, wd, c = x.shape
    hp, wp = h + 2, wd + 2
    xp = jnp.pad(x, ((0, 0), (1, 1), (1, 1), (0, 0)), constant_values=-jnp.inf)
    m_rows = n * hp * wp
    tm = _pick_tile(m_rows)
    m_pad = _round_up(m_rows, tm)
    max_off = 2 * wp + 2
    x_flat = jnp.pad(xp.reshape(m_rows, c),
                     ((0, m_pad + max_off - m_rows), (0, 0)),
                     constant_values=-jnp.inf)
    tap_offsets = tuple(a * wp + b for a in range(3) for b in range(3))

    kern = functools.partial(_maxpool_taps_kernel, tap_offsets=tap_offsets,
                             tm=tm, max_off=max_off)
    out = pl.pallas_call(
        kern,
        grid=(m_pad // tm,),
        in_specs=[pl.BlockSpec(x_flat.shape, lambda i: (0, 0))],
        out_specs=pl.BlockSpec((tm, c), lambda i: (i, 0)),
        out_shape=jax.ShapeDtypeStruct((m_pad, c), jnp.float32),
        compiler_params=_cparams(("parallel",)),
    )(x_flat)

    full = out[:m_rows].reshape(n, hp, wp, c)
    return full[:, 0:h:2, 0:wd:2, :]


def head_forward(x, w1, g, b, w2, b2):
    n, h, wd, c = x.shape
    xr = x.reshape(n, h * wd, c)
    vmem = lambda: pl.BlockSpec(memory_space=pltpu.MemorySpace.VMEM)
    return pl.pallas_call(
        _head_kernel,
        out_shape=jax.ShapeDtypeStruct((n, w2.shape[1]), jnp.float32),
        in_specs=[vmem() for _ in range(6)],
        out_specs=vmem(),
    )(xr, w1, g.reshape(1, -1), b.reshape(1, -1), w2, b2.reshape(1, -1))


# ----------------------------- glue helpers -----------------------------

def laplacian_map(x):
    """F.conv2d(x, laplacian kernel repeated over RGB, stride=1, padding=1)
    computed as VPU shifted adds (fused by XLA); fed to the stem conv as an
    extra input channel instead of running a Cout=1 matmul kernel."""
    s = jnp.sum(x, axis=-1, keepdims=True)
    sp = jnp.pad(s, ((0, 0), (1, 1), (1, 1), (0, 0)))
    return (sp[:, :-2, 1:-1] + sp[:, 2:, 1:-1]
            + sp[:, 1:-1, :-2] + sp[:, 1:-1, 2:]
            - 4.0 * sp[:, 1:-1, 1:-1])


# ----------------------------- model -----------------------------

def init_params(key):
    keys = iter(jax.random.split(key, 32))

    def w(shape, scale=0.1):
        return scale * jax.random.normal(next(keys), shape, dtype=jnp.float32)

    ones = lambda k: jnp.ones((k,), jnp.float32)
    zeros = lambda k: jnp.zeros((k,), jnp.float32)

    # NOTE: conv / fc1 biases are kept for parameter parity with the PyTorch
    # module but are mathematically inert: training-mode BN cancels them.
    params = {
        "lconv_w": w((3, 3, 1, 16)), "lconv_b": w((16,)),
        "lbn_g": ones(16), "lbn_b": zeros(16),
        "rconv_w": w((3, 3, 3, 16)), "rconv_b": w((16,)),
        "rbn_g": ones(16), "rbn_b": zeros(16),
        "blocks": [],
        "fc1_w": w((32, 16)), "fc1_b": w((16,)),
        "fc1_g": ones(16), "fc1_be": zeros(16),
        "fc2_w": w((16, 2)), "fc2_b": w((2,)),
    }
    for _ in range(3):
        params["blocks"].append({
            "w1": w((3, 3, 32, 32)), "b1": w((32,)),
            "g1": ones(32), "be1": zeros(32),
            "w2": w((3, 3, 32, 32)), "b2": w((32,)),
            "g2": ones(32), "be2": zeros(32),
        })
    return params


def model_forward(params, x_nchw):
    # x_nchw: (N, 3, H, W) like PyTorch; compute in NHWC internally.
    x = jnp.transpose(x_nchw, (0, 2, 3, 1)).astype(jnp.float32)      # (N,H,W,3)

    # ---- fused stem: laplacian + rgb branches as ONE 4->32 conv ----
    stem_in = jnp.concatenate([laplacian_map(x), x], axis=-1)        # (N,H,W,4)
    w_stem = jnp.zeros((3, 3, 4, 32), jnp.float32)
    w_stem = w_stem.at[:, :, 0:1, 0:16].set(params["lconv_w"])       # lap -> ch 0..15
    w_stem = w_stem.at[:, :, 1:4, 16:32].set(params["rconv_w"])      # rgb -> ch 16..31
    g_stem = jnp.concatenate([params["lbn_g"], params["rbn_g"]])
    b_stem = jnp.concatenate([params["lbn_b"], params["rbn_b"]])

    pre, s, q, cnt = conv3x3_stats(stem_in, w_stem, stride=2)        # (N,H/2,W/2,32)
    y = bn_apply(pre, s, q, g_stem, b_stem, cnt, relu=True)
    xm = maxpool3x3_s2(y)                                            # (N,H/4,W/4,32)
    # (== torch.cat([laplacian_block(x), rgb_block(x)], dim=1))

    # ---- 3 residual blocks on 32 channels ----
    for blk in params["blocks"]:
        pre, s, q, cnt = conv3x3_stats(xm, blk["w1"], stride=1)
        yb = bn_apply(pre, s, q, blk["g1"], blk["be1"], cnt, relu=True)
        pre, s, q, cnt = conv3x3_stats(yb, blk["w2"], stride=1)
        xm = bn_apply(pre, s, q, blk["g2"], blk["be2"], cnt,
                      relu=True, residual=xm)

    # ---- fused head: avg-pool + fc1 + BN1d + ReLU + fc2 ----
    return head_forward(xm, params["fc1_w"], params["fc1_g"],
                        params["fc1_be"], params["fc2_w"], params["fc2_b"])


if __name__ == "__main__":
    key = jax.random.PRNGKey(0)
    pkey, xkey = jax.random.split(key)
    params = init_params(pkey)
    x = jax.random.normal(xkey, (2, 3, 16, 16), dtype=jnp.float32)   # NCHW input

    fwd = jax.jit(model_forward)
    out = jax.block_until_ready(fwd(params, x))

    assert out.shape == (2, 2), out.shape
    assert bool(jnp.all(jnp.isfinite(out)))
    print("KERNEL_OK")
</pallas_src>

<mosaic_0001>
module attributes {stable_mosaic.version = 11 : i64} {
  func.func @_conv_taps_kernel(%arg0: i32, %arg1: memref<1062x4xf32, #tpu.memory_space<vmem>>, %arg2: memref<9x4x32xbf16, #tpu.memory_space<vmem>>, %arg3: memref<512x1xf32, #tpu.memory_space<vmem>>, %arg4: memref<512x32xf32, #tpu.memory_space<vmem>>, %arg5: memref<1x32xf32, #tpu.memory_space<vmem>>, %arg6: memref<1x32xf32, #tpu.memory_space<vmem>>) attributes {dimension_semantics = [#tpu.dimension_semantics<arbitrary>], iteration_bounds = array<i64: 2>, scalar_prefetch = 0 : i64, scratch_operands = 0 : i64, tpu.core_type = #tpu.core_type<tc>, window_params = [{pipeline_mode = #tpu.pipeline_mode<synchronous>, transform_indices = @transform_0, window_bounds = array<i64: 1062, 4>}, {pipeline_mode = #tpu.pipeline_mode<synchronous>, transform_indices = @transform_1, window_bounds = array<i64: 9, 4, 32>}, {transform_indices = @transform_2, window_bounds = array<i64: 512, 1>}, {transform_indices = @transform_3, window_bounds = array<i64: 512, 32>}, {pipeline_mode = #tpu.pipeline_mode<synchronous>, transform_indices = @transform_4, window_bounds = array<i64: 1, 32>}, {pipeline_mode = #tpu.pipeline_mode<synchronous>, transform_indices = @transform_5, window_bounds = array<i64: 1, 32>}]} {
    %c0_i32 = arith.constant 0 : i32
    %0 = arith.cmpi eq, %arg0, %c0_i32 : i32
    %1 = arith.extui %0 : i1 to i32
    %c0_i32_0 = arith.constant 0 : i32
    %2 = arith.cmpi ne, %1, %c0_i32_0 : i32
    scf.if %2 {
      %cst_43 = arith.constant 0.000000e+00 : f32
      %77 = vector.broadcast %cst_43 : f32 to vector<1x32xf32>
      %c0_44 = arith.constant 0 : index
      %c0_45 = arith.constant 0 : index
      %78 = vector.load %arg5[%c0_44, %c0_45] : memref<1x32xf32, #tpu.memory_space<vmem>>, vector<1x32xf32>
      tpu.vector_store %arg5[%c0_44, %c0_45], %77 {strides = array<i32>} : memref<1x32xf32, #tpu.memory_space<vmem>>, vector<1x32xf32>,
      %cst_46 = arith.constant 0.000000e+00 : f32
      %79 = vector.broadcast %cst_46 : f32 to vector<1x32xf32>
      %c0_47 = arith.constant 0 : index
      %c0_48 = arith.constant 0 : index
      %80 = vector.load %arg6[%c0_47, %c0_48] : memref<1x32xf32, #tpu.memory_space<vmem>>, vector<1x32xf32>
      tpu.vector_store %arg6[%c0_47, %c0_48], %79 {strides = array<i32>} : memref<1x32xf32, #tpu.memory_space<vmem>>, vector<1x32xf32>,
    } else {
    }
    %c512_i32 = arith.constant 512 : i32
    %3 = arith.muli %arg0, %c512_i32 : i32
    %4 = tpu.assume_multiple %3, 8 : i32
    %5 = arith.index_cast %4 : i32 to index
    %c0 = arith.constant 0 : index
    %6 = vector.load %arg1[%5, %c0] : memref<1062x4xf32, #tpu.memory_space<vmem>>, vector<550x4xf32>
    %cst = arith.constant 0.000000e+00 : f32
    %7 = vector.broadcast %cst : f32 to vector<512x32xf32>
    %8 = vector.extract_strided_slice %6 {offsets = [0, 0], sizes = [512, 4], strides = [1, 1]} : vector<550x4xf32> to vector<512x4xf32>
    %9 = arith.truncf %8 : vector<512x4xf32> to vector<512x4xbf16>
    %c0_1 = arith.constant 0 : index
    %c0_2 = arith.constant 0 : index
    %c0_3 = arith.constant 0 : index
    %10 = vector.load %arg2[%c0_1, %c0_2, %c0_3] : memref<9x4x32xbf16, #tpu.memory_space<vmem>>, vector<1x4x32xbf16>
    %11 = vector.shape_cast %10 : vector<1x4x32xbf16> to vector<4x32xbf16>
    %cst_4 = arith.constant dense<0.000000e+00> : vector<512x32xf32>
    %12 = tpu.matmul %9, %11, %cst_4 {dimension_numbers = #tpu.dot_dimension_numbers<[1], [0], [0], [1], [0, 0, 1, 1], [], []>} : vector<512x4xbf16>, vector<4x32xbf16>, vector<512x32xf32> -> vector<512x32xf32>
    %13 = arith.addf %7, %12 : vector<512x32xf32>
    %14 = vector.extract_strided_slice %6 {offsets = [1, 0], sizes = [512, 4], strides = [1, 1]} : vector<550x4xf32> to vector<512x4xf32>
    %15 = arith.truncf %14 : vector<512x4xf32> to vector<512x4xbf16>
    %c1 = arith.constant 1 : index
    %c0_5 = arith.constant 0 : index
    %c0_6 = arith.constant 0 : index
    %16 = vector.load %arg2[%c1, %c0_5, %c0_6] : memref<9x4x32xbf16, #tpu.memory_space<vmem>>, vector<1x4x32xbf16>
    %17 = vector.shape_cast %16 : vector<1x4x32xbf16> to vector<4x32xbf16>
    %cst_7 = arith.constant dense<0.000000e+00> : vector<512x32xf32>
    %18 = tpu.matmul %15, %17, %cst_7 {dimension_numbers = #tpu.dot_dimension_numbers<[1], [0], [0], [1], [0, 0, 1, 1], [], []>} : vector<512x4xbf16>, vector<4x32xbf16>, vector<512x32xf32> -> vector<512x32xf32>
    %19 = arith.addf %13, %18 : vector<512x32xf32>
    %20 = vector.extract_strided_slice %6 {offsets = [2, 0], sizes = [512, 4], strides = [1, 1]} : vector<550x4xf32> to vector<512x4xf32>
    %21 = arith.truncf %20 : vector<512x4xf32> to vector<512x4xbf16>
    %c2 = arith.constant 2 : index
    %c0_8 = arith.constant 0 : index
    %c0_9 = arith.constant 0 : index
    %22 = vector.load %arg2[%c2, %c0_8, %c0_9] : memref<9x4x32xbf16, #tpu.memory_space<vmem>>, vector<1x4x32xbf16>
    %23 = vector.shape_cast %22 : vector<1x4x32xbf16> to vector<4x32xbf16>
    %cst_10 = arith.constant dense<0.000000e+00> : vector<512x32xf32>
    %24 = tpu.matmul %21, %23, %cst_10 {dimension_numbers = #tpu.dot_dimension_numbers<[1], [0], [0], [1], [0, 0, 1, 1], [], []>} : vector<512x4xbf16>, vector<4x32xbf16>, vector<512x32xf32> -> vector<512x32xf32>
    %25 = arith.addf %19, %24 : vector<512x32xf32>
    %26 = vector.extract_strided_slice %6 {offsets = [18, 0], sizes = [512, 4], strides = [1, 1]} : vector<550x4xf32> to vector<512x4xf32>
    %27 = arith.truncf %26 : vector<512x4xf32> to vector<512x4xbf16>
    %c3 = arith.constant 3 : index
    %c0_11 = arith.constant 0 : index
    %c0_12 = arith.constant 0 : index
    %28 = vector.load %arg2[%c3, %c0_11, %c0_12] : memref<9x4x32xbf16, #tpu.memory_space<vmem>>, vector<1x4x32xbf16>
    %29 = vector.shape_cast %28 : vector<1x4x32xbf16> to vector<4x32xbf16>
    %cst_13 = arith.constant dense<0.000000e+00> : vector<512x32xf32>
    %30 = tpu.matmul %27, %29, %cst_13 {dimension_numbers = #tpu.dot_dimension_numbers<[1], [0], [0], [1], [0, 0, 1, 1], [], []>} : vector<512x4xbf16>, vector<4x32xbf16>, vector<512x32xf32> -> vector<512x32xf32>
    %31 = arith.addf %25, %30 : vector<512x32xf32>
    %32 = vector.extract_strided_slice %6 {offsets = [19, 0], sizes = [512, 4], strides = [1, 1]} : vector<550x4xf32> to vector<512x4xf32>
    %33 = arith.truncf %32 : vector<512x4xf32> to vector<512x4xbf16>
    %c4 = arith.constant 4 : index
    %c0_14 = arith.constant 0 : index
    %c0_15 = arith.constant 0 : index
    %34 = vector.load %arg2[%c4, %c0_14, %c0_15] : memref<9x4x32xbf16, #tpu.memory_space<vmem>>, vector<1x4x32xbf16>
    %35 = vector.shape_cast %34 : vector<1x4x32xbf16> to vector<4x32xbf16>
    %cst_16 = arith.constant dense<0.000000e+00> : vector<512x32xf32>
    %36 = tpu.matmul %33, %35, %cst_16 {dimension_numbers = #tpu.dot_dimension_numbers<[1], [0], [0], [1], [0, 0, 1, 1], [], []>} : vector<512x4xbf16>, vector<4x32xbf16>, vector<512x32xf32> -> vector<512x32xf32>
    %37 = arith.addf %31, %36 : vector<512x32xf32>
    %38 = vector.extract_strided_slice %6 {offsets = [20, 0], sizes = [512, 4], strides = [1, 1]} : vector<550x4xf32> to vector<512x4xf32>
    %39 = arith.truncf %38 : vector<512x4xf32> to vector<512x4xbf16>
    %c5 = arith.constant 5 : index
    %c0_17 = arith.constant 0 : index
    %c0_18 = arith.constant 0 : index
    %40 = vector.load %arg2[%c5, %c0_17, %c0_18] : memref<9x4x32xbf16, #tpu.memory_space<vmem>>, vector<1x4x32xbf16>
    %41 = vector.shape_cast %40 : vector<1x4x32xbf16> to vector<4x32xbf16>
    %cst_19 = arith.constant dense<0.000000e+00> : vector<512x32xf32>
    %42 = tpu.matmul %39, %41, %cst_19 {dimension_numbers = #tpu.dot_dimension_numbers<[1], [0], [0], [1], [0, 0, 1, 1], [], []>} : vector<512x4xbf16>, vector<4x32xbf16>, vector<512x32xf32> -> vector<512x32xf32>
    %43 = arith.addf %37, %42 : vector<512x32xf32>
    %44 = vector.extract_strided_slice %6 {offsets = [36, 0], sizes = [512, 4], strides = [1, 1]} : vector<550x4xf32> to vector<512x4xf32>
    %45 = arith.truncf %44 : vector<512x4xf32> to vector<512x4xbf16>
    %c6 = arith.constant 6 : index
    %c0_20 = arith.constant 0 : index
    %c0_21 = arith.constant 0 : index
    %46 = vector.load %arg2[%c6, %c0_20, %c0_21] : memref<9x4x32xbf16, #tpu.memory_space<vmem>>, vector<1x4x32xbf16>
    %47 = vector.shape_cast %46 : vector<1x4x32xbf16> to vector<4x32xbf16>
    %cst_22 = arith.constant dense<0.000000e+00> : vector<512x32xf32>
    %48 = tpu.matmul %45, %47, %cst_22 {dimension_numbers = #tpu.dot_dimension_numbers<[1], [0], [0], [1], [0, 0, 1, 1], [], []>} : vector<512x4xbf16>, vector<4x32xbf16>, vector<512x32xf32> -> vector<512x32xf32>
    %49 = arith.addf %43, %48 : vector<512x32xf32>
    %50 = vector.extract_strided_slice %6 {offsets = [37, 0], sizes = [512, 4], strides = [1, 1]} : vector<550x4xf32> to vector<512x4xf32>
    %51 = arith.truncf %50 : vector<512x4xf32> to vector<512x4xbf16>
    %c7 = arith.constant 7 : index
    %c0_23 = arith.constant 0 : index
    %c0_24 = arith.constant 0 : index
    %52 = vector.load %arg2[%c7, %c0_23, %c0_24] : memref<9x4x32xbf16, #tpu.memory_space<vmem>>, vector<1x4x32xbf16>
    %53 = vector.shape_cast %52 : vector<1x4x32xbf16> to vector<4x32xbf16>
    %cst_25 = arith.constant dense<0.000000e+00> : vector<512x32xf32>
    %54 = tpu.matmul %51, %53, %cst_25 {dimension_numbers = #tpu.dot_dimension_numbers<[1], [0], [0], [1], [0, 0, 1, 1], [], []>} : vector<512x4xbf16>, vector<4x32xbf16>, vector<512x32xf32> -> vector<512x32xf32>
    %55 = arith.addf %49, %54 : vector<512x32xf32>
    %56 = vector.extract_strided_slice %6 {offsets = [38, 0], sizes = [512, 4], strides = [1, 1]} : vector<550x4xf32> to vector<512x4xf32>
    %57 = arith.truncf %56 : vector<512x4xf32> to vector<512x4xbf16>
    %c8 = arith.constant 8 : index
    %c0_26 = arith.constant 0 : index
    %c0_27 = arith.constant 0 : index
    %58 = vector.load %arg2[%c8, %c0_26, %c0_27] : memref<9x4x32xbf16, #tpu.memory_space<vmem>>, vector<1x4x32xbf16>
    %59 = vector.shape_cast %58 : vector<1x4x32xbf16> to vector<4x32xbf16>
    %cst_28 = arith.constant dense<0.000000e+00> : vector<512x32xf32>
    %60 = tpu.matmul %57, %59, %cst_28 {dimension_numbers = #tpu.dot_dimension_numbers<[1], [0], [0], [1], [0, 0, 1, 1], [], []>} : vector<512x4xbf16>, vector<4x32xbf16>, vector<512x32xf32> -> vector<512x32xf32>
    %61 = arith.addf %55, %60 : vector<512x32xf32>
    %c0_29 = arith.constant 0 : index
    %c0_30 = arith.constant 0 : index
    %62 = vector.load %arg3[%c0_29, %c0_30] : memref<512x1xf32, #tpu.memory_space<vmem>>, vector<512x1xf32>
    %63 = vector.broadcast %62 : vector<512x1xf32> to vector<512x32xf32>
    %64 = arith.mulf %61, %63 : vector<512x32xf32>
    %c0_31 = arith.constant 0 : index
    %c0_32 = arith.constant 0 : index
    %65 = vector.load %arg4[%c0_31, %c0_32] : memref<512x32xf32, #tpu.memory_space<vmem>>, vector<512x32xf32>
    tpu.vector_store %arg4[%c0_31, %c0_32], %64 {strides = array<i32>} : memref<512x32xf32, #tpu.memory_space<vmem>>, vector<512x32xf32>,
    %c0_33 = arith.constant 0 : index
    %c0_34 = arith.constant 0 : index
    %66 = vector.load %arg5[%c0_33, %c0_34] : memref<1x32xf32, #tpu.memory_space<vmem>>, vector<1x32xf32>
    %cst_35 = arith.constant dense<0.000000e+00> : vector<32xf32>
    %67 = vector.multi_reduction <add>, %64, %cst_35 [0] : vector<512x32xf32> to vector<32xf32>
    %68 = vector.shape_cast %67 : vector<32xf32> to vector<1x32xf32>
    %69 = arith.addf %66, %68 : vector<1x32xf32>
    %c0_36 = arith.constant 0 : index
    %c0_37 = arith.constant 0 : index
    %70 = vector.load %arg5[%c0_36, %c0_37] : memref<1x32xf32, #tpu.memory_space<vmem>>, vector<1x32xf32>
    tpu.vector_store %arg5[%c0_36, %c0_37], %69 {strides = array<i32>} : memref<1x32xf32, #tpu.memory_space<vmem>>, vector<1x32xf32>,
    %c0_38 = arith.constant 0 : index
    %c0_39 = arith.constant 0 : index
    %71 = vector.load %arg6[%c0_38, %c0_39] : memref<1x32xf32, #tpu.memory_space<vmem>>, vector<1x32xf32>
    %72 = arith.mulf %64, %64 : vector<512x32xf32>
    %cst_40 = arith.constant dense<0.000000e+00> : vector<32xf32>
    %73 = vector.multi_reduction <add>, %72, %cst_40 [0] : vector<512x32xf32> to vector<32xf32>
    %74 = vector.shape_cast %73 : vector<32xf32> to vector<1x32xf32>
    %75 = arith.addf %71, %74 : vector<1x32xf32>
    %c0_41 = arith.constant 0 : index
    %c0_42 = arith.constant 0 : index
    %76 = vector.load %arg6[%c0_41, %c0_42] : memref<1x32xf32, #tpu.memory_space<vmem>>, vector<1x32xf32>
    tpu.vector_store %arg6[%c0_41, %c0_42], %75 {strides = array<i32>} : memref<1x32xf32, #tpu.memory_space<vmem>>, vector<1x32xf32>,
    return
  }
  func.func @transform_0(%arg0: i32) -> (i32, i32) {
    %c0_i32 = arith.constant 0 : i32
    %c0_i32_0 = arith.constant 0 : i32
    %c0_i32_1 = arith.constant 0 : i32
    return %c0_i32, %c0_i32_0 : i32, i32
  }
  func.func @transform_1(%arg0: i32) -> (i32, i32, i32) {
    %c0_i32 = arith.constant 0 : i32
    %c0_i32_0 = arith.constant 0 : i32
    %c0_i32_1 = arith.constant 0 : i32
    %c0_i32_2 = arith.constant 0 : i32
    return %c0_i32, %c0_i32_0, %c0_i32_1 : i32, i32, i32
  }
  func.func @transform_2(%arg0: i32) -> (i32, i32) {
    %c0_i32 = arith.constant 0 : i32
    %c0_i32_0 = arith.constant 0 : i32
    return %arg0, %c0_i32 : i32, i32
  }
  func.func @transform_3(%arg0: i32) -> (i32, i32) {
    %c0_i32 = arith.constant 0 : i32
    %c0_i32_0 = arith.constant 0 : i32
    return %arg0, %c0_i32 : i32, i32
  }
  func.func @transform_4(%arg0: i32) -> (i32, i32) {
    %c0_i32 = arith.constant 0 : i32
    %c0_i32_0 = arith.constant 0 : i32
    %c0_i32_1 = arith.constant 0 : i32
    return %c0_i32, %c0_i32_0 : i32, i32
  }
  func.func @transform_5(%arg0: i32) -> (i32, i32) {
    %c0_i32 = arith.constant 0 : i32
    %c0_i32_0 = arith.constant 0 : i32
    %c0_i32_1 = arith.constant 0 : i32
    return %c0_i32, %c0_i32_0 : i32, i32
  }
}

module attributes {stable_mosaic.version = 11 : i64} {
  func.func @_bn_apply_kernel(%arg0: i32, %arg1: memref<128x32xf32, #tpu.memory_space<vmem>>, %arg2: memref<1x32xf32, #tpu.memory_space<vmem>>, %arg3: memref<1x32xf32, #tpu.memory_space<vmem>>, %arg4: memref<1x32xf32, #tpu.memory_space<vmem>>, %arg5: memref<1x32xf32, #tpu.memory_space<vmem>>, %arg6: memref<128x32xf32, #tpu.memory_space<vmem>>) attributes {dimension_semantics = [#tpu.dimension_semantics<parallel>], iteration_bounds = array<i64: 1>, scalar_prefetch = 0 : i64, scratch_operands = 0 : i64, tpu.core_type = #tpu.core_type<tc>, window_params = [{transform_indices = @transform_0, window_bounds = array<i64: 128, 32>}, {pipeline_mode = #tpu.pipeline_mode<synchronous>, transform_indices = @transform_1, window_bounds = array<i64: 1, 32>}, {pipeline_mode = #tpu.pipeline_mode<synchronous>, transform_indices = @transform_2, window_bounds = array<i64: 1, 32>}, {pipeline_mode = #tpu.pipeline_mode<synchronous>, transform_indices = @transform_3, window_bounds = array<i64: 1, 32>}, {pipeline_mode = #tpu.pipeline_mode<synchronous>, transform_indices = @transform_4, window_bounds = array<i64: 1, 32>}, {transform_indices = @transform_5, window_bounds = array<i64: 128, 32>}]} {
    %c0 = arith.constant 0 : index
    %c0_0 = arith.constant 0 : index
    %0 = vector.load %arg2[%c0, %c0_0] : memref<1x32xf32, #tpu.memory_space<vmem>>, vector<1x32xf32>
    %cst = arith.constant 7.812500e-03 : f32
    %1 = vector.broadcast %cst : f32 to vector<1x32xf32>
    %2 = arith.mulf %0, %1 : vector<1x32xf32>
    %c0_1 = arith.constant 0 : index
    %c0_2 = arith.constant 0 : index
    %3 = vector.load %arg3[%c0_1, %c0_2] : memref<1x32xf32, #tpu.memory_space<vmem>>, vector<1x32xf32>
    %cst_3 = arith.constant 7.812500e-03 : f32
    %4 = vector.broadcast %cst_3 : f32 to vector<1x32xf32>
    %5 = arith.mulf %3, %4 : vector<1x32xf32>
    %6 = arith.mulf %2, %2 : vector<1x32xf32>
    %7 = arith.subf %5, %6 : vector<1x32xf32>
    %cst_4 = arith.constant 0.000000e+00 : f32
    %8 = vector.broadcast %cst_4 : f32 to vector<1x32xf32>
    %9 = arith.maximumf %7, %8 : vector<1x32xf32>
    %c0_5 = arith.constant 0 : index
    %c0_6 = arith.constant 0 : index
    %10 = vector.load %arg4[%c0_5, %c0_6] : memref<1x32xf32, #tpu.memory_space<vmem>>, vector<1x32xf32>
    %cst_7 = arith.constant 9.99999974E-6 : f32
    %11 = vector.broadcast %cst_7 : f32 to vector<1x32xf32>
    %12 = arith.addf %9, %11 : vector<1x32xf32>
    %13 = math.rsqrt %12 : vector<1x32xf32>
    %14 = arith.mulf %10, %13 : vector<1x32xf32>
    %c0_8 = arith.constant 0 : index
    %c0_9 = arith.constant 0 : index
    %15 = vector.load %arg5[%c0_8, %c0_9] : memref<1x32xf32, #tpu.memory_space<vmem>>, vector<1x32xf32>
    %16 = arith.mulf %2, %14 : vector<1x32xf32>
    %17 = arith.subf %15, %16 : vector<1x32xf32>
    %c0_10 = arith.constant 0 : index
    %c0_11 = arith.constant 0 : index
    %18 = vector.load %arg1[%c0_10, %c0_11] : memref<128x32xf32, #tpu.memory_space<vmem>>, vector<128x32xf32>
    %19 = vector.broadcast %14 : vector<1x32xf32> to vector<128x32xf32>
    %20 = arith.mulf %18, %19 : vector<128x32xf32>
    %21 = vector.broadcast %17 : vector<1x32xf32> to vector<128x32xf32>
    %22 = arith.addf %20, %21 : vector<128x32xf32>
    %cst_12 = arith.constant 0.000000e+00 : f32
    %23 = vector.broadcast %cst_12 : f32 to vector<128x32xf32>
    %24 = arith.maximumf %22, %23 : vector<128x32xf32>
    %c0_13 = arith.constant 0 : index
    %c0_14 = arith.constant 0 : index
    %25 = vector.load %arg6[%c0_13, %c0_14] : memref<128x32xf32, #tpu.memory_space<vmem>>, vector<128x32xf32>
    tpu.vector_store %arg6[%c0_13, %c0_14], %24 {strides = array<i32>} : memref<128x32xf32, #tpu.memory_space<vmem>>, vector<128x32xf32>,
    return
  }
  func.func @transform_0(%arg0: i32) -> (i32, i32) {
    %c0_i32 = arith.constant 0 : i32
    %c0_i32_0 = arith.constant 0 : i32
    return %arg0, %c0_i32 : i32, i32
  }
  func.func @transform_1(%arg0: i32) -> (i32, i32) {
    %c0_i32 = arith.constant 0 : i32
    %c0_i32_0 = arith.constant 0 : i32
    %c0_i32_1 = arith.constant 0 : i32
    return %c0_i32, %c0_i32_0 : i32, i32
  }
  func.func @transform_2(%arg0: i32) -> (i32, i32) {
    %c0_i32 = arith.constant 0 : i32
    %c0_i32_0 = arith.constant 0 : i32
    %c0_i32_1 = arith.constant 0 : i32
    return %c0_i32, %c0_i32_0 : i32, i32
  }
  func.func @transform_3(%arg0: i32) -> (i32, i32) {
    %c0_i32 = arith.constant 0 : i32
    %c0_i32_0 = arith.constant 0 : i32
    %c0_i32_1 = arith.constant 0 : i32
    return %c0_i32, %c0_i32_0 : i32, i32
  }
  func.func @transform_4(%arg0: i32) -> (i32, i32) {
    %c0_i32 = arith.constant 0 : i32
    %c0_i32_0 = arith.constant 0 : i32
    %c0_i32_1 = arith.constant 0 : i32
    return %c0_i32, %c0_i32_0 : i32, i32
  }
  func.func @transform_5(%arg0: i32) -> (i32, i32) {
    %c0_i32 = arith.constant 0 : i32
    %c0_i32_0 = arith.constant 0 : i32
    return %arg0, %c0_i32 : i32, i32
  }
}

module attributes {stable_mosaic.version = 11 : i64} {
  func.func @_maxpool_taps_kernel(%arg0: i32, %arg1: memref<222x32xf32, #tpu.memory_space<vmem>>, %arg2: memref<200x32xf32, #tpu.memory_space<vmem>>) attributes {dimension_semantics = [#tpu.dimension_semantics<parallel>], iteration_bounds = array<i64: 1>, scalar_prefetch = 0 : i64, scratch_operands = 0 : i64, tpu.core_type = #tpu.core_type<tc>, window_params = [{pipeline_mode = #tpu.pipeline_mode<synchronous>, transform_indices = @transform_0, window_bounds = array<i64: 222, 32>}, {transform_indices = @transform_1, window_bounds = array<i64: 200, 32>}]} {
    %c200_i32 = arith.constant 200 : i32
    %0 = arith.muli %arg0, %c200_i32 : i32
    %1 = tpu.assume_multiple %0, 8 : i32
    %2 = arith.index_cast %1 : i32 to index
    %c0 = arith.constant 0 : index
    %3 = vector.load %arg1[%2, %c0] : memref<222x32xf32, #tpu.memory_space<vmem>>, vector<222x32xf32>
    %4 = vector.extract_strided_slice %3 {offsets = [0, 0], sizes = [200, 32], strides = [1, 1]} : vector<222x32xf32> to vector<200x32xf32>
    %5 = vector.extract_strided_slice %3 {offsets = [1, 0], sizes = [200, 32], strides = [1, 1]} : vector<222x32xf32> to vector<200x32xf32>
    %6 = arith.maximumf %4, %5 : vector<200x32xf32>
    %7 = vector.extract_strided_slice %3 {offsets = [2, 0], sizes = [200, 32], strides = [1, 1]} : vector<222x32xf32> to vector<200x32xf32>
    %8 = arith.maximumf %6, %7 : vector<200x32xf32>
    %9 = vector.extract_strided_slice %3 {offsets = [10, 0], sizes = [200, 32], strides = [1, 1]} : vector<222x32xf32> to vector<200x32xf32>
    %10 = arith.maximumf %8, %9 : vector<200x32xf32>
    %11 = vector.extract_strided_slice %3 {offsets = [11, 0], sizes = [200, 32], strides = [1, 1]} : vector<222x32xf32> to vector<200x32xf32>
    %12 = arith.maximumf %10, %11 : vector<200x32xf32>
    %13 = vector.extract_strided_slice %3 {offsets = [12, 0], sizes = [200, 32], strides = [1, 1]} : vector<222x32xf32> to vector<200x32xf32>
    %14 = arith.maximumf %12, %13 : vector<200x32xf32>
    %15 = vector.extract_strided_slice %3 {offsets = [20, 0], sizes = [200, 32], strides = [1, 1]} : vector<222x32xf32> to vector<200x32xf32>
    %16 = arith.maximumf %14, %15 : vector<200x32xf32>
    %17 = vector.extract_strided_slice %3 {offsets = [21, 0], sizes = [200, 32], strides = [1, 1]} : vector<222x32xf32> to vector<200x32xf32>
    %18 = arith.maximumf %16, %17 : vector<200x32xf32>
    %19 = vector.extract_strided_slice %3 {offsets = [22, 0], sizes = [200, 32], strides = [1, 1]} : vector<222x32xf32> to vector<200x32xf32>
    %20 = arith.maximumf %18, %19 : vector<200x32xf32>
    %c0_0 = arith.constant 0 : index
    %c0_1 = arith.constant 0 : index
    %21 = vector.load %arg2[%c0_0, %c0_1] : memref<200x32xf32, #tpu.memory_space<vmem>>, vector<200x32xf32>
    tpu.vector_store %arg2[%c0_0, %c0_1], %20 {strides = array<i32>} : memref<200x32xf32, #tpu.memory_space<vmem>>, vector<200x32xf32>,
    return
  }
  func.func @transform_0(%arg0: i32) -> (i32, i32) {
    %c0_i32 = arith.constant 0 : i32
    %c0_i32_0 = arith.constant 0 : i32
    %c0_i32_1 = arith.constant 0 : i32
    return %c0_i32, %c0_i32_0 : i32, i32
  }
  func.func @transform_1(%arg0: i32) -> (i32, i32) {
    %c0_i32 = arith.constant 0 : i32
    %c0_i32_0 = arith.constant 0 : i32
    return %arg0, %c0_i32 : i32, i32
  }
}

module attributes {stable_mosaic.version = 11 : i64} {
  func.func @_conv_taps_kernel(%arg0: i32, %arg1: memref<86x32xf32, #tpu.memory_space<vmem>>, %arg2: memref<9x32x32xbf16, #tpu.memory_space<vmem>>, %arg3: memref<72x1xf32, #tpu.memory_space<vmem>>, %arg4: memref<72x32xf32, #tpu.memory_space<vmem>>, %arg5: memref<1x32xf32, #tpu.memory_space<vmem>>, %arg6: memref<1x32xf32, #tpu.memory_space<vmem>>) attributes {dimension_semantics = [#tpu.dimension_semantics<arbitrary>], iteration_bounds = array<i64: 1>, scalar_prefetch = 0 : i64, scratch_operands = 0 : i64, tpu.core_type = #tpu.core_type<tc>, window_params = [{pipeline_mode = #tpu.pipeline_mode<synchronous>, transform_indices = @transform_0, window_bounds = array<i64: 86, 32>}, {pipeline_mode = #tpu.pipeline_mode<synchronous>, transform_indices = @transform_1, window_bounds = array<i64: 9, 32, 32>}, {transform_indices = @transform_2, window_bounds = array<i64: 72, 1>}, {transform_indices = @transform_3, window_bounds = array<i64: 72, 32>}, {pipeline_mode = #tpu.pipeline_mode<synchronous>, transform_indices = @transform_4, window_bounds = array<i64: 1, 32>}, {pipeline_mode = #tpu.pipeline_mode<synchronous>, transform_indices = @transform_5, window_bounds = array<i64: 1, 32>}]} {
    %c0_i32 = arith.constant 0 : i32
    %0 = arith.cmpi eq, %arg0, %c0_i32 : i32
    %1 = arith.extui %0 : i1 to i32
    %c0_i32_0 = arith.constant 0 : i32
    %2 = arith.cmpi ne, %1, %c0_i32_0 : i32
    scf.if %2 {
      %cst_43 = arith.constant 0.000000e+00 : f32
      %77 = vector.broadcast %cst_43 : f32 to vector<1x32xf32>
      %c0_44 = arith.constant 0 : index
      %c0_45 = arith.constant 0 : index
      %78 = vector.load %arg5[%c0_44, %c0_45] : memref<1x32xf32, #tpu.memory_space<vmem>>, vector<1x32xf32>
      tpu.vector_store %arg5[%c0_44, %c0_45], %77 {strides = array<i32>} : memref<1x32xf32, #tpu.memory_space<vmem>>, vector<1x32xf32>,
      %cst_46 = arith.constant 0.000000e+00 : f32
      %79 = vector.broadcast %cst_46 : f32 to vector<1x32xf32>
      %c0_47 = arith.constant 0 : index
      %c0_48 = arith.constant 0 : index
      %80 = vector.load %arg6[%c0_47, %c0_48] : memref<1x32xf32, #tpu.memory_space<vmem>>, vector<1x32xf32>
      tpu.vector_store %arg6[%c0_47, %c0_48], %79 {strides = array<i32>} : memref<1x32xf32, #tpu.memory_space<vmem>>, vector<1x32xf32>,
    } else {
    }
    %c72_i32 = arith.constant 72 : i32
    %3 = arith.muli %arg0, %c72_i32 : i32
    %4 = tpu.assume_multiple %3, 8 : i32
    %5 = arith.index_cast %4 : i32 to index
    %c0 = arith.constant 0 : index
    %6 = vector.load %arg1[%5, %c0] : memref<86x32xf32, #tpu.memory_space<vmem>>, vector<86x32xf32>
    %cst = arith.constant 0.000000e+00 : f32
    %7 = vector.broadcast %cst : f32 to vector<72x32xf32>
    %8 = vector.extract_strided_slice %6 {offsets = [0, 0], sizes = [72, 32], strides = [1, 1]} : vector<86x32xf32> to vector<72x32xf32>
    %9 = arith.truncf %8 : vector<72x32xf32> to vector<72x32xbf16>
    %c0_1 = arith.constant 0 : index
    %c0_2 = arith.constant 0 : index
    %c0_3 = arith.constant 0 : index
    %10 = vector.load %arg2[%c0_1, %c0_2, %c0_3] : memref<9x32x32xbf16, #tpu.memory_space<vmem>>, vector<1x32x32xbf16>
    %11 = vector.shape_cast %10 : vector<1x32x32xbf16> to vector<32x32xbf16>
    %cst_4 = arith.constant dense<0.000000e+00> : vector<72x32xf32>
    %12 = tpu.matmul %9, %11, %cst_4 {dimension_numbers = #tpu.dot_dimension_numbers<[1], [0], [0], [1], [0, 0, 1, 1], [], []>} : vector<72x32xbf16>, vector<32x32xbf16>, vector<72x32xf32> -> vector<72x32xf32>
    %13 = arith.addf %7, %12 : vector<72x32xf32>
    %14 = vector.extract_strided_slice %6 {offsets = [1, 0], sizes = [72, 32], strides = [1, 1]} : vector<86x32xf32> to vector<72x32xf32>
    %15 = arith.truncf %14 : vector<72x32xf32> to vector<72x32xbf16>
    %c1 = arith.constant 1 : index
    %c0_5 = arith.constant 0 : index
    %c0_6 = arith.constant 0 : index
    %16 = vector.load %arg2[%c1, %c0_5, %c0_6] : memref<9x32x32xbf16, #tpu.memory_space<vmem>>, vector<1x32x32xbf16>
    %17 = vector.shape_cast %16 : vector<1x32x32xbf16> to vector<32x32xbf16>
    %cst_7 = arith.constant dense<0.000000e+00> : vector<72x32xf32>
    %18 = tpu.matmul %15, %17, %cst_7 {dimension_numbers = #tpu.dot_dimension_numbers<[1], [0], [0], [1], [0, 0, 1, 1], [], []>} : vector<72x32xbf16>, vector<32x32xbf16>, vector<72x32xf32> -> vector<72x32xf32>
    %19 = arith.addf %13, %18 : vector<72x32xf32>
    %20 = vector.extract_strided_slice %6 {offsets = [2, 0], sizes = [72, 32], strides = [1, 1]} : vector<86x32xf32> to vector<72x32xf32>
    %21 = arith.truncf %20 : vector<72x32xf32> to vector<72x32xbf16>
    %c2 = arith.constant 2 : index
    %c0_8 = arith.constant 0 : index
    %c0_9 = arith.constant 0 : index
    %22 = vector.load %arg2[%c2, %c0_8, %c0_9] : memref<9x32x32xbf16, #tpu.memory_space<vmem>>, vector<1x32x32xbf16>
    %23 = vector.shape_cast %22 : vector<1x32x32xbf16> to vector<32x32xbf16>
    %cst_10 = arith.constant dense<0.000000e+00> : vector<72x32xf32>
    %24 = tpu.matmul %21, %23, %cst_10 {dimension_numbers = #tpu.dot_dimension_numbers<[1], [0], [0], [1], [0, 0, 1, 1], [], []>} : vector<72x32xbf16>, vector<32x32xbf16>, vector<72x32xf32> -> vector<72x32xf32>
    %25 = arith.addf %19, %24 : vector<72x32xf32>
    %26 = vector.extract_strided_slice %6 {offsets = [6, 0], sizes = [72, 32], strides = [1, 1]} : vector<86x32xf32> to vector<72x32xf32>
    %27 = arith.truncf %26 : vector<72x32xf32> to vector<72x32xbf16>
    %c3 = arith.constant 3 : index
    %c0_11 = arith.constant 0 : index
    %c0_12 = arith.constant 0 : index
    %28 = vector.load %arg2[%c3, %c0_11, %c0_12] : memref<9x32x32xbf16, #tpu.memory_space<vmem>>, vector<1x32x32xbf16>
    %29 = vector.shape_cast %28 : vector<1x32x32xbf16> to vector<32x32xbf16>
    %cst_13 = arith.constant dense<0.000000e+00> : vector<72x32xf32>
    %30 = tpu.matmul %27, %29, %cst_13 {dimension_numbers = #tpu.dot_dimension_numbers<[1], [0], [0], [1], [0, 0, 1, 1], [], []>} : vector<72x32xbf16>, vector<32x32xbf16>, vector<72x32xf32> -> vector<72x32xf32>
    %31 = arith.addf %25, %30 : vector<72x32xf32>
    %32 = vector.extract_strided_slice %6 {offsets = [7, 0], sizes = [72, 32], strides = [1, 1]} : vector<86x32xf32> to vector<72x32xf32>
    %33 = arith.truncf %32 : vector<72x32xf32> to vector<72x32xbf16>
    %c4 = arith.constant 4 : index
    %c0_14 = arith.constant 0 : index
    %c0_15 = arith.constant 0 : index
    %34 = vector.load %arg2[%c4, %c0_14, %c0_15] : memref<9x32x32xbf16, #tpu.memory_space<vmem>>, vector<1x32x32xbf16>
    %35 = vector.shape_cast %34 : vector<1x32x32xbf16> to vector<32x32xbf16>
    %cst_16 = arith.constant dense<0.000000e+00> : vector<72x32xf32>
    %36 = tpu.matmul %33, %35, %cst_16 {dimension_numbers = #tpu.dot_dimension_numbers<[1], [0], [0], [1], [0, 0, 1, 1], [], []>} : vector<72x32xbf16>, vector<32x32xbf16>, vector<72x32xf32> -> vector<72x32xf32>
    %37 = arith.addf %31, %36 : vector<72x32xf32>
    %38 = vector.extract_strided_slice %6 {offsets = [8, 0], sizes = [72, 32], strides = [1, 1]} : vector<86x32xf32> to vector<72x32xf32>
    %39 = arith.truncf %38 : vector<72x32xf32> to vector<72x32xbf16>
    %c5 = arith.constant 5 : index
    %c0_17 = arith.constant 0 : index
    %c0_18 = arith.constant 0 : index
    %40 = vector.load %arg2[%c5, %c0_17, %c0_18] : memref<9x32x32xbf16, #tpu.memory_space<vmem>>, vector<1x32x32xbf16>
    %41 = vector.shape_cast %40 : vector<1x32x32xbf16> to vector<32x32xbf16>
    %cst_19 = arith.constant dense<0.000000e+00> : vector<72x32xf32>
    %42 = tpu.matmul %39, %41, %cst_19 {dimension_numbers = #tpu.dot_dimension_numbers<[1], [0], [0], [1], [0, 0, 1, 1], [], []>} : vector<72x32xbf16>, vector<32x32xbf16>, vector<72x32xf32> -> vector<72x32xf32>
    %43 = arith.addf %37, %42 : vector<72x32xf32>
    %44 = vector.extract_strided_slice %6 {offsets = [12, 0], sizes = [72, 32], strides = [1, 1]} : vector<86x32xf32> to vector<72x32xf32>
    %45 = arith.truncf %44 : vector<72x32xf32> to vector<72x32xbf16>
    %c6 = arith.constant 6 : index
    %c0_20 = arith.constant 0 : index
    %c0_21 = arith.constant 0 : index
    %46 = vector.load %arg2[%c6, %c0_20, %c0_21] : memref<9x32x32xbf16, #tpu.memory_space<vmem>>, vector<1x32x32xbf16>
    %47 = vector.shape_cast %46 : vector<1x32x32xbf16> to vector<32x32xbf16>
    %cst_22 = arith.constant dense<0.000000e+00> : vector<72x32xf32>
    %48 = tpu.matmul %45, %47, %cst_22 {dimension_numbers = #tpu.dot_dimension_numbers<[1], [0], [0], [1], [0, 0, 1, 1], [], []>} : vector<72x32xbf16>, vector<32x32xbf16>, vector<72x32xf32> -> vector<72x32xf32>
    %49 = arith.addf %43, %48 : vector<72x32xf32>
    %50 = vector.extract_strided_slice %6 {offsets = [13, 0], sizes = [72, 32], strides = [1, 1]} : vector<86x32xf32> to vector<72x32xf32>
    %51 = arith.truncf %50 : vector<72x32xf32> to vector<72x32xbf16>
    %c7 = arith.constant 7 : index
    %c0_23 = arith.constant 0 : index
    %c0_24 = arith.constant 0 : index
    %52 = vector.load %arg2[%c7, %c0_23, %c0_24] : memref<9x32x32xbf16, #tpu.memory_space<vmem>>, vector<1x32x32xbf16>
    %53 = vector.shape_cast %52 : vector<1x32x32xbf16> to vector<32x32xbf16>
    %cst_25 = arith.constant dense<0.000000e+00> : vector<72x32xf32>
    %54 = tpu.matmul %51, %53, %cst_25 {dimension_numbers = #tpu.dot_dimension_numbers<[1], [0], [0], [1], [0, 0, 1, 1], [], []>} : vector<72x32xbf16>, vector<32x32xbf16>, vector<72x32xf32> -> vector<72x32xf32>
    %55 = arith.addf %49, %54 : vector<72x32xf32>
    %56 = vector.extract_strided_slice %6 {offsets = [14, 0], sizes = [72, 32], strides = [1, 1]} : vector<86x32xf32> to vector<72x32xf32>
    %57 = arith.truncf %56 : vector<72x32xf32> to vector<72x32xbf16>
    %c8 = arith.constant 8 : index
    %c0_26 = arith.constant 0 : index
    %c0_27 = arith.constant 0 : index
    %58 = vector.load %arg2[%c8, %c0_26, %c0_27] : memref<9x32x32xbf16, #tpu.memory_space<vmem>>, vector<1x32x32xbf16>
    %59 = vector.shape_cast %58 : vector<1x32x32xbf16> to vector<32x32xbf16>
    %cst_28 = arith.constant dense<0.000000e+00> : vector<72x32xf32>
    %60 = tpu.matmul %57, %59, %cst_28 {dimension_numbers = #tpu.dot_dimension_numbers<[1], [0], [0], [1], [0, 0, 1, 1], [], []>} : vector<72x32xbf16>, vector<32x32xbf16>, vector<72x32xf32> -> vector<72x32xf32>
    %61 = arith.addf %55, %60 : vector<72x32xf32>
    %c0_29 = arith.constant 0 : index
    %c0_30 = arith.constant 0 : index
    %62 = vector.load %arg3[%c0_29, %c0_30] : memref<72x1xf32, #tpu.memory_space<vmem>>, vector<72x1xf32>
    %63 = vector.broadcast %62 : vector<72x1xf32> to vector<72x32xf32>
    %64 = arith.mulf %61, %63 : vector<72x32xf32>
    %c0_31 = arith.constant 0 : index
    %c0_32 = arith.constant 0 : index
    %65 = vector.load %arg4[%c0_31, %c0_32] : memref<72x32xf32, #tpu.memory_space<vmem>>, vector<72x32xf32>
    tpu.vector_store %arg4[%c0_31, %c0_32], %64 {strides = array<i32>} : memref<72x32xf32, #tpu.memory_space<vmem>>, vector<72x32xf32>,
    %c0_33 = arith.constant 0 : index
    %c0_34 = arith.constant 0 : index
    %66 = vector.load %arg5[%c0_33, %c0_34] : memref<1x32xf32, #tpu.memory_space<vmem>>, vector<1x32xf32>
    %cst_35 = arith.constant dense<0.000000e+00> : vector<32xf32>
    %67 = vector.multi_reduction <add>, %64, %cst_35 [0] : vector<72x32xf32> to vector<32xf32>
    %68 = vector.shape_cast %67 : vector<32xf32> to vector<1x32xf32>
    %69 = arith.addf %66, %68 : vector<1x32xf32>
    %c0_36 = arith.constant 0 : index
    %c0_37 = arith.constant 0 : index
    %70 = vector.load %arg5[%c0_36, %c0_37] : memref<1x32xf32, #tpu.memory_space<vmem>>, vector<1x32xf32>
    tpu.vector_store %arg5[%c0_36, %c0_37], %69 {strides = array<i32>} : memref<1x32xf32, #tpu.memory_space<vmem>>, vector<1x32xf32>,
    %c0_38 = arith.constant 0 : index
    %c0_39 = arith.constant 0 : index
    %71 = vector.load %arg6[%c0_38, %c0_39] : memref<1x32xf32, #tpu.memory_space<vmem>>, vector<1x32xf32>
    %72 = arith.mulf %64, %64 : vector<72x32xf32>
    %cst_40 = arith.constant dense<0.000000e+00> : vector<32xf32>
    %73 = vector.multi_reduction <add>, %72, %cst_40 [0] : vector<72x32xf32> to vector<32xf32>
    %74 = vector.shape_cast %73 : vector<32xf32> to vector<1x32xf32>
    %75 = arith.addf %71, %74 : vector<1x32xf32>
    %c0_41 = arith.constant 0 : index
    %c0_42 = arith.constant 0 : index
    %76 = vector.load %arg6[%c0_41, %c0_42] : memref<1x32xf32, #tpu.memory_space<vmem>>, vector<1x32xf32>
    tpu.vector_store %arg6[%c0_41, %c0_42], %75 {strides = array<i32>} : memref<1x32xf32, #tpu.memory_space<vmem>>, vector<1x32xf32>,
    return
  }
  func.func @transform_0(%arg0: i32) -> (i32, i32) {
    %c0_i32 = arith.constant 0 : i32
    %c0_i32_0 = arith.constant 0 : i32
    %c0_i32_1 = arith.constant 0 : i32
    return %c0_i32, %c0_i32_0 : i32, i32
  }
  func.func @transform_1(%arg0: i32) -> (i32, i32, i32) {
    %c0_i32 = arith.constant 0 : i32
    %c0_i32_0 = arith.constant 0 : i32
    %c0_i32_1 = arith.constant 0 : i32
    %c0_i32_2 = arith.constant 0 : i32
    return %c0_i32, %c0_i32_0, %c0_i32_1 : i32, i32, i32
  }
  func.func @transform_2(%arg0: i32) -> (i32, i32) {
    %c0_i32 = arith.constant 0 : i32
    %c0_i32_0 = arith.constant 0 : i32
    return %arg0, %c0_i32 : i32, i32
  }
  func.func @transform_3(%arg0: i32) -> (i32, i32) {
    %c0_i32 = arith.constant 0 : i32
    %c0_i32_0 = arith.constant 0 : i32
    return %arg0, %c0_i32 : i32, i32
  }
  func.func @transform_4(%arg0: i32) -> (i32, i32) {
    %c0_i32 = arith.constant 0 : i32
    %c0_i32_0 = arith.constant 0 : i32
    %c0_i32_1 = arith.constant 0 : i32
    return %c0_i32, %c0_i32_0 : i32, i32
  }
  func.func @transform_5(%arg0: i32) -> (i32, i32) {
    %c0_i32 = arith.constant 0 : i32
    %c0_i32_0 = arith.constant 0 : i32
    %c0_i32_1 = arith.constant 0 : i32
    return %c0_i32, %c0_i32_0 : i32, i32
  }
}

module attributes {stable_mosaic.version = 11 : i64} {
  func.func @_bn_apply_kernel(%arg0: i32, %arg1: memref<32x32xf32, #tpu.memory_space<vmem>>, %arg2: memref<1x32xf32, #tpu.memory_space<vmem>>, %arg3: memref<1x32xf32, #tpu.memory_space<vmem>>, %arg4: memref<1x32xf32, #tpu.memory_space<vmem>>, %arg5: memref<1x32xf32, #tpu.memory_space<vmem>>, %arg6: memref<32x32xf32, #tpu.memory_space<vmem>>, %arg7: memref<32x32xf32, #tpu.memory_space<vmem>>) attributes {dimension_semantics = [#tpu.dimension_semantics<parallel>], iteration_bounds = array<i64: 1>, scalar_prefetch = 0 : i64, scratch_operands = 0 : i64, tpu.core_type = #tpu.core_type<tc>, window_params = [{transform_indices = @transform_0, window_bounds = array<i64: 32, 32>}, {pipeline_mode = #tpu.pipeline_mode<synchronous>, transform_indices = @transform_1, window_bounds = array<i64: 1, 32>}, {pipeline_mode = #tpu.pipeline_mode<synchronous>, transform_indices = @transform_2, window_bounds = array<i64: 1, 32>}, {pipeline_mode = #tpu.pipeline_mode<synchronous>, transform_indices = @transform_3, window_bounds = array<i64: 1, 32>}, {pipeline_mode = #tpu.pipeline_mode<synchronous>, transform_indices = @transform_4, window_bounds = array<i64: 1, 32>}, {transform_indices = @transform_5, window_bounds = array<i64: 32, 32>}, {transform_indices = @transform_6, window_bounds = array<i64: 32, 32>}]} {
    %c0 = arith.constant 0 : index
    %c0_0 = arith.constant 0 : index
    %0 = vector.load %arg2[%c0, %c0_0] : memref<1x32xf32, #tpu.memory_space<vmem>>, vector<1x32xf32>
    %cst = arith.constant 3.125000e-02 : f32
    %1 = vector.broadcast %cst : f32 to vector<1x32xf32>
    %2 = arith.mulf %0, %1 : vector<1x32xf32>
    %c0_1 = arith.constant 0 : index
    %c0_2 = arith.constant 0 : index
    %3 = vector.load %arg3[%c0_1, %c0_2] : memref<1x32xf32, #tpu.memory_space<vmem>>, vector<1x32xf32>
    %cst_3 = arith.constant 3.125000e-02 : f32
    %4 = vector.broadcast %cst_3 : f32 to vector<1x32xf32>
    %5 = arith.mulf %3, %4 : vector<1x32xf32>
    %6 = arith.mulf %2, %2 : vector<1x32xf32>
    %7 = arith.subf %5, %6 : vector<1x32xf32>
    %cst_4 = arith.constant 0.000000e+00 : f32
    %8 = vector.broadcast %cst_4 : f32 to vector<1x32xf32>
    %9 = arith.maximumf %7, %8 : vector<1x32xf32>
    %c0_5 = arith.constant 0 : index
    %c0_6 = arith.constant 0 : index
    %10 = vector.load %arg4[%c0_5, %c0_6] : memref<1x32xf32, #tpu.memory_space<vmem>>, vector<1x32xf32>
    %cst_7 = arith.constant 9.99999974E-6 : f32
    %11 = vector.broadcast %cst_7 : f32 to vector<1x32xf32>
    %12 = arith.addf %9, %11 : vector<1x32xf32>
    %13 = math.rsqrt %12 : vector<1x32xf32>
    %14 = arith.mulf %10, %13 : vector<1x32xf32>
    %c0_8 = arith.constant 0 : index
    %c0_9 = arith.constant 0 : index
    %15 = vector.load %arg5[%c0_8, %c0_9] : memref<1x32xf32, #tpu.memory_space<vmem>>, vector<1x32xf32>
    %16 = arith.mulf %2, %14 : vector<1x32xf32>
    %17 = arith.subf %15, %16 : vector<1x32xf32>
    %c0_10 = arith.constant 0 : index
    %c0_11 = arith.constant 0 : index
    %18 = vector.load %arg1[%c0_10, %c0_11] : memref<32x32xf32, #tpu.memory_space<vmem>>, vector<32x32xf32>
    %19 = vector.broadcast %14 : vector<1x32xf32> to vector<32x32xf32>
    %20 = arith.mulf %18, %19 : vector<32x32xf32>
    %21 = vector.broadcast %17 : vector<1x32xf32> to vector<32x32xf32>
    %22 = arith.addf %20, %21 : vector<32x32xf32>
    %c0_12 = arith.constant 0 : index
    %c0_13 = arith.constant 0 : index
    %23 = vector.load %arg6[%c0_12, %c0_13] : memref<32x32xf32, #tpu.memory_space<vmem>>, vector<32x32xf32>
    %24 = arith.addf %22, %23 : vector<32x32xf32>
    %cst_14 = arith.constant 0.000000e+00 : f32
    %25 = vector.broadcast %cst_14 : f32 to vector<32x32xf32>
    %26 = arith.maximumf %24, %25 : vector<32x32xf32>
    %c0_15 = arith.constant 0 : index
    %c0_16 = arith.constant 0 : index
    %27 = vector.load %arg7[%c0_15, %c0_16] : memref<32x32xf32, #tpu.memory_space<vmem>>, vector<32x32xf32>
    tpu.vector_store %arg7[%c0_15, %c0_16], %26 {strides = array<i32>} : memref<32x32xf32, #tpu.memory_space<vmem>>, vector<32x32xf32>,
    return
  }
  func.func @transform_0(%arg0: i32) -> (i32, i32) {
    %c0_i32 = arith.constant 0 : i32
    %c0_i32_0 = arith.constant 0 : i32
    return %arg0, %c0_i32 : i32, i32
  }
  func.func @transform_1(%arg0: i32) -> (i32, i32) {
    %c0_i32 = arith.constant 0 : i32
    %c0_i32_0 = arith.constant 0 : i32
    %c0_i32_1 = arith.constant 0 : i32
    return %c0_i32, %c0_i32_0 : i32, i32
  }
  func.func @transform_2(%arg0: i32) -> (i32, i32) {
    %c0_i32 = arith.constant 0 : i32
    %c0_i32_0 = arith.constant 0 : i32
    %c0_i32_1 = arith.constant 0 : i32
    return %c0_i32, %c0_i32_0 : i32, i32
  }
  func.func @transform_3(%arg0: i32) -> (i32, i32) {
    %c0_i32 = arith.constant 0 : i32
    %c0_i32_0 = arith.constant 0 : i32
    %c0_i32_1 = arith.constant 0 : i32
    return %c0_i32, %c0_i32_0 : i32, i32
  }
  func.func @transform_4(%arg0: i32) -> (i32, i32) {
    %c0_i32 = arith.constant 0 : i32
    %c0_i32_0 = arith.constant 0 : i32
    %c0_i32_1 = arith.constant 0 : i32
    return %c0_i32, %c0_i32_0 : i32, i32
  }
  func.func @transform_5(%arg0: i32) -> (i32, i32) {
    %c0_i32 = arith.constant 0 : i32
    %c0_i32_0 = arith.constant 0 : i32
    return %arg0, %c0_i32 : i32, i32
  }
  func.func @transform_6(%arg0: i32) -> (i32, i32) {
    %c0_i32 = arith.constant 0 : i32
    %c0_i32_0 = arith.constant 0 : i32
    return %arg0, %c0_i32 : i32, i32
  }
}

module attributes {stable_mosaic.version = 11 : i64} {
  func.func @_bn_apply_kernel(%arg0: i32, %arg1: memref<32x32xf32, #tpu.memory_space<vmem>>, %arg2: memref<1x32xf32, #tpu.memory_space<vmem>>, %arg3: memref<1x32xf32, #tpu.memory_space<vmem>>, %arg4: memref<1x32xf32, #tpu.memory_space<vmem>>, %arg5: memref<1x32xf32, #tpu.memory_space<vmem>>, %arg6: memref<32x32xf32, #tpu.memory_space<vmem>>) attributes {dimension_semantics = [#tpu.dimension_semantics<parallel>], iteration_bounds = array<i64: 1>, scalar_prefetch = 0 : i64, scratch_operands = 0 : i64, tpu.core_type = #tpu.core_type<tc>, window_params = [{transform_indices = @transform_0, window_bounds = array<i64: 32, 32>}, {pipeline_mode = #tpu.pipeline_mode<synchronous>, transform_indices = @transform_1, window_bounds = array<i64: 1, 32>}, {pipeline_mode = #tpu.pipeline_mode<synchronous>, transform_indices = @transform_2, window_bounds = array<i64: 1, 32>}, {pipeline_mode = #tpu.pipeline_mode<synchronous>, transform_indices = @transform_3, window_bounds = array<i64: 1, 32>}, {pipeline_mode = #tpu.pipeline_mode<synchronous>, transform_indices = @transform_4, window_bounds = array<i64: 1, 32>}, {transform_indices = @transform_5, window_bounds = array<i64: 32, 32>}]} {
    %c0 = arith.constant 0 : index
    %c0_0 = arith.constant 0 : index
    %0 = vector.load %arg2[%c0, %c0_0] : memref<1x32xf32, #tpu.memory_space<vmem>>, vector<1x32xf32>
    %cst = arith.constant 3.125000e-02 : f32
    %1 = vector.broadcast %cst : f32 to vector<1x32xf32>
    %2 = arith.mulf %0, %1 : vector<1x32xf32>
    %c0_1 = arith.constant 0 : index
    %c0_2 = arith.constant 0 : index
    %3 = vector.load %arg3[%c0_1, %c0_2] : memref<1x32xf32, #tpu.memory_space<vmem>>, vector<1x32xf32>
    %cst_3 = arith.constant 3.125000e-02 : f32
    %4 = vector.broadcast %cst_3 : f32 to vector<1x32xf32>
    %5 = arith.mulf %3, %4 : vector<1x32xf32>
    %6 = arith.mulf %2, %2 : vector<1x32xf32>
    %7 = arith.subf %5, %6 : vector<1x32xf32>
    %cst_4 = arith.constant 0.000000e+00 : f32
    %8 = vector.broadcast %cst_4 : f32 to vector<1x32xf32>
    %9 = arith.maximumf %7, %8 : vector<1x32xf32>
    %c0_5 = arith.constant 0 : index
    %c0_6 = arith.constant 0 : index
    %10 = vector.load %arg4[%c0_5, %c0_6] : memref<1x32xf32, #tpu.memory_space<vmem>>, vector<1x32xf32>
    %cst_7 = arith.constant 9.99999974E-6 : f32
    %11 = vector.broadcast %cst_7 : f32 to vector<1x32xf32>
    %12 = arith.addf %9, %11 : vector<1x32xf32>
    %13 = math.rsqrt %12 : vector<1x32xf32>
    %14 = arith.mulf %10, %13 : vector<1x32xf32>
    %c0_8 = arith.constant 0 : index
    %c0_9 = arith.constant 0 : index
    %15 = vector.load %arg5[%c0_8, %c0_9] : memref<1x32xf32, #tpu.memory_space<vmem>>, vector<1x32xf32>
    %16 = arith.mulf %2, %14 : vector<1x32xf32>
    %17 = arith.subf %15, %16 : vector<1x32xf32>
    %c0_10 = arith.constant 0 : index
    %c0_11 = arith.constant 0 : index
    %18 = vector.load %arg1[%c0_10, %c0_11] : memref<32x32xf32, #tpu.memory_space<vmem>>, vector<32x32xf32>
    %19 = vector.broadcast %14 : vector<1x32xf32> to vector<32x32xf32>
    %20 = arith.mulf %18, %19 : vector<32x32xf32>
    %21 = vector.broadcast %17 : vector<1x32xf32> to vector<32x32xf32>
    %22 = arith.addf %20, %21 : vector<32x32xf32>
    %cst_12 = arith.constant 0.000000e+00 : f32
    %23 = vector.broadcast %cst_12 : f32 to vector<32x32xf32>
    %24 = arith.maximumf %22, %23 : vector<32x32xf32>
    %c0_13 = arith.constant 0 : index
    %c0_14 = arith.constant 0 : index
    %25 = vector.load %arg6[%c0_13, %c0_14] : memref<32x32xf32, #tpu.memory_space<vmem>>, vector<32x32xf32>
    tpu.vector_store %arg6[%c0_13, %c0_14], %24 {strides = array<i32>} : memref<32x32xf32, #tpu.memory_space<vmem>>, vector<32x32xf32>,
    return
  }
  func.func @transform_0(%arg0: i32) -> (i32, i32) {
    %c0_i32 = arith.constant 0 : i32
    %c0_i32_0 = arith.constant 0 : i32
    return %arg0, %c0_i32 : i32, i32
  }
  func.func @transform_1(%arg0: i32) -> (i32, i32) {
    %c0_i32 = arith.constant 0 : i32
    %c0_i32_0 = arith.constant 0 : i32
    %c0_i32_1 = arith.constant 0 : i32
    return %c0_i32, %c0_i32_0 : i32, i32
  }
  func.func @transform_2(%arg0: i32) -> (i32, i32) {
    %c0_i32 = arith.constant 0 : i32
    %c0_i32_0 = arith.constant 0 : i32
    %c0_i32_1 = arith.constant 0 : i32
    return %c0_i32, %c0_i32_0 : i32, i32
  }
  func.func @transform_3(%arg0: i32) -> (i32, i32) {
    %c0_i32 = arith.constant 0 : i32
    %c0_i32_0 = arith.constant 0 : i32
    %c0_i32_1 = arith.constant 0 : i32
    return %c0_i32, %c0_i32_0 : i32, i32
  }
  func.func @transform_4(%arg0: i32) -> (i32, i32) {
    %c0_i32 = arith.constant 0 : i32
    %c0_i32_0 = arith.constant 0 : i32
    %c0_i32_1 = arith.constant 0 : i32
    return %c0_i32, %c0_i32_0 : i32, i32
  }
  func.func @transform_5(%arg0: i32) -> (i32, i32) {
    %c0_i32 = arith.constant 0 : i32
    %c0_i32_0 = arith.constant 0 : i32
    return %arg0, %c0_i32 : i32, i32
  }
}

module attributes {stable_mosaic.version = 11 : i64} {
  func.func @_head_kernel(%arg0: memref<2x16x32xf32, #tpu.memory_space<vmem>>, %arg1: memref<32x16xf32, #tpu.memory_space<vmem>>, %arg2: memref<1x16xf32, #tpu.memory_space<vmem>>, %arg3: memref<1x16xf32, #tpu.memory_space<vmem>>, %arg4: memref<16x2xf32, #tpu.memory_space<vmem>>, %arg5: memref<1x2xf32, #tpu.memory_space<vmem>>, %arg6: memref<2x2xf32, #tpu.memory_space<vmem>>) attributes {dimension_semantics = [], scalar_prefetch = 0 : i64, scratch_operands = 0 : i64, tpu.core_type = #tpu.core_type<tc>} {
    %c0 = arith.constant 0 : index
    %c0_0 = arith.constant 0 : index
    %c0_1 = arith.constant 0 : index
    %0 = vector.load %arg0[%c0, %c0_0, %c0_1] : memref<2x16x32xf32, #tpu.memory_space<vmem>>, vector<2x16x32xf32>
    %cst = arith.constant dense<0.000000e+00> : vector<2x32xf32>
    %1 = vector.multi_reduction <add>, %0, %cst [1] : vector<2x16x32xf32> to vector<2x32xf32>
    %cst_2 = arith.constant 1.600000e+01 : f32
    %2 = vector.broadcast %cst_2 : f32 to vector<2x32xf32>
    %3 = arith.divf %1, %2 : vector<2x32xf32>
    %c0_3 = arith.constant 0 : index
    %c0_4 = arith.constant 0 : index
    %4 = vector.load %arg1[%c0_3, %c0_4] : memref<32x16xf32, #tpu.memory_space<vmem>>, vector<32x16xf32>
    %cst_5 = arith.constant dense<0.000000e+00> : vector<2x16xf32>
    %5 = tpu.matmul %3, %4, %cst_5 {dimension_numbers = #tpu.dot_dimension_numbers<[1], [0], [0], [1], [0, 0, 1, 1], [], []>} : vector<2x32xf32>, vector<32x16xf32>, vector<2x16xf32> -> vector<2x16xf32>
    %cst_6 = arith.constant dense<0.000000e+00> : vector<16xf32>
    %6 = vector.multi_reduction <add>, %5, %cst_6 [0] : vector<2x16xf32> to vector<16xf32>
    %7 = vector.shape_cast %6 : vector<16xf32> to vector<1x16xf32>
    %cst_7 = arith.constant 2.000000e+00 : f32
    %8 = vector.broadcast %cst_7 : f32 to vector<1x16xf32>
    %9 = arith.divf %7, %8 : vector<1x16xf32>
    %10 = arith.mulf %5, %5 : vector<2x16xf32>
    %cst_8 = arith.constant dense<0.000000e+00> : vector<16xf32>
    %11 = vector.multi_reduction <add>, %10, %cst_8 [0] : vector<2x16xf32> to vector<16xf32>
    %12 = vector.shape_cast %11 : vector<16xf32> to vector<1x16xf32>
    %cst_9 = arith.constant 2.000000e+00 : f32
    %13 = vector.broadcast %cst_9 : f32 to vector<1x16xf32>
    %14 = arith.divf %12, %13 : vector<1x16xf32>
    %15 = arith.mulf %9, %9 : vector<1x16xf32>
    %16 = arith.subf %14, %15 : vector<1x16xf32>
    %cst_10 = arith.constant 0.000000e+00 : f32
    %17 = vector.broadcast %cst_10 : f32 to vector<1x16xf32>
    %18 = arith.maximumf %16, %17 : vector<1x16xf32>
    %19 = vector.broadcast %9 : vector<1x16xf32> to vector<2x16xf32>
    %20 = arith.subf %5, %19 : vector<2x16xf32>
    %cst_11 = arith.constant 9.99999974E-6 : f32
    %21 = vector.broadcast %cst_11 : f32 to vector<1x16xf32>
    %22 = arith.addf %18, %21 : vector<1x16xf32>
    %23 = math.rsqrt %22 : vector<1x16xf32>
    %24 = vector.broadcast %23 : vector<1x16xf32> to vector<2x16xf32>
    %25 = arith.mulf %20, %24 : vector<2x16xf32>
    %c0_12 = arith.constant 0 : index
    %c0_13 = arith.constant 0 : index
    %26 = vector.load %arg2[%c0_12, %c0_13] : memref<1x16xf32, #tpu.memory_space<vmem>>, vector<1x16xf32>
    %27 = vector.broadcast %26 : vector<1x16xf32> to vector<2x16xf32>
    %28 = arith.mulf %25, %27 : vector<2x16xf32>
    %c0_14 = arith.constant 0 : index
    %c0_15 = arith.constant 0 : index
    %29 = vector.load %arg3[%c0_14, %c0_15] : memref<1x16xf32, #tpu.memory_space<vmem>>, vector<1x16xf32>
    %30 = vector.broadcast %29 : vector<1x16xf32> to vector<2x16xf32>
    %31 = arith.addf %28, %30 : vector<2x16xf32>
    %cst_16 = arith.constant 0.000000e+00 : f32
    %32 = vector.broadcast %cst_16 : f32 to vector<2x16xf32>
    %33 = arith.maximumf %31, %32 : vector<2x16xf32>
    %c0_17 = arith.constant 0 : index
    %c0_18 = arith.constant 0 : index
    %34 = vector.load %arg4[%c0_17, %c0_18] : memref<16x2xf32, #tpu.memory_space<vmem>>, vector<16x2xf32>
    %cst_19 = arith.constant dense<0.000000e+00> : vector<2x2xf32>
    %35 = tpu.matmul %33, %34, %cst_19 {dimension_numbers = #tpu.dot_dimension_numbers<[1], [0], [0], [1], [0, 0, 1, 1], [], []>} : vector<2x16xf32>, vector<16x2xf32>, vector<2x2xf32> -> vector<2x2xf32>
    %c0_20 = arith.constant 0 : index
    %c0_21 = arith.constant 0 : index
    %36 = vector.load %arg5[%c0_20, %c0_21] : memref<1x2xf32, #tpu.memory_space<vmem>>, vector<1x2xf32>
    %37 = vector.broadcast %36 : vector<1x2xf32> to vector<2x2xf32>
    %38 = arith.addf %35, %37 : vector<2x2xf32>
    %c0_22 = arith.constant 0 : index
    %c0_23 = arith.constant 0 : index
    %39 = vector.load %arg6[%c0_22, %c0_23] : memref<2x2xf32, #tpu.memory_space<vmem>>, vector<2x2xf32>
    tpu.vector_store %arg6[%c0_22, %c0_23], %38 {strides = array<i32>} : memref<2x2xf32, #tpu.memory_space<vmem>>, vector<2x2xf32>,
    return
  }
}

</mosaic_0001>

<llo_original>
// kernel: model_forward.17
$region0: #{model_forward.17}
  #allocation0 [shape = 'u32[]', space=smem, size = 0x4, offset = 0x4, fixed_abs, tag = 'smem constant byte address 0x4 - core index']
  #allocation1 [shape = 'u32[144,128]{1,0:T(1,128)}', space=vmem, size = 0x12000, scoped, tag = 'internal scratch']
  %s0 = inlined_call_operand.vmem [shape: f32[128,32], index: 0, kind: input, shape index: {}]
  %s1 = inlined_call_operand.vmem [shape: f32[1,32], index: 1, kind: input, shape index: {}]
  %s2 = inlined_call_operand.vmem [shape: f32[1,32], index: 2, kind: input, shape index: {}]
  %s3 = inlined_call_operand.vmem [shape: f32[1,32], index: 3, kind: input, shape index: {}]
  %s4 = inlined_call_operand.vmem [shape: f32[1,32], index: 4, kind: input, shape index: {}]
  %s5 = inlined_call_operand.vmem [shape: f32[128,32], index: 5, kind: output, shape index: {}]
  %s6 = sld [smem:[#allocation0]]
  $region30: #{model_forward.17} parent=0
    _
  %s8 = ssub.s32 1, %s6
  %s9 = scalar_select 0, %s8, %s6
  // Predicated region
  $region2: #{model_forward.17} parent=0 // pred_check
    _
  $region3: #{model_forward.17} parent=0 // pred_check_branch
    %11 = sbr.rel (0) target = $region5
  $region4: #{model_forward.17} parent=0 // pred_region
    _
  $region5: #{model_forward.17} parent=0 // pred_fallthru
    _
  // Predicated region
  $region6: #{model_forward.17} parent=0 // pred_check
    _
  $region7: #{model_forward.17} parent=0 // pred_check_branch
    %13 = sbr.rel (0) target = $region9
  $region8: #{model_forward.17} parent=0 // pred_region
    _
  $region9: #{model_forward.17} parent=0 // pred_fallthru
    _
  // Predicated region
  $region10: #{model_forward.17} parent=0 // pred_check
    _
  $region11: #{model_forward.17} parent=0 // pred_check_branch
    %15 = sbr.rel (0) target = $region13
  $region12: #{model_forward.17} parent=0 // pred_region
    _
  $region13: #{model_forward.17} parent=0 // pred_fallthru
    _
  // Predicated region
  $region14: #{model_forward.17} parent=0 // pred_check
    _
  $region15: #{model_forward.17} parent=0 // pred_check_branch
    %17 = sbr.rel (0) target = $region17
  $region16: #{model_forward.17} parent=0 // pred_region
    _
  $region17: #{model_forward.17} parent=0 // pred_fallthru
    _
  // Predicated region
  $region18: #{model_forward.17} parent=0 // pred_check
    _
  $region19: #{model_forward.17} parent=0 // pred_check_branch
    %19 = sbr.rel (0) target = $region21
  $region20: #{model_forward.17} parent=0 // pred_region
    _
  $region21: #{model_forward.17} parent=0 // pred_fallthru
    _
  %v20 = vld [vmem:[%s1] sm:$0x1]
  %v21 = vmul.f32 %v20, 0.0078125
  %v22 = vld [vmem:[%s2] sm:$0x1]
  %v23 = vmul.f32 %v22, 0.0078125
  %v24 = vmul.f32 %v21, %v21
  %v25 = vsub.f32 %v23, %v24
  %v26 = vmax.f32 %v25, 0.0
  %v27 = vld [vmem:[%s3] sm:$0x1]
  %v28 = vadd.f32 %v26, 1e-05
  %v29 = vrsqrt.pop %v28
  %v30 = vmul.f32 %v27, %v29
  %v31 = vld [vmem:[%s4] sm:$0x1]
  %v32 = vmul.f32 %v21, %v30
  %v33 = vsub.f32 %v31, %v32
  %v34 = vld [vmem:[%s0] sm:$0xff]
  %v35 = vld [vmem:[%s0 + $0x8] sm:$0xff]
  %v36 = vld [vmem:[%s0 + $0x10] sm:$0xff]
  %v37 = vld [vmem:[%s0 + $0x18] sm:$0xff]
  %v38 = vld [vmem:[%s0 + $0x20] sm:$0xff]
  %v39 = vld [vmem:[%s0 + $0x28] sm:$0xff]
  %v40 = vld [vmem:[%s0 + $0x30] sm:$0xff]
  %v41 = vld [vmem:[%s0 + $0x38] sm:$0xff]
  %v42 = vld [vmem:[%s0 + $0x40] sm:$0xff]
  %v43 = vld [vmem:[%s0 + $0x48] sm:$0xff]
  %v44 = vld [vmem:[%s0 + $0x50] sm:$0xff]
  %v45 = vld [vmem:[%s0 + $0x58] sm:$0xff]
  %v46 = vld [vmem:[%s0 + $0x60] sm:$0xff]
  %v47 = vld [vmem:[%s0 + $0x68] sm:$0xff]
  %v48 = vld [vmem:[%s0 + $0x70] sm:$0xff]
  %v49 = vld [vmem:[%s0 + $0x78] sm:$0xff]
  %v51 = vlaneseq
  %v52 = vshrl.u32 %v51, 7
  %v53 = vsub.s32 0, %v52
  %v54 = vrot.slane %v30, %v53
  %v56 = vmul.f32 %v34, %v54
  %v57 = vmul.f32 %v35, %v54
  %v58 = vmul.f32 %v36, %v54
  %v59 = vmul.f32 %v37, %v54
  %v60 = vmul.f32 %v38, %v54
  %v61 = vmul.f32 %v39, %v54
  %v62 = vmul.f32 %v40, %v54
  %v63 = vmul.f32 %v41, %v54
  %v64 = vmul.f32 %v42, %v54
  %v65 = vmul.f32 %v43, %v54
  %v66 = vmul.f32 %v44, %v54
  %v67 = vmul.f32 %v45, %v54
  %v68 = vmul.f32 %v46, %v54
  %v69 = vmul.f32 %v47, %v54
  %v70 = vmul.f32 %v48, %v54
  %v71 = vmul.f32 %v49, %v54
  %v73 = vlaneseq
  %v74 = vshrl.u32 %v73, 7
  %v75 = vsub.s32 0, %v74
  %v76 = vrot.slane %v33, %v75
  %v78 = vadd.f32 %v56, %v76
  %v79 = vadd.f32 %v57, %v76
  %v80 = vadd.f32 %v58, %v76
  %v81 = vadd.f32 %v59, %v76
  %v82 = vadd.f32 %v60, %v76
  %v83 = vadd.f32 %v61, %v76
  %v84 = vadd.f32 %v62, %v76
  %v85 = vadd.f32 %v63, %v76
  %v86 = vadd.f32 %v64, %v76
  %v87 = vadd.f32 %v65, %v76
  %v88 = vadd.f32 %v66, %v76
  %v89 = vadd.f32 %v67, %v76
  %v90 = vadd.f32 %v68, %v76
  %v91 = vadd.f32 %v69, %v76
  %v92 = vadd.f32 %v70, %v76
  %v93 = vadd.f32 %v71, %v76
  %v94 = vmax.f32 %v78, 0.0
  %v95 = vmax.f32 %v79, 0.0
  %v96 = vmax.f32 %v80, 0.0
  %v97 = vmax.f32 %v81, 0.0
  %v98 = vmax.f32 %v82, 0.0
  %v99 = vmax.f32 %v83, 0.0
  %v100 = vmax.f32 %v84, 0.0
  %v101 = vmax.f32 %v85, 0.0
  %v102 = vmax.f32 %v86, 0.0
  %v103 = vmax.f32 %v87, 0.0
  %v104 = vmax.f32 %v88, 0.0
  %v105 = vmax.f32 %v89, 0.0
  %v106 = vmax.f32 %v90, 0.0
  %v107 = vmax.f32 %v91, 0.0
  %v108 = vmax.f32 %v92, 0.0
  %v109 = vmax.f32 %v93, 0.0
  %vm110 = vcmask 261120
  %111 = vst.msk [vmem:[%s5] sm:$0xff] %vm110, %v94
  %112 = vst.msk [vmem:[%s5 + $0x8] sm:$0xff] %vm110, %v95
  %113 = vst.msk [vmem:[%s5 + $0x10] sm:$0xff] %vm110, %v96
  %114 = vst.msk [vmem:[%s5 + $0x18] sm:$0xff] %vm110, %v97
  %115 = vst.msk [vmem:[%s5 + $0x20] sm:$0xff] %vm110, %v98
  %116 = vst.msk [vmem:[%s5 + $0x28] sm:$0xff] %vm110, %v99
  %117 = vst.msk [vmem:[%s5 + $0x30] sm:$0xff] %vm110, %v100
  %118 = vst.msk [vmem:[%s5 + $0x38] sm:$0xff] %vm110, %v101
  %119 = vst.msk [vmem:[%s5 + $0x40] sm:$0xff] %vm110, %v102
  %120 = vst.msk [vmem:[%s5 + $0x48] sm:$0xff] %vm110, %v103
  %121 = vst.msk [vmem:[%s5 + $0x50] sm:$0xff] %vm110, %v104
  %122 = vst.msk [vmem:[%s5 + $0x58] sm:$0xff] %vm110, %v105
  %123 = vst.msk [vmem:[%s5 + $0x60] sm:$0xff] %vm110, %v106
  %124 = vst.msk [vmem:[%s5 + $0x68] sm:$0xff] %vm110, %v107
  %125 = vst.msk [vmem:[%s5 + $0x70] sm:$0xff] %vm110, %v108
  %126 = vst.msk [vmem:[%s5 + $0x78] sm:$0xff] %vm110, %v109
  // Predicated region
  $region22: #{model_forward.17} parent=0 // pred_check
    _
  $region23: #{model_forward.17} parent=0 // pred_check_branch
    %128 = sbr.rel (0) target = $region25
  $region24: #{model_forward.17} parent=0 // pred_region
    _
  $region25: #{model_forward.17} parent=0 // pred_fallthru
    _
  // Predicated region
  $region26: #{model_forward.17} parent=0 // pred_check
    _
  $region27: #{model_forward.17} parent=0 // pred_check_branch
    %130 = sbr.rel (0) target = $region29
  $region28: #{model_forward.17} parent=0 // pred_region
    _
  $region29: #{model_forward.17} parent=0 // pred_fallthru
    _

// kernel: model_forward.18
$region0: #{model_forward.18}
  #allocation0 [shape = 'u32[]', space=smem, size = 0x4, offset = 0x4, fixed_abs, tag = 'smem constant byte address 0x4 - core index']
  #allocation1 [shape = 'u32[144,128]{1,0:T(1,128)}', space=vmem, size = 0x12000, scoped, tag = 'internal scratch']
  %s0 = inlined_call_operand.vmem [shape: f32[222,32], index: 0, kind: input, shape index: {}]
  %s1 = inlined_call_operand.vmem [shape: f32[200,32], index: 1, kind: output, shape index: {}]
  %s2 = sld [smem:[#allocation0]]
  $region14: #{model_forward.18} parent=0
    _
  %s4 = ssub.s32 1, %s2
  %s5 = scalar_select 0, %s4, %s2
  // Predicated region
  $region2: #{model_forward.18} parent=0 // pred_check
    _
  $region3: #{model_forward.18} parent=0 // pred_check_branch
    %7 = sbr.rel (0) target = $region5
  $region4: #{model_forward.18} parent=0 // pred_region
    _
  $region5: #{model_forward.18} parent=0 // pred_fallthru
    _
  %s8 = smul.u32 0, 200
  %s9 = scalar_lea.vmem %s0, %s8
  %v10 = vld [vmem:[%s9] sm:$0xff]
  %v11 = vld [vmem:[%s9 + $0x8] sm:$0xff]
  %v12 = vld [vmem:[%s9 + $0x10] sm:$0xff]
  %v13 = vld [vmem:[%s9 + $0x18] sm:$0xff]
  %v14 = vld [vmem:[%s9 + $0x20] sm:$0xff]
  %v15 = vld [vmem:[%s9 + $0x28] sm:$0xff]
  %v16 = vld [vmem:[%s9 + $0x30] sm:$0xff]
  %v17 = vld [vmem:[%s9 + $0x38] sm:$0xff]
  %v18 = vld [vmem:[%s9 + $0x40] sm:$0xff]
  %v19 = vld [vmem:[%s9 + $0x48] sm:$0xff]
  %v20 = vld [vmem:[%s9 + $0x50] sm:$0xff]
  %v21 = vld [vmem:[%s9 + $0x58] sm:$0xff]
  %v22 = vld [vmem:[%s9 + $0x60] sm:$0xff]
  %v23 = vld [vmem:[%s9 + $0x68] sm:$0xff]
  %v24 = vld [vmem:[%s9 + $0x70] sm:$0xff]
  %v25 = vld [vmem:[%s9 + $0x78] sm:$0xff]
  %v26 = vld [vmem:[%s9 + $0x80] sm:$0xff]
  %v27 = vld [vmem:[%s9 + $0x88] sm:$0xff]
  %v28 = vld [vmem:[%s9 + $0x90] sm:$0xff]
  %v29 = vld [vmem:[%s9 + $0x98] sm:$0xff]
  %v30 = vld [vmem:[%s9 + $0xa0] sm:$0xff]
  %v31 = vld [vmem:[%s9 + $0xa8] sm:$0xff]
  %v32 = vld [vmem:[%s9 + $0xb0] sm:$0xff]
  %v33 = vld [vmem:[%s9 + $0xb8] sm:$0xff]
  %v34 = vld [vmem:[%s9 + $0xc0] sm:$0xff]
  %v35 = vld [vmem:[%s9 + $0xc8] sm:$0xff]
  %v36 = vld [vmem:[%s9 + $0xd0] sm:$0xff]
  %v37 = vld [vmem:[%s9 + $0xd8] sm:$0x3f]
  %vm64 = vcmask 1046528
  %v65 = vrot.slane %v10, 1
  %v66 = vrot.slane %v11, 1
  %v67 = vsel %vm64, %v65, %v66
  %v68 = vrot.slane %v12, 1
  %v69 = vsel %vm64, %v66, %v68
  %v70 = vrot.slane %v13, 1
  %v71 = vsel %vm64, %v68, %v70
  %v72 = vrot.slane %v14, 1
  %v73 = vsel %vm64, %v70, %v72
  %v74 = vrot.slane %v15, 1
  %v75 = vsel %vm64, %v72, %v74
  %v76 = vrot.slane %v16, 1
  %v77 = vsel %vm64, %v74, %v76
  %v78 = vrot.slane %v17, 1
  %v79 = vsel %vm64, %v76, %v78
  %v80 = vrot.slane %v18, 1
  %v81 = vsel %vm64, %v78, %v80
  %v82 = vrot.slane %v19, 1
  %v83 = vsel %vm64, %v80, %v82
  %v84 = vrot.slane %v20, 1
  %v85 = vsel %vm64, %v82, %v84
  %v86 = vrot.slane %v21, 1
  %v87 = vsel %vm64, %v84, %v86
  %v88 = vrot.slane %v22, 1
  %v89 = vsel %vm64, %v86, %v88
  %v90 = vrot.slane %v23, 1
  %v91 = vsel %vm64, %v88, %v90
  %v92 = vrot.slane %v24, 1
  %v93 = vsel %vm64, %v90, %v92
  %v94 = vrot.slane %v25, 1
  %v95 = vsel %vm64, %v92, %v94
  %v96 = vrot.slane %v26, 1
  %v97 = vsel %vm64, %v94, %v96
  %v98 = vrot.slane %v27, 1
  %v99 = vsel %vm64, %v96, %v98
  %v100 = vrot.slane %v28, 1
  %v101 = vsel %vm64, %v98, %v100
  %v102 = vrot.slane %v29, 1
  %v103 = vsel %vm64, %v100, %v102
  %v104 = vrot.slane %v30, 1
  %v105 = vsel %vm64, %v102, %v104
  %v106 = vrot.slane %v31, 1
  %v107 = vsel %vm64, %v104, %v106
  %v108 = vrot.slane %v32, 1
  %v109 = vsel %vm64, %v106, %v108
  %v110 = vrot.slane %v33, 1
  %v111 = vsel %vm64, %v108, %v110
  %v112 = vrot.slane %v34, 1
  %v113 = vsel %vm64, %v110, %v112
  %v114 = vrot.slane %v35, 1
  %v115 = vsel %vm64, %v112, %v114
  %v141 = vmax.f32 %v10, %v67
  %v142 = vmax.f32 %v11, %v69
  %v143 = vmax.f32 %v12, %v71
  %v144 = vmax.f32 %v13, %v73
  %v145 = vmax.f32 %v14, %v75
  %v146 = vmax.f32 %v15, %v77
  %v147 = vmax.f32 %v16, %v79
  %v148 = vmax.f32 %v17, %v81
  %v149 = vmax.f32 %v18, %v83
  %v150 = vmax.f32 %v19, %v85
  %v151 = vmax.f32 %v20, %v87
  %v152 = vmax.f32 %v21, %v89
  %v153 = vmax.f32 %v22, %v91
  %v154 = vmax.f32 %v23, %v93
  %v155 = vmax.f32 %v24, %v95
  %v156 = vmax.f32 %v25, %v97
  %v157 = vmax.f32 %v26, %v99
  %v158 = vmax.f32 %v27, %v101
  %v159 = vmax.f32 %v28, %v103
  %v160 = vmax.f32 %v29, %v105
  %v161 = vmax.f32 %v30, %v107
  %v162 = vmax.f32 %v31, %v109
  %v163 = vmax.f32 %v32, %v111
  %v164 = vmax.f32 %v33, %v113
  %v165 = vmax.f32 %v34, %v115
  %vm166 = vcmask 1045504
  %v167 = vrot.slane %v10, 2
  %v168 = vrot.slane %v11, 2
  %v169 = vsel %vm166, %v167, %v168
  %v170 = vrot.slane %v12, 2
  %v171 = vsel %vm166, %v168, %v170
  %v172 = vrot.slane %v13, 2
  %v173 = vsel %vm166, %v170, %v172
  %v174 = vrot.slane %v14, 2
  %v175 = vsel %vm166, %v172, %v174
  %v176 = vrot.slane %v15, 2
  %v177 = vsel %vm166, %v174, %v176
  %v178 = vrot.slane %v16, 2
  %v179 = vsel %vm166, %v176, %v178
  %v180 = vrot.slane %v17, 2
  %v181 = vsel %vm166, %v178, %v180
  %v182 = vrot.slane %v18, 2
  %v183 = vsel %vm166, %v180, %v182
  %v184 = vrot.slane %v19, 2
  %v185 = vsel %vm166, %v182, %v184
  %v186 = vrot.slane %v20, 2
  %v187 = vsel %vm166, %v184, %v186
  %v188 = vrot.slane %v21, 2
  %v189 = vsel %vm166, %v186, %v188
  %v190 = vrot.slane %v22, 2
  %v191 = vsel %vm166, %v188, %v190
  %v192 = vrot.slane %v23, 2
  %v193 = vsel %vm166, %v190, %v192
  %v194 = vrot.slane %v24, 2
  %v195 = vsel %vm166, %v192, %v194
  %v196 = vrot.slane %v25, 2
  %v197 = vsel %vm166, %v194, %v196
  %v198 = vrot.slane %v26, 2
  %v199 = vsel %vm166, %v196, %v198
  %v200 = vrot.slane %v27, 2
  %v201 = vsel %vm166, %v198, %v200
  %v202 = vrot.slane %v28, 2
  %v203 = vsel %vm166, %v200, %v202
  %v204 = vrot.slane %v29, 2
  %v205 = vsel %vm166, %v202, %v204
  %v206 = vrot.slane %v30, 2
  %v207 = vsel %vm166, %v204, %v206
  %v208 = vrot.slane %v31, 2
  %v209 = vsel %vm166, %v206, %v208
  %v210 = vrot.slane %v32, 2
  %v211 = vsel %vm166, %v208, %v210
  %v212 = vrot.slane %v33, 2
  %v213 = vsel %vm166, %v210, %v212
  %v214 = vrot.slane %v34, 2
  %v215 = vsel %vm166, %v212, %v214
  %v216 = vrot.slane %v35, 2
  %v217 = vsel %vm166, %v214, %v216
  %v243 = vmax.f32 %v141, %v169
  %v244 = vmax.f32 %v142, %v171
  %v245 = vmax.f32 %v143, %v173
  %v246 = vmax.f32 %v144, %v175
  %v247 = vmax.f32 %v145, %v177
  %v248 = vmax.f32 %v146, %v179
  %v249 = vmax.f32 %v147, %v181
  %v250 = vmax.f32 %v148, %v183
  %v251 = vmax.f32 %v149, %v185
  %v252 = vmax.f32 %v150, %v187
  %v253 = vmax.f32 %v151, %v189
  %v254 = vmax.f32 %v152, %v191
  %v255 = vmax.f32 %v153, %v193
  %v256 = vmax.f32 %v154, %v195
  %v257 = vmax.f32 %v155, %v197
  %v258 = vmax.f32 %v156, %v199
  %v259 = vmax.f32 %v157, %v201
  %v260 = vmax.f32 %v158, %v203
  %v261 = vmax.f32 %v159, %v205
  %v262 = vmax.f32 %v160, %v207
  %v263 = vmax.f32 %v161, %v209
  %v264 = vmax.f32 %v162, %v211
  %v265 = vmax.f32 %v163, %v213
  %v266 = vmax.f32 %v164, %v215
  %v267 = vmax.f32 %v165, %v217
  %v269 = vrot.slane %v36, 2
  %v270 = vsel %vm166, %v216, %v269
  %v272 = vmax.f32 %v243, %v171
  %v273 = vmax.f32 %v244, %v173
  %v274 = vmax.f32 %v245, %v175
  %v275 = vmax.f32 %v246, %v177
  %v276 = vmax.f32 %v247, %v179
  %v277 = vmax.f32 %v248, %v181
  %v278 = vmax.f32 %v249, %v183
  %v279 = vmax.f32 %v250, %v185
  %v280 = vmax.f32 %v251, %v187
  %v281 = vmax.f32 %v252, %v189
  %v282 = vmax.f32 %v253, %v191
  %v283 = vmax.f32 %v254, %v193
  %v284 = vmax.f32 %v255, %v195
  %v285 = vmax.f32 %v256, %v197
  %v286 = vmax.f32 %v257, %v199
  %v287 = vmax.f32 %v258, %v201
  %v288 = vmax.f32 %v259, %v203
  %v289 = vmax.f32 %v260, %v205
  %v290 = vmax.f32 %v261, %v207
  %v291 = vmax.f32 %v262, %v209
  %v292 = vmax.f32 %v263, %v211
  %v293 = vmax.f32 %v264, %v213
  %v294 = vmax.f32 %v265, %v215
  %v295 = vmax.f32 %v266, %v217
  %v296 = vmax.f32 %v267, %v270
  %vm297 = vcmask 1044480
  %v298 = vrot.slane %v11, 3
  %v299 = vrot.slane %v12, 3
  %v300 = vsel %vm297, %v298, %v299
  %v301 = vrot.slane %v13, 3
  %v302 = vsel %vm297, %v299, %v301
  %v303 = vrot.slane %v14, 3
  %v304 = vsel %vm297, %v301, %v303
  %v305 = vrot.slane %v15, 3
  %v306 = vsel %vm297, %v303, %v305
  %v307 = vrot.slane %v16, 3
  %v308 = vsel %vm297, %v305, %v307
  %v309 = vrot.slane %v17, 3
  %v310 = vsel %vm297, %v307, %v309
  %v311 = vrot.slane %v18, 3
  %v312 = vsel %vm297, %v309, %v311
  %v313 = vrot.slane %v19, 3
  %v314 = vsel %vm297, %v311, %v313
  %v315 = vrot.slane %v20, 3
  %v316 = vsel %vm297, %v313, %v315
  %v317 = vrot.slane %v21, 3
  %v318 = vsel %vm297, %v315, %v317
  %v319 = vrot.slane %v22, 3
  %v320 = vsel %vm297, %v317, %v319
  %v321 = vrot.slane %v23, 3
  %v322 = vsel %vm297, %v319, %v321
  %v323 = vrot.slane %v24, 3
  %v324 = vsel %vm297, %v321, %v323
  %v325 = vrot.slane %v25, 3
  %v326 = vsel %vm297, %v323, %v325
  %v327 = vrot.slane %v26, 3
  %v328 = vsel %vm297, %v325, %v327
  %v329 = vrot.slane %v27, 3
  %v330 = vsel %vm297, %v327, %v329
  %v331 = vrot.slane %v28, 3
  %v332 = vsel %vm297, %v329, %v331
  %v333 = vrot.slane %v29, 3
  %v334 = vsel %vm297, %v331, %v333
  %v335 = vrot.slane %v30, 3
  %v336 = vsel %vm297, %v333, %v335
  %v337 = vrot.slane %v31, 3
  %v338 = vsel %vm297, %v335, %v337
  %v339 = vrot.slane %v32, 3
  %v340 = vsel %vm297, %v337, %v339
  %v341 = vrot.slane %v33, 3
  %v342 = vsel %vm297, %v339, %v341
  %v343 = vrot.slane %v34, 3
  %v344 = vsel %vm297, %v341, %v343
  %v345 = vrot.slane %v35, 3
  %v346 = vsel %vm297, %v343, %v345
  %v347 = vrot.slane %v36, 3
  %v348 = vsel %vm297, %v345, %v347
  %v374 = vmax.f32 %v272, %v300
  %v375 = vmax.f32 %v273, %v302
  %v376 = vmax.f32 %v274, %v304
  %v377 = vmax.f32 %v275, %v306
  %v378 = vmax.f32 %v276, %v308
  %v379 = vmax.f32 %v277, %v310
  %v380 = vmax.f32 %v278, %v312
  %v381 = vmax.f32 %v279, %v314
  %v382 = vmax.f32 %v280, %v316
  %v383 = vmax.f32 %v281, %v318
  %v384 = vmax.f32 %v282, %v320
  %v385 = vmax.f32 %v283, %v322
  %v386 = vmax.f32 %v284, %v324
  %v387 = vmax.f32 %v285, %v326
  %v388 = vmax.f32 %v286, %v328
  %v389 = vmax.f32 %v287, %v330
  %v390 = vmax.f32 %v288, %v332
  %v391 = vmax.f32 %v289, %v334
  %v392 = vmax.f32 %v290, %v336
  %v393 = vmax.f32 %v291, %v338
  %v394 = vmax.f32 %v292, %v340
  %v395 = vmax.f32 %v293, %v342
  %v396 = vmax.f32 %v294, %v344
  %v397 = vmax.f32 %v295, %v346
  %v398 = vmax.f32 %v296, %v348
  %vm399 = vcmask 1043456
  %v400 = vrot.slane %v11, 4
  %v401 = vrot.slane %v12, 4
  %v402 = vsel %vm399, %v400, %v401
  %v403 = vrot.slane %v13, 4
  %v404 = vsel %vm399, %v401, %v403
  %v405 = vrot.slane %v14, 4
  %v406 = vsel %vm399, %v403, %v405
  %v407 = vrot.slane %v15, 4
  %v408 = vsel %vm399, %v405, %v407
  %v409 = vrot.slane %v16, 4
  %v410 = vsel %vm399, %v407, %v409
  %v411 = vrot.slane %v17, 4
  %v412 = vsel %vm399, %v409, %v411
  %v413 = vrot.slane %v18, 4
  %v414 = vsel %vm399, %v411, %v413
  %v415 = vrot.slane %v19, 4
  %v416 = vsel %vm399, %v413, %v415
  %v417 = vrot.slane %v20, 4
  %v418 = vsel %vm399, %v415, %v417
  %v419 = vrot.slane %v21, 4
  %v420 = vsel %vm399, %v417, %v419
  %v421 = vrot.slane %v22, 4
  %v422 = vsel %vm399, %v419, %v421
  %v423 = vrot.slane %v23, 4
  %v424 = vsel %vm399, %v421, %v423
  %v425 = vrot.slane %v24, 4
  %v426 = vsel %vm399, %v423, %v425
  %v427 = vrot.slane %v25, 4
  %v428 = vsel %vm399, %v425, %v427
  %v429 = vrot.slane %v26, 4
  %v430 = vsel %vm399, %v427, %v429
  %v431 = vrot.slane %v27, 4
  %v432 = vsel %vm399, %v429, %v431
  %v433 = vrot.slane %v28, 4
  %v434 = vsel %vm399, %v431, %v433
  %v435 = vrot.slane %v29, 4
  %v436 = vsel %vm399, %v433, %v435
  %v437 = vrot.slane %v30, 4
  %v438 = vsel %vm399, %v435, %v437
  %v439 = vrot.slane %v31, 4
  %v440 = vsel %vm399, %v437, %v439
  %v441 = vrot.slane %v32, 4
  %v442 = vsel %vm399, %v439, %v441
  %v443 = vrot.slane %v33, 4
  %v444 = vsel %vm399, %v441, %v443
  %v445 = vrot.slane %v34, 4
  %v446 = vsel %vm399, %v443, %v445
  %v447 = vrot.slane %v35, 4
  %v448 = vsel %vm399, %v445, %v447
  %v449 = vrot.slane %v36, 4
  %v450 = vsel %vm399, %v447, %v449
  %v476 = vmax.f32 %v374, %v402
  %v477 = vmax.f32 %v375, %v404
  %v478 = vmax.f32 %v376, %v406
  %v479 = vmax.f32 %v377, %v408
  %v480 = vmax.f32 %v378, %v410
  %v481 = vmax.f32 %v379, %v412
  %v482 = vmax.f32 %v380, %v414
  %v483 = vmax.f32 %v381, %v416
  %v484 = vmax.f32 %v382, %v418
  %v485 = vmax.f32 %v383, %v420
  %v486 = vmax.f32 %v384, %v422
  %v487 = vmax.f32 %v385, %v424
  %v488 = vmax.f32 %v386, %v426
  %v489 = vmax.f32 %v387, %v428
  %v490 = vmax.f32 %v388, %v430
  %v491 = vmax.f32 %v389, %v432
  %v492 = vmax.f32 %v390, %v434
  %v493 = vmax.f32 %v391, %v436
  %v494 = vmax.f32 %v392, %v438
  %v495 = vmax.f32 %v393, %v440
  %v496 = vmax.f32 %v394, %v442
  %v497 = vmax.f32 %v395, %v444
  %v498 = vmax.f32 %v396, %v446
  %v499 = vmax.f32 %v397, %v448
  %v500 = vmax.f32 %v398, %v450
  %v502 = vrot.slane %v37, 4
  %v503 = vsel %vm399, %v449, %v502
  %v505 = vmax.f32 %v476, %v404
  %v506 = vmax.f32 %v477, %v406
  %v507 = vmax.f32 %v478, %v408
  %v508 = vmax.f32 %v479, %v410
  %v509 = vmax.f32 %v480, %v412
  %v510 = vmax.f32 %v481, %v414
  %v511 = vmax.f32 %v482, %v416
  %v512 = vmax.f32 %v483, %v418
  %v513 = vmax.f32 %v484, %v420
  %v514 = vmax.f32 %v485, %v422
  %v515 = vmax.f32 %v486, %v424
  %v516 = vmax.f32 %v487, %v426
  %v517 = vmax.f32 %v488, %v428
  %v518 = vmax.f32 %v489, %v430
  %v519 = vmax.f32 %v490, %v432
  %v520 = vmax.f32 %v491, %v434
  %v521 = vmax.f32 %v492, %v436
  %v522 = vmax.f32 %v493, %v438
  %v523 = vmax.f32 %v494, %v440
  %v524 = vmax.f32 %v495, %v442
  %v525 = vmax.f32 %v496, %v444
  %v526 = vmax.f32 %v497, %v446
  %v527 = vmax.f32 %v498, %v448
  %v528 = vmax.f32 %v499, %v450
  %v529 = vmax.f32 %v500, %v503
  %vm530 = vcmask 1042432
  %v531 = vrot.slane %v12, 5
  %v532 = vrot.slane %v13, 5
  %v533 = vsel %vm530, %v531, %v532
  %v534 = vrot.slane %v14, 5
  %v535 = vsel %vm530, %v532, %v534
  %v536 = vrot.slane %v15, 5
  %v537 = vsel %vm530, %v534, %v536
  %v538 = vrot.slane %v16, 5
  %v539 = vsel %vm530, %v536, %v538
  %v540 = vrot.slane %v17, 5
  %v541 = vsel %vm530, %v538, %v540
  %v542 = vrot.slane %v18, 5
  %v543 = vsel %vm530, %v540, %v542
  %v544 = vrot.slane %v19, 5
  %v545 = vsel %vm530, %v542, %v544
  %v546 = vrot.slane %v20, 5
  %v547 = vsel %vm530, %v544, %v546
  %v548 = vrot.slane %v21, 5
  %v549 = vsel %vm530, %v546, %v548
  %v550 = vrot.slane %v22, 5
  %v551 = vsel %vm530, %v548, %v550
  %v552 = vrot.slane %v23, 5
  %v553 = vsel %vm530, %v550, %v552
  %v554 = vrot.slane %v24, 5
  %v555 = vsel %vm530, %v552, %v554
  %v556 = vrot.slane %v25, 5
  %v557 = vsel %vm530, %v554, %v556
  %v558 = vrot.slane %v26, 5
  %v559 = vsel %vm530, %v556, %v558
  %v560 = vrot.slane %v27, 5
  %v561 = vsel %vm530, %v558, %v560
  %v562 = vrot.slane %v28, 5
  %v563 = vsel %vm530, %v560, %v562
  %v564 = vrot.slane %v29, 5
  %v565 = vsel %vm530, %v562, %v564
  %v566 = vrot.slane %v30, 5
  %v567 = vsel %vm530, %v564, %v566
  %v568 = vrot.slane %v31, 5
  %v569 = vsel %vm530, %v566, %v568
  %v570 = vrot.slane %v32, 5
  %v571 = vsel %vm530, %v568, %v570
  %v572 = vrot.slane %v33, 5
  %v573 = vsel %vm530, %v570, %v572
  %v574 = vrot.slane %v34, 5
  %v575 = vsel %vm530, %v572, %v574
  %v576 = vrot.slane %v35, 5
  %v577 = vsel %vm530, %v574, %v576
  %v578 = vrot.slane %v36, 5
  %v579 = vsel %vm530, %v576, %v578
  %v580 = vrot.slane %v37, 5
  %v581 = vsel %vm530, %v578, %v580
  %v607 = vmax.f32 %v505, %v533
  %v608 = vmax.f32 %v506, %v535
  %v609 = vmax.f32 %v507, %v537
  %v610 = vmax.f32 %v508, %v539
  %v611 = vmax.f32 %v509, %v541
  %v612 = vmax.f32 %v510, %v543
  %v613 = vmax.f32 %v511, %v545
  %v614 = vmax.f32 %v512, %v547
  %v615 = vmax.f32 %v513, %v549
  %v616 = vmax.f32 %v514, %v551
  %v617 = vmax.f32 %v515, %v553
  %v618 = vmax.f32 %v516, %v555
  %v619 = vmax.f32 %v517, %v557
  %v620 = vmax.f32 %v518, %v559
  %v621 = vmax.f32 %v519, %v561
  %v622 = vmax.f32 %v520, %v563
  %v623 = vmax.f32 %v521, %v565
  %v624 = vmax.f32 %v522, %v567
  %v625 = vmax.f32 %v523, %v569
  %v626 = vmax.f32 %v524, %v571
  %v627 = vmax.f32 %v525, %v573
  %v628 = vmax.f32 %v526, %v575
  %v629 = vmax.f32 %v527, %v577
  %v630 = vmax.f32 %v528, %v579
  %v631 = vmax.f32 %v529, %v581
  %vm632 = vcmask 1041408
  %v633 = vrot.slane %v12, 6
  %v634 = vrot.slane %v13, 6
  %v635 = vsel %vm632, %v633, %v634
  %v636 = vrot.slane %v14, 6
  %v637 = vsel %vm632, %v634, %v636
  %v638 = vrot.slane %v15, 6
  %v639 = vsel %vm632, %v636, %v638
  %v640 = vrot.slane %v16, 6
  %v641 = vsel %vm632, %v638, %v640
  %v642 = vrot.slane %v17, 6
  %v643 = vsel %vm632, %v640, %v642
  %v644 = vrot.slane %v18, 6
  %v645 = vsel %vm632, %v642, %v644
  %v646 = vrot.slane %v19, 6
  %v647 = vsel %vm632, %v644, %v646
  %v648 = vrot.slane %v20, 6
  %v649 = vsel %vm632, %v646, %v648
  %v650 = vrot.slane %v21, 6
  %v651 = vsel %vm632, %v648, %v650
  %v652 = vrot.slane %v22, 6
  %v653 = vsel %vm632, %v650, %v652
  %v654 = vrot.slane %v23, 6
  %v655 = vsel %vm632, %v652, %v654
  %v656 = vrot.slane %v24, 6
  %v657 = vsel %vm632, %v654, %v656
  %v658 = vrot.slane %v25, 6
  %v659 = vsel %vm632, %v656, %v658
  %v660 = vrot.slane %v26, 6
  %v661 = vsel %vm632, %v658, %v660
  %v662 = vrot.slane %v27, 6
  %v663 = vsel %vm632, %v660, %v662
  %v664 = vrot.slane %v28, 6
  %v665 = vsel %vm632, %v662, %v664
  %v666 = vrot.slane %v29, 6
  %v667 = vsel %vm632, %v664, %v666
  %v668 = vrot.slane %v30, 6
  %v669 = vsel %vm632, %v666, %v668
  %v670 = vrot.slane %v31, 6
  %v671 = vsel %vm632, %v668, %v670
  %v672 = vrot.slane %v32, 6
  %v673 = vsel %vm632, %v670, %v672
  %v674 = vrot.slane %v33, 6
  %v675 = vsel %vm632, %v672, %v674
  %v676 = vrot.slane %v34, 6
  %v677 = vsel %vm632, %v674, %v676
  %v678 = vrot.slane %v35, 6
  %v679 = vsel %vm632, %v676, %v678
  %v680 = vrot.slane %v36, 6
  %v681 = vsel %vm632, %v678, %v680
  %v682 = vrot.slane %v37, 6
  %v683 = vsel %vm632, %v680, %v682
  %v709 = vmax.f32 %v607, %v635
  %v710 = vmax.f32 %v608, %v637
  %v711 = vmax.f32 %v609, %v639
  %v712 = vmax.f32 %v610, %v641
  %v713 = vmax.f32 %v611, %v643
  %v714 = vmax.f32 %v612, %v645
  %v715 = vmax.f32 %v613, %v647
  %v716 = vmax.f32 %v614, %v649
  %v717 = vmax.f32 %v615, %v651
  %v718 = vmax.f32 %v616, %v653
  %v719 = vmax.f32 %v617, %v655
  %v720 = vmax.f32 %v618, %v657
  %v721 = vmax.f32 %v619, %v659
  %v722 = vmax.f32 %v620, %v661
  %v723 = vmax.f32 %v621, %v663
  %v724 = vmax.f32 %v622, %v665
  %v725 = vmax.f32 %v623, %v667
  %v726 = vmax.f32 %v624, %v669
  %v727 = vmax.f32 %v625, %v671
  %v728 = vmax.f32 %v626, %v673
  %v729 = vmax.f32 %v627, %v675
  %v730 = vmax.f32 %v628, %v677
  %v731 = vmax.f32 %v629, %v679
  %v732 = vmax.f32 %v630, %v681
  %v733 = vmax.f32 %v631, %v683
  %vm734 = vcmask 261120
  %735 = vst.msk [vmem:[%s1] sm:$0xff] %vm734, %v709
  %736 = vst.msk [vmem:[%s1 + $0x8] sm:$0xff] %vm734, %v710
  %737 = vst.msk [vmem:[%s1 + $0x10] sm:$0xff] %vm734, %v711
  %738 = vst.msk [vmem:[%s1 + $0x18] sm:$0xff] %vm734, %v712
  %739 = vst.msk [vmem:[%s1 + $0x20] sm:$0xff] %vm734, %v713
  %740 = vst.msk [vmem:[%s1 + $0x28] sm:$0xff] %vm734, %v714
  %741 = vst.msk [vmem:[%s1 + $0x30] sm:$0xff] %vm734, %v715
  %742 = vst.msk [vmem:[%s1 + $0x38] sm:$0xff] %vm734, %v716
  %743 = vst.msk [vmem:[%s1 + $0x40] sm:$0xff] %vm734, %v717
  %744 = vst.msk [vmem:[%s1 + $0x48] sm:$0xff] %vm734, %v718
  %745 = vst.msk [vmem:[%s1 + $0x50] sm:$0xff] %vm734, %v719
  %746 = vst.msk [vmem:[%s1 + $0x58] sm:$0xff] %vm734, %v720
  %747 = vst.msk [vmem:[%s1 + $0x60] sm:$0xff] %vm734, %v721
  %748 = vst.msk [vmem:[%s1 + $0x68] sm:$0xff] %vm734, %v722
  %749 = vst.msk [vmem:[%s1 + $0x70] sm:$0xff] %vm734, %v723
  %750 = vst.msk [vmem:[%s1 + $0x78] sm:$0xff] %vm734, %v724
  %751 = vst.msk [vmem:[%s1 + $0x80] sm:$0xff] %vm734, %v725
  %752 = vst.msk [vmem:[%s1 + $0x88] sm:$0xff] %vm734, %v726
  %753 = vst.msk [vmem:[%s1 + $0x90] sm:$0xff] %vm734, %v727
  %754 = vst.msk [vmem:[%s1 + $0x98] sm:$0xff] %vm734, %v728
  %755 = vst.msk [vmem:[%s1 + $0xa0] sm:$0xff] %vm734, %v729
  %756 = vst.msk [vmem:[%s1 + $0xa8] sm:$0xff] %vm734, %v730
  %757 = vst.msk [vmem:[%s1 + $0xb0] sm:$0xff] %vm734, %v731
  %758 = vst.msk [vmem:[%s1 + $0xb8] sm:$0xff] %vm734, %v732
  %759 = vst.msk [vmem:[%s1 + $0xc0] sm:$0xff] %vm734, %v733
  // Predicated region
  $region6: #{model_forward.18} parent=0 // pred_check
    _
  $region7: #{model_forward.18} parent=0 // pred_check_branch
    %761 = sbr.rel (0) target = $region9
  $region8: #{model_forward.18} parent=0 // pred_region
    _
  $region9: #{model_forward.18} parent=0 // pred_fallthru
    _
  // Predicated region
  $region10: #{model_forward.18} parent=0 // pred_check
    _
  $region11: #{model_forward.18} parent=0 // pred_check_branch
    %763 = sbr.rel (0) target = $region13
  $region12: #{model_forward.18} parent=0 // pred_region
    _
  $region13: #{model_forward.18} parent=0 // pred_fallthru
    _

// kernel: model_forward.22
$region0: #{model_forward.22}
  #allocation0 [shape = 'u32[]', space=smem, size = 0x4, offset = 0x4, fixed_abs, tag = 'smem constant byte address 0x4 - core index']
  #allocation1 [shape = 'u32[144,128]{1,0:T(1,128)}', space=vmem, size = 0x12000, scoped, tag = 'internal scratch']
  %s0 = inlined_call_operand.vmem [shape: f32[32,32], index: 0, kind: input, shape index: {}]
  %s1 = inlined_call_operand.vmem [shape: f32[1,32], index: 1, kind: input, shape index: {}]
  %s2 = inlined_call_operand.vmem [shape: f32[1,32], index: 2, kind: input, shape index: {}]
  %s3 = inlined_call_operand.vmem [shape: f32[1,32], index: 3, kind: input, shape index: {}]
  %s4 = inlined_call_operand.vmem [shape: f32[1,32], index: 4, kind: input, shape index: {}]
  %s5 = inlined_call_operand.vmem [shape: f32[32,32], index: 5, kind: input, shape index: {}]
  %s6 = inlined_call_operand.vmem [shape: f32[32,32], index: 6, kind: output, shape index: {}]
  %s7 = sld [smem:[#allocation0]]
  $region34: #{model_forward.22} parent=0
    _
  %s9 = ssub.s32 1, %s7
  %s10 = scalar_select 0, %s9, %s7
  // Predicated region
  $region2: #{model_forward.22} parent=0 // pred_check
    _
  $region3: #{model_forward.22} parent=0 // pred_check_branch
    %12 = sbr.rel (0) target = $region5
  $region4: #{model_forward.22} parent=0 // pred_region
    _
  $region5: #{model_forward.22} parent=0 // pred_fallthru
    _
  // Predicated region
  $region6: #{model_forward.22} parent=0 // pred_check
    _
  $region7: #{model_forward.22} parent=0 // pred_check_branch
    %14 = sbr.rel (0) target = $region9
  $region8: #{model_forward.22} parent=0 // pred_region
    _
  $region9: #{model_forward.22} parent=0 // pred_fallthru
    _
  // Predicated region
  $region10: #{model_forward.22} parent=0 // pred_check
    _
  $region11: #{model_forward.22} parent=0 // pred_check_branch
    %16 = sbr.rel (0) target = $region13
  $region12: #{model_forward.22} parent=0 // pred_region
    _
  $region13: #{model_forward.22} parent=0 // pred_fallthru
    _
  // Predicated region
  $region14: #{model_forward.22} parent=0 // pred_check
    _
  $region15: #{model_forward.22} parent=0 // pred_check_branch
    %18 = sbr.rel (0) target = $region17
  $region16: #{model_forward.22} parent=0 // pred_region
    _
  $region17: #{model_forward.22} parent=0 // pred_fallthru
    _
  // Predicated region
  $region18: #{model_forward.22} parent=0 // pred_check
    _
  $region19: #{model_forward.22} parent=0 // pred_check_branch
    %20 = sbr.rel (0) target = $region21
  $region20: #{model_forward.22} parent=0 // pred_region
    _
  $region21: #{model_forward.22} parent=0 // pred_fallthru
    _
  // Predicated region
  $region22: #{model_forward.22} parent=0 // pred_check
    _
  $region23: #{model_forward.22} parent=0 // pred_check_branch
    %22 = sbr.rel (0) target = $region25
  $region24: #{model_forward.22} parent=0 // pred_region
    _
  $region25: #{model_forward.22} parent=0 // pred_fallthru
    _
  %v23 = vld [vmem:[%s1] sm:$0x1]
  %v24 = vmul.f32 %v23, 0.03125
  %v25 = vld [vmem:[%s2] sm:$0x1]
  %v26 = vmul.f32 %v25, 0.03125
  %v27 = vmul.f32 %v24, %v24
  %v28 = vsub.f32 %v26, %v27
  %v29 = vmax.f32 %v28, 0.0
  %v30 = vld [vmem:[%s3] sm:$0x1]
  %v31 = vadd.f32 %v29, 1e-05
  %v32 = vrsqrt.pop %v31
  %v33 = vmul.f32 %v30, %v32
  %v34 = vld [vmem:[%s4] sm:$0x1]
  %v35 = vmul.f32 %v24, %v33
  %v36 = vsub.f32 %v34, %v35
  %v37 = vld [vmem:[%s0] sm:$0xff]
  %v38 = vld [vmem:[%s0 + $0x8] sm:$0xff]
  %v39 = vld [vmem:[%s0 + $0x10] sm:$0xff]
  %v40 = vld [vmem:[%s0 + $0x18] sm:$0xff]
  %v42 = vlaneseq
  %v43 = vshrl.u32 %v42, 7
  %v44 = vsub.s32 0, %v43
  %v45 = vrot.slane %v33, %v44
  %v47 = vmul.f32 %v37, %v45
  %v48 = vmul.f32 %v38, %v45
  %v49 = vmul.f32 %v39, %v45
  %v50 = vmul.f32 %v40, %v45
  %v52 = vlaneseq
  %v53 = vshrl.u32 %v52, 7
  %v54 = vsub.s32 0, %v53
  %v55 = vrot.slane %v36, %v54
  %v57 = vadd.f32 %v47, %v55
  %v58 = vadd.f32 %v48, %v55
  %v59 = vadd.f32 %v49, %v55
  %v60 = vadd.f32 %v50, %v55
  %v61 = vld [vmem:[%s5] sm:$0xff]
  %v62 = vld [vmem:[%s5 + $0x8] sm:$0xff]
  %v63 = vld [vmem:[%s5 + $0x10] sm:$0xff]
  %v64 = vld [vmem:[%s5 + $0x18] sm:$0xff]
  %v65 = vadd.f32 %v57, %v61
  %v66 = vadd.f32 %v58, %v62
  %v67 = vadd.f32 %v59, %v63
  %v68 = vadd.f32 %v60, %v64
  %v69 = vmax.f32 %v65, 0.0
  %v70 = vmax.f32 %v66, 0.0
  %v71 = vmax.f32 %v67, 0.0
  %v72 = vmax.f32 %v68, 0.0
  %vm73 = vcmask 261120
  %74 = vst.msk [vmem:[%s6] sm:$0xff] %vm73, %v69
  %75 = vst.msk [vmem:[%s6 + $0x8] sm:$0xff] %vm73, %v70
  %76 = vst.msk [vmem:[%s6 + $0x10] sm:$0xff] %vm73, %v71
  %77 = vst.msk [vmem:[%s6 + $0x18] sm:$0xff] %vm73, %v72
  // Predicated region
  $region26: #{model_forward.22} parent=0 // pred_check
    _
  $region27: #{model_forward.22} parent=0 // pred_check_branch
    %79 = sbr.rel (0) target = $region29
  $region28: #{model_forward.22} parent=0 // pred_region
    _
  $region29: #{model_forward.22} parent=0 // pred_fallthru
    _
  // Predicated region
  $region30: #{model_forward.22} parent=0 // pred_check
    _
  $region31: #{model_forward.22} parent=0 // pred_check_branch
    %81 = sbr.rel (0) target = $region33
  $region32: #{model_forward.22} parent=0 // pred_region
    _
  $region33: #{model_forward.22} parent=0 // pred_fallthru
    _

// kernel: model_forward.16
$region0: #{model_forward.16}
  #allocation0 [shape = 'u32[]', space=smem, size = 0x4, offset = 0x4, fixed_abs, tag = 'smem constant byte address 0x4 - core index']
  #allocation1 [shape = 'u32[144,128]{1,0:T(1,128)}', space=vmem, size = 0x12000, scoped, tag = 'internal scratch']
  %s0 = inlined_call_operand.vmem [shape: f32[1062,4], index: 0, kind: input, shape index: {}]
  %s1 = inlined_call_operand.vmem [shape: bf16[9,4,32], index: 1, kind: input, shape index: {}]
  %s2 = inlined_call_operand.vmem [shape: f32[1024,1], index: 2, kind: input, shape index: {}]
  %s3 = inlined_call_operand.vmem [shape: f32[1024,32], index: 3, kind: output, shape index: {0}]
  %s4 = inlined_call_operand.vmem [shape: f32[1,32], index: 4, kind: output, shape index: {1}]
  %s5 = inlined_call_operand.vmem [shape: f32[1,32], index: 5, kind: output, shape index: {2}]
  %6 = xla_tuple %s3, %s4, %s5
  %s7 = sld [smem:[#allocation0]]
  $region65: #{model_forward.16} parent=0
    _
  %s9 = ssub.s32 1, %s7
  %s10 = scalar_select 0, %s9, %s7
  loop: start=0, step=1, limit=4
  $region2: #{model_forward.16} parent=0 // loop_pre_header
    _
  $region3: #{model_forward.16} parent=0 // loop_header
    %s12 = sphi 0, %s16
    %p13 = scmp.ge.s32.totalorder %s12, 4
    %s20 = sphi 0, %s20
    %s22 = sphi 0, %s20
    %s23 = sphi 0, %s22
    %s37 = sphi 0, %s23
    %s41 = sphi 0, %s41
    %s43 = sphi 0, %s41
    %s44 = sphi 0, %s43
    %s58 = sphi 0, %s44
    %s64 = sphi 0, %s66
    %s67 = sphi 0, %s64
    %s68 = sphi 0, %s67
    %s84 = sphi 0, %s68
    %s90 = sphi 0, %s92
    %s93 = sphi 0, %s90
    %s94 = sphi 0, %s93
    %s110 = sphi 0, %s94
    %s114 = sphi 0, %s114
    %s116 = sphi 0, %s114
    %s117 = sphi 0, %s116
    %s131 = sphi 0, %s117
    %s135 = sphi 0, %s135
    %s137 = sphi 0, %s135
    %s138 = sphi 0, %s137
    %s152 = sphi 0, %s138
  $region4: #{model_forward.16} parent=0 // loop_header_branch
    %15 = sbr.rel (%p13) target = $region8
  $region5: #{model_forward.16} parent=0 // loop_body
    %s17 = ssub.s32 %s12, 1
    %s18 = ssub.s32 %s12, 2
    %s19 = sadd.s32 %s12, 1
    %s21 = sadd.s32 %s20, 1
    %p24 = scmp.eq.s32.totalorder %s12, 1
    %p25 = scmp.ne.s32.totalorder %s20, %s22
    %p26 = scmp.eq.s32.totalorder %s12, 0
    %p27 = por %p25, %p26
    %p28 = scmp.ne.s32.totalorder %s20, %s22
    %p29 = scmp.eq.s32.totalorder %s17, 1
    %p30 = por %p28, %p29
    %p31 = scmp.ne.s32.totalorder %s22, %s23
    %p32 = scmp.eq.s32.totalorder %s17, 0
    %p33 = por %p31, %p32
    %p34 = scmp.ne.s32.totalorder %s22, %s23
    %p35 = scmp.eq.s32.totalorder %s18, 1
    %p36 = por %p34, %p35
    %p38 = scmp.ne.s32.totalorder %s23, %s37
    %p39 = scmp.eq.s32.totalorder %s18, 0
    %p40 = por %p38, %p39
    %s42 = sadd.s32 %s41, 1
    %p45 = scmp.eq.s32.totalorder %s12, 1
    %p46 = scmp.ne.s32.totalorder %s41, %s43
    %p47 = scmp.eq.s32.totalorder %s12, 0
    %p48 = por %p46, %p47
    %p49 = scmp.ne.s32.totalorder %s41, %s43
    %p50 = scmp.eq.s32.totalorder %s17, 1
    %p51 = por %p49, %p50
    %p52 = scmp.ne.s32.totalorder %s43, %s44
    %p53 = scmp.eq.s32.totalorder %s17, 0
    %p54 = por %p52, %p53
    %p55 = scmp.ne.s32.totalorder %s43, %s44
    %p56 = scmp.eq.s32.totalorder %s18, 1
    %p57 = por %p55, %p56
    %p59 = scmp.ne.s32.totalorder %s44, %s58
    %p60 = scmp.eq.s32.totalorder %s18, 0
    %p61 = por %p59, %p60
    %s62 = ssub.s32 %s12, %s19
    %p63 = scmp.eq.s32.totalorder %s62, 0
    %s65 = sadd.s32 %s64, 1
    %s66 = scalar_select %p63, %s64, %s65
    %p69 = pneg %p63
    %p70 = scmp.eq.s32.totalorder %s12, 1
    %p71 = por %p69, %p70
    %p72 = scmp.ne.s32.totalorder %s64, %s67
    %p73 = scmp.eq.s32.totalorder %s12, 0
    %p74 = por %p72, %p73
    %p75 = scmp.ne.s32.totalorder %s64, %s67
    %p76 = scmp.eq.s32.totalorder %s17, 1
    %p77 = por %p75, %p76
    %p78 = scmp.ne.s32.totalorder %s67, %s68
    %p79 = scmp.eq.s32.totalorder %s17, 0
    %p80 = por %p78, %p79
    %p81 = scmp.ne.s32.totalorder %s67, %s68
    %p82 = scmp.eq.s32.totalorder %s18, 1
    %p83 = por %p81, %p82
    %p85 = scmp.ne.s32.totalorder %s68, %s84
    %p86 = scmp.eq.s32.totalorder %s18, 0
    %p87 = por %p85, %p86
    %s88 = ssub.s32 %s12, %s19
    %p89 = scmp.eq.s32.totalorder %s88, 0
    %s91 = sadd.s32 %s90, 1
    %s92 = scalar_select %p89, %s90, %s91
    %p95 = pneg %p89
    %p96 = scmp.eq.s32.totalorder %s12, 1
    %p97 = por %p95, %p96
    %p98 = scmp.ne.s32.totalorder %s90, %s93
    %p99 = scmp.eq.s32.totalorder %s12, 0
    %p100 = por %p98, %p99
    %p101 = scmp.ne.s32.totalorder %s90, %s93
    %p102 = scmp.eq.s32.totalorder %s17, 1
    %p103 = por %p101, %p102
    %p104 = scmp.ne.s32.totalorder %s93, %s94
    %p105 = scmp.eq.s32.totalorder %s17, 0
    %p106 = por %p104, %p105
    %p107 = scmp.ne.s32.totalorder %s93, %s94
    %p108 = scmp.eq.s32.totalorder %s18, 1
    %p109 = por %p107, %p108
    %p111 = scmp.ne.s32.totalorder %s94, %s110
    %p112 = scmp.eq.s32.totalorder %s18, 0
    %p113 = por %p111, %p112
    %s115 = sadd.s32 %s114, 1
    %p118 = scmp.eq.s32.totalorder %s12, 1
    %p119 = scmp.ne.s32.totalorder %s114, %s116
    %p120 = scmp.eq.s32.totalorder %s12, 0
    %p121 = por %p119, %p120
    %p122 = scmp.ne.s32.totalorder %s114, %s116
    %p123 = scmp.eq.s32.totalorder %s17, 1
    %p124 = por %p122, %p123
    %p125 = scmp.ne.s32.totalorder %s116, %s117
    %p126 = scmp.eq.s32.totalorder %s17, 0
    %p127 = por %p125, %p126
    %p128 = scmp.ne.s32.totalorder %s116, %s117
    %p129 = scmp.eq.s32.totalorder %s18, 1
    %p130 = por %p128, %p129
    %p132 = scmp.ne.s32.totalorder %s117, %s131
    %p133 = scmp.eq.s32.totalorder %s18, 0
    %p134 = por %p132, %p133
    %s136 = sadd.s32 %s135, 1
    %p139 = scmp.eq.s32.totalorder %s12, 1
    %p140 = scmp.ne.s32.totalorder %s135, %s137
    %p141 = scmp.eq.s32.totalorder %s12, 0
    %p142 = por %p140, %p141
    %p143 = scmp.ne.s32.totalorder %s135, %s137
    %p144 = scmp.eq.s32.totalorder %s17, 1
    %p145 = por %p143, %p144
    %p146 = scmp.ne.s32.totalorder %s137, %s138
    %p147 = scmp.eq.s32.totalorder %s17, 0
    %p148 = por %p146, %p147
    %p149 = scmp.ne.s32.totalorder %s137, %s138
    %p150 = scmp.eq.s32.totalorder %s18, 1
    %p151 = por %p149, %p150
    %p153 = scmp.ne.s32.totalorder %s138, %s152
    %p154 = scmp.eq.s32.totalorder %s18, 0
    %p155 = por %p153, %p154
    %p156 = scmp.le.s32.totalorder 1, %s12
    %p157 = scmp.lt.s32.totalorder %s12, 3
    %p158 = pnand %p156, %p157
    %p159 = pneg %p158
    // Predicated region
    $region9: #{model_forward.16} parent=5 // pred_check
      _
    $region10: #{model_forward.16} parent=5 // pred_check_branch
      %161 = sbr.rel (%p158) target = $region12
    $region11: #{model_forward.16} parent=5 // pred_region
      %s162 = ssub.s32 %s12, 1
      // Predicated region
      $region13: #{model_forward.16} parent=11 // pred_check
        %p163 = pneg %p33
      $region14: #{model_forward.16} parent=11 // pred_check_branch
        %165 = sbr.rel (%p163) target = $region16
      $region15: #{model_forward.16} parent=11 // pred_region
        _
      $region16: #{model_forward.16} parent=11 // pred_fallthru
        _
      // Predicated region
      $region17: #{model_forward.16} parent=11 // pred_check
        %p166 = pneg %p54
      $region18: #{model_forward.16} parent=11 // pred_check_branch
        %168 = sbr.rel (%p166) target = $region20
      $region19: #{model_forward.16} parent=11 // pred_region
        _
      $region20: #{model_forward.16} parent=11 // pred_fallthru
        _
    $region12: #{model_forward.16} parent=5 // pred_fallthru
      _
    %p169 = scmp.lt.s32.totalorder %s12, 2
    // Predicated region
    $region21: #{model_forward.16} parent=5 // pred_check
      %p170 = pneg %p169
    $region22: #{model_forward.16} parent=5 // pred_check_branch
      %172 = sbr.rel (%p170) target = $region24
    $region23: #{model_forward.16} parent=5 // pred_region
      // Predicated region
      $region25: #{model_forward.16} parent=23 // pred_check
        %p173 = pneg %p74
      $region26: #{model_forward.16} parent=23 // pred_check_branch
        %175 = sbr.rel (%p173) target = $region28
      $region27: #{model_forward.16} parent=23 // pred_region
        %s176 = smul.u32 64, %s12
        %p177 = scmp.lt.s32.totalorder %s176, 127
        %s178 = scalar_select %p177, %s176, 127
        %s179 = smul.addr %s178, 8
        %s180 = scalar_lea.vmem %s2, %s179
        %s181 = smul.u32 64, %s12
      $region28: #{model_forward.16} parent=23 // pred_fallthru
        _
    $region24: #{model_forward.16} parent=5 // pred_fallthru
      _
    %p182 = scmp.le.s32.totalorder 1, %s12
    %p183 = scmp.lt.s32.totalorder %s12, 3
    %p184 = pnand %p182, %p183
    %p185 = pneg %p184
    // Predicated region
    $region29: #{model_forward.16} parent=5 // pred_check
      _
    $region30: #{model_forward.16} parent=5 // pred_check_branch
      %187 = sbr.rel (%p184) target = $region32
    $region31: #{model_forward.16} parent=5 // pred_region
      %s188 = ssub.s32 %s12, 1
      %p189 = pneg %p33
      %p190 = pneg %p30
      %p191 = pneg %p54
      %p192 = pneg %p51
      %s193 = smul.u32 64, %s17
      %p194 = scmp.lt.s32.totalorder %s193, 127
      %s195 = scalar_select %p194, %s193, 127
      %s196 = smul.addr %s195, 8
      %s197 = scalar_lea.vmem %s2, %s196
      %p198 = pneg %p80
      %p199 = pneg %p77
      %p200 = pneg %p106
      %p201 = pneg %p103
      %s202 = smul.u32 64, %s17
      %p203 = scmp.lt.s32.totalorder %s202, 127
      %s204 = scalar_select %p203, %s202, 127
      %s205 = smul.addr %s204, 8
      %s206 = scalar_lea.vmem %s3, %s205
      %p207 = pneg %p127
      %p208 = pneg %p124
      %p209 = pneg %p148
      %p210 = pneg %p145
      %s211 = smul.u32 64, %s17
      %p212 = scmp.lt.s32.totalorder %s211, 127
      %s213 = scalar_select %p212, %s211, 127
      %s214 = smul.addr %s213, 8
      %s215 = scalar_lea.vmem %s2, %s214
      %s216 = smul.u32 64, %s17
      %s217 = smul.u32 64, %s17
      %p218 = scmp.lt.s32.totalorder %s217, 127
      %s219 = scalar_select %p218, %s217, 127
      %s220 = smul.addr %s219, 8
      %s221 = scalar_lea.vmem %s3, %s220
      %s222 = smul.u32 64, %s17
      %p224 = scmp.eq.s32.totalorder %s17, 0
      // Predicated region
      $region33: #{model_forward.16} parent=31 // pred_check
        %p225 = pneg %p224
      $region34: #{model_forward.16} parent=31 // pred_check_branch
        %227 = sbr.rel (%p225) target = $region36
      $region35: #{model_forward.16} parent=31 // pred_region
        %vm228 = vcmask 253952
        %229 = vst.msk [vmem:[%s4] sm:$0x1] %vm228, 0.0
        %230 = vst.msk [vmem:[%s5] sm:$0x1] %vm228, 0.0
      $region36: #{model_forward.16} parent=31 // pred_fallthru
        _
      %s231 = smul.u32 %s17, 512
      %s232 = scalar_lea.vmem %s0, %s231
      %v233 = vld [vmem:[%s232] sm:$0xff]
      %v234 = vld [vmem:[%s232 + $0x8] sm:$0xff]
      %v235 = vld [vmem:[%s232 + $0x10] sm:$0xff]
      %v236 = vld [vmem:[%s232 + $0x18] sm:$0xff]
      %v237 = vld [vmem:[%s232 + $0x20] sm:$0xff]
      %v238 = vld [vmem:[%s232 + $0x28] sm:$0xff]
      %v239 = vld [vmem:[%s232 + $0x30] sm:$0xff]
      %v240 = vld [vmem:[%s232 + $0x38] sm:$0xff]
      %v241 = vld [vmem:[%s232 + $0x40] sm:$0xff]
      %v242 = vld [vmem:[%s232 + $0x48] sm:$0xff]
      %v243 = vld [vmem:[%s232 + $0x50] sm:$0xff]
      %v244 = vld [vmem:[%s232 + $0x58] sm:$0xff]
      %v245 = vld [vmem:[%s232 + $0x60] sm:$0xff]
      %v246 = vld [vmem:[%s232 + $0x68] sm:$0xff]
      %v247 = vld [vmem:[%s232 + $0x70] sm:$0xff]
      %v248 = vld [vmem:[%s232 + $0x78] sm:$0xff]
      %v249 = vld [vmem:[%s232 + $0x80] sm:$0xff]
      %v250 = vld [vmem:[%s232 + $0x88] sm:$0xff]
      %v251 = vld [vmem:[%s232 + $0x90] sm:$0xff]
      %v252 = vld [vmem:[%s232 + $0x98] sm:$0xff]
      %v253 = vld [vmem:[%s232 + $0xa0] sm:$0xff]
      %v254 = vld [vmem:[%s232 + $0xa8] sm:$0xff]
      %v255 = vld [vmem:[%s232 + $0xb0] sm:$0xff]
      %v256 = vld [vmem:[%s232 + $0xb8] sm:$0xff]
      %v257 = vld [vmem:[%s232 + $0xc0] sm:$0xff]
      %v258 = vld [vmem:[%s232 + $0xc8] sm:$0xff]
      %v259 = vld [vmem:[%s232 + $0xd0] sm:$0xff]
      %v260 = vld [vmem:[%s232 + $0xd8] sm:$0xff]
      %v261 = vld [vmem:[%s232 + $0xe0] sm:$0xff]
      %v262 = vld [vmem:[%s232 + $0xe8] sm:$0xff]
      %v263 = vld [vmem:[%s232 + $0xf0] sm:$0xff]
      %v264 = vld [vmem:[%s232 + $0xf8] sm:$0xff]
      %v265 = vld [vmem:[%s232 + $0x100] sm:$0xff]
      %v266 = vld [vmem:[%s232 + $0x108] sm:$0xff]
      %v267 = vld [vmem:[%s232 + $0x110] sm:$0xff]
      %v268 = vld [vmem:[%s232 + $0x118] sm:$0xff]
      %v269 = vld [vmem:[%s232 + $0x120] sm:$0xff]
      %v270 = vld [vmem:[%s232 + $0x128] sm:$0xff]
      %v271 = vld [vmem:[%s232 + $0x130] sm:$0xff]
      %v272 = vld [vmem:[%s232 + $0x138] sm:$0xff]
      %v273 = vld [vmem:[%s232 + $0x140] sm:$0xff]
      %v274 = vld [vmem:[%s232 + $0x148] sm:$0xff]
      %v275 = vld [vmem:[%s232 + $0x150] sm:$0xff]
      %v276 = vld [vmem:[%s232 + $0x158] sm:$0xff]
      %v277 = vld [vmem:[%s232 + $0x160] sm:$0xff]
      %v278 = vld [vmem:[%s232 + $0x168] sm:$0xff]
      %v279 = vld [vmem:[%s232 + $0x170] sm:$0xff]
      %v280 = vld [vmem:[%s232 + $0x178] sm:$0xff]
      %v281 = vld [vmem:[%s232 + $0x180] sm:$0xff]
      %v282 = vld [vmem:[%s232 + $0x188] sm:$0xff]
      %v283 = vld [vmem:[%s232 + $0x190] sm:$0xff]
      %v284 = vld [vmem:[%s232 + $0x198] sm:$0xff]
      %v285 = vld [vmem:[%s232 + $0x1a0] sm:$0xff]
      %v286 = vld [vmem:[%s232 + $0x1a8] sm:$0xff]
      %v287 = vld [vmem:[%s232 + $0x1b0] sm:$0xff]
      %v288 = vld [vmem:[%s232 + $0x1b8] sm:$0xff]
      %v289 = vld [vmem:[%s232 + $0x1c0] sm:$0xff]
      %v290 = vld [vmem:[%s232 + $0x1c8] sm:$0xff]
      %v291 = vld [vmem:[%s232 + $0x1d0] sm:$0xff]
      %v292 = vld [vmem:[%s232 + $0x1d8] sm:$0xff]
      %v293 = vld [vmem:[%s232 + $0x1e0] sm:$0xff]
      %v294 = vld [vmem:[%s232 + $0x1e8] sm:$0xff]
      %v295 = vld [vmem:[%s232 + $0x1f0] sm:$0xff]
      %v296 = vld [vmem:[%s232 + $0x1f8] sm:$0xff]
      %v297 = vld [vmem:[%s232 + $0x200] sm:$0xff]
      %v298 = vld [vmem:[%s232 + $0x208] sm:$0xff]
      %v299 = vld [vmem:[%s232 + $0x210] sm:$0xff]
      %v300 = vld [vmem:[%s232 + $0x218] sm:$0xff]
      %v301 = vld [vmem:[%s232 + $0x220] sm:$0x3f]
      %v302 = vpack.c.bf16 %v234, %v233
      %v303 = vpack.c.bf16 %v236, %v235
      %v304 = vpack.c.bf16 %v238, %v237
      %v305 = vpack.c.bf16 %v240, %v239
      %v306 = vpack.c.bf16 %v242, %v241
      %v307 = vpack.c.bf16 %v244, %v243
      %v308 = vpack.c.bf16 %v246, %v245
      %v309 = vpack.c.bf16 %v248, %v247
      %v310 = vpack.c.bf16 %v250, %v249
      %v311 = vpack.c.bf16 %v252, %v251
      %v312 = vpack.c.bf16 %v254, %v253
      %v313 = vpack.c.bf16 %v256, %v255
      %v314 = vpack.c.bf16 %v258, %v257
      %v315 = vpack.c.bf16 %v260, %v259
      %v316 = vpack.c.bf16 %v262, %v261
      %v317 = vpack.c.bf16 %v264, %v263
      %v318 = vpack.c.bf16 %v266, %v265
      %v319 = vpack.c.bf16 %v268, %v267
      %v320 = vpack.c.bf16 %v270, %v269
      %v321 = vpack.c.bf16 %v272, %v271
      %v322 = vpack.c.bf16 %v274, %v273
      %v323 = vpack.c.bf16 %v276, %v275
      %v324 = vpack.c.bf16 %v278, %v277
      %v325 = vpack.c.bf16 %v280, %v279
      %v326 = vpack.c.bf16 %v282, %v281
      %v327 = vpack.c.bf16 %v284, %v283
      %v328 = vpack.c.bf16 %v286, %v285
      %v329 = vpack.c.bf16 %v288, %v287
      %v330 = vpack.c.bf16 %v290, %v289
      %v331 = vpack.c.bf16 %v292, %v291
      %v332 = vpack.c.bf16 %v294, %v293
      %v333 = vpack.c.bf16 %v296, %v295
      %v334 = vld [vmem:[%s1] sm:$0x3]
      %v335 = vpack.c.bf16 %v297, %v297
      %s336 = scalar_lea.vmem %s1, 2
      %v337 = vld [vmem:[%s336] sm:$0x3]
      %vm338 = vsmask.f32 7424
      %v340 = vshrl.u32 %v302, 16
      %v342 = vshll.u32 %v302, 16
      %v344 = vrot.slane %v342, 1
      %v345 = vor.u32 %v340, %v344
      %v347 = vshll.u32 %v303, 16
      %v349 = vrot.slane %v347, 1
      %v350 = vsel %vm338, %v345, %v349
      %v351 = vshrl.u32 %v303, 16
      %v353 = vor.u32 %v351, %v349
      %v355 = vshll.u32 %v304, 16
      %v357 = vrot.slane %v355, 1
      %v358 = vsel %vm338, %v353, %v357
      %v359 = vshrl.u32 %v304, 16
      %v361 = vor.u32 %v359, %v357
      %v363 = vshll.u32 %v305, 16
      %v365 = vrot.slane %v363, 1
      %v366 = vsel %vm338, %v361, %v365
      %v367 = vshrl.u32 %v305, 16
      %v369 = vor.u32 %v367, %v365
      %v371 = vshll.u32 %v306, 16
      %v373 = vrot.slane %v371, 1
      %v374 = vsel %vm338, %v369, %v373
      %v375 = vshrl.u32 %v306, 16
      %v377 = vor.u32 %v375, %v373
      %v379 = vshll.u32 %v307, 16
      %v381 = vrot.slane %v379, 1
      %v382 = vsel %vm338, %v377, %v381
      %v383 = vshrl.u32 %v307, 16
      %v385 = vor.u32 %v383, %v381
      %v387 = vshll.u32 %v308, 16
      %v389 = vrot.slane %v387, 1
      %v390 = vsel %vm338, %v385, %v389
      %v391 = vshrl.u32 %v308, 16
      %v393 = vor.u32 %v391, %v389
      %v395 = vshll.u32 %v309, 16
      %v397 = vrot.slane %v395, 1
      %v398 = vsel %vm338, %v393, %v397
      %v399 = vshrl.u32 %v309, 16
      %v401 = vor.u32 %v399, %v397
      %v403 = vshll.u32 %v310, 16
      %v405 = vrot.slane %v403, 1
      %v406 = vsel %vm338, %v401, %v405
      %v407 = vshrl.u32 %v310, 16
      %v409 = vor.u32 %v407, %v405
      %v411 = vshll.u32 %v311, 16
      %v413 = vrot.slane %v411, 1
      %v414 = vsel %vm338, %v409, %v413
      %v415 = vshrl.u32 %v311, 16
      %v417 = vor.u32 %v415, %v413
      %v419 = vshll.u32 %v312, 16
      %v421 = vrot.slane %v419, 1
      %v422 = vsel %vm338, %v417, %v421
      %v423 = vshrl.u32 %v312, 16
      %v425 = vor.u32 %v423, %v421
      %v427 = vshll.u32 %v313, 16
      %v429 = vrot.slane %v427, 1
      %v430 = vsel %vm338, %v425, %v429
      %v431 = vshrl.u32 %v313, 16
      %v433 = vor.u32 %v431, %v429
      %v435 = vshll.u32 %v314, 16
      %v437 = vrot.slane %v435, 1
      %v438 = vsel %vm338, %v433, %v437
      %v439 = vshrl.u32 %v314, 16
      %v441 = vor.u32 %v439, %v437
      %v443 = vshll.u32 %v315, 16
      %v445 = vrot.slane %v443, 1
      %v446 = vsel %vm338, %v441, %v445
      %v447 = vshrl.u32 %v315, 16
      %v449 = vor.u32 %v447, %v445
      %v451 = vshll.u32 %v316, 16
      %v453 = vrot.slane %v451, 1
      %v454 = vsel %vm338, %v449, %v453
      %v455 = vshrl.u32 %v316, 16
      %v457 = vor.u32 %v455, %v453
      %v459 = vshll.u32 %v317, 16
      %v461 = vrot.slane %v459, 1
      %v462 = vsel %vm338, %v457, %v461
      %v463 = vshrl.u32 %v317, 16
      %v465 = vor.u32 %v463, %v461
      %v467 = vshll.u32 %v318, 16
      %v469 = vrot.slane %v467, 1
      %v470 = vsel %vm338, %v465, %v469
      %v471 = vshrl.u32 %v318, 16
      %v473 = vor.u32 %v471, %v469
      %v475 = vshll.u32 %v319, 16
      %v477 = vrot.slane %v475, 1
      %v478 = vsel %vm338, %v473, %v477
      %v479 = vshrl.u32 %v319, 16
      %v481 = vor.u32 %v479, %v477
      %v483 = vshll.u32 %v320, 16
      %v485 = vrot.slane %v483, 1
      %v486 = vsel %vm338, %v481, %v485
      %v487 = vshrl.u32 %v320, 16
      %v489 = vor.u32 %v487, %v485
      %v491 = vshll.u32 %v321, 16
      %v493 = vrot.slane %v491, 1
      %v494 = vsel %vm338, %v489, %v493
      %v495 = vshrl.u32 %v321, 16
      %v497 = vor.u32 %v495, %v493
      %v499 = vshll.u32 %v322, 16
      %v501 = vrot.slane %v499, 1
      %v502 = vsel %vm338, %v497, %v501
      %v503 = vshrl.u32 %v322, 16
      %v505 = vor.u32 %v503, %v501
      %v507 = vshll.u32 %v323, 16
      %v509 = vrot.slane %v507, 1
      %v510 = vsel %vm338, %v505, %v509
      %v511 = vshrl.u32 %v323, 16
      %v513 = vor.u32 %v511, %v509
      %v515 = vshll.u32 %v324, 16
      %v517 = vrot.slane %v515, 1
      %v518 = vsel %vm338, %v513, %v517
      %v519 = vshrl.u32 %v324, 16
      %v521 = vor.u32 %v519, %v517
      %v523 = vshll.u32 %v325, 16
      %v525 = vrot.slane %v523, 1
      %v526 = vsel %vm338, %v521, %v525
      %v527 = vshrl.u32 %v325, 16
      %v529 = vor.u32 %v527, %v525
      %v531 = vshll.u32 %v326, 16
      %v533 = vrot.slane %v531, 1
      %v534 = vsel %vm338, %v529, %v533
      %v535 = vshrl.u32 %v326, 16
      %v537 = vor.u32 %v535, %v533
      %v539 = vshll.u32 %v327, 16
      %v541 = vrot.slane %v539, 1
      %v542 = vsel %vm338, %v537, %v541
      %v543 = vshrl.u32 %v327, 16
      %v545 = vor.u32 %v543, %v541
      %v547 = vshll.u32 %v328, 16
      %v549 = vrot.slane %v547, 1
      %v550 = vsel %vm338, %v545, %v549
      %v551 = vshrl.u32 %v328, 16
      %v553 = vor.u32 %v551, %v549
      %v555 = vshll.u32 %v329, 16
      %v557 = vrot.slane %v555, 1
      %v558 = vsel %vm338, %v553, %v557
      %v559 = vshrl.u32 %v329, 16
      %v561 = vor.u32 %v559, %v557
      %v563 = vshll.u32 %v330, 16
      %v565 = vrot.slane %v563, 1
      %v566 = vsel %vm338, %v561, %v565
      %v567 = vshrl.u32 %v330, 16
      %v569 = vor.u32 %v567, %v565
      %v571 = vshll.u32 %v331, 16
      %v573 = vrot.slane %v571, 1
      %v574 = vsel %vm338, %v569, %v573
      %v575 = vshrl.u32 %v331, 16
      %v577 = vor.u32 %v575, %v573
      %v579 = vshll.u32 %v332, 16
      %v581 = vrot.slane %v579, 1
      %v582 = vsel %vm338, %v577, %v581
      %v583 = vshrl.u32 %v332, 16
      %v585 = vor.u32 %v583, %v581
      %v587 = vshll.u32 %v333, 16
      %v589 = vrot.slane %v587, 1
      %v590 = vsel %vm338, %v585, %v589
      %v591 = vshrl.u32 %v333, 16
      %v593 = vor.u32 %v591, %v589
      %v595 = vshll.u32 %v335, 16
      %v597 = vrot.slane %v595, 1
      %v598 = vsel %vm338, %v593, %v597
      %vm599 = vcmask 31744
      %v601 = vsel %vm599, %v350, 0
      %v604 = vsel %vm599, %v358, 0
      %v607 = vsel %vm599, %v366, 0
      %v610 = vsel %vm599, %v374, 0
      %v613 = vsel %vm599, %v382, 0
      %v616 = vsel %vm599, %v390, 0
      %v619 = vsel %vm599, %v398, 0
      %v622 = vsel %vm599, %v406, 0
      %v625 = vsel %vm599, %v414, 0
      %v628 = vsel %vm599, %v422, 0
      %v631 = vsel %vm599, %v430, 0
      %v634 = vsel %vm599, %v438, 0
      %v637 = vsel %vm599, %v446, 0
      %v640 = vsel %vm599, %v454, 0
      %v643 = vsel %vm599, %v462, 0
      %v646 = vsel %vm599, %v470, 0
      %v649 = vsel %vm599, %v478, 0
      %v652 = vsel %vm599, %v486, 0
      %v655 = vsel %vm599, %v494, 0
      %v658 = vsel %vm599, %v502, 0
      %v661 = vsel %vm599, %v510, 0
      %v664 = vsel %vm599, %v518, 0
      %v667 = vsel %vm599, %v526, 0
      %v670 = vsel %vm599, %v534, 0
      %v673 = vsel %vm599, %v542, 0
      %v676 = vsel %vm599, %v550, 0
      %v679 = vsel %vm599, %v558, 0
      %v682 = vsel %vm599, %v566, 0
      %v685 = vsel %vm599, %v574, 0
      %v688 = vsel %vm599, %v582, 0
      %v691 = vsel %vm599, %v590, 0
      %v694 = vsel %vm599, %v598, 0
      %vm696 = vcmask 1041408
      %v698 = vsel %vm696, %v337, 0
      %700 = vmatprep.subr.bf16.mxu0 0
      %701 = vmatpush1.bf16.msra.mxu0 %v698
      %702 = vmatprep.subr.bf16.mxu0 0
      %703 = vmatpush1.bf16.msra.mxu0 0
      %704 = vmatprep.subr.bf16.mxu0 0
      %705 = vmatpush1.bf16.msra.mxu0 0
      %706 = vmatprep.subr.bf16.mxu0 0
      %707 = vmatpush1.bf16.msra.mxu0 0
      %708 = vmatprep.subr.bf16.mxu0 0
      %709 = vmatpush1.bf16.msra.mxu0 0
      %710 = vmatprep.subr.bf16.mxu0 0
      %711 = vmatpush1.bf16.msra.mxu0 0
      %712 = vmatprep.subr.bf16.mxu0 0
      %713 = vmatpush1.bf16.msra.mxu0 0
      %714 = vmatprep.subr.bf16.mxu0 0
      %715 = vmatpush1.bf16.msra.mxu0 0
      %716 = vmatprep.subr.bf16.mxu0 0
      %717 = vmatpush1.bf16.msra.mxu0 0
      %718 = vmatprep.subr.bf16.mxu0 0
      %719 = vmatpush1.bf16.msra.mxu0 0
      %720 = vmatprep.subr.bf16.mxu0 0
      %721 = vmatpush1.bf16.msra.mxu0 0
      %722 = vmatprep.subr.bf16.mxu0 0
      %723 = vmatpush1.bf16.msra.mxu0 0
      %724 = vmatprep.subr.bf16.mxu0 0
      %725 = vmatpush1.bf16.msra.mxu0 0
      %726 = vmatprep.subr.bf16.mxu0 0
      %727 = vmatpush1.bf16.msra.mxu0 0
      %728 = vmatprep.subr.bf16.mxu0 0
      %729 = vmatpush1.bf16.msra.mxu0 0
      %730 = vmatprep.subr.bf16.mxu0 0
      %731 = vmatpush1.bf16.msra.mxu0 0
      %732 = vmatprep.mubr.bf16.mxu0 0
      %733 = vmatmul.mubr.bf16.gmra.mrb[0].mxu0 %v601
      %v734 = vpop.f32.mrb[0].mxu0
      %v735 = vadd.f32 0.0, %v734
      %v736 = vpop.f32.mrb[0].mxu0
      %v737 = vpop.f32.mrb[0].mxu0
      %v738 = vadd.f32 0.0, %v737
      %v739 = vpop.f32.mrb[0].mxu0
      %740 = vmatprep.mubr.bf16.mxu0 0
      %741 = vmatmul.mubr.bf16.gmra.mrb[0].mxu0 %v604
      %v742 = vpop.f32.mrb[0].mxu0
      %v743 = vadd.f32 0.0, %v742
      %v744 = vpop.f32.mrb[0].mxu0
      %v745 = vpop.f32.mrb[0].mxu0
      %v746 = vadd.f32 0.0, %v745
      %v747 = vpop.f32.mrb[0].mxu0
      %748 = vmatprep.mubr.bf16.mxu0 0
      %749 = vmatmul.mubr.bf16.gmra.mrb[0].mxu0 %v607
      %v750 = vpop.f32.mrb[0].mxu0
      %v751 = vadd.f32 0.0, %v750
      %v752 = vpop.f32.mrb[0].mxu0
      %v753 = vpop.f32.mrb[0].mxu0
      %v754 = vadd.f32 0.0, %v753
      %v755 = vpop.f32.mrb[0].mxu0
      %756 = vmatprep.mubr.bf16.mxu0 0
      %757 = vmatmul.mubr.bf16.gmra.mrb[0].mxu0 %v610
      %v758 = vpop.f32.mrb[0].mxu0
      %v759 = vadd.f32 0.0, %v758
      %v760 = vpop.f32.mrb[0].mxu0
      %v761 = vpop.f32.mrb[0].mxu0
      %v762 = vadd.f32 0.0, %v761
      %v763 = vpop.f32.mrb[0].mxu0
      %764 = vmatprep.mubr.bf16.mxu0 0
      %765 = vmatmul.mubr.bf16.gmra.mrb[0].mxu0 %v613
      %v766 = vpop.f32.mrb[0].mxu0
      %v767 = vadd.f32 0.0, %v766
      %v768 = vpop.f32.mrb[0].mxu0
      %v769 = vpop.f32.mrb[0].mxu0
      %v770 = vadd.f32 0.0, %v769
      %v771 = vpop.f32.mrb[0].mxu0
      %772 = vmatprep.mubr.bf16.mxu0 0
      %773 = vmatmul.mubr.bf16.gmra.mrb[0].mxu0 %v616
      %v774 = vpop.f32.mrb[0].mxu0
      %v775 = vadd.f32 0.0, %v774
      %v776 = vpop.f32.mrb[0].mxu0
      %v777 = vpop.f32.mrb[0].mxu0
      %v778 = vadd.f32 0.0, %v777
      %v779 = vpop.f32.mrb[0].mxu0
      %780 = vmatprep.mubr.bf16.mxu0 0
      %781 = vmatmul.mubr.bf16.gmra.mrb[0].mxu0 %v619
      %v782 = vpop.f32.mrb[0].mxu0
      %v783 = vadd.f32 0.0, %v782
      %v784 = vpop.f32.mrb[0].mxu0
      %v785 = vpop.f32.mrb[0].mxu0
      %v786 = vadd.f32 0.0, %v785
      %v787 = vpop.f32.mrb[0].mxu0
      %788 = vmatprep.mubr.bf16.mxu0 0
      %789 = vmatmul.mubr.bf16.gmra.mrb[0].mxu0 %v622
      %v790 = vpop.f32.mrb[0].mxu0
      %v791 = vadd.f32 0.0, %v790
      %v792 = vpop.f32.mrb[0].mxu0
      %v793 = vpop.f32.mrb[0].mxu0
      %v794 = vadd.f32 0.0, %v793
      %v795 = vpop.f32.mrb[0].mxu0
      %796 = vmatprep.mubr.bf16.mxu0 0
      %797 = vmatmul.mubr.bf16.gmra.mrb[0].mxu0 %v625
      %v798 = vpop.f32.mrb[0].mxu0
      %v799 = vadd.f32 0.0, %v798
      %v800 = vpop.f32.mrb[0].mxu0
      %v801 = vpop.f32.mrb[0].mxu0
      %v802 = vadd.f32 0.0, %v801
      %v803 = vpop.f32.mrb[0].mxu0
      %804 = vmatprep.mubr.bf16.mxu0 0
      %805 = vmatmul.mubr.bf16.gmra.mrb[0].mxu0 %v628
      %v806 = vpop.f32.mrb[0].mxu0
      %v807 = vadd.f32 0.0, %v806
      %v808 = vpop.f32.mrb[0].mxu0
      %v809 = vpop.f32.mrb[0].mxu0
      %v810 = vadd.f32 0.0, %v809
      %v811 = vpop.f32.mrb[0].mxu0
      %812 = vmatprep.mubr.bf16.mxu0 0
      %813 = vmatmul.mubr.bf16.gmra.mrb[0].mxu0 %v631
      %v814 = vpop.f32.mrb[0].mxu0
      %v815 = vadd.f32 0.0, %v814
      %v816 = vpop.f32.mrb[0].mxu0
      %v817 = vpop.f32.mrb[0].mxu0
      %v818 = vadd.f32 0.0, %v817
      %v819 = vpop.f32.mrb[0].mxu0
      %820 = vmatprep.mubr.bf16.mxu0 0
      %821 = vmatmul.mubr.bf16.gmra.mrb[0].mxu0 %v634
      %v822 = vpop.f32.mrb[0].mxu0
      %v823 = vadd.f32 0.0, %v822
      %v824 = vpop.f32.mrb[0].mxu0
      %v825 = vpop.f32.mrb[0].mxu0
      %v826 = vadd.f32 0.0, %v825
      %v827 = vpop.f32.mrb[0].mxu0
      %828 = vmatprep.mubr.bf16.mxu0 0
      %829 = vmatmul.mubr.bf16.gmra.mrb[0].mxu0 %v637
      %v830 = vpop.f32.mrb[0].mxu0
      %v831 = vadd.f32 0.0, %v830
      %v832 = vpop.f32.mrb[0].mxu0
      %v833 = vpop.f32.mrb[0].mxu0
      %v834 = vadd.f32 0.0, %v833
      %v835 = vpop.f32.mrb[0].mxu0
      %836 = vmatprep.mubr.bf16.mxu0 0
      %837 = vmatmul.mubr.bf16.gmra.mrb[0].mxu0 %v640
      %v838 = vpop.f32.mrb[0].mxu0
      %v839 = vadd.f32 0.0, %v838
      %v840 = vpop.f32.mrb[0].mxu0
      %v841 = vpop.f32.mrb[0].mxu0
      %v842 = vadd.f32 0.0, %v841
      %v843 = vpop.f32.mrb[0].mxu0
      %844 = vmatprep.mubr.bf16.mxu0 0
      %845 = vmatmul.mubr.bf16.gmra.mrb[0].mxu0 %v643
      %v846 = vpop.f32.mrb[0].mxu0
      %v847 = vadd.f32 0.0, %v846
      %v848 = vpop.f32.mrb[0].mxu0
      %v849 = vpop.f32.mrb[0].mxu0
      %v850 = vadd.f32 0.0, %v849
      %v851 = vpop.f32.mrb[0].mxu0
      %852 = vmatprep.mubr.bf16.mxu0 0
      %853 = vmatmul.mubr.bf16.gmra.mrb[0].mxu0 %v646
      %v854 = vpop.f32.mrb[0].mxu0
      %v855 = vadd.f32 0.0, %v854
      %v856 = vpop.f32.mrb[0].mxu0
      %v857 = vpop.f32.mrb[0].mxu0
      %v858 = vadd.f32 0.0, %v857
      %v859 = vpop.f32.mrb[0].mxu0
      %860 = vmatprep.mubr.bf16.mxu0 0
      %861 = vmatmul.mubr.bf16.gmra.mrb[0].mxu0 %v649
      %v862 = vpop.f32.mrb[0].mxu0
      %v863 = vadd.f32 0.0, %v862
      %v864 = vpop.f32.mrb[0].mxu0
      %v865 = vpop.f32.mrb[0].mxu0
      %v866 = vadd.f32 0.0, %v865
      %v867 = vpop.f32.mrb[0].mxu0
      %868 = vmatprep.mubr.bf16.mxu0 0
      %869 = vmatmul.mubr.bf16.gmra.mrb[0].mxu0 %v652
      %v870 = vpop.f32.mrb[0].mxu0
      %v871 = vadd.f32 0.0, %v870
      %v872 = vpop.f32.mrb[0].mxu0
      %v873 = vpop.f32.mrb[0].mxu0
      %v874 = vadd.f32 0.0, %v873
      %v875 = vpop.f32.mrb[0].mxu0
      %876 = vmatprep.mubr.bf16.mxu0 0
      %877 = vmatmul.mubr.bf16.gmra.mrb[0].mxu0 %v655
      %v878 = vpop.f32.mrb[0].mxu0
      %v879 = vadd.f32 0.0, %v878
      %v880 = vpop.f32.mrb[0].mxu0
      %v881 = vpop.f32.mrb[0].mxu0
      %v882 = vadd.f32 0.0, %v881
      %v883 = vpop.f32.mrb[0].mxu0
      %884 = vmatprep.mubr.bf16.mxu0 0
      %885 = vmatmul.mubr.bf16.gmra.mrb[0].mxu0 %v658
      %v886 = vpop.f32.mrb[0].mxu0
      %v887 = vadd.f32 0.0, %v886
      %v888 = vpop.f32.mrb[0].mxu0
      %v889 = vpop.f32.mrb[0].mxu0
      %v890 = vadd.f32 0.0, %v889
      %v891 = vpop.f32.mrb[0].mxu0
      %892 = vmatprep.mubr.bf16.mxu0 0
      %893 = vmatmul.mubr.bf16.gmra.mrb[0].mxu0 %v661
      %v894 = vpop.f32.mrb[0].mxu0
      %v895 = vadd.f32 0.0, %v894
      %v896 = vpop.f32.mrb[0].mxu0
      %v897 = vpop.f32.mrb[0].mxu0
      %v898 = vadd.f32 0.0, %v897
      %v899 = vpop.f32.mrb[0].mxu0
      %900 = vmatprep.mubr.bf16.mxu0 0
      %901 = vmatmul.mubr.bf16.gmra.mrb[0].mxu0 %v664
      %v902 = vpop.f32.mrb[0].mxu0
      %v903 = vadd.f32 0.0, %v902
      %v904 = vpop.f32.mrb[0].mxu0
      %v905 = vpop.f32.mrb[0].mxu0
      %v906 = vadd.f32 0.0, %v905
      %v907 = vpop.f32.mrb[0].mxu0
      %908 = vmatprep.mubr.bf16.mxu0 0
      %909 = vmatmul.mubr.bf16.gmra.mrb[0].mxu0 %v667
      %v910 = vpop.f32.mrb[0].mxu0
      %v911 = vadd.f32 0.0, %v910
      %v912 = vpop.f32.mrb[0].mxu0
      %v913 = vpop.f32.mrb[0].mxu0
      %v914 = vadd.f32 0.0, %v913
      %v915 = vpop.f32.mrb[0].mxu0
      %916 = vmatprep.mubr.bf16.mxu0 0
      %917 = vmatmul.mubr.bf16.gmra.mrb[0].mxu0 %v670
      %v918 = vpop.f32.mrb[0].mxu0
      %v919 = vadd.f32 0.0, %v918
      %v920 = vpop.f32.mrb[0].mxu0
      %v921 = vpop.f32.mrb[0].mxu0
      %v922 = vadd.f32 0.0, %v921
      %v923 = vpop.f32.mrb[0].mxu0
      %924 = vmatprep.mubr.bf16.mxu0 0
      %925 = vmatmul.mubr.bf16.gmra.mrb[0].mxu0 %v673
      %v926 = vpop.f32.mrb[0].mxu0
      %v927 = vadd.f32 0.0, %v926
      %v928 = vpop.f32.mrb[0].mxu0
      %v929 = vpop.f32.mrb[0].mxu0
      %v930 = vadd.f32 0.0, %v929
      %v931 = vpop.f32.mrb[0].mxu0
      %932 = vmatprep.mubr.bf16.mxu0 0
      %933 = vmatmul.mubr.bf16.gmra.mrb[0].mxu0 %v676
      %v934 = vpop.f32.mrb[0].mxu0
      %v935 = vadd.f32 0.0, %v934
      %v936 = vpop.f32.mrb[0].mxu0
      %v937 = vpop.f32.mrb[0].mxu0
      %v938 = vadd.f32 0.0, %v937
      %v939 = vpop.f32.mrb[0].mxu0
      %940 = vmatprep.mubr.bf16.mxu0 0
      %941 = vmatmul.mubr.bf16.gmra.mrb[0].mxu0 %v679
      %v942 = vpop.f32.mrb[0].mxu0
      %v943 = vadd.f32 0.0, %v942
      %v944 = vpop.f32.mrb[0].mxu0
      %v945 = vpop.f32.mrb[0].mxu0
      %v946 = vadd.f32 0.0, %v945
      %v947 = vpop.f32.mrb[0].mxu0
      %948 = vmatprep.mubr.bf16.mxu0 0
      %949 = vmatmul.mubr.bf16.gmra.mrb[0].mxu0 %v682
      %v950 = vpop.f32.mrb[0].mxu0
      %v951 = vadd.f32 0.0, %v950
      %v952 = vpop.f32.mrb[0].mxu0
      %v953 = vpop.f32.mrb[0].mxu0
      %v954 = vadd.f32 0.0, %v953
      %v955 = vpop.f32.mrb[0].mxu0
      %956 = vmatprep.mubr.bf16.mxu0 0
      %957 = vmatmul.mubr.bf16.gmra.mrb[0].mxu0 %v685
      %v958 = vpop.f32.mrb[0].mxu0
      %v959 = vadd.f32 0.0, %v958
      %v960 = vpop.f32.mrb[0].mxu0
      %v961 = vpop.f32.mrb[0].mxu0
      %v962 = vadd.f32 0.0, %v961
      %v963 = vpop.f32.mrb[0].mxu0
      %964 = vmatprep.mubr.bf16.mxu0 0
      %965 = vmatmul.mubr.bf16.gmra.mrb[0].mxu0 %v688
      %v966 = vpop.f32.mrb[0].mxu0
      %v967 = vadd.f32 0.0, %v966
      %v968 = vpop.f32.mrb[0].mxu0
      %v969 = vpop.f32.mrb[0].mxu0
      %v970 = vadd.f32 0.0, %v969
      %v971 = vpop.f32.mrb[0].mxu0
      %972 = vmatprep.mubr.bf16.mxu0 0
      %973 = vmatmul.mubr.bf16.gmra.mrb[0].mxu0 %v691
      %v974 = vpop.f32.mrb[0].mxu0
      %v975 = vadd.f32 0.0, %v974
      %v976 = vpop.f32.mrb[0].mxu0
      %v977 = vpop.f32.mrb[0].mxu0
      %v978 = vadd.f32 0.0, %v977
      %v979 = vpop.f32.mrb[0].mxu0
      %980 = vmatprep.mubr.bf16.mxu0 0
      %981 = vmatmul.mubr.bf16.gmra.mrb[0].mxu0 %v694
      %v982 = vpop.f32.mrb[0].mxu0
      %v983 = vadd.f32 0.0, %v982
      %v984 = vpop.f32.mrb[0].mxu0
      %v985 = vpop.f32.mrb[0].mxu0
      %v986 = vadd.f32 0.0, %v985
      %v987 = vpop.f32.mrb[0].mxu0
      %988 = vdwg.mxu0
      %v989 = vsel %vm599, %v302, 0
      %v991 = vsel %vm599, %v303, 0
      %v993 = vsel %vm599, %v304, 0
      %v995 = vsel %vm599, %v305, 0
      %v997 = vsel %vm599, %v306, 0
      %v999 = vsel %vm599, %v307, 0
      %v1001 = vsel %vm599, %v308, 0
      %v1003 = vsel %vm599, %v309, 0
      %v1005 = vsel %vm599, %v310, 0
      %v1007 = vsel %vm599, %v311, 0
      %v1009 = vsel %vm599, %v312, 0
      %v1011 = vsel %vm599, %v313, 0
      %v1013 = vsel %vm599, %v314, 0
      %v1015 = vsel %vm599, %v315, 0
      %v1017 = vsel %vm599, %v316, 0
      %v1019 = vsel %vm599, %v317, 0
      %v1021 = vsel %vm599, %v318, 0
      %v1023 = vsel %vm599, %v319, 0
      %v1025 = vsel %vm599, %v320, 0
      %v1027 = vsel %vm599, %v321, 0
      %v1029 = vsel %vm599, %v322, 0
      %v1031 = vsel %vm599, %v323, 0
      %v1033 = vsel %vm599, %v324, 0
      %v1035 = vsel %vm599, %v325, 0
      %v1037 = vsel %vm599, %v326, 0
      %v1039 = vsel %vm599, %v327, 0
      %v1041 = vsel %vm599, %v328, 0
      %v1043 = vsel %vm599, %v329, 0
      %v1045 = vsel %vm599, %v330, 0
      %v1047 = vsel %vm599, %v331, 0
      %v1049 = vsel %vm599, %v332, 0
      %v1051 = vsel %vm599, %v333, 0
      %v1054 = vsel %vm696, %v334, 0
      %1056 = vmatprep.subr.bf16.mxu0 0
      %1057 = vmatpush1.bf16.msra.mxu0 %v1054
      %1058 = vmatprep.subr.bf16.mxu0 0
      %1059 = vmatpush1.bf16.msra.mxu0 0
      %1060 = vmatprep.subr.bf16.mxu0 0
      %1061 = vmatpush1.bf16.msra.mxu0 0
      %1062 = vmatprep.subr.bf16.mxu0 0
      %1063 = vmatpush1.bf16.msra.mxu0 0
      %1064 = vmatprep.subr.bf16.mxu0 0
      %1065 = vmatpush1.bf16.msra.mxu0 0
      %1066 = vmatprep.subr.bf16.mxu0 0
      %1067 = vmatpush1.bf16.msra.mxu0 0
      %1068 = vmatprep.subr.bf16.mxu0 0
      %1069 = vmatpush1.bf16.msra.mxu0 0
      %1070 = vmatprep.subr.bf16.mxu0 0
      %1071 = vmatpush1.bf16.msra.mxu0 0
      %1072 = vmatprep.subr.bf16.mxu0 0
      %1073 = vmatpush1.bf16.msra.mxu0 0
      %1074 = vmatprep.subr.bf16.mxu0 0
      %1075 = vmatpush1.bf16.msra.mxu0 0
      %1076 = vmatprep.subr.bf16.mxu0 0
      %1077 = vmatpush1.bf16.msra.mxu0 0
      %1078 = vmatprep.subr.bf16.mxu0 0
      %1079 = vmatpush1.bf16.msra.mxu0 0
      %1080 = vmatprep.subr.bf16.mxu0 0
      %1081 = vmatpush1.bf16.msra.mxu0 0
      %1082 = vmatprep.subr.bf16.mxu0 0
      %1083 = vmatpush1.bf16.msra.mxu0 0
      %1084 = vmatprep.subr.bf16.mxu0 0
      %1085 = vmatpush1.bf16.msra.mxu0 0
      %1086 = vmatprep.subr.bf16.mxu0 0
      %1087 = vmatpush1.bf16.msra.mxu0 0
      %1088 = vmatprep.mubr.bf16.mxu0 0
      %1089 = vmatmul.mubr.bf16.gmra.mrb[0].mxu0 %v989
      %v1090 = vpop.f32.mrb[0].mxu0
      %v1091 = vadd.f32 %v735, %v1090
      %v1092 = vpop.f32.mrb[0].mxu0
      %v1093 = vpop.f32.mrb[0].mxu0
      %v1094 = vadd.f32 %v738, %v1093
      %v1095 = vpop.f32.mrb[0].mxu0
      %1096 = vmatprep.mubr.bf16.mxu0 0
      %1097 = vmatmul.mubr.bf16.gmra.mrb[0].mxu0 %v991
      %v1098 = vpop.f32.mrb[0].mxu0
      %v1099 = vadd.f32 %v743, %v1098
      %v1100 = vpop.f32.mrb[0].mxu0
      %v1101 = vpop.f32.mrb[0].mxu0
      %v1102 = vadd.f32 %v746, %v1101
      %v1103 = vpop.f32.mrb[0].mxu0
      %1104 = vmatprep.mubr.bf16.mxu0 0
      %1105 = vmatmul.mubr.bf16.gmra.mrb[0].mxu0 %v993
      %v1106 = vpop.f32.mrb[0].mxu0
      %v1107 = vadd.f32 %v751, %v1106
      %v1108 = vpop.f32.mrb[0].mxu0
      %v1109 = vpop.f32.mrb[0].mxu0
      %v1110 = vadd.f32 %v754, %v1109
      %v1111 = vpop.f32.mrb[0].mxu0
      %1112 = vmatprep.mubr.bf16.mxu0 0
      %1113 = vmatmul.mubr.bf16.gmra.mrb[0].mxu0 %v995
      %v1114 = vpop.f32.mrb[0].mxu0
      %v1115 = vadd.f32 %v759, %v1114
      %v1116 = vpop.f32.mrb[0].mxu0
      %v1117 = vpop.f32.mrb[0].mxu0
      %v1118 = vadd.f32 %v762, %v1117
      %v1119 = vpop.f32.mrb[0].mxu0
      %1120 = vmatprep.mubr.bf16.mxu0 0
      %1121 = vmatmul.mubr.bf16.gmra.mrb[0].mxu0 %v997
      %v1122 = vpop.f32.mrb[0].mxu0
      %v1123 = vadd.f32 %v767, %v1122
      %v1124 = vpop.f32.mrb[0].mxu0
      %v1125 = vpop.f32.mrb[0].mxu0
      %v1126 = vadd.f32 %v770, %v1125
      %v1127 = vpop.f32.mrb[0].mxu0
      %1128 = vmatprep.mubr.bf16.mxu0 0
      %1129 = vmatmul.mubr.bf16.gmra.mrb[0].mxu0 %v999
      %v1130 = vpop.f32.mrb[0].mxu0
      %v1131 = vadd.f32 %v775, %v1130
      %v1132 = vpop.f32.mrb[0].mxu0
      %v1133 = vpop.f32.mrb[0].mxu0
      %v1134 = vadd.f32 %v778, %v1133
      %v1135 = vpop.f32.mrb[0].mxu0
      %1136 = vmatprep.mubr.bf16.mxu0 0
      %1137 = vmatmul.mubr.bf16.gmra.mrb[0].mxu0 %v1001
      %v1138 = vpop.f32.mrb[0].mxu0
      %v1139 = vadd.f32 %v783, %v1138
      %v1140 = vpop.f32.mrb[0].mxu0
      %v1141 = vpop.f32.mrb[0].mxu0
      %v1142 = vadd.f32 %v786, %v1141
      %v1143 = vpop.f32.mrb[0].mxu0
      %1144 = vmatprep.mubr.bf16.mxu0 0
      %1145 = vmatmul.mubr.bf16.gmra.mrb[0].mxu0 %v1003
      %v1146 = vpop.f32.mrb[0].mxu0
      %v1147 = vadd.f32 %v791, %v1146
      %v1148 = vpop.f32.mrb[0].mxu0
      %v1149 = vpop.f32.mrb[0].mxu0
      %v1150 = vadd.f32 %v794, %v1149
      %v1151 = vpop.f32.mrb[0].mxu0
      %1152 = vmatprep.mubr.bf16.mxu0 0
      %1153 = vmatmul.mubr.bf16.gmra.mrb[0].mxu0 %v1005
      %v1154 = vpop.f32.mrb[0].mxu0
      %v1155 = vadd.f32 %v799, %v1154
      %v1156 = vpop.f32.mrb[0].mxu0
      %v1157 = vpop.f32.mrb[0].mxu0
      %v1158 = vadd.f32 %v802, %v1157
      %v1159 = vpop.f32.mrb[0].mxu0
      %1160 = vmatprep.mubr.bf16.mxu0 0
      %1161 = vmatmul.mubr.bf16.gmra.mrb[0].mxu0 %v1007
      %v1162 = vpop.f32.mrb[0].mxu0
      %v1163 = vadd.f32 %v807, %v1162
      %v1164 = vpop.f32.mrb[0].mxu0
      %v1165 = vpop.f32.mrb[0].mxu0
      %v1166 = vadd.f32 %v810, %v1165
      %v1167 = vpop.f32.mrb[0].mxu0
      %1168 = vmatprep.mubr.bf16.mxu0 0
      %1169 = vmatmul.mubr.bf16.gmra.mrb[0].mxu0 %v1009
      %v1170 = vpop.f32.mrb[0].mxu0
      %v1171 = vadd.f32 %v815, %v1170
      %v1172 = vpop.f32.mrb[0].mxu0
      %v1173 = vpop.f32.mrb[0].mxu0
      %v1174 = vadd.f32 %v818, %v1173
      %v1175 = vpop.f32.mrb[0].mxu0
      %1176 = vmatprep.mubr.bf16.mxu0 0
      %1177 = vmatmul.mubr.bf16.gmra.mrb[0].mxu0 %v1011
      %v1178 = vpop.f32.mrb[0].mxu0
      %v1179 = vadd.f32 %v823, %v1178
      %v1180 = vpop.f32.mrb[0].mxu0
      %v1181 = vpop.f32.mrb[0].mxu0
      %v1182 = vadd.f32 %v826, %v1181
      %v1183 = vpop.f32.mrb[0].mxu0
      %1184 = vmatprep.mubr.bf16.mxu0 0
      %1185 = vmatmul.mubr.bf16.gmra.mrb[0].mxu0 %v1013
      %v1186 = vpop.f32.mrb[0].mxu0
      %v1187 = vadd.f32 %v831, %v1186
      %v1188 = vpop.f32.mrb[0].mxu0
      %v1189 = vpop.f32.mrb[0].mxu0
      %v1190 = vadd.f32 %v834, %v1189
      %v1191 = vpop.f32.mrb[0].mxu0
      %1192 = vmatprep.mubr.bf16.mxu0 0
      %1193 = vmatmul.mubr.bf16.gmra.mrb[0].mxu0 %v1015
      %v1194 = vpop.f32.mrb[0].mxu0
      %v1195 = vadd.f32 %v839, %v1194
      %v1196 = vpop.f32.mrb[0].mxu0
      %v1197 = vpop.f32.mrb[0].mxu0
      %v1198 = vadd.f32 %v842, %v1197
      %v1199 = vpop.f32.mrb[0].mxu0
      %1200 = vmatprep.mubr.bf16.mxu0 0
      %1201 = vmatmul.mubr.bf16.gmra.mrb[0].mxu0 %v1017
      %v1202 = vpop.f32.mrb[0].mxu0
      %v1203 = vadd.f32 %v847, %v1202
      %v1204 = vpop.f32.mrb[0].mxu0
      %v1205 = vpop.f32.mrb[0].mxu0
      %v1206 = vadd.f32 %v850, %v1205
      %v1207 = vpop.f32.mrb[0].mxu0
      %1208 = vmatprep.mubr.bf16.mxu0 0
      %1209 = vmatmul.mubr.bf16.gmra.mrb[0].mxu0 %v1019
      %v1210 = vpop.f32.mrb[0].mxu0
      %v1211 = vadd.f32 %v855, %v1210
      %v1212 = vpop.f32.mrb[0].mxu0
      %v1213 = vpop.f32.mrb[0].mxu0
      %v1214 = vadd.f32 %v858, %v1213
      %v1215 = vpop.f32.mrb[0].mxu0
      %1216 = vmatprep.mubr.bf16.mxu0 0
      %1217 = vmatmul.mubr.bf16.gmra.mrb[0].mxu0 %v1021
      %v1218 = vpop.f32.mrb[0].mxu0
      %v1219 = vadd.f32 %v863, %v1218
      %v1220 = vpop.f32.mrb[0].mxu0
      %v1221 = vpop.f32.mrb[0].mxu0
      %v1222 = vadd.f32 %v866, %v1221
      %v1223 = vpop.f32.mrb[0].mxu0
      %1224 = vmatprep.mubr.bf16.mxu0 0
      %1225 = vmatmul.mubr.bf16.gmra.mrb[0].mxu0 %v1023
      %v1226 = vpop.f32.mrb[0].mxu0
      %v1227 = vadd.f32 %v871, %v1226
      %v1228 = vpop.f32.mrb[0].mxu0
      %v1229 = vpop.f32.mrb[0].mxu0
      %v1230 = vadd.f32 %v874, %v1229
      %v1231 = vpop.f32.mrb[0].mxu0
      %1232 = vmatprep.mubr.bf16.mxu0 0
      %1233 = vmatmul.mubr.bf16.gmra.mrb[0].mxu0 %v1025
      %v1234 = vpop.f32.mrb[0].mxu0
      %v1235 = vadd.f32 %v879, %v1234
      %v1236 = vpop.f32.mrb[0].mxu0
      %v1237 = vpop.f32.mrb[0].mxu0
      %v1238 = vadd.f32 %v882, %v1237
      %v1239 = vpop.f32.mrb[0].mxu0
      %1240 = vmatprep.mubr.bf16.mxu0 0
      %1241 = vmatmul.mubr.bf16.gmra.mrb[0].mxu0 %v1027
      %v1242 = vpop.f32.mrb[0].mxu0
      %v1243 = vadd.f32 %v887, %v1242
      %v1244 = vpop.f32.mrb[0].mxu0
      %v1245 = vpop.f32.mrb[0].mxu0
      %v1246 = vadd.f32 %v890, %v1245
      %v1247 = vpop.f32.mrb[0].mxu0
      %1248 = vmatprep.mubr.bf16.mxu0 0
      %1249 = vmatmul.mubr.bf16.gmra.mrb[0].mxu0 %v1029
      %v1250 = vpop.f32.mrb[0].mxu0
      %v1251 = vadd.f32 %v895, %v1250
      %v1252 = vpop.f32.mrb[0].mxu0
      %v1253 = vpop.f32.mrb[0].mxu0
      %v1254 = vadd.f32 %v898, %v1253
      %v1255 = vpop.f32.mrb[0].mxu0
      %1256 = vmatprep.mubr.bf16.mxu0 0
      %1257 = vmatmul.mubr.bf16.gmra.mrb[0].mxu0 %v1031
      %v1258 = vpop.f32.mrb[0].mxu0
      %v1259 = vadd.f32 %v903, %v1258
      %v1260 = vpop.f32.mrb[0].mxu0
      %v1261 = vpop.f32.mrb[0].mxu0
      %v1262 = vadd.f32 %v906, %v1261
      %v1263 = vpop.f32.mrb[0].mxu0
      %1264 = vmatprep.mubr.bf16.mxu0 0
      %1265 = vmatmul.mubr.bf16.gmra.mrb[0].mxu0 %v1033
      %v1266 = vpop.f32.mrb[0].mxu0
      %v1267 = vadd.f32 %v911, %v1266
      %v1268 = vpop.f32.mrb[0].mxu0
      %v1269 = vpop.f32.mrb[0].mxu0
      %v1270 = vadd.f32 %v914, %v1269
      %v1271 = vpop.f32.mrb[0].mxu0
      %1272 = vmatprep.mubr.bf16.mxu0 0
      %1273 = vmatmul.mubr.bf16.gmra.mrb[0].mxu0 %v1035
      %v1274 = vpop.f32.mrb[0].mxu0
      %v1275 = vadd.f32 %v919, %v1274
      %v1276 = vpop.f32.mrb[0].mxu0
      %v1277 = vpop.f32.mrb[0].mxu0
      %v1278 = vadd.f32 %v922, %v1277
      %v1279 = vpop.f32.mrb[0].mxu0
      %1280 = vmatprep.mubr.bf16.mxu0 0
      %1281 = vmatmul.mubr.bf16.gmra.mrb[0].mxu0 %v1037
      %v1282 = vpop.f32.mrb[0].mxu0
      %v1283 = vadd.f32 %v927, %v1282
      %v1284 = vpop.f32.mrb[0].mxu0
      %v1285 = vpop.f32.mrb[0].mxu0
      %v1286 = vadd.f32 %v930, %v1285
      %v1287 = vpop.f32.mrb[0].mxu0
      %1288 = vmatprep.mubr.bf16.mxu0 0
      %1289 = vmatmul.mubr.bf16.gmra.mrb[0].mxu0 %v1039
      %v1290 = vpop.f32.mrb[0].mxu0
      %v1291 = vadd.f32 %v935, %v1290
      %v1292 = vpop.f32.mrb[0].mxu0
      %v1293 = vpop.f32.mrb[0].mxu0
      %v1294 = vadd.f32 %v938, %v1293
      %v1295 = vpop.f32.mrb[0].mxu0
      %1296 = vmatprep.mubr.bf16.mxu0 0
      %1297 = vmatmul.mubr.bf16.gmra.mrb[0].mxu0 %v1041
      %v1298 = vpop.f32.mrb[0].mxu0
      %v1299 = vadd.f32 %v943, %v1298
      %v1300 = vpop.f32.mrb[0].mxu0
      %v1301 = vpop.f32.mrb[0].mxu0
      %v1302 = vadd.f32 %v946, %v1301
      %v1303 = vpop.f32.mrb[0].mxu0
      %1304 = vmatprep.mubr.bf16.mxu0 0
      %1305 = vmatmul.mubr.bf16.gmra.mrb[0].mxu0 %v1043
      %v1306 = vpop.f32.mrb[0].mxu0
      %v1307 = vadd.f32 %v951, %v1306
      %v1308 = vpop.f32.mrb[0].mxu0
      %v1309 = vpop.f32.mrb[0].mxu0
      %v1310 = vadd.f32 %v954, %v1309
      %v1311 = vpop.f32.mrb[0].mxu0
      %1312 = vmatprep.mubr.bf16.mxu0 0
      %1313 = vmatmul.mubr.bf16.gmra.mrb[0].mxu0 %v1045
      %v1314 = vpop.f32.mrb[0].mxu0
      %v1315 = vadd.f32 %v959, %v1314
      %v1316 = vpop.f32.mrb[0].mxu0
      %v1317 = vpop.f32.mrb[0].mxu0
      %v1318 = vadd.f32 %v962, %v1317
      %v1319 = vpop.f32.mrb[0].mxu0
      %1320 = vmatprep.mubr.bf16.mxu0 0
      %1321 = vmatmul.mubr.bf16.gmra.mrb[0].mxu0 %v1047
      %v1322 = vpop.f32.mrb[0].mxu0
      %v1323 = vadd.f32 %v967, %v1322
      %v1324 = vpop.f32.mrb[0].mxu0
      %v1325 = vpop.f32.mrb[0].mxu0
      %v1326 = vadd.f32 %v970, %v1325
      %v1327 = vpop.f32.mrb[0].mxu0
      %1328 = vmatprep.mubr.bf16.mxu0 0
      %1329 = vmatmul.mubr.bf16.gmra.mrb[0].mxu0 %v1049
      %v1330 = vpop.f32.mrb[0].mxu0
      %v1331 = vadd.f32 %v975, %v1330
      %v1332 = vpop.f32.mrb[0].mxu0
      %v1333 = vpop.f32.mrb[0].mxu0
      %v1334 = vadd.f32 %v978, %v1333
      %v1335 = vpop.f32.mrb[0].mxu0
      %1336 = vmatprep.mubr.bf16.mxu0 0
      %1337 = vmatmul.mubr.bf16.gmra.mrb[0].mxu0 %v1051
      %v1338 = vpop.f32.mrb[0].mxu0
      %v1339 = vadd.f32 %v983, %v1338
      %v1340 = vpop.f32.mrb[0].mxu0
      %v1341 = vpop.f32.mrb[0].mxu0
      %v1342 = vadd.f32 %v986, %v1341
      %v1343 = vpop.f32.mrb[0].mxu0
      %1344 = vdwg.mxu0
      %s1345 = scalar_lea.vmem %s1, 4
      %v1346 = vld [vmem:[%s1345] sm:$0x3]
      %vm1380 = vcmask 1046528
      %v1381 = vrot.slane %v302, 1
      %v1382 = vrot.slane %v303, 1
      %v1383 = vsel %vm1380, %v1381, %v1382
      %v1384 = vrot.slane %v304, 1
      %v1385 = vsel %vm1380, %v1382, %v1384
      %v1386 = vrot.slane %v305, 1
      %v1387 = vsel %vm1380, %v1384, %v1386
      %v1388 = vrot.slane %v306, 1
      %v1389 = vsel %vm1380, %v1386, %v1388
      %v1390 = vrot.slane %v307, 1
      %v1391 = vsel %vm1380, %v1388, %v1390
      %v1392 = vrot.slane %v308, 1
      %v1393 = vsel %vm1380, %v1390, %v1392
      %v1394 = vrot.slane %v309, 1
      %v1395 = vsel %vm1380, %v1392, %v1394
      %v1396 = vrot.slane %v310, 1
      %v1397 = vsel %vm1380, %v1394, %v1396
      %v1398 = vrot.slane %v311, 1
      %v1399 = vsel %vm1380, %v1396, %v1398
      %v1400 = vrot.slane %v312, 1
      %v1401 = vsel %vm1380, %v1398, %v1400
      %v1402 = vrot.slane %v313, 1
      %v1403 = vsel %vm1380, %v1400, %v1402
      %v1404 = vrot.slane %v314, 1
      %v1405 = vsel %vm1380, %v1402, %v1404
      %v1406 = vrot.slane %v315, 1
      %v1407 = vsel %vm1380, %v1404, %v1406
      %v1408 = vrot.slane %v316, 1
      %v1409 = vsel %vm1380, %v1406, %v1408
      %v1410 = vrot.slane %v317, 1
      %v1411 = vsel %vm1380, %v1408, %v1410
      %v1412 = vrot.slane %v318, 1
      %v1413 = vsel %vm1380, %v1410, %v1412
      %v1414 = vrot.slane %v319, 1
      %v1415 = vsel %vm1380, %v1412, %v1414
      %v1416 = vrot.slane %v320, 1
      %v1417 = vsel %vm1380, %v1414, %v1416
      %v1418 = vrot.slane %v321, 1
      %v1419 = vsel %vm1380, %v1416, %v1418
      %v1420 = vrot.slane %v322, 1
      %v1421 = vsel %vm1380, %v1418, %v1420
      %v1422 = vrot.slane %v323, 1
      %v1423 = vsel %vm1380, %v1420, %v1422
      %v1424 = vrot.slane %v324, 1
      %v1425 = vsel %vm1380, %v1422, %v1424
      %v1426 = vrot.slane %v325, 1
      %v1427 = vsel %vm1380, %v1424, %v1426
      %v1428 = vrot.slane %v326, 1
      %v1429 = vsel %vm1380, %v1426, %v1428
      %v1430 = vrot.slane %v327, 1
      %v1431 = vsel %vm1380, %v1428, %v1430
      %v1432 = vrot.slane %v328, 1
      %v1433 = vsel %vm1380, %v1430, %v1432
      %v1434 = vrot.slane %v329, 1
      %v1435 = vsel %vm1380, %v1432, %v1434
      %v1436 = vrot.slane %v330, 1
      %v1437 = vsel %vm1380, %v1434, %v1436
      %v1438 = vrot.slane %v331, 1
      %v1439 = vsel %vm1380, %v1436, %v1438
      %v1440 = vrot.slane %v332, 1
      %v1441 = vsel %vm1380, %v1438, %v1440
      %v1442 = vrot.slane %v333, 1
      %v1443 = vsel %vm1380, %v1440, %v1442
      %v1444 = vrot.slane %v335, 1
      %v1445 = vsel %vm1380, %v1442, %v1444
      %v1447 = vsel %vm599, %v1383, 0
      %v1450 = vsel %vm599, %v1385, 0
      %v1453 = vsel %vm599, %v1387, 0
      %v1456 = vsel %vm599, %v1389, 0
      %v1459 = vsel %vm599, %v1391, 0
      %v1462 = vsel %vm599, %v1393, 0
      %v1465 = vsel %vm599, %v1395, 0
      %v1468 = vsel %vm599, %v1397, 0
      %v1471 = vsel %vm599, %v1399, 0
      %v1474 = vsel %vm599, %v1401, 0
      %v1477 = vsel %vm599, %v1403, 0
      %v1480 = vsel %vm599, %v1405, 0
      %v1483 = vsel %vm599, %v1407, 0
      %v1486 = vsel %vm599, %v1409, 0
      %v1489 = vsel %vm599, %v1411, 0
      %v1492 = vsel %vm599, %v1413, 0
      %v1495 = vsel %vm599, %v1415, 0
      %v1498 = vsel %vm599, %v1417, 0
      %v1501 = vsel %vm599, %v1419, 0
      %v1504 = vsel %vm599, %v1421, 0
      %v1507 = vsel %vm599, %v1423, 0
      %v1510 = vsel %vm599, %v1425, 0
      %v1513 = vsel %vm599, %v1427, 0
      %v1516 = vsel %vm599, %v1429, 0
      %v1519 = vsel %vm599, %v1431, 0
      %v1522 = vsel %vm599, %v1433, 0
      %v1525 = vsel %vm599, %v1435, 0
      %v1528 = vsel %vm599, %v1437, 0
      %v1531 = vsel %vm599, %v1439, 0
      %v1534 = vsel %vm599, %v1441, 0
      %v1537 = vsel %vm599, %v1443, 0
      %v1540 = vsel %vm599, %v1445, 0
      %v1543 = vsel %vm696, %v1346, 0
      %1545 = vmatprep.subr.bf16.mxu0 0
      %1546 = vmatpush1.bf16.msra.mxu0 %v1543
      %1547 = vmatprep.subr.bf16.mxu0 0
      %1548 = vmatpush1.bf16.msra.mxu0 0
      %1549 = vmatprep.subr.bf16.mxu0 0
      %1550 = vmatpush1.bf16.msra.mxu0 0
      %1551 = vmatprep.subr.bf16.mxu0 0
      %1552 = vmatpush1.bf16.msra.mxu0 0
      %1553 = vmatprep.subr.bf16.mxu0 0
      %1554 = vmatpush1.bf16.msra.mxu0 0
      %1555 = vmatprep.subr.bf16.mxu0 0
      %1556 = vmatpush1.bf16.msra.mxu0 0
      %1557 = vmatprep.subr.bf16.mxu0 0
      %1558 = vmatpush1.bf16.msra.mxu0 0
      %1559 = vmatprep.subr.bf16.mxu0 0
      %1560 = vmatpush1.bf16.msra.mxu0 0
      %1561 = vmatprep.subr.bf16.mxu0 0
      %1562 = vmatpush1.bf16.msra.mxu0 0
      %1563 = vmatprep.subr.bf16.mxu0 0
      %1564 = vmatpush1.bf16.msra.mxu0 0
      %1565 = vmatprep.subr.bf16.mxu0 0
      %1566 = vmatpush1.bf16.msra.mxu0 0
      %1567 = vmatprep.subr.bf16.mxu0 0
      %1568 = vmatpush1.bf16.msra.mxu0 0
      %1569 = vmatprep.subr.bf16.mxu0 0
      %1570 = vmatpush1.bf16.msra.mxu0 0
      %1571 = vmatprep.subr.bf16.mxu0 0
      %1572 = vmatpush1.bf16.msra.mxu0 0
      %1573 = vmatprep.subr.bf16.mxu0 0
      %1574 = vmatpush1.bf16.msra.mxu0 0
      %1575 = vmatprep.subr.bf16.mxu0 0
      %1576 = vmatpush1.bf16.msra.mxu0 0
      %1577 = vmatprep.mubr.bf16.mxu0 0
      %1578 = vmatmul.mubr.bf16.gmra.mrb[0].mxu0 %v1447
      %v1579 = vpop.f32.mrb[0].mxu0
      %v1580 = vadd.f32 0.0, %v1579
      %v1581 = vpop.f32.mrb[0].mxu0
      %v1582 = vpop.f32.mrb[0].mxu0
      %v1583 = vadd.f32 0.0, %v1582
      %v1584 = vpop.f32.mrb[0].mxu0
      %1585 = vmatprep.mubr.bf16.mxu0 0
      %1586 = vmatmul.mubr.bf16.gmra.mrb[0].mxu0 %v1450
      %v1587 = vpop.f32.mrb[0].mxu0
      %v1588 = vadd.f32 0.0, %v1587
      %v1589 = vpop.f32.mrb[0].mxu0
      %v1590 = vpop.f32.mrb[0].mxu0
      %v1591 = vadd.f32 0.0, %v1590
      %v1592 = vpop.f32.mrb[0].mxu0
      %1593 = vmatprep.mubr.bf16.mxu0 0
      %1594 = vmatmul.mubr.bf16.gmra.mrb[0].mxu0 %v1453
      %v1595 = vpop.f32.mrb[0].mxu0
      %v1596 = vadd.f32 0.0, %v1595
      %v1597 = vpop.f32.mrb[0].mxu0
      %v1598 = vpop.f32.mrb[0].mxu0
      %v1599 = vadd.f32 0.0, %v1598
      %v1600 = vpop.f32.mrb[0].mxu0
      %1601 = vmatprep.mubr.bf16.mxu0 0
      %1602 = vmatmul.mubr.bf16.gmra.mrb[0].mxu0 %v1456
      %v1603 = vpop.f32.mrb[0].mxu0
      %v1604 = vadd.f32 0.0, %v1603
      %v1605 = vpop.f32.mrb[0].mxu0
      %v1606 = vpop.f32.mrb[0].mxu0
      %v1607 = vadd.f32 0.0, %v1606
      %v1608 = vpop.f32.mrb[0].mxu0
      %1609 = vmatprep.mubr.bf16.mxu0 0
      %1610 = vmatmul.mubr.bf16.gmra.mrb[0].mxu0 %v1459
      %v1611 = vpop.f32.mrb[0].mxu0
      %v1612 = vadd.f32 0.0, %v1611
      %v1613 = vpop.f32.mrb[0].mxu0
      %v1614 = vpop.f32.mrb[0].mxu0
      %v1615 = vadd.f32 0.0, %v1614
      %v1616 = vpop.f32.mrb[0].mxu0
      %1617 = vmatprep.mubr.bf16.mxu0 0
      %1618 = vmatmul.mubr.bf16.gmra.mrb[0].mxu0 %v1462
      %v1619 = vpop.f32.mrb[0].mxu0
      %v1620 = vadd.f32 0.0, %v1619
      %v1621 = vpop.f32.mrb[0].mxu0
      %v1622 = vpop.f32.mrb[0].mxu0
      %v1623 = vadd.f32 0.0, %v1622
      %v1624 = vpop.f32.mrb[0].mxu0
      %1625 = vmatprep.mubr.bf16.mxu0 0
      %1626 = vmatmul.mubr.bf16.gmra.mrb[0].mxu0 %v1465
      %v1627 = vpop.f32.mrb[0].mxu0
      %v1628 = vadd.f32 0.0, %v1627
      %v1629 = vpop.f32.mrb[0].mxu0
      %v1630 = vpop.f32.mrb[0].mxu0
      %v1631 = vadd.f32 0.0, %v1630
      %v1632 = vpop.f32.mrb[0].mxu0
      %1633 = vmatprep.mubr.bf16.mxu0 0
      %1634 = vmatmul.mubr.bf16.gmra.mrb[0].mxu0 %v1468
      %v1635 = vpop.f32.mrb[0].mxu0
      %v1636 = vadd.f32 0.0, %v1635
      %v1637 = vpop.f32.mrb[0].mxu0
      %v1638 = vpop.f32.mrb[0].mxu0
      %v1639 = vadd.f32 0.0, %v1638
      %v1640 = vpop.f32.mrb[0].mxu0
      %1641 = vmatprep.mubr.bf16.mxu0 0
      %1642 = vmatmul.mubr.bf16.gmra.mrb[0].mxu0 %v1471
      %v1643 = vpop.f32.mrb[0].mxu0
      %v1644 = vadd.f32 0.0, %v1643
      %v1645 = vpop.f32.mrb[0].mxu0
      %v1646 = vpop.f32.mrb[0].mxu0
      %v1647 = vadd.f32 0.0, %v1646
      %v1648 = vpop.f32.mrb[0].mxu0
      %1649 = vmatprep.mubr.bf16.mxu0 0
      %1650 = vmatmul.mubr.bf16.gmra.mrb[0].mxu0 %v1474
      %v1651 = vpop.f32.mrb[0].mxu0
      %v1652 = vadd.f32 0.0, %v1651
      %v1653 = vpop.f32.mrb[0].mxu0
      %v1654 = vpop.f32.mrb[0].mxu0
      %v1655 = vadd.f32 0.0, %v1654
      %v1656 = vpop.f32.mrb[0].mxu0
      %1657 = vmatprep.mubr.bf16.mxu0 0
      %1658 = vmatmul.mubr.bf16.gmra.mrb[0].mxu0 %v1477
      %v1659 = vpop.f32.mrb[0].mxu0
      %v1660 = vadd.f32 0.0, %v1659
      %v1661 = vpop.f32.mrb[0].mxu0
      %v1662 = vpop.f32.mrb[0].mxu0
      %v1663 = vadd.f32 0.0, %v1662
      %v1664 = vpop.f32.mrb[0].mxu0
      %1665 = vmatprep.mubr.bf16.mxu0 0
      %1666 = vmatmul.mubr.bf16.gmra.mrb[0].mxu0 %v1480
      %v1667 = vpop.f32.mrb[0].mxu0
      %v1668 = vadd.f32 0.0, %v1667
      %v1669 = vpop.f32.mrb[0].mxu0
      %v1670 = vpop.f32.mrb[0].mxu0
      %v1671 = vadd.f32 0.0, %v1670
      %v1672 = vpop.f32.mrb[0].mxu0
      %1673 = vmatprep.mubr.bf16.mxu0 0
      %1674 = vmatmul.mubr.bf16.gmra.mrb[0].mxu0 %v1483
      %v1675 = vpop.f32.mrb[0].mxu0
      %v1676 = vadd.f32 0.0, %v1675
      %v1677 = vpop.f32.mrb[0].mxu0
      %v1678 = vpop.f32.mrb[0].mxu0
      %v1679 = vadd.f32 0.0, %v1678
      %v1680 = vpop.f32.mrb[0].mxu0
      %1681 = vmatprep.mubr.bf16.mxu0 0
      %1682 = vmatmul.mubr.bf16.gmra.mrb[0].mxu0 %v1486
      %v1683 = vpop.f32.mrb[0].mxu0
      %v1684 = vadd.f32 0.0, %v1683
      %v1685 = vpop.f32.mrb[0].mxu0
      %v1686 = vpop.f32.mrb[0].mxu0
      %v1687 = vadd.f32 0.0, %v1686
      %v1688 = vpop.f32.mrb[0].mxu0
      %1689 = vmatprep.mubr.bf16.mxu0 0
      %1690 = vmatmul.mubr.bf16.gmra.mrb[0].mxu0 %v1489
      %v1691 = vpop.f32.mrb[0].mxu0
      %v1692 = vadd.f32 0.0, %v1691
      %v1693 = vpop.f32.mrb[0].mxu0
      %v1694 = vpop.f32.mrb[0].mxu0
      %v1695 = vadd.f32 0.0, %v1694
      %v1696 = vpop.f32.mrb[0].mxu0
      %1697 = vmatprep.mubr.bf16.mxu0 0
      %1698 = vmatmul.mubr.bf16.gmra.mrb[0].mxu0 %v1492
      %v1699 = vpop.f32.mrb[0].mxu0
      %v1700 = vadd.f32 0.0, %v1699
      %v1701 = vpop.f32.mrb[0].mxu0
      %v1702 = vpop.f32.mrb[0].mxu0
      %v1703 = vadd.f32 0.0, %v1702
      %v1704 = vpop.f32.mrb[0].mxu0
      %1705 = vmatprep.mubr.bf16.mxu0 0
      %1706 = vmatmul.mubr.bf16.gmra.mrb[0].mxu0 %v1495
      %v1707 = vpop.f32.mrb[0].mxu0
      %v1708 = vadd.f32 0.0, %v1707
      %v1709 = vpop.f32.mrb[0].mxu0
      %v1710 = vpop.f32.mrb[0].mxu0
      %v1711 = vadd.f32 0.0, %v1710
      %v1712 = vpop.f32.mrb[0].mxu0
      %1713 = vmatprep.mubr.bf16.mxu0 0
      %1714 = vmatmul.mubr.bf16.gmra.mrb[0].mxu0 %v1498
      %v1715 = vpop.f32.mrb[0].mxu0
      %v1716 = vadd.f32 0.0, %v1715
      %v1717 = vpop.f32.mrb[0].mxu0
      %v1718 = vpop.f32.mrb[0].mxu0
      %v1719 = vadd.f32 0.0, %v1718
      %v1720 = vpop.f32.mrb[0].mxu0
      %1721 = vmatprep.mubr.bf16.mxu0 0
      %1722 = vmatmul.mubr.bf16.gmra.mrb[0].mxu0 %v1501
      %v1723 = vpop.f32.mrb[0].mxu0
      %v1724 = vadd.f32 0.0, %v1723
      %v1725 = vpop.f32.mrb[0].mxu0
      %v1726 = vpop.f32.mrb[0].mxu0
      %v1727 = vadd.f32 0.0, %v1726
      %v1728 = vpop.f32.mrb[0].mxu0
      %1729 = vmatprep.mubr.bf16.mxu0 0
      %1730 = vmatmul.mubr.bf16.gmra.mrb[0].mxu0 %v1504
      %v1731 = vpop.f32.mrb[0].mxu0
      %v1732 = vadd.f32 0.0, %v1731
      %v1733 = vpop.f32.mrb[0].mxu0
      %v1734 = vpop.f32.mrb[0].mxu0
      %v1735 = vadd.f32 0.0, %v1734
      %v1736 = vpop.f32.mrb[0].mxu0
      %1737 = vmatprep.mubr.bf16.mxu0 0
      %1738 = vmatmul.mubr.bf16.gmra.mrb[0].mxu0 %v1507
      %v1739 = vpop.f32.mrb[0].mxu0
      %v1740 = vadd.f32 0.0, %v1739
      %v1741 = vpop.f32.mrb[0].mxu0
      %v1742 = vpop.f32.mrb[0].mxu0
      %v1743 = vadd.f32 0.0, %v1742
      %v1744 = vpop.f32.mrb[0].mxu0
      %1745 = vmatprep.mubr.bf16.mxu0 0
      %1746 = vmatmul.mubr.bf16.gmra.mrb[0].mxu0 %v1510
      %v1747 = vpop.f32.mrb[0].mxu0
      %v1748 = vadd.f32 0.0, %v1747
      %v1749 = vpop.f32.mrb[0].mxu0
      %v1750 = vpop.f32.mrb[0].mxu0
      %v1751 = vadd.f32 0.0, %v1750
      %v1752 = vpop.f32.mrb[0].mxu0
      %1753 = vmatprep.mubr.bf16.mxu0 0
      %1754 = vmatmul.mubr.bf16.gmra.mrb[0].mxu0 %v1513
      %v1755 = vpop.f32.mrb[0].mxu0
      %v1756 = vadd.f32 0.0, %v1755
      %v1757 = vpop.f32.mrb[0].mxu0
      %v1758 = vpop.f32.mrb[0].mxu0
      %v1759 = vadd.f32 0.0, %v1758
      %v1760 = vpop.f32.mrb[0].mxu0
      %1761 = vmatprep.mubr.bf16.mxu0 0
      %1762 = vmatmul.mubr.bf16.gmra.mrb[0].mxu0 %v1516
      %v1763 = vpop.f32.mrb[0].mxu0
      %v1764 = vadd.f32 0.0, %v1763
      %v1765 = vpop.f32.mrb[0].mxu0
      %v1766 = vpop.f32.mrb[0].mxu0
      %v1767 = vadd.f32 0.0, %v1766
      %v1768 = vpop.f32.mrb[0].mxu0
      %1769 = vmatprep.mubr.bf16.mxu0 0
      %1770 = vmatmul.mubr.bf16.gmra.mrb[0].mxu0 %v1519
      %v1771 = vpop.f32.mrb[0].mxu0
      %v1772 = vadd.f32 0.0, %v1771
      %v1773 = vpop.f32.mrb[0].mxu0
      %v1774 = vpop.f32.mrb[0].mxu0
      %v1775 = vadd.f32 0.0, %v1774
      %v1776 = vpop.f32.mrb[0].mxu0
      %1777 = vmatprep.mubr.bf16.mxu0 0
      %1778 = vmatmul.mubr.bf16.gmra.mrb[0].mxu0 %v1522
      %v1779 = vpop.f32.mrb[0].mxu0
      %v1780 = vadd.f32 0.0, %v1779
      %v1781 = vpop.f32.mrb[0].mxu0
      %v1782 = vpop.f32.mrb[0].mxu0
      %v1783 = vadd.f32 0.0, %v1782
      %v1784 = vpop.f32.mrb[0].mxu0
      %1785 = vmatprep.mubr.bf16.mxu0 0
      %1786 = vmatmul.mubr.bf16.gmra.mrb[0].mxu0 %v1525
      %v1787 = vpop.f32.mrb[0].mxu0
      %v1788 = vadd.f32 0.0, %v1787
      %v1789 = vpop.f32.mrb[0].mxu0
      %v1790 = vpop.f32.mrb[0].mxu0
      %v1791 = vadd.f32 0.0, %v1790
      %v1792 = vpop.f32.mrb[0].mxu0
      %1793 = vmatprep.mubr.bf16.mxu0 0
      %1794 = vmatmul.mubr.bf16.gmra.mrb[0].mxu0 %v1528
      %v1795 = vpop.f32.mrb[0].mxu0
      %v1796 = vadd.f32 0.0, %v1795
      %v1797 = vpop.f32.mrb[0].mxu0
      %v1798 = vpop.f32.mrb[0].mxu0
      %v1799 = vadd.f32 0.0, %v1798
      %v1800 = vpop.f32.mrb[0].mxu0
      %1801 = vmatprep.mubr.bf16.mxu0 0
      %1802 = vmatmul.mubr.bf16.gmra.mrb[0].mxu0 %v1531
      %v1803 = vpop.f32.mrb[0].mxu0
      %v1804 = vadd.f32 0.0, %v1803
      %v1805 = vpop.f32.mrb[0].mxu0
      %v1806 = vpop.f32.mrb[0].mxu0
      %v1807 = vadd.f32 0.0, %v1806
      %v1808 = vpop.f32.mrb[0].mxu0
      %1809 = vmatprep.mubr.bf16.mxu0 0
      %1810 = vmatmul.mubr.bf16.gmra.mrb[0].mxu0 %v1534
      %v1811 = vpop.f32.mrb[0].mxu0
      %v1812 = vadd.f32 0.0, %v1811
      %v1813 = vpop.f32.mrb[0].mxu0
      %v1814 = vpop.f32.mrb[0].mxu0
      %v1815 = vadd.f32 0.0, %v1814
      %v1816 = vpop.f32.mrb[0].mxu0
      %1817 = vmatprep.mubr.bf16.mxu0 0
      %1818 = vmatmul.mubr.bf16.gmra.mrb[0].mxu0 %v1537
      %v1819 = vpop.f32.mrb[0].mxu0
      %v1820 = vadd.f32 0.0, %v1819
      %v1821 = vpop.f32.mrb[0].mxu0
      %v1822 = vpop.f32.mrb[0].mxu0
      %v1823 = vadd.f32 0.0, %v1822
      %v1824 = vpop.f32.mrb[0].mxu0
      %1825 = vmatprep.mubr.bf16.mxu0 0
      %1826 = vmatmul.mubr.bf16.gmra.mrb[0].mxu0 %v1540
      %v1827 = vpop.f32.mrb[0].mxu0
      %v1828 = vadd.f32 0.0, %v1827
      %v1829 = vpop.f32.mrb[0].mxu0
      %v1830 = vpop.f32.mrb[0].mxu0
      %v1831 = vadd.f32 0.0, %v1830
      %v1832 = vpop.f32.mrb[0].mxu0
      %1833 = vdwg.mxu0
      %v1834 = vadd.f32 %v1091, %v1580
      %v1835 = vadd.f32 %v1094, %v1583
      %v1836 = vadd.f32 %v1099, %v1588
      %v1837 = vadd.f32 %v1102, %v1591
      %v1838 = vadd.f32 %v1107, %v1596
      %v1839 = vadd.f32 %v1110, %v1599
      %v1840 = vadd.f32 %v1115, %v1604
      %v1841 = vadd.f32 %v1118, %v1607
      %v1842 = vadd.f32 %v1123, %v1612
      %v1843 = vadd.f32 %v1126, %v1615
      %v1844 = vadd.f32 %v1131, %v1620
      %v1845 = vadd.f32 %v1134, %v1623
      %v1846 = vadd.f32 %v1139, %v1628
      %v1847 = vadd.f32 %v1142, %v1631
      %v1848 = vadd.f32 %v1147, %v1636
      %v1849 = vadd.f32 %v1150, %v1639
      %v1850 = vadd.f32 %v1155, %v1644
      %v1851 = vadd.f32 %v1158, %v1647
      %v1852 = vadd.f32 %v1163, %v1652
      %v1853 = vadd.f32 %v1166, %v1655
      %v1854 = vadd.f32 %v1171, %v1660
      %v1855 = vadd.f32 %v1174, %v1663
      %v1856 = vadd.f32 %v1179, %v1668
      %v1857 = vadd.f32 %v1182, %v1671
      %v1858 = vadd.f32 %v1187, %v1676
      %v1859 = vadd.f32 %v1190, %v1679
      %v1860 = vadd.f32 %v1195, %v1684
      %v1861 = vadd.f32 %v1198, %v1687
      %v1862 = vadd.f32 %v1203, %v1692
      %v1863 = vadd.f32 %v1206, %v1695
      %v1864 = vadd.f32 %v1211, %v1700
      %v1865 = vadd.f32 %v1214, %v1703
      %v1866 = vadd.f32 %v1219, %v1708
      %v1867 = vadd.f32 %v1222, %v1711
      %v1868 = vadd.f32 %v1227, %v1716
      %v1869 = vadd.f32 %v1230, %v1719
      %v1870 = vadd.f32 %v1235, %v1724
      %v1871 = vadd.f32 %v1238, %v1727
      %v1872 = vadd.f32 %v1243, %v1732
      %v1873 = vadd.f32 %v1246, %v1735
      %v1874 = vadd.f32 %v1251, %v1740
      %v1875 = vadd.f32 %v1254, %v1743
      %v1876 = vadd.f32 %v1259, %v1748
      %v1877 = vadd.f32 %v1262, %v1751
      %v1878 = vadd.f32 %v1267, %v1756
      %v1879 = vadd.f32 %v1270, %v1759
      %v1880 = vadd.f32 %v1275, %v1764
      %v1881 = vadd.f32 %v1278, %v1767
      %v1882 = vadd.f32 %v1283, %v1772
      %v1883 = vadd.f32 %v1286, %v1775
      %v1884 = vadd.f32 %v1291, %v1780
      %v1885 = vadd.f32 %v1294, %v1783
      %v1886 = vadd.f32 %v1299, %v1788
      %v1887 = vadd.f32 %v1302, %v1791
      %v1888 = vadd.f32 %v1307, %v1796
      %v1889 = vadd.f32 %v1310, %v1799
      %v1890 = vadd.f32 %v1315, %v1804
      %v1891 = vadd.f32 %v1318, %v1807
      %v1892 = vadd.f32 %v1323, %v1812
      %v1893 = vadd.f32 %v1326, %v1815
      %v1894 = vadd.f32 %v1331, %v1820
      %v1895 = vadd.f32 %v1334, %v1823
      %v1896 = vadd.f32 %v1339, %v1828
      %v1897 = vadd.f32 %v1342, %v1831
      %v1898 = vpack.c.bf16 %v298, %v297
      %v1899 = vpack.c.bf16 %v299, %v299
      %s1900 = scalar_lea.vmem %s1, 6
      %v1901 = vld [vmem:[%s1900] sm:$0x3]
      %v1904 = vrot.slane %v1898, 1
      %v1905 = vsel %vm1380, %v1442, %v1904
      %v1906 = vrot.slane %v1899, 1
      %v1907 = vsel %vm1380, %v1904, %v1906
      %v1909 = vsel %vm599, %v1905, 0
      %v1912 = vsel %vm599, %v1907, 0
      %v1915 = vsel %vm696, %v1901, 0
      %1917 = vmatprep.subr.bf16.mxu0 0
      %1918 = vmatpush1.bf16.msra.mxu0 %v1915
      %1919 = vmatprep.subr.bf16.mxu0 0
      %1920 = vmatpush1.bf16.msra.mxu0 0
      %1921 = vmatprep.subr.bf16.mxu0 0
      %1922 = vmatpush1.bf16.msra.mxu0 0
      %1923 = vmatprep.subr.bf16.mxu0 0
      %1924 = vmatpush1.bf16.msra.mxu0 0
      %1925 = vmatprep.subr.bf16.mxu0 0
      %1926 = vmatpush1.bf16.msra.mxu0 0
      %1927 = vmatprep.subr.bf16.mxu0 0
      %1928 = vmatpush1.bf16.msra.mxu0 0
      %1929 = vmatprep.subr.bf16.mxu0 0
      %1930 = vmatpush1.bf16.msra.mxu0 0
      %1931 = vmatprep.subr.bf16.mxu0 0
      %1932 = vmatpush1.bf16.msra.mxu0 0
      %1933 = vmatprep.subr.bf16.mxu0 0
      %1934 = vmatpush1.bf16.msra.mxu0 0
      %1935 = vmatprep.subr.bf16.mxu0 0
      %1936 = vmatpush1.bf16.msra.mxu0 0
      %1937 = vmatprep.subr.bf16.mxu0 0
      %1938 = vmatpush1.bf16.msra.mxu0 0
      %1939 = vmatprep.subr.bf16.mxu0 0
      %1940 = vmatpush1.bf16.msra.mxu0 0
      %1941 = vmatprep.subr.bf16.mxu0 0
      %1942 = vmatpush1.bf16.msra.mxu0 0
      %1943 = vmatprep.subr.bf16.mxu0 0
      %1944 = vmatpush1.bf16.msra.mxu0 0
      %1945 = vmatprep.subr.bf16.mxu0 0
      %1946 = vmatpush1.bf16.msra.mxu0 0
      %1947 = vmatprep.subr.bf16.mxu0 0
      %1948 = vmatpush1.bf16.msra.mxu0 0
      %1949 = vmatprep.mubr.bf16.mxu0 0
      %1950 = vmatmul.mubr.bf16.gmra.mrb[0].mxu0 %v1450
      %v1951 = vpop.f32.mrb[0].mxu0
      %v1952 = vadd.f32 0.0, %v1951
      %v1953 = vpop.f32.mrb[0].mxu0
      %v1954 = vpop.f32.mrb[0].mxu0
      %v1955 = vadd.f32 0.0, %v1954
      %v1956 = vpop.f32.mrb[0].mxu0
      %1957 = vmatprep.mubr.bf16.mxu0 0
      %1958 = vmatmul.mubr.bf16.gmra.mrb[0].mxu0 %v1453
      %v1959 = vpop.f32.mrb[0].mxu0
      %v1960 = vadd.f32 0.0, %v1959
      %v1961 = vpop.f32.mrb[0].mxu0
      %v1962 = vpop.f32.mrb[0].mxu0
      %v1963 = vadd.f32 0.0, %v1962
      %v1964 = vpop.f32.mrb[0].mxu0
      %1965 = vmatprep.mubr.bf16.mxu0 0
      %1966 = vmatmul.mubr.bf16.gmra.mrb[0].mxu0 %v1456
      %v1967 = vpop.f32.mrb[0].mxu0
      %v1968 = vadd.f32 0.0, %v1967
      %v1969 = vpop.f32.mrb[0].mxu0
      %v1970 = vpop.f32.mrb[0].mxu0
      %v1971 = vadd.f32 0.0, %v1970
      %v1972 = vpop.f32.mrb[0].mxu0
      %1973 = vmatprep.mubr.bf16.mxu0 0
      %1974 = vmatmul.mubr.bf16.gmra.mrb[0].mxu0 %v1459
      %v1975 = vpop.f32.mrb[0].mxu0
      %v1976 = vadd.f32 0.0, %v1975
      %v1977 = vpop.f32.mrb[0].mxu0
      %v1978 = vpop.f32.mrb[0].mxu0
      %v1979 = vadd.f32 0.0, %v1978
      %v1980 = vpop.f32.mrb[0].mxu0
      %1981 = vmatprep.mubr.bf16.mxu0 0
      %1982 = vmatmul.mubr.bf16.gmra.mrb[0].mxu0 %v1462
      %v1983 = vpop.f32.mrb[0].mxu0
      %v1984 = vadd.f32 0.0, %v1983
      %v1985 = vpop.f32.mrb[0].mxu0
      %v1986 = vpop.f32.mrb[0].mxu0
      %v1987 = vadd.f32 0.0, %v1986
      %v1988 = vpop.f32.mrb[0].mxu0
      %1989 = vmatprep.mubr.bf16.mxu0 0
      %1990 = vmatmul.mubr.bf16.gmra.mrb[0].mxu0 %v1465
      %v1991 = vpop.f32.mrb[0].mxu0
      %v1992 = vadd.f32 0.0, %v1991
      %v1993 = vpop.f32.mrb[0].mxu0
      %v1994 = vpop.f32.mrb[0].mxu0
      %v1995 = vadd.f32 0.0, %v1994
      %v1996 = vpop.f32.mrb[0].mxu0
      %1997 = vmatprep.mubr.bf16.mxu0 0
      %1998 = vmatmul.mubr.bf16.gmra.mrb[0].mxu0 %v1468
      %v1999 = vpop.f32.mrb[0].mxu0
      %v2000 = vadd.f32 0.0, %v1999
      %v2001 = vpop.f32.mrb[0].mxu0
      %v2002 = vpop.f32.mrb[0].mxu0
      %v2003 = vadd.f32 0.0, %v2002
      %v2004 = vpop.f32.mrb[0].mxu0
      %2005 = vmatprep.mubr.bf16.mxu0 0
      %2006 = vmatmul.mubr.bf16.gmra.mrb[0].mxu0 %v1471
      %v2007 = vpop.f32.mrb[0].mxu0
      %v2008 = vadd.f32 0.0, %v2007
      %v2009 = vpop.f32.mrb[0].mxu0
      %v2010 = vpop.f32.mrb[0].mxu0
      %v2011 = vadd.f32 0.0, %v2010
      %v2012 = vpop.f32.mrb[0].mxu0
      %2013 = vmatprep.mubr.bf16.mxu0 0
      %2014 = vmatmul.mubr.bf16.gmra.mrb[0].mxu0 %v1474
      %v2015 = vpop.f32.mrb[0].mxu0
      %v2016 = vadd.f32 0.0, %v2015
      %v2017 = vpop.f32.mrb[0].mxu0
      %v2018 = vpop.f32.mrb[0].mxu0
      %v2019 = vadd.f32 0.0, %v2018
      %v2020 = vpop.f32.mrb[0].mxu0
      %2021 = vmatprep.mubr.bf16.mxu0 0
      %2022 = vmatmul.mubr.bf16.gmra.mrb[0].mxu0 %v1477
      %v2023 = vpop.f32.mrb[0].mxu0
      %v2024 = vadd.f32 0.0, %v2023
      %v2025 = vpop.f32.mrb[0].mxu0
      %v2026 = vpop.f32.mrb[0].mxu0
      %v2027 = vadd.f32 0.0, %v2026
      %v2028 = vpop.f32.mrb[0].mxu0
      %2029 = vmatprep.mubr.bf16.mxu0 0
      %2030 = vmatmul.mubr.bf16.gmra.mrb[0].mxu0 %v1480
      %v2031 = vpop.f32.mrb[0].mxu0
      %v2032 = vadd.f32 0.0, %v2031
      %v2033 = vpop.f32.mrb[0].mxu0
      %v2034 = vpop.f32.mrb[0].mxu0
      %v2035 = vadd.f32 0.0, %v2034
      %v2036 = vpop.f32.mrb[0].mxu0
      %2037 = vmatprep.mubr.bf16.mxu0 0
      %2038 = vmatmul.mubr.bf16.gmra.mrb[0].mxu0 %v1483
      %v2039 = vpop.f32.mrb[0].mxu0
      %v2040 = vadd.f32 0.0, %v2039
      %v2041 = vpop.f32.mrb[0].mxu0
      %v2042 = vpop.f32.mrb[0].mxu0
      %v2043 = vadd.f32 0.0, %v2042
      %v2044 = vpop.f32.mrb[0].mxu0
      %2045 = vmatprep.mubr.bf16.mxu0 0
      %2046 = vmatmul.mubr.bf16.gmra.mrb[0].mxu0 %v1486
      %v2047 = vpop.f32.mrb[0].mxu0
      %v2048 = vadd.f32 0.0, %v2047
      %v2049 = vpop.f32.mrb[0].mxu0
      %v2050 = vpop.f32.mrb[0].mxu0
      %v2051 = vadd.f32 0.0, %v2050
      %v2052 = vpop.f32.mrb[0].mxu0
      %2053 = vmatprep.mubr.bf16.mxu0 0
      %2054 = vmatmul.mubr.bf16.gmra.mrb[0].mxu0 %v1489
      %v2055 = vpop.f32.mrb[0].mxu0
      %v2056 = vadd.f32 0.0, %v2055
      %v2057 = vpop.f32.mrb[0].mxu0
      %v2058 = vpop.f32.mrb[0].mxu0
      %v2059 = vadd.f32 0.0, %v2058
      %v2060 = vpop.f32.mrb[0].mxu0
      %2061 = vmatprep.mubr.bf16.mxu0 0
      %2062 = vmatmul.mubr.bf16.gmra.mrb[0].mxu0 %v1492
      %v2063 = vpop.f32.mrb[0].mxu0
      %v2064 = vadd.f32 0.0, %v2063
      %v2065 = vpop.f32.mrb[0].mxu0
      %v2066 = vpop.f32.mrb[0].mxu0
      %v2067 = vadd.f32 0.0, %v2066
      %v2068 = vpop.f32.mrb[0].mxu0
      %2069 = vmatprep.mubr.bf16.mxu0 0
      %2070 = vmatmul.mubr.bf16.gmra.mrb[0].mxu0 %v1495
      %v2071 = vpop.f32.mrb[0].mxu0
      %v2072 = vadd.f32 0.0, %v2071
      %v2073 = vpop.f32.mrb[0].mxu0
      %v2074 = vpop.f32.mrb[0].mxu0
      %v2075 = vadd.f32 0.0, %v2074
      %v2076 = vpop.f32.mrb[0].mxu0
      %2077 = vmatprep.mubr.bf16.mxu0 0
      %2078 = vmatmul.mubr.bf16.gmra.mrb[0].mxu0 %v1498
      %v2079 = vpop.f32.mrb[0].mxu0
      %v2080 = vadd.f32 0.0, %v2079
      %v2081 = vpop.f32.mrb[0].mxu0
      %v2082 = vpop.f32.mrb[0].mxu0
      %v2083 = vadd.f32 0.0, %v2082
      %v2084 = vpop.f32.mrb[0].mxu0
      %2085 = vmatprep.mubr.bf16.mxu0 0
      %2086 = vmatmul.mubr.bf16.gmra.mrb[0].mxu0 %v1501
      %v2087 = vpop.f32.mrb[0].mxu0
      %v2088 = vadd.f32 0.0, %v2087
      %v2089 = vpop.f32.mrb[0].mxu0
      %v2090 = vpop.f32.mrb[0].mxu0
      %v2091 = vadd.f32 0.0, %v2090
      %v2092 = vpop.f32.mrb[0].mxu0
      %2093 = vmatprep.mubr.bf16.mxu0 0
      %2094 = vmatmul.mubr.bf16.gmra.mrb[0].mxu0 %v1504
      %v2095 = vpop.f32.mrb[0].mxu0
      %v2096 = vadd.f32 0.0, %v2095
      %v2097 = vpop.f32.mrb[0].mxu0
      %v2098 = vpop.f32.mrb[0].mxu0
      %v2099 = vadd.f32 0.0, %v2098
      %v2100 = vpop.f32.mrb[0].mxu0
      %2101 = vmatprep.mubr.bf16.mxu0 0
      %2102 = vmatmul.mubr.bf16.gmra.mrb[0].mxu0 %v1507
      %v2103 = vpop.f32.mrb[0].mxu0
      %v2104 = vadd.f32 0.0, %v2103
      %v2105 = vpop.f32.mrb[0].mxu0
      %v2106 = vpop.f32.mrb[0].mxu0
      %v2107 = vadd.f32 0.0, %v2106
      %v2108 = vpop.f32.mrb[0].mxu0
      %2109 = vmatprep.mubr.bf16.mxu0 0
      %2110 = vmatmul.mubr.bf16.gmra.mrb[0].mxu0 %v1510
      %v2111 = vpop.f32.mrb[0].mxu0
      %v2112 = vadd.f32 0.0, %v2111
      %v2113 = vpop.f32.mrb[0].mxu0
      %v2114 = vpop.f32.mrb[0].mxu0
      %v2115 = vadd.f32 0.0, %v2114
      %v2116 = vpop.f32.mrb[0].mxu0
      %2117 = vmatprep.mubr.bf16.mxu0 0
      %2118 = vmatmul.mubr.bf16.gmra.mrb[0].mxu0 %v1513
      %v2119 = vpop.f32.mrb[0].mxu0
      %v2120 = vadd.f32 0.0, %v2119
      %v2121 = vpop.f32.mrb[0].mxu0
      %v2122 = vpop.f32.mrb[0].mxu0
      %v2123 = vadd.f32 0.0, %v2122
      %v2124 = vpop.f32.mrb[0].mxu0
      %2125 = vmatprep.mubr.bf16.mxu0 0
      %2126 = vmatmul.mubr.bf16.gmra.mrb[0].mxu0 %v1516
      %v2127 = vpop.f32.mrb[0].mxu0
      %v2128 = vadd.f32 0.0, %v2127
      %v2129 = vpop.f32.mrb[0].mxu0
      %v2130 = vpop.f32.mrb[0].mxu0
      %v2131 = vadd.f32 0.0, %v2130
      %v2132 = vpop.f32.mrb[0].mxu0
      %2133 = vmatprep.mubr.bf16.mxu0 0
      %2134 = vmatmul.mubr.bf16.gmra.mrb[0].mxu0 %v1519
      %v2135 = vpop.f32.mrb[0].mxu0
      %v2136 = vadd.f32 0.0, %v2135
      %v2137 = vpop.f32.mrb[0].mxu0
      %v2138 = vpop.f32.mrb[0].mxu0
      %v2139 = vadd.f32 0.0, %v2138
      %v2140 = vpop.f32.mrb[0].mxu0
      %2141 = vmatprep.mubr.bf16.mxu0 0
      %2142 = vmatmul.mubr.bf16.gmra.mrb[0].mxu0 %v1522
      %v2143 = vpop.f32.mrb[0].mxu0
      %v2144 = vadd.f32 0.0, %v2143
      %v2145 = vpop.f32.mrb[0].mxu0
      %v2146 = vpop.f32.mrb[0].mxu0
      %v2147 = vadd.f32 0.0, %v2146
      %v2148 = vpop.f32.mrb[0].mxu0
      %2149 = vmatprep.mubr.bf16.mxu0 0
      %2150 = vmatmul.mubr.bf16.gmra.mrb[0].mxu0 %v1525
      %v2151 = vpop.f32.mrb[0].mxu0
      %v2152 = vadd.f32 0.0, %v2151
      %v2153 = vpop.f32.mrb[0].mxu0
      %v2154 = vpop.f32.mrb[0].mxu0
      %v2155 = vadd.f32 0.0, %v2154
      %v2156 = vpop.f32.mrb[0].mxu0
      %2157 = vmatprep.mubr.bf16.mxu0 0
      %2158 = vmatmul.mubr.bf16.gmra.mrb[0].mxu0 %v1528
      %v2159 = vpop.f32.mrb[0].mxu0
      %v2160 = vadd.f32 0.0, %v2159
      %v2161 = vpop.f32.mrb[0].mxu0
      %v2162 = vpop.f32.mrb[0].mxu0
      %v2163 = vadd.f32 0.0, %v2162
      %v2164 = vpop.f32.mrb[0].mxu0
      %2165 = vmatprep.mubr.bf16.mxu0 0
      %2166 = vmatmul.mubr.bf16.gmra.mrb[0].mxu0 %v1531
      %v2167 = vpop.f32.mrb[0].mxu0
      %v2168 = vadd.f32 0.0, %v2167
      %v2169 = vpop.f32.mrb[0].mxu0
      %v2170 = vpop.f32.mrb[0].mxu0
      %v2171 = vadd.f32 0.0, %v2170
      %v2172 = vpop.f32.mrb[0].mxu0
      %2173 = vmatprep.mubr.bf16.mxu0 0
      %2174 = vmatmul.mubr.bf16.gmra.mrb[0].mxu0 %v1534
      %v2175 = vpop.f32.mrb[0].mxu0
      %v2176 = vadd.f32 0.0, %v2175
      %v2177 = vpop.f32.mrb[0].mxu0
      %v2178 = vpop.f32.mrb[0].mxu0
      %v2179 = vadd.f32 0.0, %v2178
      %v2180 = vpop.f32.mrb[0].mxu0
      %2181 = vmatprep.mubr.bf16.mxu0 0
      %2182 = vmatmul.mubr.bf16.gmra.mrb[0].mxu0 %v1537
      %v2183 = vpop.f32.mrb[0].mxu0
      %v2184 = vadd.f32 0.0, %v2183
      %v2185 = vpop.f32.mrb[0].mxu0
      %v2186 = vpop.f32.mrb[0].mxu0
      %v2187 = vadd.f32 0.0, %v2186
      %v2188 = vpop.f32.mrb[0].mxu0
      %2189 = vmatprep.mubr.bf16.mxu0 0
      %2190 = vmatmul.mubr.bf16.gmra.mrb[0].mxu0 %v1909
      %v2191 = vpop.f32.mrb[0].mxu0
      %v2192 = vadd.f32 0.0, %v2191
      %v2193 = vpop.f32.mrb[0].mxu0
      %v2194 = vpop.f32.mrb[0].mxu0
      %v2195 = vadd.f32 0.0, %v2194
      %v2196 = vpop.f32.mrb[0].mxu0
      %2197 = vmatprep.mubr.bf16.mxu0 0
      %2198 = vmatmul.mubr.bf16.gmra.mrb[0].mxu0 %v1912
      %v2199 = vpop.f32.mrb[0].mxu0
      %v2200 = vadd.f32 0.0, %v2199
      %v2201 = vpop.f32.mrb[0].mxu0
      %v2202 = vpop.f32.mrb[0].mxu0
      %v2203 = vadd.f32 0.0, %v2202
      %v2204 = vpop.f32.mrb[0].mxu0
      %2205 = vdwg.mxu0
      %v2206 = vadd.f32 %v1834, %v1952
      %v2207 = vadd.f32 %v1835, %v1955
      %v2208 = vadd.f32 %v1836, %v1960
      %v2209 = vadd.f32 %v1837, %v1963
      %v2210 = vadd.f32 %v1838, %v1968
      %v2211 = vadd.f32 %v1839, %v1971
      %v2212 = vadd.f32 %v1840, %v1976
      %v2213 = vadd.f32 %v1841, %v1979
      %v2214 = vadd.f32 %v1842, %v1984
      %v2215 = vadd.f32 %v1843, %v1987
      %v2216 = vadd.f32 %v1844, %v1992
      %v2217 = vadd.f32 %v1845, %v1995
      %v2218 = vadd.f32 %v1846, %v2000
      %v2219 = vadd.f32 %v1847, %v2003
      %v2220 = vadd.f32 %v1848, %v2008
      %v2221 = vadd.f32 %v1849, %v2011
      %v2222 = vadd.f32 %v1850, %v2016
      %v2223 = vadd.f32 %v1851, %v2019
      %v2224 = vadd.f32 %v1852, %v2024
      %v2225 = vadd.f32 %v1853, %v2027
      %v2226 = vadd.f32 %v1854, %v2032
      %v2227 = vadd.f32 %v1855, %v2035
      %v2228 = vadd.f32 %v1856, %v2040
      %v2229 = vadd.f32 %v1857, %v2043
      %v2230 = vadd.f32 %v1858, %v2048
      %v2231 = vadd.f32 %v1859, %v2051
      %v2232 = vadd.f32 %v1860, %v2056
      %v2233 = vadd.f32 %v1861, %v2059
      %v2234 = vadd.f32 %v1862, %v2064
      %v2235 = vadd.f32 %v1863, %v2067
      %v2236 = vadd.f32 %v1864, %v2072
      %v2237 = vadd.f32 %v1865, %v2075
      %v2238 = vadd.f32 %v1866, %v2080
      %v2239 = vadd.f32 %v1867, %v2083
      %v2240 = vadd.f32 %v1868, %v2088
      %v2241 = vadd.f32 %v1869, %v2091
      %v2242 = vadd.f32 %v1870, %v2096
      %v2243 = vadd.f32 %v1871, %v2099
      %v2244 = vadd.f32 %v1872, %v2104
      %v2245 = vadd.f32 %v1873, %v2107
      %v2246 = vadd.f32 %v1874, %v2112
      %v2247 = vadd.f32 %v1875, %v2115
      %v2248 = vadd.f32 %v1876, %v2120
      %v2249 = vadd.f32 %v1877, %v2123
      %v2250 = vadd.f32 %v1878, %v2128
      %v2251 = vadd.f32 %v1879, %v2131
      %v2252 = vadd.f32 %v1880, %v2136
      %v2253 = vadd.f32 %v1881, %v2139
      %v2254 = vadd.f32 %v1882, %v2144
      %v2255 = vadd.f32 %v1883, %v2147
      %v2256 = vadd.f32 %v1884, %v2152
      %v2257 = vadd.f32 %v1885, %v2155
      %v2258 = vadd.f32 %v1886, %v2160
      %v2259 = vadd.f32 %v1887, %v2163
      %v2260 = vadd.f32 %v1888, %v2168
      %v2261 = vadd.f32 %v1889, %v2171
      %v2262 = vadd.f32 %v1890, %v2176
      %v2263 = vadd.f32 %v1891, %v2179
      %v2264 = vadd.f32 %v1892, %v2184
      %v2265 = vadd.f32 %v1893, %v2187
      %v2266 = vadd.f32 %v1894, %v2192
      %v2267 = vadd.f32 %v1895, %v2195
      %v2268 = vadd.f32 %v1896, %v2200
      %v2269 = vadd.f32 %v1897, %v2203
      %s2270 = scalar_lea.vmem %s1, 8
      %v2271 = vld [vmem:[%s2270] sm:$0x3]
      %vm2272 = vsmask.f32 6400
      %v2273 = vrot.slane %v351, 1
      %v2274 = vrot.slane %v347, 2
      %v2275 = vor.u32 %v2273, %v2274
      %v2276 = vrot.slane %v359, 1
      %v2277 = vrot.slane %v355, 2
      %v2278 = vor.u32 %v2276, %v2277
      %v2279 = vsel %vm2272, %v2275, %v2278
      %v2280 = vrot.slane %v367, 1
      %v2281 = vrot.slane %v363, 2
      %v2282 = vor.u32 %v2280, %v2281
      %v2283 = vsel %vm2272, %v2278, %v2282
      %v2284 = vrot.slane %v375, 1
      %v2285 = vrot.slane %v371, 2
      %v2286 = vor.u32 %v2284, %v2285
      %v2287 = vsel %vm2272, %v2282, %v2286
      %v2288 = vrot.slane %v383, 1
      %v2289 = vrot.slane %v379, 2
      %v2290 = vor.u32 %v2288, %v2289
      %v2291 = vsel %vm2272, %v2286, %v2290
      %v2292 = vrot.slane %v391, 1
      %v2293 = vrot.slane %v387, 2
      %v2294 = vor.u32 %v2292, %v2293
      %v2295 = vsel %vm2272, %v2290, %v2294
      %v2296 = vrot.slane %v399, 1
      %v2297 = vrot.slane %v395, 2
      %v2298 = vor.u32 %v2296, %v2297
      %v2299 = vsel %vm2272, %v2294, %v2298
      %v2300 = vrot.slane %v407, 1
      %v2301 = vrot.slane %v403, 2
      %v2302 = vor.u32 %v2300, %v2301
      %v2303 = vsel %vm2272, %v2298, %v2302
      %v2304 = vrot.slane %v415, 1
      %v2305 = vrot.slane %v411, 2
      %v2306 = vor.u32 %v2304, %v2305
      %v2307 = vsel %vm2272, %v2302, %v2306
      %v2308 = vrot.slane %v423, 1
      %v2309 = vrot.slane %v419, 2
      %v2310 = vor.u32 %v2308, %v2309
      %v2311 = vsel %vm2272, %v2306, %v2310
      %v2312 = vrot.slane %v431, 1
      %v2313 = vrot.slane %v427, 2
      %v2314 = vor.u32 %v2312, %v2313
      %v2315 = vsel %vm2272, %v2310, %v2314
      %v2316 = vrot.slane %v439, 1
      %v2317 = vrot.slane %v435, 2
      %v2318 = vor.u32 %v2316, %v2317
      %v2319 = vsel %vm2272, %v2314, %v2318
      %v2320 = vrot.slane %v447, 1
      %v2321 = vrot.slane %v443, 2
      %v2322 = vor.u32 %v2320, %v2321
      %v2323 = vsel %vm2272, %v2318, %v2322
      %v2324 = vrot.slane %v455, 1
      %v2325 = vrot.slane %v451, 2
      %v2326 = vor.u32 %v2324, %v2325
      %v2327 = vsel %vm2272, %v2322, %v2326
      %v2328 = vrot.slane %v463, 1
      %v2329 = vrot.slane %v459, 2
      %v2330 = vor.u32 %v2328, %v2329
      %v2331 = vsel %vm2272, %v2326, %v2330
      %v2332 = vrot.slane %v471, 1
      %v2333 = vrot.slane %v467, 2
      %v2334 = vor.u32 %v2332, %v2333
      %v2335 = vsel %vm2272, %v2330, %v2334
      %v2336 = vrot.slane %v479, 1
      %v2337 = vrot.slane %v475, 2
      %v2338 = vor.u32 %v2336, %v2337
      %v2339 = vsel %vm2272, %v2334, %v2338
      %v2340 = vrot.slane %v487, 1
      %v2341 = vrot.slane %v483, 2
      %v2342 = vor.u32 %v2340, %v2341
      %v2343 = vsel %vm2272, %v2338, %v2342
      %v2344 = vrot.slane %v495, 1
      %v2345 = vrot.slane %v491, 2
      %v2346 = vor.u32 %v2344, %v2345
      %v2347 = vsel %vm2272, %v2342, %v2346
      %v2348 = vrot.slane %v503, 1
      %v2349 = vrot.slane %v499, 2
      %v2350 = vor.u32 %v2348, %v2349
      %v2351 = vsel %vm2272, %v2346, %v2350
      %v2352 = vrot.slane %v511, 1
      %v2353 = vrot.slane %v507, 2
      %v2354 = vor.u32 %v2352, %v2353
      %v2355 = vsel %vm2272, %v2350, %v2354
      %v2356 = vrot.slane %v519, 1
      %v2357 = vrot.slane %v515, 2
      %v2358 = vor.u32 %v2356, %v2357
      %v2359 = vsel %vm2272, %v2354, %v2358
      %v2360 = vrot.slane %v527, 1
      %v2361 = vrot.slane %v523, 2
      %v2362 = vor.u32 %v2360, %v2361
      %v2363 = vsel %vm2272, %v2358, %v2362
      %v2364 = vrot.slane %v535, 1
      %v2365 = vrot.slane %v531, 2
      %v2366 = vor.u32 %v2364, %v2365
      %v2367 = vsel %vm2272, %v2362, %v2366
      %v2368 = vrot.slane %v543, 1
      %v2369 = vrot.slane %v539, 2
      %v2370 = vor.u32 %v2368, %v2369
      %v2371 = vsel %vm2272, %v2366, %v2370
      %v2372 = vrot.slane %v551, 1
      %v2373 = vrot.slane %v547, 2
      %v2374 = vor.u32 %v2372, %v2373
      %v2375 = vsel %vm2272, %v2370, %v2374
      %v2376 = vrot.slane %v559, 1
      %v2377 = vrot.slane %v555, 2
      %v2378 = vor.u32 %v2376, %v2377
      %v2379 = vsel %vm2272, %v2374, %v2378
      %v2380 = vrot.slane %v567, 1
      %v2381 = vrot.slane %v563, 2
      %v2382 = vor.u32 %v2380, %v2381
      %v2383 = vsel %vm2272, %v2378, %v2382
      %v2384 = vrot.slane %v575, 1
      %v2385 = vrot.slane %v571, 2
      %v2386 = vor.u32 %v2384, %v2385
      %v2387 = vsel %vm2272, %v2382, %v2386
      %v2388 = vrot.slane %v583, 1
      %v2389 = vrot.slane %v579, 2
      %v2390 = vor.u32 %v2388, %v2389
      %v2391 = vsel %vm2272, %v2386, %v2390
      %v2392 = vrot.slane %v591, 1
      %v2393 = vrot.slane %v587, 2
      %v2394 = vor.u32 %v2392, %v2393
      %v2395 = vsel %vm2272, %v2390, %v2394
      %v2397 = vshrl.u32 %v1898, 16
      %v2399 = vrot.slane %v2397, 1
      %v2400 = vshll.u32 %v1898, 16
      %v2402 = vrot.slane %v2400, 2
      %v2403 = vor.u32 %v2399, %v2402
      %v2404 = vsel %vm2272, %v2394, %v2403
      %v2406 = vshrl.u32 %v1899, 16
      %v2408 = vrot.slane %v2406, 1
      %v2409 = vshll.u32 %v1899, 16
      %v2411 = vrot.slane %v2409, 2
      %v2412 = vor.u32 %v2408, %v2411
      %v2413 = vsel %vm2272, %v2403, %v2412
      %v2415 = vsel %vm599, %v2279, 0
      %v2418 = vsel %vm599, %v2283, 0
      %v2421 = vsel %vm599, %v2287, 0
      %v2424 = vsel %vm599, %v2291, 0
      %v2427 = vsel %vm599, %v2295, 0
      %v2430 = vsel %vm599, %v2299, 0
      %v2433 = vsel %vm599, %v2303, 0
      %v2436 = vsel %vm599, %v2307, 0
      %v2439 = vsel %vm599, %v2311, 0
      %v2442 = vsel %vm599, %v2315, 0
      %v2445 = vsel %vm599, %v2319, 0
      %v2448 = vsel %vm599, %v2323, 0
      %v2451 = vsel %vm599, %v2327, 0
      %v2454 = vsel %vm599, %v2331, 0
      %v2457 = vsel %vm599, %v2335, 0
      %v2460 = vsel %vm599, %v2339, 0
      %v2463 = vsel %vm599, %v2343, 0
      %v2466 = vsel %vm599, %v2347, 0
      %v2469 = vsel %vm599, %v2351, 0
      %v2472 = vsel %vm599, %v2355, 0
      %v2475 = vsel %vm599, %v2359, 0
      %v2478 = vsel %vm599, %v2363, 0
      %v2481 = vsel %vm599, %v2367, 0
      %v2484 = vsel %vm599, %v2371, 0
      %v2487 = vsel %vm599, %v2375, 0
      %v2490 = vsel %vm599, %v2379, 0
      %v2493 = vsel %vm599, %v2383, 0
      %v2496 = vsel %vm599, %v2387, 0
      %v2499 = vsel %vm599, %v2391, 0
      %v2502 = vsel %vm599, %v2395, 0
      %v2505 = vsel %vm599, %v2404, 0
      %v2508 = vsel %vm599, %v2413, 0
      %v2511 = vsel %vm696, %v2271, 0
      %2513 = vmatprep.subr.bf16.mxu0 0
      %2514 = vmatpush1.bf16.msra.mxu0 %v2511
      %2515 = vmatprep.subr.bf16.mxu0 0
      %2516 = vmatpush1.bf16.msra.mxu0 0
      %2517 = vmatprep.subr.bf16.mxu0 0
      %2518 = vmatpush1.bf16.msra.mxu0 0
      %2519 = vmatprep.subr.bf16.mxu0 0
      %2520 = vmatpush1.bf16.msra.mxu0 0
      %2521 = vmatprep.subr.bf16.mxu0 0
      %2522 = vmatpush1.bf16.msra.mxu0 0
      %2523 = vmatprep.subr.bf16.mxu0 0
      %2524 = vmatpush1.bf16.msra.mxu0 0
      %2525 = vmatprep.subr.bf16.mxu0 0
      %2526 = vmatpush1.bf16.msra.mxu0 0
      %2527 = vmatprep.subr.bf16.mxu0 0
      %2528 = vmatpush1.bf16.msra.mxu0 0
      %2529 = vmatprep.subr.bf16.mxu0 0
      %2530 = vmatpush1.bf16.msra.mxu0 0
      %2531 = vmatprep.subr.bf16.mxu0 0
      %2532 = vmatpush1.bf16.msra.mxu0 0
      %2533 = vmatprep.subr.bf16.mxu0 0
      %2534 = vmatpush1.bf16.msra.mxu0 0
      %2535 = vmatprep.subr.bf16.mxu0 0
      %2536 = vmatpush1.bf16.msra.mxu0 0
      %2537 = vmatprep.subr.bf16.mxu0 0
      %2538 = vmatpush1.bf16.msra.mxu0 0
      %2539 = vmatprep.subr.bf16.mxu0 0
      %2540 = vmatpush1.bf16.msra.mxu0 0
      %2541 = vmatprep.subr.bf16.mxu0 0
      %2542 = vmatpush1.bf16.msra.mxu0 0
      %2543 = vmatprep.subr.bf16.mxu0 0
      %2544 = vmatpush1.bf16.msra.mxu0 0
      %2545 = vmatprep.mubr.bf16.mxu0 0
      %2546 = vmatmul.mubr.bf16.gmra.mrb[0].mxu0 %v2415
      %v2547 = vpop.f32.mrb[0].mxu0
      %v2548 = vadd.f32 0.0, %v2547
      %v2549 = vpop.f32.mrb[0].mxu0
      %v2550 = vpop.f32.mrb[0].mxu0
      %v2551 = vadd.f32 0.0, %v2550
      %v2552 = vpop.f32.mrb[0].mxu0
      %2553 = vmatprep.mubr.bf16.mxu0 0
      %2554 = vmatmul.mubr.bf16.gmra.mrb[0].mxu0 %v2418
      %v2555 = vpop.f32.mrb[0].mxu0
      %v2556 = vadd.f32 0.0, %v2555
      %v2557 = vpop.f32.mrb[0].mxu0
      %v2558 = vpop.f32.mrb[0].mxu0
      %v2559 = vadd.f32 0.0, %v2558
      %v2560 = vpop.f32.mrb[0].mxu0
      %2561 = vmatprep.mubr.bf16.mxu0 0
      %2562 = vmatmul.mubr.bf16.gmra.mrb[0].mxu0 %v2421
      %v2563 = vpop.f32.mrb[0].mxu0
      %v2564 = vadd.f32 0.0, %v2563
      %v2565 = vpop.f32.mrb[0].mxu0
      %v2566 = vpop.f32.mrb[0].mxu0
      %v2567 = vadd.f32 0.0, %v2566
      %v2568 = vpop.f32.mrb[0].mxu0
      %2569 = vmatprep.mubr.bf16.mxu0 0
      %2570 = vmatmul.mubr.bf16.gmra.mrb[0].mxu0 %v2424
      %v2571 = vpop.f32.mrb[0].mxu0
      %v2572 = vadd.f32 0.0, %v2571
      %v2573 = vpop.f32.mrb[0].mxu0
      %v2574 = vpop.f32.mrb[0].mxu0
      %v2575 = vadd.f32 0.0, %v2574
      %v2576 = vpop.f32.mrb[0].mxu0
      %2577 = vmatprep.mubr.bf16.mxu0 0
      %2578 = vmatmul.mubr.bf16.gmra.mrb[0].mxu0 %v2427
      %v2579 = vpop.f32.mrb[0].mxu0
      %v2580 = vadd.f32 0.0, %v2579
      %v2581 = vpop.f32.mrb[0].mxu0
      %v2582 = vpop.f32.mrb[0].mxu0
      %v2583 = vadd.f32 0.0, %v2582
      %v2584 = vpop.f32.mrb[0].mxu0
      %2585 = vmatprep.mubr.bf16.mxu0 0
      %2586 = vmatmul.mubr.bf16.gmra.mrb[0].mxu0 %v2430
      %v2587 = vpop.f32.mrb[0].mxu0
      %v2588 = vadd.f32 0.0, %v2587
      %v2589 = vpop.f32.mrb[0].mxu0
      %v2590 = vpop.f32.mrb[0].mxu0
      %v2591 = vadd.f32 0.0, %v2590
      %v2592 = vpop.f32.mrb[0].mxu0
      %2593 = vmatprep.mubr.bf16.mxu0 0
      %2594 = vmatmul.mubr.bf16.gmra.mrb[0].mxu0 %v2433
      %v2595 = vpop.f32.mrb[0].mxu0
      %v2596 = vadd.f32 0.0, %v2595
      %v2597 = vpop.f32.mrb[0].mxu0
      %v2598 = vpop.f32.mrb[0].mxu0
      %v2599 = vadd.f32 0.0, %v2598
      %v2600 = vpop.f32.mrb[0].mxu0
      %2601 = vmatprep.mubr.bf16.mxu0 0
      %2602 = vmatmul.mubr.bf16.gmra.mrb[0].mxu0 %v2436
      %v2603 = vpop.f32.mrb[0].mxu0
      %v2604 = vadd.f32 0.0, %v2603
      %v2605 = vpop.f32.mrb[0].mxu0
      %v2606 = vpop.f32.mrb[0].mxu0
      %v2607 = vadd.f32 0.0, %v2606
      %v2608 = vpop.f32.mrb[0].mxu0
      %2609 = vmatprep.mubr.bf16.mxu0 0
      %2610 = vmatmul.mubr.bf16.gmra.mrb[0].mxu0 %v2439
      %v2611 = vpop.f32.mrb[0].mxu0
      %v2612 = vadd.f32 0.0, %v2611
      %v2613 = vpop.f32.mrb[0].mxu0
      %v2614 = vpop.f32.mrb[0].mxu0
      %v2615 = vadd.f32 0.0, %v2614
      %v2616 = vpop.f32.mrb[0].mxu0
      %2617 = vmatprep.mubr.bf16.mxu0 0
      %2618 = vmatmul.mubr.bf16.gmra.mrb[0].mxu0 %v2442
      %v2619 = vpop.f32.mrb[0].mxu0
      %v2620 = vadd.f32 0.0, %v2619
      %v2621 = vpop.f32.mrb[0].mxu0
      %v2622 = vpop.f32.mrb[0].mxu0
      %v2623 = vadd.f32 0.0, %v2622
      %v2624 = vpop.f32.mrb[0].mxu0
      %2625 = vmatprep.mubr.bf16.mxu0 0
      %2626 = vmatmul.mubr.bf16.gmra.mrb[0].mxu0 %v2445
      %v2627 = vpop.f32.mrb[0].mxu0
      %v2628 = vadd.f32 0.0, %v2627
      %v2629 = vpop.f32.mrb[0].mxu0
      %v2630 = vpop.f32.mrb[0].mxu0
      %v2631 = vadd.f32 0.0, %v2630
      %v2632 = vpop.f32.mrb[0].mxu0
      %2633 = vmatprep.mubr.bf16.mxu0 0
      %2634 = vmatmul.mubr.bf16.gmra.mrb[0].mxu0 %v2448
      %v2635 = vpop.f32.mrb[0].mxu0
      %v2636 = vadd.f32 0.0, %v2635
      %v2637 = vpop.f32.mrb[0].mxu0
      %v2638 = vpop.f32.mrb[0].mxu0
      %v2639 = vadd.f32 0.0, %v2638
      %v2640 = vpop.f32.mrb[0].mxu0
      %2641 = vmatprep.mubr.bf16.mxu0 0
      %2642 = vmatmul.mubr.bf16.gmra.mrb[0].mxu0 %v2451
      %v2643 = vpop.f32.mrb[0].mxu0
      %v2644 = vadd.f32 0.0, %v2643
      %v2645 = vpop.f32.mrb[0].mxu0
      %v2646 = vpop.f32.mrb[0].mxu0
      %v2647 = vadd.f32 0.0, %v2646
      %v2648 = vpop.f32.mrb[0].mxu0
      %2649 = vmatprep.mubr.bf16.mxu0 0
      %2650 = vmatmul.mubr.bf16.gmra.mrb[0].mxu0 %v2454
      %v2651 = vpop.f32.mrb[0].mxu0
      %v2652 = vadd.f32 0.0, %v2651
      %v2653 = vpop.f32.mrb[0].mxu0
      %v2654 = vpop.f32.mrb[0].mxu0
      %v2655 = vadd.f32 0.0, %v2654
      %v2656 = vpop.f32.mrb[0].mxu0
      %2657 = vmatprep.mubr.bf16.mxu0 0
      %2658 = vmatmul.mubr.bf16.gmra.mrb[0].mxu0 %v2457
      %v2659 = vpop.f32.mrb[0].mxu0
      %v2660 = vadd.f32 0.0, %v2659
      %v2661 = vpop.f32.mrb[0].mxu0
      %v2662 = vpop.f32.mrb[0].mxu0
      %v2663 = vadd.f32 0.0, %v2662
      %v2664 = vpop.f32.mrb[0].mxu0
      %2665 = vmatprep.mubr.bf16.mxu0 0
      %2666 = vmatmul.mubr.bf16.gmra.mrb[0].mxu0 %v2460
      %v2667 = vpop.f32.mrb[0].mxu0
      %v2668 = vadd.f32 0.0, %v2667
      %v2669 = vpop.f32.mrb[0].mxu0
      %v2670 = vpop.f32.mrb[0].mxu0
      %v2671 = vadd.f32 0.0, %v2670
      %v2672 = vpop.f32.mrb[0].mxu0
      %2673 = vmatprep.mubr.bf16.mxu0 0
      %2674 = vmatmul.mubr.bf16.gmra.mrb[0].mxu0 %v2463
      %v2675 = vpop.f32.mrb[0].mxu0
      %v2676 = vadd.f32 0.0, %v2675
      %v2677 = vpop.f32.mrb[0].mxu0
      %v2678 = vpop.f32.mrb[0].mxu0
      %v2679 = vadd.f32 0.0, %v2678
      %v2680 = vpop.f32.mrb[0].mxu0
      %2681 = vmatprep.mubr.bf16.mxu0 0
      %2682 = vmatmul.mubr.bf16.gmra.mrb[0].mxu0 %v2466
      %v2683 = vpop.f32.mrb[0].mxu0
      %v2684 = vadd.f32 0.0, %v2683
      %v2685 = vpop.f32.mrb[0].mxu0
      %v2686 = vpop.f32.mrb[0].mxu0
      %v2687 = vadd.f32 0.0, %v2686
      %v2688 = vpop.f32.mrb[0].mxu0
      %2689 = vmatprep.mubr.bf16.mxu0 0
      %2690 = vmatmul.mubr.bf16.gmra.mrb[0].mxu0 %v2469
      %v2691 = vpop.f32.mrb[0].mxu0
      %v2692 = vadd.f32 0.0, %v2691
      %v2693 = vpop.f32.mrb[0].mxu0
      %v2694 = vpop.f32.mrb[0].mxu0
      %v2695 = vadd.f32 0.0, %v2694
      %v2696 = vpop.f32.mrb[0].mxu0
      %2697 = vmatprep.mubr.bf16.mxu0 0
      %2698 = vmatmul.mubr.bf16.gmra.mrb[0].mxu0 %v2472
      %v2699 = vpop.f32.mrb[0].mxu0
      %v2700 = vadd.f32 0.0, %v2699
      %v2701 = vpop.f32.mrb[0].mxu0
      %v2702 = vpop.f32.mrb[0].mxu0
      %v2703 = vadd.f32 0.0, %v2702
      %v2704 = vpop.f32.mrb[0].mxu0
      %2705 = vmatprep.mubr.bf16.mxu0 0
      %2706 = vmatmul.mubr.bf16.gmra.mrb[0].mxu0 %v2475
      %v2707 = vpop.f32.mrb[0].mxu0
      %v2708 = vadd.f32 0.0, %v2707
      %v2709 = vpop.f32.mrb[0].mxu0
      %v2710 = vpop.f32.mrb[0].mxu0
      %v2711 = vadd.f32 0.0, %v2710
      %v2712 = vpop.f32.mrb[0].mxu0
      %2713 = vmatprep.mubr.bf16.mxu0 0
      %2714 = vmatmul.mubr.bf16.gmra.mrb[0].mxu0 %v2478
      %v2715 = vpop.f32.mrb[0].mxu0
      %v2716 = vadd.f32 0.0, %v2715
      %v2717 = vpop.f32.mrb[0].mxu0
      %v2718 = vpop.f32.mrb[0].mxu0
      %v2719 = vadd.f32 0.0, %v2718
      %v2720 = vpop.f32.mrb[0].mxu0
      %2721 = vmatprep.mubr.bf16.mxu0 0
      %2722 = vmatmul.mubr.bf16.gmra.mrb[0].mxu0 %v2481
      %v2723 = vpop.f32.mrb[0].mxu0
      %v2724 = vadd.f32 0.0, %v2723
      %v2725 = vpop.f32.mrb[0].mxu0
      %v2726 = vpop.f32.mrb[0].mxu0
      %v2727 = vadd.f32 0.0, %v2726
      %v2728 = vpop.f32.mrb[0].mxu0
      %2729 = vmatprep.mubr.bf16.mxu0 0
      %2730 = vmatmul.mubr.bf16.gmra.mrb[0].mxu0 %v2484
      %v2731 = vpop.f32.mrb[0].mxu0
      %v2732 = vadd.f32 0.0, %v2731
      %v2733 = vpop.f32.mrb[0].mxu0
      %v2734 = vpop.f32.mrb[0].mxu0
      %v2735 = vadd.f32 0.0, %v2734
      %v2736 = vpop.f32.mrb[0].mxu0
      %2737 = vmatprep.mubr.bf16.mxu0 0
      %2738 = vmatmul.mubr.bf16.gmra.mrb[0].mxu0 %v2487
      %v2739 = vpop.f32.mrb[0].mxu0
      %v2740 = vadd.f32 0.0, %v2739
      %v2741 = vpop.f32.mrb[0].mxu0
      %v2742 = vpop.f32.mrb[0].mxu0
      %v2743 = vadd.f32 0.0, %v2742
      %v2744 = vpop.f32.mrb[0].mxu0
      %2745 = vmatprep.mubr.bf16.mxu0 0
      %2746 = vmatmul.mubr.bf16.gmra.mrb[0].mxu0 %v2490
      %v2747 = vpop.f32.mrb[0].mxu0
      %v2748 = vadd.f32 0.0, %v2747
      %v2749 = vpop.f32.mrb[0].mxu0
      %v2750 = vpop.f32.mrb[0].mxu0
      %v2751 = vadd.f32 0.0, %v2750
      %v2752 = vpop.f32.mrb[0].mxu0
      %2753 = vmatprep.mubr.bf16.mxu0 0
      %2754 = vmatmul.mubr.bf16.gmra.mrb[0].mxu0 %v2493
      %v2755 = vpop.f32.mrb[0].mxu0
      %v2756 = vadd.f32 0.0, %v2755
      %v2757 = vpop.f32.mrb[0].mxu0
      %v2758 = vpop.f32.mrb[0].mxu0
      %v2759 = vadd.f32 0.0, %v2758
      %v2760 = vpop.f32.mrb[0].mxu0
      %2761 = vmatprep.mubr.bf16.mxu0 0
      %2762 = vmatmul.mubr.bf16.gmra.mrb[0].mxu0 %v2496
      %v2763 = vpop.f32.mrb[0].mxu0
      %v2764 = vadd.f32 0.0, %v2763
      %v2765 = vpop.f32.mrb[0].mxu0
      %v2766 = vpop.f32.mrb[0].mxu0
      %v2767 = vadd.f32 0.0, %v2766
      %v2768 = vpop.f32.mrb[0].mxu0
      %2769 = vmatprep.mubr.bf16.mxu0 0
      %2770 = vmatmul.mubr.bf16.gmra.mrb[0].mxu0 %v2499
      %v2771 = vpop.f32.mrb[0].mxu0
      %v2772 = vadd.f32 0.0, %v2771
      %v2773 = vpop.f32.mrb[0].mxu0
      %v2774 = vpop.f32.mrb[0].mxu0
      %v2775 = vadd.f32 0.0, %v2774
      %v2776 = vpop.f32.mrb[0].mxu0
      %2777 = vmatprep.mubr.bf16.mxu0 0
      %2778 = vmatmul.mubr.bf16.gmra.mrb[0].mxu0 %v2502
      %v2779 = vpop.f32.mrb[0].mxu0
      %v2780 = vadd.f32 0.0, %v2779
      %v2781 = vpop.f32.mrb[0].mxu0
      %v2782 = vpop.f32.mrb[0].mxu0
      %v2783 = vadd.f32 0.0, %v2782
      %v2784 = vpop.f32.mrb[0].mxu0
      %2785 = vmatprep.mubr.bf16.mxu0 0
      %2786 = vmatmul.mubr.bf16.gmra.mrb[0].mxu0 %v2505
      %v2787 = vpop.f32.mrb[0].mxu0
      %v2788 = vadd.f32 0.0, %v2787
      %v2789 = vpop.f32.mrb[0].mxu0
      %v2790 = vpop.f32.mrb[0].mxu0
      %v2791 = vadd.f32 0.0, %v2790
      %v2792 = vpop.f32.mrb[0].mxu0
      %2793 = vmatprep.mubr.bf16.mxu0 0
      %2794 = vmatmul.mubr.bf16.gmra.mrb[0].mxu0 %v2508
      %v2795 = vpop.f32.mrb[0].mxu0
      %v2796 = vadd.f32 0.0, %v2795
      %v2797 = vpop.f32.mrb[0].mxu0
      %v2798 = vpop.f32.mrb[0].mxu0
      %v2799 = vadd.f32 0.0, %v2798
      %v2800 = vpop.f32.mrb[0].mxu0
      %2801 = vdwg.mxu0
      %v2802 = vadd.f32 %v2206, %v2548
      %v2803 = vadd.f32 %v2207, %v2551
      %v2804 = vadd.f32 %v2208, %v2556
      %v2805 = vadd.f32 %v2209, %v2559
      %v2806 = vadd.f32 %v2210, %v2564
      %v2807 = vadd.f32 %v2211, %v2567
      %v2808 = vadd.f32 %v2212, %v2572
      %v2809 = vadd.f32 %v2213, %v2575
      %v2810 = vadd.f32 %v2214, %v2580
      %v2811 = vadd.f32 %v2215, %v2583
      %v2812 = vadd.f32 %v2216, %v2588
      %v2813 = vadd.f32 %v2217, %v2591
      %v2814 = vadd.f32 %v2218, %v2596
      %v2815 = vadd.f32 %v2219, %v2599
      %v2816 = vadd.f32 %v2220, %v2604
      %v2817 = vadd.f32 %v2221, %v2607
      %v2818 = vadd.f32 %v2222, %v2612
      %v2819 = vadd.f32 %v2223, %v2615
      %v2820 = vadd.f32 %v2224, %v2620
      %v2821 = vadd.f32 %v2225, %v2623
      %v2822 = vadd.f32 %v2226, %v2628
      %v2823 = vadd.f32 %v2227, %v2631
      %v2824 = vadd.f32 %v2228, %v2636
      %v2825 = vadd.f32 %v2229, %v2639
      %v2826 = vadd.f32 %v2230, %v2644
      %v2827 = vadd.f32 %v2231, %v2647
      %v2828 = vadd.f32 %v2232, %v2652
      %v2829 = vadd.f32 %v2233, %v2655
      %v2830 = vadd.f32 %v2234, %v2660
      %v2831 = vadd.f32 %v2235, %v2663
      %v2832 = vadd.f32 %v2236, %v2668
      %v2833 = vadd.f32 %v2237, %v2671
      %v2834 = vadd.f32 %v2238, %v2676
      %v2835 = vadd.f32 %v2239, %v2679
      %v2836 = vadd.f32 %v2240, %v2684
      %v2837 = vadd.f32 %v2241, %v2687
      %v2838 = vadd.f32 %v2242, %v2692
      %v2839 = vadd.f32 %v2243, %v2695
      %v2840 = vadd.f32 %v2244, %v2700
      %v2841 = vadd.f32 %v2245, %v2703
      %v2842 = vadd.f32 %v2246, %v2708
      %v2843 = vadd.f32 %v2247, %v2711
      %v2844 = vadd.f32 %v2248, %v2716
      %v2845 = vadd.f32 %v2249, %v2719
      %v2846 = vadd.f32 %v2250, %v2724
      %v2847 = vadd.f32 %v2251, %v2727
      %v2848 = vadd.f32 %v2252, %v2732
      %v2849 = vadd.f32 %v2253, %v2735
      %v2850 = vadd.f32 %v2254, %v2740
      %v2851 = vadd.f32 %v2255, %v2743
      %v2852 = vadd.f32 %v2256, %v2748
      %v2853 = vadd.f32 %v2257, %v2751
      %v2854 = vadd.f32 %v2258, %v2756
      %v2855 = vadd.f32 %v2259, %v2759
      %v2856 = vadd.f32 %v2260, %v2764
      %v2857 = vadd.f32 %v2261, %v2767
      %v2858 = vadd.f32 %v2262, %v2772
      %v2859 = vadd.f32 %v2263, %v2775
      %v2860 = vadd.f32 %v2264, %v2780
      %v2861 = vadd.f32 %v2265, %v2783
      %v2862 = vadd.f32 %v2266, %v2788
      %v2863 = vadd.f32 %v2267, %v2791
      %v2864 = vadd.f32 %v2268, %v2796
      %v2865 = vadd.f32 %v2269, %v2799
      %s2866 = scalar_lea.vmem %s1, 10
      %v2867 = vld [vmem:[%s2866] sm:$0x3]
      %vm2868 = vcmask 1045504
      %v2869 = vrot.slane %v303, 2
      %v2870 = vrot.slane %v304, 2
      %v2871 = vsel %vm2868, %v2869, %v2870
      %v2872 = vrot.slane %v305, 2
      %v2873 = vsel %vm2868, %v2870, %v2872
      %v2874 = vrot.slane %v306, 2
      %v2875 = vsel %vm2868, %v2872, %v2874
      %v2876 = vrot.slane %v307, 2
      %v2877 = vsel %vm2868, %v2874, %v2876
      %v2878 = vrot.slane %v308, 2
      %v2879 = vsel %vm2868, %v2876, %v2878
      %v2880 = vrot.slane %v309, 2
      %v2881 = vsel %vm2868, %v2878, %v2880
      %v2882 = vrot.slane %v310, 2
      %v2883 = vsel %vm2868, %v2880, %v2882
      %v2884 = vrot.slane %v311, 2
      %v2885 = vsel %vm2868, %v2882, %v2884
      %v2886 = vrot.slane %v312, 2
      %v2887 = vsel %vm2868, %v2884, %v2886
      %v2888 = vrot.slane %v313, 2
      %v2889 = vsel %vm2868, %v2886, %v2888
      %v2890 = vrot.slane %v314, 2
      %v2891 = vsel %vm2868, %v2888, %v2890
      %v2892 = vrot.slane %v315, 2
      %v2893 = vsel %vm2868, %v2890, %v2892
      %v2894 = vrot.slane %v316, 2
      %v2895 = vsel %vm2868, %v2892, %v2894
      %v2896 = vrot.slane %v317, 2
      %v2897 = vsel %vm2868, %v2894, %v2896
      %v2898 = vrot.slane %v318, 2
      %v2899 = vsel %vm2868, %v2896, %v2898
      %v2900 = vrot.slane %v319, 2
      %v2901 = vsel %vm2868, %v2898, %v2900
      %v2902 = vrot.slane %v320, 2
      %v2903 = vsel %vm2868, %v2900, %v2902
      %v2904 = vrot.slane %v321, 2
      %v2905 = vsel %vm2868, %v2902, %v2904
      %v2906 = vrot.slane %v322, 2
      %v2907 = vsel %vm2868, %v2904, %v2906
      %v2908 = vrot.slane %v323, 2
      %v2909 = vsel %vm2868, %v2906, %v2908
      %v2910 = vrot.slane %v324, 2
      %v2911 = vsel %vm2868, %v2908, %v2910
      %v2912 = vrot.slane %v325, 2
      %v2913 = vsel %vm2868, %v2910, %v2912
      %v2914 = vrot.slane %v326, 2
      %v2915 = vsel %vm2868, %v2912, %v2914
      %v2916 = vrot.slane %v327, 2
      %v2917 = vsel %vm2868, %v2914, %v2916
      %v2918 = vrot.slane %v328, 2
      %v2919 = vsel %vm2868, %v2916, %v2918
      %v2920 = vrot.slane %v329, 2
      %v2921 = vsel %vm2868, %v2918, %v2920
      %v2922 = vrot.slane %v330, 2
      %v2923 = vsel %vm2868, %v2920, %v2922
      %v2924 = vrot.slane %v331, 2
      %v2925 = vsel %vm2868, %v2922, %v2924
      %v2926 = vrot.slane %v332, 2
      %v2927 = vsel %vm2868, %v2924, %v2926
      %v2928 = vrot.slane %v333, 2
      %v2929 = vsel %vm2868, %v2926, %v2928
      %v2930 = vrot.slane %v1898, 2
      %v2931 = vsel %vm2868, %v2928, %v2930
      %v2932 = vrot.slane %v1899, 2
      %v2933 = vsel %vm2868, %v2930, %v2932
      %v2935 = vsel %vm599, %v2871, 0
      %v2938 = vsel %vm599, %v2873, 0
      %v2941 = vsel %vm599, %v2875, 0
      %v2944 = vsel %vm599, %v2877, 0
      %v2947 = vsel %vm599, %v2879, 0
      %v2950 = vsel %vm599, %v2881, 0
      %v2953 = vsel %vm599, %v2883, 0
      %v2956 = vsel %vm599, %v2885, 0
      %v2959 = vsel %vm599, %v2887, 0
      %v2962 = vsel %vm599, %v2889, 0
      %v2965 = vsel %vm599, %v2891, 0
      %v2968 = vsel %vm599, %v2893, 0
      %v2971 = vsel %vm599, %v2895, 0
      %v2974 = vsel %vm599, %v2897, 0
      %v2977 = vsel %vm599, %v2899, 0
      %v2980 = vsel %vm599, %v2901, 0
      %v2983 = vsel %vm599, %v2903, 0
      %v2986 = vsel %vm599, %v2905, 0
      %v2989 = vsel %vm599, %v2907, 0
      %v2992 = vsel %vm599, %v2909, 0
      %v2995 = vsel %vm599, %v2911, 0
      %v2998 = vsel %vm599, %v2913, 0
      %v3001 = vsel %vm599, %v2915, 0
      %v3004 = vsel %vm599, %v2917, 0
      %v3007 = vsel %vm599, %v2919, 0
      %v3010 = vsel %vm599, %v2921, 0
      %v3013 = vsel %vm599, %v2923, 0
      %v3016 = vsel %vm599, %v2925, 0
      %v3019 = vsel %vm599, %v2927, 0
      %v3022 = vsel %vm599, %v2929, 0
      %v3025 = vsel %vm599, %v2931, 0
      %v3028 = vsel %vm599, %v2933, 0
      %v3031 = vsel %vm696, %v2867, 0
      %3033 = vmatprep.subr.bf16.mxu0 0
      %3034 = vmatpush1.bf16.msra.mxu0 %v3031
      %3035 = vmatprep.subr.bf16.mxu0 0
      %3036 = vmatpush1.bf16.msra.mxu0 0
      %3037 = vmatprep.subr.bf16.mxu0 0
      %3038 = vmatpush1.bf16.msra.mxu0 0
      %3039 = vmatprep.subr.bf16.mxu0 0
      %3040 = vmatpush1.bf16.msra.mxu0 0
      %3041 = vmatprep.subr.bf16.mxu0 0
      %3042 = vmatpush1.bf16.msra.mxu0 0
      %3043 = vmatprep.subr.bf16.mxu0 0
      %3044 = vmatpush1.bf16.msra.mxu0 0
      %3045 = vmatprep.subr.bf16.mxu0 0
      %3046 = vmatpush1.bf16.msra.mxu0 0
      %3047 = vmatprep.subr.bf16.mxu0 0
      %3048 = vmatpush1.bf16.msra.mxu0 0
      %3049 = vmatprep.subr.bf16.mxu0 0
      %3050 = vmatpush1.bf16.msra.mxu0 0
      %3051 = vmatprep.subr.bf16.mxu0 0
      %3052 = vmatpush1.bf16.msra.mxu0 0
      %3053 = vmatprep.subr.bf16.mxu0 0
      %3054 = vmatpush1.bf16.msra.mxu0 0
      %3055 = vmatprep.subr.bf16.mxu0 0
      %3056 = vmatpush1.bf16.msra.mxu0 0
      %3057 = vmatprep.subr.bf16.mxu0 0
      %3058 = vmatpush1.bf16.msra.mxu0 0
      %3059 = vmatprep.subr.bf16.mxu0 0
      %3060 = vmatpush1.bf16.msra.mxu0 0
      %3061 = vmatprep.subr.bf16.mxu0 0
      %3062 = vmatpush1.bf16.msra.mxu0 0
      %3063 = vmatprep.subr.bf16.mxu0 0
      %3064 = vmatpush1.bf16.msra.mxu0 0
      %3065 = vmatprep.mubr.bf16.mxu0 0
      %3066 = vmatmul.mubr.bf16.gmra.mrb[0].mxu0 %v2935
      %v3067 = vpop.f32.mrb[0].mxu0
      %v3068 = vadd.f32 0.0, %v3067
      %v3069 = vpop.f32.mrb[0].mxu0
      %v3070 = vpop.f32.mrb[0].mxu0
      %v3071 = vadd.f32 0.0, %v3070
      %v3072 = vpop.f32.mrb[0].mxu0
      %3073 = vmatprep.mubr.bf16.mxu0 0
      %3074 = vmatmul.mubr.bf16.gmra.mrb[0].mxu0 %v2938
      %v3075 = vpop.f32.mrb[0].mxu0
      %v3076 = vadd.f32 0.0, %v3075
      %v3077 = vpop.f32.mrb[0].mxu0
      %v3078 = vpop.f32.mrb[0].mxu0
      %v3079 = vadd.f32 0.0, %v3078
      %v3080 = vpop.f32.mrb[0].mxu0
      %3081 = vmatprep.mubr.bf16.mxu0 0
      %3082 = vmatmul.mubr.bf16.gmra.mrb[0].mxu0 %v2941
      %v3083 = vpop.f32.mrb[0].mxu0
      %v3084 = vadd.f32 0.0, %v3083
      %v3085 = vpop.f32.mrb[0].mxu0
      %v3086 = vpop.f32.mrb[0].mxu0
      %v3087 = vadd.f32 0.0, %v3086
      %v3088 = vpop.f32.mrb[0].mxu0
      %3089 = vmatprep.mubr.bf16.mxu0 0
      %3090 = vmatmul.mubr.bf16.gmra.mrb[0].mxu0 %v2944
      %v3091 = vpop.f32.mrb[0].mxu0
      %v3092 = vadd.f32 0.0, %v3091
      %v3093 = vpop.f32.mrb[0].mxu0
      %v3094 = vpop.f32.mrb[0].mxu0
      %v3095 = vadd.f32 0.0, %v3094
      %v3096 = vpop.f32.mrb[0].mxu0
      %3097 = vmatprep.mubr.bf16.mxu0 0
      %3098 = vmatmul.mubr.bf16.gmra.mrb[0].mxu0 %v2947
      %v3099 = vpop.f32.mrb[0].mxu0
      %v3100 = vadd.f32 0.0, %v3099
      %v3101 = vpop.f32.mrb[0].mxu0
      %v3102 = vpop.f32.mrb[0].mxu0
      %v3103 = vadd.f32 0.0, %v3102
      %v3104 = vpop.f32.mrb[0].mxu0
      %3105 = vmatprep.mubr.bf16.mxu0 0
      %3106 = vmatmul.mubr.bf16.gmra.mrb[0].mxu0 %v2950
      %v3107 = vpop.f32.mrb[0].mxu0
      %v3108 = vadd.f32 0.0, %v3107
      %v3109 = vpop.f32.mrb[0].mxu0
      %v3110 = vpop.f32.mrb[0].mxu0
      %v3111 = vadd.f32 0.0, %v3110
      %v3112 = vpop.f32.mrb[0].mxu0
      %3113 = vmatprep.mubr.bf16.mxu0 0
      %3114 = vmatmul.mubr.bf16.gmra.mrb[0].mxu0 %v2953
      %v3115 = vpop.f32.mrb[0].mxu0
      %v3116 = vadd.f32 0.0, %v3115
      %v3117 = vpop.f32.mrb[0].mxu0
      %v3118 = vpop.f32.mrb[0].mxu0
      %v3119 = vadd.f32 0.0, %v3118
      %v3120 = vpop.f32.mrb[0].mxu0
      %3121 = vmatprep.mubr.bf16.mxu0 0
      %3122 = vmatmul.mubr.bf16.gmra.mrb[0].mxu0 %v2956
      %v3123 = vpop.f32.mrb[0].mxu0
      %v3124 = vadd.f32 0.0, %v3123
      %v3125 = vpop.f32.mrb[0].mxu0
      %v3126 = vpop.f32.mrb[0].mxu0
      %v3127 = vadd.f32 0.0, %v3126
      %v3128 = vpop.f32.mrb[0].mxu0
      %3129 = vmatprep.mubr.bf16.mxu0 0
      %3130 = vmatmul.mubr.bf16.gmra.mrb[0].mxu0 %v2959
      %v3131 = vpop.f32.mrb[0].mxu0
      %v3132 = vadd.f32 0.0, %v3131
      %v3133 = vpop.f32.mrb[0].mxu0
      %v3134 = vpop.f32.mrb[0].mxu0
      %v3135 = vadd.f32 0.0, %v3134
      %v3136 = vpop.f32.mrb[0].mxu0
      %3137 = vmatprep.mubr.bf16.mxu0 0
      %3138 = vmatmul.mubr.bf16.gmra.mrb[0].mxu0 %v2962
      %v3139 = vpop.f32.mrb[0].mxu0
      %v3140 = vadd.f32 0.0, %v3139
      %v3141 = vpop.f32.mrb[0].mxu0
      %v3142 = vpop.f32.mrb[0].mxu0
      %v3143 = vadd.f32 0.0, %v3142
      %v3144 = vpop.f32.mrb[0].mxu0
      %3145 = vmatprep.mubr.bf16.mxu0 0
      %3146 = vmatmul.mubr.bf16.gmra.mrb[0].mxu0 %v2965
      %v3147 = vpop.f32.mrb[0].mxu0
      %v3148 = vadd.f32 0.0, %v3147
      %v3149 = vpop.f32.mrb[0].mxu0
      %v3150 = vpop.f32.mrb[0].mxu0
      %v3151 = vadd.f32 0.0, %v3150
      %v3152 = vpop.f32.mrb[0].mxu0
      %3153 = vmatprep.mubr.bf16.mxu0 0
      %3154 = vmatmul.mubr.bf16.gmra.mrb[0].mxu0 %v2968
      %v3155 = vpop.f32.mrb[0].mxu0
      %v3156 = vadd.f32 0.0, %v3155
      %v3157 = vpop.f32.mrb[0].mxu0
      %v3158 = vpop.f32.mrb[0].mxu0
      %v3159 = vadd.f32 0.0, %v3158
      %v3160 = vpop.f32.mrb[0].mxu0
      %3161 = vmatprep.mubr.bf16.mxu0 0
      %3162 = vmatmul.mubr.bf16.gmra.mrb[0].mxu0 %v2971
      %v3163 = vpop.f32.mrb[0].mxu0
      %v3164 = vadd.f32 0.0, %v3163
      %v3165 = vpop.f32.mrb[0].mxu0
      %v3166 = vpop.f32.mrb[0].mxu0
      %v3167 = vadd.f32 0.0, %v3166
      %v3168 = vpop.f32.mrb[0].mxu0
      %3169 = vmatprep.mubr.bf16.mxu0 0
      %3170 = vmatmul.mubr.bf16.gmra.mrb[0].mxu0 %v2974
      %v3171 = vpop.f32.mrb[0].mxu0
      %v3172 = vadd.f32 0.0, %v3171
      %v3173 = vpop.f32.mrb[0].mxu0
      %v3174 = vpop.f32.mrb[0].mxu0
      %v3175 = vadd.f32 0.0, %v3174
      %v3176 = vpop.f32.mrb[0].mxu0
      %3177 = vmatprep.mubr.bf16.mxu0 0
      %3178 = vmatmul.mubr.bf16.gmra.mrb[0].mxu0 %v2977
      %v3179 = vpop.f32.mrb[0].mxu0
      %v3180 = vadd.f32 0.0, %v3179
      %v3181 = vpop.f32.mrb[0].mxu0
      %v3182 = vpop.f32.mrb[0].mxu0
      %v3183 = vadd.f32 0.0, %v3182
      %v3184 = vpop.f32.mrb[0].mxu0
      %3185 = vmatprep.mubr.bf16.mxu0 0
      %3186 = vmatmul.mubr.bf16.gmra.mrb[0].mxu0 %v2980
      %v3187 = vpop.f32.mrb[0].mxu0
      %v3188 = vadd.f32 0.0, %v3187
      %v3189 = vpop.f32.mrb[0].mxu0
      %v3190 = vpop.f32.mrb[0].mxu0
      %v3191 = vadd.f32 0.0, %v3190
      %v3192 = vpop.f32.mrb[0].mxu0
      %3193 = vmatprep.mubr.bf16.mxu0 0
      %3194 = vmatmul.mubr.bf16.gmra.mrb[0].mxu0 %v2983
      %v3195 = vpop.f32.mrb[0].mxu0
      %v3196 = vadd.f32 0.0, %v3195
      %v3197 = vpop.f32.mrb[0].mxu0
      %v3198 = vpop.f32.mrb[0].mxu0
      %v3199 = vadd.f32 0.0, %v3198
      %v3200 = vpop.f32.mrb[0].mxu0
      %3201 = vmatprep.mubr.bf16.mxu0 0
      %3202 = vmatmul.mubr.bf16.gmra.mrb[0].mxu0 %v2986
      %v3203 = vpop.f32.mrb[0].mxu0
      %v3204 = vadd.f32 0.0, %v3203
      %v3205 = vpop.f32.mrb[0].mxu0
      %v3206 = vpop.f32.mrb[0].mxu0
      %v3207 = vadd.f32 0.0, %v3206
      %v3208 = vpop.f32.mrb[0].mxu0
      %3209 = vmatprep.mubr.bf16.mxu0 0
      %3210 = vmatmul.mubr.bf16.gmra.mrb[0].mxu0 %v2989
      %v3211 = vpop.f32.mrb[0].mxu0
      %v3212 = vadd.f32 0.0, %v3211
      %v3213 = vpop.f32.mrb[0].mxu0
      %v3214 = vpop.f32.mrb[0].mxu0
      %v3215 = vadd.f32 0.0, %v3214
      %v3216 = vpop.f32.mrb[0].mxu0
      %3217 = vmatprep.mubr.bf16.mxu0 0
      %3218 = vmatmul.mubr.bf16.gmra.mrb[0].mxu0 %v2992
      %v3219 = vpop.f32.mrb[0].mxu0
      %v3220 = vadd.f32 0.0, %v3219
      %v3221 = vpop.f32.mrb[0].mxu0
      %v3222 = vpop.f32.mrb[0].mxu0
      %v3223 = vadd.f32 0.0, %v3222
      %v3224 = vpop.f32.mrb[0].mxu0
      %3225 = vmatprep.mubr.bf16.mxu0 0
      %3226 = vmatmul.mubr.bf16.gmra.mrb[0].mxu0 %v2995
      %v3227 = vpop.f32.mrb[0].mxu0
      %v3228 = vadd.f32 0.0, %v3227
      %v3229 = vpop.f32.mrb[0].mxu0
      %v3230 = vpop.f32.mrb[0].mxu0
      %v3231 = vadd.f32 0.0, %v3230
      %v3232 = vpop.f32.mrb[0].mxu0
      %3233 = vmatprep.mubr.bf16.mxu0 0
      %3234 = vmatmul.mubr.bf16.gmra.mrb[0].mxu0 %v2998
      %v3235 = vpop.f32.mrb[0].mxu0
      %v3236 = vadd.f32 0.0, %v3235
      %v3237 = vpop.f32.mrb[0].mxu0
      %v3238 = vpop.f32.mrb[0].mxu0
      %v3239 = vadd.f32 0.0, %v3238
      %v3240 = vpop.f32.mrb[0].mxu0
      %3241 = vmatprep.mubr.bf16.mxu0 0
      %3242 = vmatmul.mubr.bf16.gmra.mrb[0].mxu0 %v3001
      %v3243 = vpop.f32.mrb[0].mxu0
      %v3244 = vadd.f32 0.0, %v3243
      %v3245 = vpop.f32.mrb[0].mxu0
      %v3246 = vpop.f32.mrb[0].mxu0
      %v3247 = vadd.f32 0.0, %v3246
      %v3248 = vpop.f32.mrb[0].mxu0
      %3249 = vmatprep.mubr.bf16.mxu0 0
      %3250 = vmatmul.mubr.bf16.gmra.mrb[0].mxu0 %v3004
      %v3251 = vpop.f32.mrb[0].mxu0
      %v3252 = vadd.f32 0.0, %v3251
      %v3253 = vpop.f32.mrb[0].mxu0
      %v3254 = vpop.f32.mrb[0].mxu0
      %v3255 = vadd.f32 0.0, %v3254
      %v3256 = vpop.f32.mrb[0].mxu0
      %3257 = vmatprep.mubr.bf16.mxu0 0
      %3258 = vmatmul.mubr.bf16.gmra.mrb[0].mxu0 %v3007
      %v3259 = vpop.f32.mrb[0].mxu0
      %v3260 = vadd.f32 0.0, %v3259
      %v3261 = vpop.f32.mrb[0].mxu0
      %v3262 = vpop.f32.mrb[0].mxu0
      %v3263 = vadd.f32 0.0, %v3262
      %v3264 = vpop.f32.mrb[0].mxu0
      %3265 = vmatprep.mubr.bf16.mxu0 0
      %3266 = vmatmul.mubr.bf16.gmra.mrb[0].mxu0 %v3010
      %v3267 = vpop.f32.mrb[0].mxu0
      %v3268 = vadd.f32 0.0, %v3267
      %v3269 = vpop.f32.mrb[0].mxu0
      %v3270 = vpop.f32.mrb[0].mxu0
      %v3271 = vadd.f32 0.0, %v3270
      %v3272 = vpop.f32.mrb[0].mxu0
      %3273 = vmatprep.mubr.bf16.mxu0 0
      %3274 = vmatmul.mubr.bf16.gmra.mrb[0].mxu0 %v3013
      %v3275 = vpop.f32.mrb[0].mxu0
      %v3276 = vadd.f32 0.0, %v3275
      %v3277 = vpop.f32.mrb[0].mxu0
      %v3278 = vpop.f32.mrb[0].mxu0
      %v3279 = vadd.f32 0.0, %v3278
      %v3280 = vpop.f32.mrb[0].mxu0
      %3281 = vmatprep.mubr.bf16.mxu0 0
      %3282 = vmatmul.mubr.bf16.gmra.mrb[0].mxu0 %v3016
      %v3283 = vpop.f32.mrb[0].mxu0
      %v3284 = vadd.f32 0.0, %v3283
      %v3285 = vpop.f32.mrb[0].mxu0
      %v3286 = vpop.f32.mrb[0].mxu0
      %v3287 = vadd.f32 0.0, %v3286
      %v3288 = vpop.f32.mrb[0].mxu0
      %3289 = vmatprep.mubr.bf16.mxu0 0
      %3290 = vmatmul.mubr.bf16.gmra.mrb[0].mxu0 %v3019
      %v3291 = vpop.f32.mrb[0].mxu0
      %v3292 = vadd.f32 0.0, %v3291
      %v3293 = vpop.f32.mrb[0].mxu0
      %v3294 = vpop.f32.mrb[0].mxu0
      %v3295 = vadd.f32 0.0, %v3294
      %v3296 = vpop.f32.mrb[0].mxu0
      %3297 = vmatprep.mubr.bf16.mxu0 0
      %3298 = vmatmul.mubr.bf16.gmra.mrb[0].mxu0 %v3022
      %v3299 = vpop.f32.mrb[0].mxu0
      %v3300 = vadd.f32 0.0, %v3299
      %v3301 = vpop.f32.mrb[0].mxu0
      %v3302 = vpop.f32.mrb[0].mxu0
      %v3303 = vadd.f32 0.0, %v3302
      %v3304 = vpop.f32.mrb[0].mxu0
      %3305 = vmatprep.mubr.bf16.mxu0 0
      %3306 = vmatmul.mubr.bf16.gmra.mrb[0].mxu0 %v3025
      %v3307 = vpop.f32.mrb[0].mxu0
      %v3308 = vadd.f32 0.0, %v3307
      %v3309 = vpop.f32.mrb[0].mxu0
      %v3310 = vpop.f32.mrb[0].mxu0
      %v3311 = vadd.f32 0.0, %v3310
      %v3312 = vpop.f32.mrb[0].mxu0
      %3313 = vmatprep.mubr.bf16.mxu0 0
      %3314 = vmatmul.mubr.bf16.gmra.mrb[0].mxu0 %v3028
      %v3315 = vpop.f32.mrb[0].mxu0
      %v3316 = vadd.f32 0.0, %v3315
      %v3317 = vpop.f32.mrb[0].mxu0
      %v3318 = vpop.f32.mrb[0].mxu0
      %v3319 = vadd.f32 0.0, %v3318
      %v3320 = vpop.f32.mrb[0].mxu0
      %3321 = vdwg.mxu0
      %v3322 = vadd.f32 %v2802, %v3068
      %v3323 = vadd.f32 %v2803, %v3071
      %v3324 = vadd.f32 %v2804, %v3076
      %v3325 = vadd.f32 %v2805, %v3079
      %v3326 = vadd.f32 %v2806, %v3084
      %v3327 = vadd.f32 %v2807, %v3087
      %v3328 = vadd.f32 %v2808, %v3092
      %v3329 = vadd.f32 %v2809, %v3095
      %v3330 = vadd.f32 %v2810, %v3100
      %v3331 = vadd.f32 %v2811, %v3103
      %v3332 = vadd.f32 %v2812, %v3108
      %v3333 = vadd.f32 %v2813, %v3111
      %v3334 = vadd.f32 %v2814, %v3116
      %v3335 = vadd.f32 %v2815, %v3119
      %v3336 = vadd.f32 %v2816, %v3124
      %v3337 = vadd.f32 %v2817, %v3127
      %v3338 = vadd.f32 %v2818, %v3132
      %v3339 = vadd.f32 %v2819, %v3135
      %v3340 = vadd.f32 %v2820, %v3140
      %v3341 = vadd.f32 %v2821, %v3143
      %v3342 = vadd.f32 %v2822, %v3148
      %v3343 = vadd.f32 %v2823, %v3151
      %v3344 = vadd.f32 %v2824, %v3156
      %v3345 = vadd.f32 %v2825, %v3159
      %v3346 = vadd.f32 %v2826, %v3164
      %v3347 = vadd.f32 %v2827, %v3167
      %v3348 = vadd.f32 %v2828, %v3172
      %v3349 = vadd.f32 %v2829, %v3175
      %v3350 = vadd.f32 %v2830, %v3180
      %v3351 = vadd.f32 %v2831, %v3183
      %v3352 = vadd.f32 %v2832, %v3188
      %v3353 = vadd.f32 %v2833, %v3191
      %v3354 = vadd.f32 %v2834, %v3196
      %v3355 = vadd.f32 %v2835, %v3199
      %v3356 = vadd.f32 %v2836, %v3204
      %v3357 = vadd.f32 %v2837, %v3207
      %v3358 = vadd.f32 %v2838, %v3212
      %v3359 = vadd.f32 %v2839, %v3215
      %v3360 = vadd.f32 %v2840, %v3220
      %v3361 = vadd.f32 %v2841, %v3223
      %v3362 = vadd.f32 %v2842, %v3228
      %v3363 = vadd.f32 %v2843, %v3231
      %v3364 = vadd.f32 %v2844, %v3236
      %v3365 = vadd.f32 %v2845, %v3239
      %v3366 = vadd.f32 %v2846, %v3244
      %v3367 = vadd.f32 %v2847, %v3247
      %v3368 = vadd.f32 %v2848, %v3252
      %v3369 = vadd.f32 %v2849, %v3255
      %v3370 = vadd.f32 %v2850, %v3260
      %v3371 = vadd.f32 %v2851, %v3263
      %v3372 = vadd.f32 %v2852, %v3268
      %v3373 = vadd.f32 %v2853, %v3271
      %v3374 = vadd.f32 %v2854, %v3276
      %v3375 = vadd.f32 %v2855, %v3279
      %v3376 = vadd.f32 %v2856, %v3284
      %v3377 = vadd.f32 %v2857, %v3287
      %v3378 = vadd.f32 %v2858, %v3292
      %v3379 = vadd.f32 %v2859, %v3295
      %v3380 = vadd.f32 %v2860, %v3300
      %v3381 = vadd.f32 %v2861, %v3303
      %v3382 = vadd.f32 %v2862, %v3308
      %v3383 = vadd.f32 %v2863, %v3311
      %v3384 = vadd.f32 %v2864, %v3316
      %v3385 = vadd.f32 %v2865, %v3319
      %v3386 = vpack.c.bf16 %v300, %v299
      %v3387 = vpack.c.bf16 %v301, %v301
      %s3388 = scalar_lea.vmem %s1, 12
      %v3389 = vld [vmem:[%s3388] sm:$0x3]
      %v3392 = vrot.slane %v3386, 2
      %v3393 = vsel %vm2868, %v2930, %v3392
      %v3394 = vrot.slane %v3387, 2
      %v3395 = vsel %vm2868, %v3392, %v3394
      %v3397 = vsel %vm599, %v3393, 0
      %v3400 = vsel %vm599, %v3395, 0
      %v3403 = vsel %vm696, %v3389, 0
      %3405 = vmatprep.subr.bf16.mxu0 0
      %3406 = vmatpush1.bf16.msra.mxu0 %v3403
      %3407 = vmatprep.subr.bf16.mxu0 0
      %3408 = vmatpush1.bf16.msra.mxu0 0
      %3409 = vmatprep.subr.bf16.mxu0 0
      %3410 = vmatpush1.bf16.msra.mxu0 0
      %3411 = vmatprep.subr.bf16.mxu0 0
      %3412 = vmatpush1.bf16.msra.mxu0 0
      %3413 = vmatprep.subr.bf16.mxu0 0
      %3414 = vmatpush1.bf16.msra.mxu0 0
      %3415 = vmatprep.subr.bf16.mxu0 0
      %3416 = vmatpush1.bf16.msra.mxu0 0
      %3417 = vmatprep.subr.bf16.mxu0 0
      %3418 = vmatpush1.bf16.msra.mxu0 0
      %3419 = vmatprep.subr.bf16.mxu0 0
      %3420 = vmatpush1.bf16.msra.mxu0 0
      %3421 = vmatprep.subr.bf16.mxu0 0
      %3422 = vmatpush1.bf16.msra.mxu0 0
      %3423 = vmatprep.subr.bf16.mxu0 0
      %3424 = vmatpush1.bf16.msra.mxu0 0
      %3425 = vmatprep.subr.bf16.mxu0 0
      %3426 = vmatpush1.bf16.msra.mxu0 0
      %3427 = vmatprep.subr.bf16.mxu0 0
      %3428 = vmatpush1.bf16.msra.mxu0 0
      %3429 = vmatprep.subr.bf16.mxu0 0
      %3430 = vmatpush1.bf16.msra.mxu0 0
      %3431 = vmatprep.subr.bf16.mxu0 0
      %3432 = vmatpush1.bf16.msra.mxu0 0
      %3433 = vmatprep.subr.bf16.mxu0 0
      %3434 = vmatpush1.bf16.msra.mxu0 0
      %3435 = vmatprep.subr.bf16.mxu0 0
      %3436 = vmatpush1.bf16.msra.mxu0 0
      %3437 = vmatprep.mubr.bf16.mxu0 0
      %3438 = vmatmul.mubr.bf16.gmra.mrb[0].mxu0 %v2938
      %v3439 = vpop.f32.mrb[0].mxu0
      %v3440 = vadd.f32 0.0, %v3439
      %v3441 = vpop.f32.mrb[0].mxu0
      %v3442 = vpop.f32.mrb[0].mxu0
      %v3443 = vadd.f32 0.0, %v3442
      %v3444 = vpop.f32.mrb[0].mxu0
      %3445 = vmatprep.mubr.bf16.mxu0 0
      %3446 = vmatmul.mubr.bf16.gmra.mrb[0].mxu0 %v2941
      %v3447 = vpop.f32.mrb[0].mxu0
      %v3448 = vadd.f32 0.0, %v3447
      %v3449 = vpop.f32.mrb[0].mxu0
      %v3450 = vpop.f32.mrb[0].mxu0
      %v3451 = vadd.f32 0.0, %v3450
      %v3452 = vpop.f32.mrb[0].mxu0
      %3453 = vmatprep.mubr.bf16.mxu0 0
      %3454 = vmatmul.mubr.bf16.gmra.mrb[0].mxu0 %v2944
      %v3455 = vpop.f32.mrb[0].mxu0
      %v3456 = vadd.f32 0.0, %v3455
      %v3457 = vpop.f32.mrb[0].mxu0
      %v3458 = vpop.f32.mrb[0].mxu0
      %v3459 = vadd.f32 0.0, %v3458
      %v3460 = vpop.f32.mrb[0].mxu0
      %3461 = vmatprep.mubr.bf16.mxu0 0
      %3462 = vmatmul.mubr.bf16.gmra.mrb[0].mxu0 %v2947
      %v3463 = vpop.f32.mrb[0].mxu0
      %v3464 = vadd.f32 0.0, %v3463
      %v3465 = vpop.f32.mrb[0].mxu0
      %v3466 = vpop.f32.mrb[0].mxu0
      %v3467 = vadd.f32 0.0, %v3466
      %v3468 = vpop.f32.mrb[0].mxu0
      %3469 = vmatprep.mubr.bf16.mxu0 0
      %3470 = vmatmul.mubr.bf16.gmra.mrb[0].mxu0 %v2950
      %v3471 = vpop.f32.mrb[0].mxu0
      %v3472 = vadd.f32 0.0, %v3471
      %v3473 = vpop.f32.mrb[0].mxu0
      %v3474 = vpop.f32.mrb[0].mxu0
      %v3475 = vadd.f32 0.0, %v3474
      %v3476 = vpop.f32.mrb[0].mxu0
      %3477 = vmatprep.mubr.bf16.mxu0 0
      %3478 = vmatmul.mubr.bf16.gmra.mrb[0].mxu0 %v2953
      %v3479 = vpop.f32.mrb[0].mxu0
      %v3480 = vadd.f32 0.0, %v3479
      %v3481 = vpop.f32.mrb[0].mxu0
      %v3482 = vpop.f32.mrb[0].mxu0
      %v3483 = vadd.f32 0.0, %v3482
      %v3484 = vpop.f32.mrb[0].mxu0
      %3485 = vmatprep.mubr.bf16.mxu0 0
      %3486 = vmatmul.mubr.bf16.gmra.mrb[0].mxu0 %v2956
      %v3487 = vpop.f32.mrb[0].mxu0
      %v3488 = vadd.f32 0.0, %v3487
      %v3489 = vpop.f32.mrb[0].mxu0
      %v3490 = vpop.f32.mrb[0].mxu0
      %v3491 = vadd.f32 0.0, %v3490
      %v3492 = vpop.f32.mrb[0].mxu0
      %3493 = vmatprep.mubr.bf16.mxu0 0
      %3494 = vmatmul.mubr.bf16.gmra.mrb[0].mxu0 %v2959
      %v3495 = vpop.f32.mrb[0].mxu0
      %v3496 = vadd.f32 0.0, %v3495
      %v3497 = vpop.f32.mrb[0].mxu0
      %v3498 = vpop.f32.mrb[0].mxu0
      %v3499 = vadd.f32 0.0, %v3498
      %v3500 = vpop.f32.mrb[0].mxu0
      %3501 = vmatprep.mubr.bf16.mxu0 0
      %3502 = vmatmul.mubr.bf16.gmra.mrb[0].mxu0 %v2962
      %v3503 = vpop.f32.mrb[0].mxu0
      %v3504 = vadd.f32 0.0, %v3503
      %v3505 = vpop.f32.mrb[0].mxu0
      %v3506 = vpop.f32.mrb[0].mxu0
      %v3507 = vadd.f32 0.0, %v3506
      %v3508 = vpop.f32.mrb[0].mxu0
      %3509 = vmatprep.mubr.bf16.mxu0 0
      %3510 = vmatmul.mubr.bf16.gmra.mrb[0].mxu0 %v2965
      %v3511 = vpop.f32.mrb[0].mxu0
      %v3512 = vadd.f32 0.0, %v3511
      %v3513 = vpop.f32.mrb[0].mxu0
      %v3514 = vpop.f32.mrb[0].mxu0
      %v3515 = vadd.f32 0.0, %v3514
      %v3516 = vpop.f32.mrb[0].mxu0
      %3517 = vmatprep.mubr.bf16.mxu0 0
      %3518 = vmatmul.mubr.bf16.gmra.mrb[0].mxu0 %v2968
      %v3519 = vpop.f32.mrb[0].mxu0
      %v3520 = vadd.f32 0.0, %v3519
      %v3521 = vpop.f32.mrb[0].mxu0
      %v3522 = vpop.f32.mrb[0].mxu0
      %v3523 = vadd.f32 0.0, %v3522
      %v3524 = vpop.f32.mrb[0].mxu0
      %3525 = vmatprep.mubr.bf16.mxu0 0
      %3526 = vmatmul.mubr.bf16.gmra.mrb[0].mxu0 %v2971
      %v3527 = vpop.f32.mrb[0].mxu0
      %v3528 = vadd.f32 0.0, %v3527
      %v3529 = vpop.f32.mrb[0].mxu0
      %v3530 = vpop.f32.mrb[0].mxu0
      %v3531 = vadd.f32 0.0, %v3530
      %v3532 = vpop.f32.mrb[0].mxu0
      %3533 = vmatprep.mubr.bf16.mxu0 0
      %3534 = vmatmul.mubr.bf16.gmra.mrb[0].mxu0 %v2974
      %v3535 = vpop.f32.mrb[0].mxu0
      %v3536 = vadd.f32 0.0, %v3535
      %v3537 = vpop.f32.mrb[0].mxu0
      %v3538 = vpop.f32.mrb[0].mxu0
      %v3539 = vadd.f32 0.0, %v3538
      %v3540 = vpop.f32.mrb[0].mxu0
      %3541 = vmatprep.mubr.bf16.mxu0 0
      %3542 = vmatmul.mubr.bf16.gmra.mrb[0].mxu0 %v2977
      %v3543 = vpop.f32.mrb[0].mxu0
      %v3544 = vadd.f32 0.0, %v3543
      %v3545 = vpop.f32.mrb[0].mxu0
      %v3546 = vpop.f32.mrb[0].mxu0
      %v3547 = vadd.f32 0.0, %v3546
      %v3548 = vpop.f32.mrb[0].mxu0
      %3549 = vmatprep.mubr.bf16.mxu0 0
      %3550 = vmatmul.mubr.bf16.gmra.mrb[0].mxu0 %v2980
      %v3551 = vpop.f32.mrb[0].mxu0
      %v3552 = vadd.f32 0.0, %v3551
      %v3553 = vpop.f32.mrb[0].mxu0
      %v3554 = vpop.f32.mrb[0].mxu0
      %v3555 = vadd.f32 0.0, %v3554
      %v3556 = vpop.f32.mrb[0].mxu0
      %3557 = vmatprep.mubr.bf16.mxu0 0
      %3558 = vmatmul.mubr.bf16.gmra.mrb[0].mxu0 %v2983
      %v3559 = vpop.f32.mrb[0].mxu0
      %v3560 = vadd.f32 0.0, %v3559
      %v3561 = vpop.f32.mrb[0].mxu0
      %v3562 = vpop.f32.mrb[0].mxu0
      %v3563 = vadd.f32 0.0, %v3562
      %v3564 = vpop.f32.mrb[0].mxu0
      %3565 = vmatprep.mubr.bf16.mxu0 0
      %3566 = vmatmul.mubr.bf16.gmra.mrb[0].mxu0 %v2986
      %v3567 = vpop.f32.mrb[0].mxu0
      %v3568 = vadd.f32 0.0, %v3567
      %v3569 = vpop.f32.mrb[0].mxu0
      %v3570 = vpop.f32.mrb[0].mxu0
      %v3571 = vadd.f32 0.0, %v3570
      %v3572 = vpop.f32.mrb[0].mxu0
      %3573 = vmatprep.mubr.bf16.mxu0 0
      %3574 = vmatmul.mubr.bf16.gmra.mrb[0].mxu0 %v2989
      %v3575 = vpop.f32.mrb[0].mxu0
      %v3576 = vadd.f32 0.0, %v3575
      %v3577 = vpop.f32.mrb[0].mxu0
      %v3578 = vpop.f32.mrb[0].mxu0
      %v3579 = vadd.f32 0.0, %v3578
      %v3580 = vpop.f32.mrb[0].mxu0
      %3581 = vmatprep.mubr.bf16.mxu0 0
      %3582 = vmatmul.mubr.bf16.gmra.mrb[0].mxu0 %v2992
      %v3583 = vpop.f32.mrb[0].mxu0
      %v3584 = vadd.f32 0.0, %v3583
      %v3585 = vpop.f32.mrb[0].mxu0
      %v3586 = vpop.f32.mrb[0].mxu0
      %v3587 = vadd.f32 0.0, %v3586
      %v3588 = vpop.f32.mrb[0].mxu0
      %3589 = vmatprep.mubr.bf16.mxu0 0
      %3590 = vmatmul.mubr.bf16.gmra.mrb[0].mxu0 %v2995
      %v3591 = vpop.f32.mrb[0].mxu0
      %v3592 = vadd.f32 0.0, %v3591
      %v3593 = vpop.f32.mrb[0].mxu0
      %v3594 = vpop.f32.mrb[0].mxu0
      %v3595 = vadd.f32 0.0, %v3594
      %v3596 = vpop.f32.mrb[0].mxu0
      %3597 = vmatprep.mubr.bf16.mxu0 0
      %3598 = vmatmul.mubr.bf16.gmra.mrb[0].mxu0 %v2998
      %v3599 = vpop.f32.mrb[0].mxu0
      %v3600 = vadd.f32 0.0, %v3599
      %v3601 = vpop.f32.mrb[0].mxu0
      %v3602 = vpop.f32.mrb[0].mxu0
      %v3603 = vadd.f32 0.0, %v3602
      %v3604 = vpop.f32.mrb[0].mxu0
      %3605 = vmatprep.mubr.bf16.mxu0 0
      %3606 = vmatmul.mubr.bf16.gmra.mrb[0].mxu0 %v3001
      %v3607 = vpop.f32.mrb[0].mxu0
      %v3608 = vadd.f32 0.0, %v3607
      %v3609 = vpop.f32.mrb[0].mxu0
      %v3610 = vpop.f32.mrb[0].mxu0
      %v3611 = vadd.f32 0.0, %v3610
      %v3612 = vpop.f32.mrb[0].mxu0
      %3613 = vmatprep.mubr.bf16.mxu0 0
      %3614 = vmatmul.mubr.bf16.gmra.mrb[0].mxu0 %v3004
      %v3615 = vpop.f32.mrb[0].mxu0
      %v3616 = vadd.f32 0.0, %v3615
      %v3617 = vpop.f32.mrb[0].mxu0
      %v3618 = vpop.f32.mrb[0].mxu0
      %v3619 = vadd.f32 0.0, %v3618
      %v3620 = vpop.f32.mrb[0].mxu0
      %3621 = vmatprep.mubr.bf16.mxu0 0
      %3622 = vmatmul.mubr.bf16.gmra.mrb[0].mxu0 %v3007
      %v3623 = vpop.f32.mrb[0].mxu0
      %v3624 = vadd.f32 0.0, %v3623
      %v3625 = vpop.f32.mrb[0].mxu0
      %v3626 = vpop.f32.mrb[0].mxu0
      %v3627 = vadd.f32 0.0, %v3626
      %v3628 = vpop.f32.mrb[0].mxu0
      %3629 = vmatprep.mubr.bf16.mxu0 0
      %3630 = vmatmul.mubr.bf16.gmra.mrb[0].mxu0 %v3010
      %v3631 = vpop.f32.mrb[0].mxu0
      %v3632 = vadd.f32 0.0, %v3631
      %v3633 = vpop.f32.mrb[0].mxu0
      %v3634 = vpop.f32.mrb[0].mxu0
      %v3635 = vadd.f32 0.0, %v3634
      %v3636 = vpop.f32.mrb[0].mxu0
      %3637 = vmatprep.mubr.bf16.mxu0 0
      %3638 = vmatmul.mubr.bf16.gmra.mrb[0].mxu0 %v3013
      %v3639 = vpop.f32.mrb[0].mxu0
      %v3640 = vadd.f32 0.0, %v3639
      %v3641 = vpop.f32.mrb[0].mxu0
      %v3642 = vpop.f32.mrb[0].mxu0
      %v3643 = vadd.f32 0.0, %v3642
      %v3644 = vpop.f32.mrb[0].mxu0
      %3645 = vmatprep.mubr.bf16.mxu0 0
      %3646 = vmatmul.mubr.bf16.gmra.mrb[0].mxu0 %v3016
      %v3647 = vpop.f32.mrb[0].mxu0
      %v3648 = vadd.f32 0.0, %v3647
      %v3649 = vpop.f32.mrb[0].mxu0
      %v3650 = vpop.f32.mrb[0].mxu0
      %v3651 = vadd.f32 0.0, %v3650
      %v3652 = vpop.f32.mrb[0].mxu0
      %3653 = vmatprep.mubr.bf16.mxu0 0
      %3654 = vmatmul.mubr.bf16.gmra.mrb[0].mxu0 %v3019
      %v3655 = vpop.f32.mrb[0].mxu0
      %v3656 = vadd.f32 0.0, %v3655
      %v3657 = vpop.f32.mrb[0].mxu0
      %v3658 = vpop.f32.mrb[0].mxu0
      %v3659 = vadd.f32 0.0, %v3658
      %v3660 = vpop.f32.mrb[0].mxu0
      %3661 = vmatprep.mubr.bf16.mxu0 0
      %3662 = vmatmul.mubr.bf16.gmra.mrb[0].mxu0 %v3022
      %v3663 = vpop.f32.mrb[0].mxu0
      %v3664 = vadd.f32 0.0, %v3663
      %v3665 = vpop.f32.mrb[0].mxu0
      %v3666 = vpop.f32.mrb[0].mxu0
      %v3667 = vadd.f32 0.0, %v3666
      %v3668 = vpop.f32.mrb[0].mxu0
      %3669 = vmatprep.mubr.bf16.mxu0 0
      %3670 = vmatmul.mubr.bf16.gmra.mrb[0].mxu0 %v3025
      %v3671 = vpop.f32.mrb[0].mxu0
      %v3672 = vadd.f32 0.0, %v3671
      %v3673 = vpop.f32.mrb[0].mxu0
      %v3674 = vpop.f32.mrb[0].mxu0
      %v3675 = vadd.f32 0.0, %v3674
      %v3676 = vpop.f32.mrb[0].mxu0
      %3677 = vmatprep.mubr.bf16.mxu0 0
      %3678 = vmatmul.mubr.bf16.gmra.mrb[0].mxu0 %v3397
      %v3679 = vpop.f32.mrb[0].mxu0
      %v3680 = vadd.f32 0.0, %v3679
      %v3681 = vpop.f32.mrb[0].mxu0
      %v3682 = vpop.f32.mrb[0].mxu0
      %v3683 = vadd.f32 0.0, %v3682
      %v3684 = vpop.f32.mrb[0].mxu0
      %3685 = vmatprep.mubr.bf16.mxu0 0
      %3686 = vmatmul.mubr.bf16.gmra.mrb[0].mxu0 %v3400
      %v3687 = vpop.f32.mrb[0].mxu0
      %v3688 = vadd.f32 0.0, %v3687
      %v3689 = vpop.f32.mrb[0].mxu0
      %v3690 = vpop.f32.mrb[0].mxu0
      %v3691 = vadd.f32 0.0, %v3690
      %v3692 = vpop.f32.mrb[0].mxu0
      %3693 = vdwg.mxu0
      %v3694 = vadd.f32 %v3322, %v3440
      %v3695 = vadd.f32 %v3323, %v3443
      %v3696 = vadd.f32 %v3324, %v3448
      %v3697 = vadd.f32 %v3325, %v3451
      %v3698 = vadd.f32 %v3326, %v3456
      %v3699 = vadd.f32 %v3327, %v3459
      %v3700 = vadd.f32 %v3328, %v3464
      %v3701 = vadd.f32 %v3329, %v3467
      %v3702 = vadd.f32 %v3330, %v3472
      %v3703 = vadd.f32 %v3331, %v3475
      %v3704 = vadd.f32 %v3332, %v3480
      %v3705 = vadd.f32 %v3333, %v3483
      %v3706 = vadd.f32 %v3334, %v3488
      %v3707 = vadd.f32 %v3335, %v3491
      %v3708 = vadd.f32 %v3336, %v3496
      %v3709 = vadd.f32 %v3337, %v3499
      %v3710 = vadd.f32 %v3338, %v3504
      %v3711 = vadd.f32 %v3339, %v3507
      %v3712 = vadd.f32 %v3340, %v3512
      %v3713 = vadd.f32 %v3341, %v3515
      %v3714 = vadd.f32 %v3342, %v3520
      %v3715 = vadd.f32 %v3343, %v3523
      %v3716 = vadd.f32 %v3344, %v3528
      %v3717 = vadd.f32 %v3345, %v3531
      %v3718 = vadd.f32 %v3346, %v3536
      %v3719 = vadd.f32 %v3347, %v3539
      %v3720 = vadd.f32 %v3348, %v3544
      %v3721 = vadd.f32 %v3349, %v3547
      %v3722 = vadd.f32 %v3350, %v3552
      %v3723 = vadd.f32 %v3351, %v3555
      %v3724 = vadd.f32 %v3352, %v3560
      %v3725 = vadd.f32 %v3353, %v3563
      %v3726 = vadd.f32 %v3354, %v3568
      %v3727 = vadd.f32 %v3355, %v3571
      %v3728 = vadd.f32 %v3356, %v3576
      %v3729 = vadd.f32 %v3357, %v3579
      %v3730 = vadd.f32 %v3358, %v3584
      %v3731 = vadd.f32 %v3359, %v3587
      %v3732 = vadd.f32 %v3360, %v3592
      %v3733 = vadd.f32 %v3361, %v3595
      %v3734 = vadd.f32 %v3362, %v3600
      %v3735 = vadd.f32 %v3363, %v3603
      %v3736 = vadd.f32 %v3364, %v3608
      %v3737 = vadd.f32 %v3365, %v3611
      %v3738 = vadd.f32 %v3366, %v3616
      %v3739 = vadd.f32 %v3367, %v3619
      %v3740 = vadd.f32 %v3368, %v3624
      %v3741 = vadd.f32 %v3369, %v3627
      %v3742 = vadd.f32 %v3370, %v3632
      %v3743 = vadd.f32 %v3371, %v3635
      %v3744 = vadd.f32 %v3372, %v3640
      %v3745 = vadd.f32 %v3373, %v3643
      %v3746 = vadd.f32 %v3374, %v3648
      %v3747 = vadd.f32 %v3375, %v3651
      %v3748 = vadd.f32 %v3376, %v3656
      %v3749 = vadd.f32 %v3377, %v3659
      %v3750 = vadd.f32 %v3378, %v3664
      %v3751 = vadd.f32 %v3379, %v3667
      %v3752 = vadd.f32 %v3380, %v3672
      %v3753 = vadd.f32 %v3381, %v3675
      %v3754 = vadd.f32 %v3382, %v3680
      %v3755 = vadd.f32 %v3383, %v3683
      %v3756 = vadd.f32 %v3384, %v3688
      %v3757 = vadd.f32 %v3385, %v3691
      %s3758 = scalar_lea.vmem %s1, 14
      %v3759 = vld [vmem:[%s3758] sm:$0x3]
      %vm3760 = vsmask.f32 5376
      %v3761 = vrot.slane %v359, 2
      %v3762 = vrot.slane %v355, 3
      %v3763 = vor.u32 %v3761, %v3762
      %v3764 = vrot.slane %v367, 2
      %v3765 = vrot.slane %v363, 3
      %v3766 = vor.u32 %v3764, %v3765
      %v3767 = vsel %vm3760, %v3763, %v3766
      %v3768 = vrot.slane %v375, 2
      %v3769 = vrot.slane %v371, 3
      %v3770 = vor.u32 %v3768, %v3769
      %v3771 = vsel %vm3760, %v3766, %v3770
      %v3772 = vrot.slane %v383, 2
      %v3773 = vrot.slane %v379, 3
      %v3774 = vor.u32 %v3772, %v3773
      %v3775 = vsel %vm3760, %v3770, %v3774
      %v3776 = vrot.slane %v391, 2
      %v3777 = vrot.slane %v387, 3
      %v3778 = vor.u32 %v3776, %v3777
      %v3779 = vsel %vm3760, %v3774, %v3778
      %v3780 = vrot.slane %v399, 2
      %v3781 = vrot.slane %v395, 3
      %v3782 = vor.u32 %v3780, %v3781
      %v3783 = vsel %vm3760, %v3778, %v3782
      %v3784 = vrot.slane %v407, 2
      %v3785 = vrot.slane %v403, 3
      %v3786 = vor.u32 %v3784, %v3785
      %v3787 = vsel %vm3760, %v3782, %v3786
      %v3788 = vrot.slane %v415, 2
      %v3789 = vrot.slane %v411, 3
      %v3790 = vor.u32 %v3788, %v3789
      %v3791 = vsel %vm3760, %v3786, %v3790
      %v3792 = vrot.slane %v423, 2
      %v3793 = vrot.slane %v419, 3
      %v3794 = vor.u32 %v3792, %v3793
      %v3795 = vsel %vm3760, %v3790, %v3794
      %v3796 = vrot.slane %v431, 2
      %v3797 = vrot.slane %v427, 3
      %v3798 = vor.u32 %v3796, %v3797
      %v3799 = vsel %vm3760, %v3794, %v3798
      %v3800 = vrot.slane %v439, 2
      %v3801 = vrot.slane %v435, 3
      %v3802 = vor.u32 %v3800, %v3801
      %v3803 = vsel %vm3760, %v3798, %v3802
      %v3804 = vrot.slane %v447, 2
      %v3805 = vrot.slane %v443, 3
      %v3806 = vor.u32 %v3804, %v3805
      %v3807 = vsel %vm3760, %v3802, %v3806
      %v3808 = vrot.slane %v455, 2
      %v3809 = vrot.slane %v451, 3
      %v3810 = vor.u32 %v3808, %v3809
      %v3811 = vsel %vm3760, %v3806, %v3810
      %v3812 = vrot.slane %v463, 2
      %v3813 = vrot.slane %v459, 3
      %v3814 = vor.u32 %v3812, %v3813
      %v3815 = vsel %vm3760, %v3810, %v3814
      %v3816 = vrot.slane %v471, 2
      %v3817 = vrot.slane %v467, 3
      %v3818 = vor.u32 %v3816, %v3817
      %v3819 = vsel %vm3760, %v3814, %v3818
      %v3820 = vrot.slane %v479, 2
      %v3821 = vrot.slane %v475, 3
      %v3822 = vor.u32 %v3820, %v3821
      %v3823 = vsel %vm3760, %v3818, %v3822
      %v3824 = vrot.slane %v487, 2
      %v3825 = vrot.slane %v483, 3
      %v3826 = vor.u32 %v3824, %v3825
      %v3827 = vsel %vm3760, %v3822, %v3826
      %v3828 = vrot.slane %v495, 2
      %v3829 = vrot.slane %v491, 3
      %v3830 = vor.u32 %v3828, %v3829
      %v3831 = vsel %vm3760, %v3826, %v3830
      %v3832 = vrot.slane %v503, 2
      %v3833 = vrot.slane %v499, 3
      %v3834 = vor.u32 %v3832, %v3833
      %v3835 = vsel %vm3760, %v3830, %v3834
      %v3836 = vrot.slane %v511, 2
      %v3837 = vrot.slane %v507, 3
      %v3838 = vor.u32 %v3836, %v3837
      %v3839 = vsel %vm3760, %v3834, %v3838
      %v3840 = vrot.slane %v519, 2
      %v3841 = vrot.slane %v515, 3
      %v3842 = vor.u32 %v3840, %v3841
      %v3843 = vsel %vm3760, %v3838, %v3842
      %v3844 = vrot.slane %v527, 2
      %v3845 = vrot.slane %v523, 3
      %v3846 = vor.u32 %v3844, %v3845
      %v3847 = vsel %vm3760, %v3842, %v3846
      %v3848 = vrot.slane %v535, 2
      %v3849 = vrot.slane %v531, 3
      %v3850 = vor.u32 %v3848, %v3849
      %v3851 = vsel %vm3760, %v3846, %v3850
      %v3852 = vrot.slane %v543, 2
      %v3853 = vrot.slane %v539, 3
      %v3854 = vor.u32 %v3852, %v3853
      %v3855 = vsel %vm3760, %v3850, %v3854
      %v3856 = vrot.slane %v551, 2
      %v3857 = vrot.slane %v547, 3
      %v3858 = vor.u32 %v3856, %v3857
      %v3859 = vsel %vm3760, %v3854, %v3858
      %v3860 = vrot.slane %v559, 2
      %v3861 = vrot.slane %v555, 3
      %v3862 = vor.u32 %v3860, %v3861
      %v3863 = vsel %vm3760, %v3858, %v3862
      %v3864 = vrot.slane %v567, 2
      %v3865 = vrot.slane %v563, 3
      %v3866 = vor.u32 %v3864, %v3865
      %v3867 = vsel %vm3760, %v3862, %v3866
      %v3868 = vrot.slane %v575, 2
      %v3869 = vrot.slane %v571, 3
      %v3870 = vor.u32 %v3868, %v3869
      %v3871 = vsel %vm3760, %v3866, %v3870
      %v3872 = vrot.slane %v583, 2
      %v3873 = vrot.slane %v579, 3
      %v3874 = vor.u32 %v3872, %v3873
      %v3875 = vsel %vm3760, %v3870, %v3874
      %v3876 = vrot.slane %v591, 2
      %v3877 = vrot.slane %v587, 3
      %v3878 = vor.u32 %v3876, %v3877
      %v3879 = vsel %vm3760, %v3874, %v3878
      %v3880 = vrot.slane %v2397, 2
      %v3881 = vrot.slane %v2400, 3
      %v3882 = vor.u32 %v3880, %v3881
      %v3883 = vsel %vm3760, %v3878, %v3882
      %v3885 = vshrl.u32 %v3386, 16
      %v3887 = vrot.slane %v3885, 2
      %v3888 = vshll.u32 %v3386, 16
      %v3890 = vrot.slane %v3888, 3
      %v3891 = vor.u32 %v3887, %v3890
      %v3892 = vsel %vm3760, %v3882, %v3891
      %v3894 = vshrl.u32 %v3387, 16
      %v3896 = vrot.slane %v3894, 2
      %v3897 = vshll.u32 %v3387, 16
      %v3899 = vrot.slane %v3897, 3
      %v3900 = vor.u32 %v3896, %v3899
      %v3901 = vsel %vm3760, %v3891, %v3900
      %v3903 = vsel %vm599, %v3767, 0
      %v3906 = vsel %vm599, %v3771, 0
      %v3909 = vsel %vm599, %v3775, 0
      %v3912 = vsel %vm599, %v3779, 0
      %v3915 = vsel %vm599, %v3783, 0
      %v3918 = vsel %vm599, %v3787, 0
      %v3921 = vsel %vm599, %v3791, 0
      %v3924 = vsel %vm599, %v3795, 0
      %v3927 = vsel %vm599, %v3799, 0
      %v3930 = vsel %vm599, %v3803, 0
      %v3933 = vsel %vm599, %v3807, 0
      %v3936 = vsel %vm599, %v3811, 0
      %v3939 = vsel %vm599, %v3815, 0
      %v3942 = vsel %vm599, %v3819, 0
      %v3945 = vsel %vm599, %v3823, 0
      %v3948 = vsel %vm599, %v3827, 0
      %v3951 = vsel %vm599, %v3831, 0
      %v3954 = vsel %vm599, %v3835, 0
      %v3957 = vsel %vm599, %v3839, 0
      %v3960 = vsel %vm599, %v3843, 0
      %v3963 = vsel %vm599, %v3847, 0
      %v3966 = vsel %vm599, %v3851, 0
      %v3969 = vsel %vm599, %v3855, 0
      %v3972 = vsel %vm599, %v3859, 0
      %v3975 = vsel %vm599, %v3863, 0
      %v3978 = vsel %vm599, %v3867, 0
      %v3981 = vsel %vm599, %v3871, 0
      %v3984 = vsel %vm599, %v3875, 0
      %v3987 = vsel %vm599, %v3879, 0
      %v3990 = vsel %vm599, %v3883, 0
      %v3993 = vsel %vm599, %v3892, 0
      %v3996 = vsel %vm599, %v3901, 0
      %v3999 = vsel %vm696, %v3759, 0
      %4001 = vmatprep.subr.bf16.mxu0 0
      %4002 = vmatpush1.bf16.msra.mxu0 %v3999
      %4003 = vmatprep.subr.bf16.mxu0 0
      %4004 = vmatpush1.bf16.msra.mxu0 0
      %4005 = vmatprep.subr.bf16.mxu0 0
      %4006 = vmatpush1.bf16.msra.mxu0 0
      %4007 = vmatprep.subr.bf16.mxu0 0
      %4008 = vmatpush1.bf16.msra.mxu0 0
      %4009 = vmatprep.subr.bf16.mxu0 0
      %4010 = vmatpush1.bf16.msra.mxu0 0
      %4011 = vmatprep.subr.bf16.mxu0 0
      %4012 = vmatpush1.bf16.msra.mxu0 0
      %4013 = vmatprep.subr.bf16.mxu0 0
      %4014 = vmatpush1.bf16.msra.mxu0 0
      %4015 = vmatprep.subr.bf16.mxu0 0
      %4016 = vmatpush1.bf16.msra.mxu0 0
      %4017 = vmatprep.subr.bf16.mxu0 0
      %4018 = vmatpush1.bf16.msra.mxu0 0
      %4019 = vmatprep.subr.bf16.mxu0 0
      %4020 = vmatpush1.bf16.msra.mxu0 0
      %4021 = vmatprep.subr.bf16.mxu0 0
      %4022 = vmatpush1.bf16.msra.mxu0 0
      %4023 = vmatprep.subr.bf16.mxu0 0
      %4024 = vmatpush1.bf16.msra.mxu0 0
      %4025 = vmatprep.subr.bf16.mxu0 0
      %4026 = vmatpush1.bf16.msra.mxu0 0
      %4027 = vmatprep.subr.bf16.mxu0 0
      %4028 = vmatpush1.bf16.msra.mxu0 0
      %4029 = vmatprep.subr.bf16.mxu0 0
      %4030 = vmatpush1.bf16.msra.mxu0 0
      %4031 = vmatprep.subr.bf16.mxu0 0
      %4032 = vmatpush1.bf16.msra.mxu0 0
      %4033 = vmatprep.mubr.bf16.mxu0 0
      %4034 = vmatmul.mubr.bf16.gmra.mrb[0].mxu0 %v3903
      %v4035 = vpop.f32.mrb[0].mxu0
      %v4036 = vadd.f32 0.0, %v4035
      %v4037 = vpop.f32.mrb[0].mxu0
      %v4038 = vpop.f32.mrb[0].mxu0
      %v4039 = vadd.f32 0.0, %v4038
      %v4040 = vpop.f32.mrb[0].mxu0
      %4041 = vmatprep.mubr.bf16.mxu0 0
      %4042 = vmatmul.mubr.bf16.gmra.mrb[0].mxu0 %v3906
      %v4043 = vpop.f32.mrb[0].mxu0
      %v4044 = vadd.f32 0.0, %v4043
      %v4045 = vpop.f32.mrb[0].mxu0
      %v4046 = vpop.f32.mrb[0].mxu0
      %v4047 = vadd.f32 0.0, %v4046
      %v4048 = vpop.f32.mrb[0].mxu0
      %4049 = vmatprep.mubr.bf16.mxu0 0
      %4050 = vmatmul.mubr.bf16.gmra.mrb[0].mxu0 %v3909
      %v4051 = vpop.f32.mrb[0].mxu0
      %v4052 = vadd.f32 0.0, %v4051
      %v4053 = vpop.f32.mrb[0].mxu0
      %v4054 = vpop.f32.mrb[0].mxu0
      %v4055 = vadd.f32 0.0, %v4054
      %v4056 = vpop.f32.mrb[0].mxu0
      %4057 = vmatprep.mubr.bf16.mxu0 0
      %4058 = vmatmul.mubr.bf16.gmra.mrb[0].mxu0 %v3912
      %v4059 = vpop.f32.mrb[0].mxu0
      %v4060 = vadd.f32 0.0, %v4059
      %v4061 = vpop.f32.mrb[0].mxu0
      %v4062 = vpop.f32.mrb[0].mxu0
      %v4063 = vadd.f32 0.0, %v4062
      %v4064 = vpop.f32.mrb[0].mxu0
      %4065 = vmatprep.mubr.bf16.mxu0 0
      %4066 = vmatmul.mubr.bf16.gmra.mrb[0].mxu0 %v3915
      %v4067 = vpop.f32.mrb[0].mxu0
      %v4068 = vadd.f32 0.0, %v4067
      %v4069 = vpop.f32.mrb[0].mxu0
      %v4070 = vpop.f32.mrb[0].mxu0
      %v4071 = vadd.f32 0.0, %v4070
      %v4072 = vpop.f32.mrb[0].mxu0
      %4073 = vmatprep.mubr.bf16.mxu0 0
      %4074 = vmatmul.mubr.bf16.gmra.mrb[0].mxu0 %v3918
      %v4075 = vpop.f32.mrb[0].mxu0
      %v4076 = vadd.f32 0.0, %v4075
      %v4077 = vpop.f32.mrb[0].mxu0
      %v4078 = vpop.f32.mrb[0].mxu0
      %v4079 = vadd.f32 0.0, %v4078
      %v4080 = vpop.f32.mrb[0].mxu0
      %4081 = vmatprep.mubr.bf16.mxu0 0
      %4082 = vmatmul.mubr.bf16.gmra.mrb[0].mxu0 %v3921
      %v4083 = vpop.f32.mrb[0].mxu0
      %v4084 = vadd.f32 0.0, %v4083
      %v4085 = vpop.f32.mrb[0].mxu0
      %v4086 = vpop.f32.mrb[0].mxu0
      %v4087 = vadd.f32 0.0, %v4086
      %v4088 = vpop.f32.mrb[0].mxu0
      %4089 = vmatprep.mubr.bf16.mxu0 0
      %4090 = vmatmul.mubr.bf16.gmra.mrb[0].mxu0 %v3924
      %v4091 = vpop.f32.mrb[0].mxu0
      %v4092 = vadd.f32 0.0, %v4091
      %v4093 = vpop.f32.mrb[0].mxu0
      %v4094 = vpop.f32.mrb[0].mxu0
      %v4095 = vadd.f32 0.0, %v4094
      %v4096 = vpop.f32.mrb[0].mxu0
      %4097 = vmatprep.mubr.bf16.mxu0 0
      %4098 = vmatmul.mubr.bf16.gmra.mrb[0].mxu0 %v3927
      %v4099 = vpop.f32.mrb[0].mxu0
      %v4100 = vadd.f32 0.0, %v4099
      %v4101 = vpop.f32.mrb[0].mxu0
      %v4102 = vpop.f32.mrb[0].mxu0
      %v4103 = vadd.f32 0.0, %v4102
      %v4104 = vpop.f32.mrb[0].mxu0
      %4105 = vmatprep.mubr.bf16.mxu0 0
      %4106 = vmatmul.mubr.bf16.gmra.mrb[0].mxu0 %v3930
      %v4107 = vpop.f32.mrb[0].mxu0
      %v4108 = vadd.f32 0.0, %v4107
      %v4109 = vpop.f32.mrb[0].mxu0
      %v4110 = vpop.f32.mrb[0].mxu0
      %v4111 = vadd.f32 0.0, %v4110
      %v4112 = vpop.f32.mrb[0].mxu0
      %4113 = vmatprep.mubr.bf16.mxu0 0
      %4114 = vmatmul.mubr.bf16.gmra.mrb[0].mxu0 %v3933
      %v4115 = vpop.f32.mrb[0].mxu0
      %v4116 = vadd.f32 0.0, %v4115
      %v4117 = vpop.f32.mrb[0].mxu0
      %v4118 = vpop.f32.mrb[0].mxu0
      %v4119 = vadd.f32 0.0, %v4118
      %v4120 = vpop.f32.mrb[0].mxu0
      %4121 = vmatprep.mubr.bf16.mxu0 0
      %4122 = vmatmul.mubr.bf16.gmra.mrb[0].mxu0 %v3936
      %v4123 = vpop.f32.mrb[0].mxu0
      %v4124 = vadd.f32 0.0, %v4123
      %v4125 = vpop.f32.mrb[0].mxu0
      %v4126 = vpop.f32.mrb[0].mxu0
      %v4127 = vadd.f32 0.0, %v4126
      %v4128 = vpop.f32.mrb[0].mxu0
      %4129 = vmatprep.mubr.bf16.mxu0 0
      %4130 = vmatmul.mubr.bf16.gmra.mrb[0].mxu0 %v3939
      %v4131 = vpop.f32.mrb[0].mxu0
      %v4132 = vadd.f32 0.0, %v4131
      %v4133 = vpop.f32.mrb[0].mxu0
      %v4134 = vpop.f32.mrb[0].mxu0
      %v4135 = vadd.f32 0.0, %v4134
      %v4136 = vpop.f32.mrb[0].mxu0
      %4137 = vmatprep.mubr.bf16.mxu0 0
      %4138 = vmatmul.mubr.bf16.gmra.mrb[0].mxu0 %v3942
      %v4139 = vpop.f32.mrb[0].mxu0
      %v4140 = vadd.f32 0.0, %v4139
      %v4141 = vpop.f32.mrb[0].mxu0
      %v4142 = vpop.f32.mrb[0].mxu0
      %v4143 = vadd.f32 0.0, %v4142
      %v4144 = vpop.f32.mrb[0].mxu0
      %4145 = vmatprep.mubr.bf16.mxu0 0
      %4146 = vmatmul.mubr.bf16.gmra.mrb[0].mxu0 %v3945
      %v4147 = vpop.f32.mrb[0].mxu0
      %v4148 = vadd.f32 0.0, %v4147
      %v4149 = vpop.f32.mrb[0].mxu0
      %v4150 = vpop.f32.mrb[0].mxu0
      %v4151 = vadd.f32 0.0, %v4150
      %v4152 = vpop.f32.mrb[0].mxu0
      %4153 = vmatprep.mubr.bf16.mxu0 0
      %4154 = vmatmul.mubr.bf16.gmra.mrb[0].mxu0 %v3948
      %v4155 = vpop.f32.mrb[0].mxu0
      %v4156 = vadd.f32 0.0, %v4155
      %v4157 = vpop.f32.mrb[0].mxu0
      %v4158 = vpop.f32.mrb[0].mxu0
      %v4159 = vadd.f32 0.0, %v4158
      %v4160 = vpop.f32.mrb[0].mxu0
      %4161 = vmatprep.mubr.bf16.mxu0 0
      %4162 = vmatmul.mubr.bf16.gmra.mrb[0].mxu0 %v3951
      %v4163 = vpop.f32.mrb[0].mxu0
      %v4164 = vadd.f32 0.0, %v4163
      %v4165 = vpop.f32.mrb[0].mxu0
      %v4166 = vpop.f32.mrb[0].mxu0
      %v4167 = vadd.f32 0.0, %v4166
      %v4168 = vpop.f32.mrb[0].mxu0
      %4169 = vmatprep.mubr.bf16.mxu0 0
      %4170 = vmatmul.mubr.bf16.gmra.mrb[0].mxu0 %v3954
      %v4171 = vpop.f32.mrb[0].mxu0
      %v4172 = vadd.f32 0.0, %v4171
      %v4173 = vpop.f32.mrb[0].mxu0
      %v4174 = vpop.f32.mrb[0].mxu0
      %v4175 = vadd.f32 0.0, %v4174
      %v4176 = vpop.f32.mrb[0].mxu0
      %4177 = vmatprep.mubr.bf16.mxu0 0
      %4178 = vmatmul.mubr.bf16.gmra.mrb[0].mxu0 %v3957
      %v4179 = vpop.f32.mrb[0].mxu0
      %v4180 = vadd.f32 0.0, %v4179
      %v4181 = vpop.f32.mrb[0].mxu0
      %v4182 = vpop.f32.mrb[0].mxu0
      %v4183 = vadd.f32 0.0, %v4182
      %v4184 = vpop.f32.mrb[0].mxu0
      %4185 = vmatprep.mubr.bf16.mxu0 0
      %4186 = vmatmul.mubr.bf16.gmra.mrb[0].mxu0 %v3960
      %v4187 = vpop.f32.mrb[0].mxu0
      %v4188 = vadd.f32 0.0, %v4187
      %v4189 = vpop.f32.mrb[0].mxu0
      %v4190 = vpop.f32.mrb[0].mxu0
      %v4191 = vadd.f32 0.0, %v4190
      %v4192 = vpop.f32.mrb[0].mxu0
      %4193 = vmatprep.mubr.bf16.mxu0 0
      %4194 = vmatmul.mubr.bf16.gmra.mrb[0].mxu0 %v3963
      %v4195 = vpop.f32.mrb[0].mxu0
      %v4196 = vadd.f32 0.0, %v4195
      %v4197 = vpop.f32.mrb[0].mxu0
      %v4198 = vpop.f32.mrb[0].mxu0
      %v4199 = vadd.f32 0.0, %v4198
      %v4200 = vpop.f32.mrb[0].mxu0
      %4201 = vmatprep.mubr.bf16.mxu0 0
      %4202 = vmatmul.mubr.bf16.gmra.mrb[0].mxu0 %v3966
      %v4203 = vpop.f32.mrb[0].mxu0
      %v4204 = vadd.f32 0.0, %v4203
      %v4205 = vpop.f32.mrb[0].mxu0
      %v4206 = vpop.f32.mrb[0].mxu0
      %v4207 = vadd.f32 0.0, %v4206
      %v4208 = vpop.f32.mrb[0].mxu0
      %4209 = vmatprep.mubr.bf16.mxu0 0
      %4210 = vmatmul.mubr.bf16.gmra.mrb[0].mxu0 %v3969
      %v4211 = vpop.f32.mrb[0].mxu0
      %v4212 = vadd.f32 0.0, %v4211
      %v4213 = vpop.f32.mrb[0].mxu0
      %v4214 = vpop.f32.mrb[0].mxu0
      %v4215 = vadd.f32 0.0, %v4214
      %v4216 = vpop.f32.mrb[0].mxu0
      %4217 = vmatprep.mubr.bf16.mxu0 0
      %4218 = vmatmul.mubr.bf16.gmra.mrb[0].mxu0 %v3972
      %v4219 = vpop.f32.mrb[0].mxu0
      %v4220 = vadd.f32 0.0, %v4219
      %v4221 = vpop.f32.mrb[0].mxu0
      %v4222 = vpop.f32.mrb[0].mxu0
      %v4223 = vadd.f32 0.0, %v4222
      %v4224 = vpop.f32.mrb[0].mxu0
      %4225 = vmatprep.mubr.bf16.mxu0 0
      %4226 = vmatmul.mubr.bf16.gmra.mrb[0].mxu0 %v3975
      %v4227 = vpop.f32.mrb[0].mxu0
      %v4228 = vadd.f32 0.0, %v4227
      %v4229 = vpop.f32.mrb[0].mxu0
      %v4230 = vpop.f32.mrb[0].mxu0
      %v4231 = vadd.f32 0.0, %v4230
      %v4232 = vpop.f32.mrb[0].mxu0
      %4233 = vmatprep.mubr.bf16.mxu0 0
      %4234 = vmatmul.mubr.bf16.gmra.mrb[0].mxu0 %v3978
      %v4235 = vpop.f32.mrb[0].mxu0
      %v4236 = vadd.f32 0.0, %v4235
      %v4237 = vpop.f32.mrb[0].mxu0
      %v4238 = vpop.f32.mrb[0].mxu0
      %v4239 = vadd.f32 0.0, %v4238
      %v4240 = vpop.f32.mrb[0].mxu0
      %4241 = vmatprep.mubr.bf16.mxu0 0
      %4242 = vmatmul.mubr.bf16.gmra.mrb[0].mxu0 %v3981
      %v4243 = vpop.f32.mrb[0].mxu0
      %v4244 = vadd.f32 0.0, %v4243
      %v4245 = vpop.f32.mrb[0].mxu0
      %v4246 = vpop.f32.mrb[0].mxu0
      %v4247 = vadd.f32 0.0, %v4246
      %v4248 = vpop.f32.mrb[0].mxu0
      %4249 = vmatprep.mubr.bf16.mxu0 0
      %4250 = vmatmul.mubr.bf16.gmra.mrb[0].mxu0 %v3984
      %v4251 = vpop.f32.mrb[0].mxu0
      %v4252 = vadd.f32 0.0, %v4251
      %v4253 = vpop.f32.mrb[0].mxu0
      %v4254 = vpop.f32.mrb[0].mxu0
      %v4255 = vadd.f32 0.0, %v4254
      %v4256 = vpop.f32.mrb[0].mxu0
      %4257 = vmatprep.mubr.bf16.mxu0 0
      %4258 = vmatmul.mubr.bf16.gmra.mrb[0].mxu0 %v3987
      %v4259 = vpop.f32.mrb[0].mxu0
      %v4260 = vadd.f32 0.0, %v4259
      %v4261 = vpop.f32.mrb[0].mxu0
      %v4262 = vpop.f32.mrb[0].mxu0
      %v4263 = vadd.f32 0.0, %v4262
      %v4264 = vpop.f32.mrb[0].mxu0
      %4265 = vmatprep.mubr.bf16.mxu0 0
      %4266 = vmatmul.mubr.bf16.gmra.mrb[0].mxu0 %v3990
      %v4267 = vpop.f32.mrb[0].mxu0
      %v4268 = vadd.f32 0.0, %v4267
      %v4269 = vpop.f32.mrb[0].mxu0
      %v4270 = vpop.f32.mrb[0].mxu0
      %v4271 = vadd.f32 0.0, %v4270
      %v4272 = vpop.f32.mrb[0].mxu0
      %4273 = vmatprep.mubr.bf16.mxu0 0
      %4274 = vmatmul.mubr.bf16.gmra.mrb[0].mxu0 %v3993
      %v4275 = vpop.f32.mrb[0].mxu0
      %v4276 = vadd.f32 0.0, %v4275
      %v4277 = vpop.f32.mrb[0].mxu0
      %v4278 = vpop.f32.mrb[0].mxu0
      %v4279 = vadd.f32 0.0, %v4278
      %v4280 = vpop.f32.mrb[0].mxu0
      %4281 = vmatprep.mubr.bf16.mxu0 0
      %4282 = vmatmul.mubr.bf16.gmra.mrb[0].mxu0 %v3996
      %v4283 = vpop.f32.mrb[0].mxu0
      %v4284 = vadd.f32 0.0, %v4283
      %v4285 = vpop.f32.mrb[0].mxu0
      %v4286 = vpop.f32.mrb[0].mxu0
      %v4287 = vadd.f32 0.0, %v4286
      %v4288 = vpop.f32.mrb[0].mxu0
      %4289 = vdwg.mxu0
      %v4290 = vadd.f32 %v3694, %v4036
      %v4291 = vadd.f32 %v3695, %v4039
      %v4292 = vadd.f32 %v3696, %v4044
      %v4293 = vadd.f32 %v3697, %v4047
      %v4294 = vadd.f32 %v3698, %v4052
      %v4295 = vadd.f32 %v3699, %v4055
      %v4296 = vadd.f32 %v3700, %v4060
      %v4297 = vadd.f32 %v3701, %v4063
      %v4298 = vadd.f32 %v3702, %v4068
      %v4299 = vadd.f32 %v3703, %v4071
      %v4300 = vadd.f32 %v3704, %v4076
      %v4301 = vadd.f32 %v3705, %v4079
      %v4302 = vadd.f32 %v3706, %v4084
      %v4303 = vadd.f32 %v3707, %v4087
      %v4304 = vadd.f32 %v3708, %v4092
      %v4305 = vadd.f32 %v3709, %v4095
      %v4306 = vadd.f32 %v3710, %v4100
      %v4307 = vadd.f32 %v3711, %v4103
      %v4308 = vadd.f32 %v3712, %v4108
      %v4309 = vadd.f32 %v3713, %v4111
      %v4310 = vadd.f32 %v3714, %v4116
      %v4311 = vadd.f32 %v3715, %v4119
      %v4312 = vadd.f32 %v3716, %v4124
      %v4313 = vadd.f32 %v3717, %v4127
      %v4314 = vadd.f32 %v3718, %v4132
      %v4315 = vadd.f32 %v3719, %v4135
      %v4316 = vadd.f32 %v3720, %v4140
      %v4317 = vadd.f32 %v3721, %v4143
      %v4318 = vadd.f32 %v3722, %v4148
      %v4319 = vadd.f32 %v3723, %v4151
      %v4320 = vadd.f32 %v3724, %v4156
      %v4321 = vadd.f32 %v3725, %v4159
      %v4322 = vadd.f32 %v3726, %v4164
      %v4323 = vadd.f32 %v3727, %v4167
      %v4324 = vadd.f32 %v3728, %v4172
      %v4325 = vadd.f32 %v3729, %v4175
      %v4326 = vadd.f32 %v3730, %v4180
      %v4327 = vadd.f32 %v3731, %v4183
      %v4328 = vadd.f32 %v3732, %v4188
      %v4329 = vadd.f32 %v3733, %v4191
      %v4330 = vadd.f32 %v3734, %v4196
      %v4331 = vadd.f32 %v3735, %v4199
      %v4332 = vadd.f32 %v3736, %v4204
      %v4333 = vadd.f32 %v3737, %v4207
      %v4334 = vadd.f32 %v3738, %v4212
      %v4335 = vadd.f32 %v3739, %v4215
      %v4336 = vadd.f32 %v3740, %v4220
      %v4337 = vadd.f32 %v3741, %v4223
      %v4338 = vadd.f32 %v3742, %v4228
      %v4339 = vadd.f32 %v3743, %v4231
      %v4340 = vadd.f32 %v3744, %v4236
      %v4341 = vadd.f32 %v3745, %v4239
      %v4342 = vadd.f32 %v3746, %v4244
      %v4343 = vadd.f32 %v3747, %v4247
      %v4344 = vadd.f32 %v3748, %v4252
      %v4345 = vadd.f32 %v3749, %v4255
      %v4346 = vadd.f32 %v3750, %v4260
      %v4347 = vadd.f32 %v3751, %v4263
      %v4348 = vadd.f32 %v3752, %v4268
      %v4349 = vadd.f32 %v3753, %v4271
      %v4350 = vadd.f32 %v3754, %v4276
      %v4351 = vadd.f32 %v3755, %v4279
      %v4352 = vadd.f32 %v3756, %v4284
      %v4353 = vadd.f32 %v3757, %v4287
      %s4354 = scalar_lea.vmem %s1, 16
      %v4355 = vld [vmem:[%s4354] sm:$0x3]
      %vm4356 = vcmask 1044480
      %v4357 = vrot.slane %v304, 3
      %v4358 = vrot.slane %v305, 3
      %v4359 = vsel %vm4356, %v4357, %v4358
      %v4360 = vrot.slane %v306, 3
      %v4361 = vsel %vm4356, %v4358, %v4360
      %v4362 = vrot.slane %v307, 3
      %v4363 = vsel %vm4356, %v4360, %v4362
      %v4364 = vrot.slane %v308, 3
      %v4365 = vsel %vm4356, %v4362, %v4364
      %v4366 = vrot.slane %v309, 3
      %v4367 = vsel %vm4356, %v4364, %v4366
      %v4368 = vrot.slane %v310, 3
      %v4369 = vsel %vm4356, %v4366, %v4368
      %v4370 = vrot.slane %v311, 3
      %v4371 = vsel %vm4356, %v4368, %v4370
      %v4372 = vrot.slane %v312, 3
      %v4373 = vsel %vm4356, %v4370, %v4372
      %v4374 = vrot.slane %v313, 3
      %v4375 = vsel %vm4356, %v4372, %v4374
      %v4376 = vrot.slane %v314, 3
      %v4377 = vsel %vm4356, %v4374, %v4376
      %v4378 = vrot.slane %v315, 3
      %v4379 = vsel %vm4356, %v4376, %v4378
      %v4380 = vrot.slane %v316, 3
      %v4381 = vsel %vm4356, %v4378, %v4380
      %v4382 = vrot.slane %v317, 3
      %v4383 = vsel %vm4356, %v4380, %v4382
      %v4384 = vrot.slane %v318, 3
      %v4385 = vsel %vm4356, %v4382, %v4384
      %v4386 = vrot.slane %v319, 3
      %v4387 = vsel %vm4356, %v4384, %v4386
      %v4388 = vrot.slane %v320, 3
      %v4389 = vsel %vm4356, %v4386, %v4388
      %v4390 = vrot.slane %v321, 3
      %v4391 = vsel %vm4356, %v4388, %v4390
      %v4392 = vrot.slane %v322, 3
      %v4393 = vsel %vm4356, %v4390, %v4392
      %v4394 = vrot.slane %v323, 3
      %v4395 = vsel %vm4356, %v4392, %v4394
      %v4396 = vrot.slane %v324, 3
      %v4397 = vsel %vm4356, %v4394, %v4396
      %v4398 = vrot.slane %v325, 3
      %v4399 = vsel %vm4356, %v4396, %v4398
      %v4400 = vrot.slane %v326, 3
      %v4401 = vsel %vm4356, %v4398, %v4400
      %v4402 = vrot.slane %v327, 3
      %v4403 = vsel %vm4356, %v4400, %v4402
      %v4404 = vrot.slane %v328, 3
      %v4405 = vsel %vm4356, %v4402, %v4404
      %v4406 = vrot.slane %v329, 3
      %v4407 = vsel %vm4356, %v4404, %v4406
      %v4408 = vrot.slane %v330, 3
      %v4409 = vsel %vm4356, %v4406, %v4408
      %v4410 = vrot.slane %v331, 3
      %v4411 = vsel %vm4356, %v4408, %v4410
      %v4412 = vrot.slane %v332, 3
      %v4413 = vsel %vm4356, %v4410, %v4412
      %v4414 = vrot.slane %v333, 3
      %v4415 = vsel %vm4356, %v4412, %v4414
      %v4416 = vrot.slane %v1898, 3
      %v4417 = vsel %vm4356, %v4414, %v4416
      %v4418 = vrot.slane %v3386, 3
      %v4419 = vsel %vm4356, %v4416, %v4418
      %v4420 = vrot.slane %v3387, 3
      %v4421 = vsel %vm4356, %v4418, %v4420
      %v4423 = vsel %vm599, %v4359, 0
      %v4426 = vsel %vm599, %v4361, 0
      %v4429 = vsel %vm599, %v4363, 0
      %v4432 = vsel %vm599, %v4365, 0
      %v4435 = vsel %vm599, %v4367, 0
      %v4438 = vsel %vm599, %v4369, 0
      %v4441 = vsel %vm599, %v4371, 0
      %v4444 = vsel %vm599, %v4373, 0
      %v4447 = vsel %vm599, %v4375, 0
      %v4450 = vsel %vm599, %v4377, 0
      %v4453 = vsel %vm599, %v4379, 0
      %v4456 = vsel %vm599, %v4381, 0
      %v4459 = vsel %vm599, %v4383, 0
      %v4462 = vsel %vm599, %v4385, 0
      %v4465 = vsel %vm599, %v4387, 0
      %v4468 = vsel %vm599, %v4389, 0
      %v4471 = vsel %vm599, %v4391, 0
      %v4474 = vsel %vm599, %v4393, 0
      %v4477 = vsel %vm599, %v4395, 0
      %v4480 = vsel %vm599, %v4397, 0
      %v4483 = vsel %vm599, %v4399, 0
      %v4486 = vsel %vm599, %v4401, 0
      %v4489 = vsel %vm599, %v4403, 0
      %v4492 = vsel %vm599, %v4405, 0
      %v4495 = vsel %vm599, %v4407, 0
      %v4498 = vsel %vm599, %v4409, 0
      %v4501 = vsel %vm599, %v4411, 0
      %v4504 = vsel %vm599, %v4413, 0
      %v4507 = vsel %vm599, %v4415, 0
      %v4510 = vsel %vm599, %v4417, 0
      %v4513 = vsel %vm599, %v4419, 0
      %v4516 = vsel %vm599, %v4421, 0
      %v4519 = vsel %vm696, %v4355, 0
      %4521 = vmatprep.subr.bf16.mxu0 0
      %4522 = vmatpush1.bf16.msra.mxu0 %v4519
      %4523 = vmatprep.subr.bf16.mxu0 0
      %4524 = vmatpush1.bf16.msra.mxu0 0
      %4525 = vmatprep.subr.bf16.mxu0 0
      %4526 = vmatpush1.bf16.msra.mxu0 0
      %4527 = vmatprep.subr.bf16.mxu0 0
      %4528 = vmatpush1.bf16.msra.mxu0 0
      %4529 = vmatprep.subr.bf16.mxu0 0
      %4530 = vmatpush1.bf16.msra.mxu0 0
      %4531 = vmatprep.subr.bf16.mxu0 0
      %4532 = vmatpush1.bf16.msra.mxu0 0
      %4533 = vmatprep.subr.bf16.mxu0 0
      %4534 = vmatpush1.bf16.msra.mxu0 0
      %4535 = vmatprep.subr.bf16.mxu0 0
      %4536 = vmatpush1.bf16.msra.mxu0 0
      %4537 = vmatprep.subr.bf16.mxu0 0
      %4538 = vmatpush1.bf16.msra.mxu0 0
      %4539 = vmatprep.subr.bf16.mxu0 0
      %4540 = vmatpush1.bf16.msra.mxu0 0
      %4541 = vmatprep.subr.bf16.mxu0 0
      %4542 = vmatpush1.bf16.msra.mxu0 0
      %4543 = vmatprep.subr.bf16.mxu0 0
      %4544 = vmatpush1.bf16.msra.mxu0 0
      %4545 = vmatprep.subr.bf16.mxu0 0
      %4546 = vmatpush1.bf16.msra.mxu0 0
      %4547 = vmatprep.subr.bf16.mxu0 0
      %4548 = vmatpush1.bf16.msra.mxu0 0
      %4549 = vmatprep.subr.bf16.mxu0 0
      %4550 = vmatpush1.bf16.msra.mxu0 0
      %4551 = vmatprep.subr.bf16.mxu0 0
      %4552 = vmatpush1.bf16.msra.mxu0 0
      %4553 = vmatprep.mubr.bf16.mxu0 0
      %4554 = vmatmul.mubr.bf16.gmra.mrb[0].mxu0 %v4423
      %v4555 = vpop.f32.mrb[0].mxu0
      %v4556 = vadd.f32 0.0, %v4555
      %v4557 = vpop.f32.mrb[0].mxu0
      %v4558 = vpop.f32.mrb[0].mxu0
      %v4559 = vadd.f32 0.0, %v4558
      %v4560 = vpop.f32.mrb[0].mxu0
      %4561 = vmatprep.mubr.bf16.mxu0 0
      %4562 = vmatmul.mubr.bf16.gmra.mrb[0].mxu0 %v4426
      %v4563 = vpop.f32.mrb[0].mxu0
      %v4564 = vadd.f32 0.0, %v4563
      %v4565 = vpop.f32.mrb[0].mxu0
      %v4566 = vpop.f32.mrb[0].mxu0
      %v4567 = vadd.f32 0.0, %v4566
      %v4568 = vpop.f32.mrb[0].mxu0
      %4569 = vmatprep.mubr.bf16.mxu0 0
      %4570 = vmatmul.mubr.bf16.gmra.mrb[0].mxu0 %v4429
      %v4571 = vpop.f32.mrb[0].mxu0
      %v4572 = vadd.f32 0.0, %v4571
      %v4573 = vpop.f32.mrb[0].mxu0
      %v4574 = vpop.f32.mrb[0].mxu0
      %v4575 = vadd.f32 0.0, %v4574
      %v4576 = vpop.f32.mrb[0].mxu0
      %4577 = vmatprep.mubr.bf16.mxu0 0
      %4578 = vmatmul.mubr.bf16.gmra.mrb[0].mxu0 %v4432
      %v4579 = vpop.f32.mrb[0].mxu0
      %v4580 = vadd.f32 0.0, %v4579
      %v4581 = vpop.f32.mrb[0].mxu0
      %v4582 = vpop.f32.mrb[0].mxu0
      %v4583 = vadd.f32 0.0, %v4582
      %v4584 = vpop.f32.mrb[0].mxu0
      %4585 = vmatprep.mubr.bf16.mxu0 0
      %4586 = vmatmul.mubr.bf16.gmra.mrb[0].mxu0 %v4435
      %v4587 = vpop.f32.mrb[0].mxu0
      %v4588 = vadd.f32 0.0, %v4587
      %v4589 = vpop.f32.mrb[0].mxu0
      %v4590 = vpop.f32.mrb[0].mxu0
      %v4591 = vadd.f32 0.0, %v4590
      %v4592 = vpop.f32.mrb[0].mxu0
      %4593 = vmatprep.mubr.bf16.mxu0 0
      %4594 = vmatmul.mubr.bf16.gmra.mrb[0].mxu0 %v4438
      %v4595 = vpop.f32.mrb[0].mxu0
      %v4596 = vadd.f32 0.0, %v4595
      %v4597 = vpop.f32.mrb[0].mxu0
      %v4598 = vpop.f32.mrb[0].mxu0
      %v4599 = vadd.f32 0.0, %v4598
      %v4600 = vpop.f32.mrb[0].mxu0
      %4601 = vmatprep.mubr.bf16.mxu0 0
      %4602 = vmatmul.mubr.bf16.gmra.mrb[0].mxu0 %v4441
      %v4603 = vpop.f32.mrb[0].mxu0
      %v4604 = vadd.f32 0.0, %v4603
      %v4605 = vpop.f32.mrb[0].mxu0
      %v4606 = vpop.f32.mrb[0].mxu0
      %v4607 = vadd.f32 0.0, %v4606
      %v4608 = vpop.f32.mrb[0].mxu0
      %4609 = vmatprep.mubr.bf16.mxu0 0
      %4610 = vmatmul.mubr.bf16.gmra.mrb[0].mxu0 %v4444
      %v4611 = vpop.f32.mrb[0].mxu0
      %v4612 = vadd.f32 0.0, %v4611
      %v4613 = vpop.f32.mrb[0].mxu0
      %v4614 = vpop.f32.mrb[0].mxu0
      %v4615 = vadd.f32 0.0, %v4614
      %v4616 = vpop.f32.mrb[0].mxu0
      %4617 = vmatprep.mubr.bf16.mxu0 0
      %4618 = vmatmul.mubr.bf16.gmra.mrb[0].mxu0 %v4447
      %v4619 = vpop.f32.mrb[0].mxu0
      %v4620 = vadd.f32 0.0, %v4619
      %v4621 = vpop.f32.mrb[0].mxu0
      %v4622 = vpop.f32.mrb[0].mxu0
      %v4623 = vadd.f32 0.0, %v4622
      %v4624 = vpop.f32.mrb[0].mxu0
      %4625 = vmatprep.mubr.bf16.mxu0 0
      %4626 = vmatmul.mubr.bf16.gmra.mrb[0].mxu0 %v4450
      %v4627 = vpop.f32.mrb[0].mxu0
      %v4628 = vadd.f32 0.0, %v4627
      %v4629 = vpop.f32.mrb[0].mxu0
      %v4630 = vpop.f32.mrb[0].mxu0
      %v4631 = vadd.f32 0.0, %v4630
      %v4632 = vpop.f32.mrb[0].mxu0
      %4633 = vmatprep.mubr.bf16.mxu0 0
      %4634 = vmatmul.mubr.bf16.gmra.mrb[0].mxu0 %v4453
      %v4635 = vpop.f32.mrb[0].mxu0
      %v4636 = vadd.f32 0.0, %v4635
      %v4637 = vpop.f32.mrb[0].mxu0
      %v4638 = vpop.f32.mrb[0].mxu0
      %v4639 = vadd.f32 0.0, %v4638
      %v4640 = vpop.f32.mrb[0].mxu0
      %4641 = vmatprep.mubr.bf16.mxu0 0
      %4642 = vmatmul.mubr.bf16.gmra.mrb[0].mxu0 %v4456
      %v4643 = vpop.f32.mrb[0].mxu0
      %v4644 = vadd.f32 0.0, %v4643
      %v4645 = vpop.f32.mrb[0].mxu0
      %v4646 = vpop.f32.mrb[0].mxu0
      %v4647 = vadd.f32 0.0, %v4646
      %v4648 = vpop.f32.mrb[0].mxu0
      %4649 = vmatprep.mubr.bf16.mxu0 0
      %4650 = vmatmul.mubr.bf16.gmra.mrb[0].mxu0 %v4459
      %v4651 = vpop.f32.mrb[0].mxu0
      %v4652 = vadd.f32 0.0, %v4651
      %v4653 = vpop.f32.mrb[0].mxu0
      %v4654 = vpop.f32.mrb[0].mxu0
      %v4655 = vadd.f32 0.0, %v4654
      %v4656 = vpop.f32.mrb[0].mxu0
      %4657 = vmatprep.mubr.bf16.mxu0 0
      %4658 = vmatmul.mubr.bf16.gmra.mrb[0].mxu0 %v4462
      %v4659 = vpop.f32.mrb[0].mxu0
      %v4660 = vadd.f32 0.0, %v4659
      %v4661 = vpop.f32.mrb[0].mxu0
      %v4662 = vpop.f32.mrb[0].mxu0
      %v4663 = vadd.f32 0.0, %v4662
      %v4664 = vpop.f32.mrb[0].mxu0
      %4665 = vmatprep.mubr.bf16.mxu0 0
      %4666 = vmatmul.mubr.bf16.gmra.mrb[0].mxu0 %v4465
      %v4667 = vpop.f32.mrb[0].mxu0
      %v4668 = vadd.f32 0.0, %v4667
      %v4669 = vpop.f32.mrb[0].mxu0
      %v4670 = vpop.f32.mrb[0].mxu0
      %v4671 = vadd.f32 0.0, %v4670
      %v4672 = vpop.f32.mrb[0].mxu0
      %4673 = vmatprep.mubr.bf16.mxu0 0
      %4674 = vmatmul.mubr.bf16.gmra.mrb[0].mxu0 %v4468
      %v4675 = vpop.f32.mrb[0].mxu0
      %v4676 = vadd.f32 0.0, %v4675
      %v4677 = vpop.f32.mrb[0].mxu0
      %v4678 = vpop.f32.mrb[0].mxu0
      %v4679 = vadd.f32 0.0, %v4678
      %v4680 = vpop.f32.mrb[0].mxu0
      %4681 = vmatprep.mubr.bf16.mxu0 0
      %4682 = vmatmul.mubr.bf16.gmra.mrb[0].mxu0 %v4471
      %v4683 = vpop.f32.mrb[0].mxu0
      %v4684 = vadd.f32 0.0, %v4683
      %v4685 = vpop.f32.mrb[0].mxu0
      %v4686 = vpop.f32.mrb[0].mxu0
      %v4687 = vadd.f32 0.0, %v4686
      %v4688 = vpop.f32.mrb[0].mxu0
      %4689 = vmatprep.mubr.bf16.mxu0 0
      %4690 = vmatmul.mubr.bf16.gmra.mrb[0].mxu0 %v4474
      %v4691 = vpop.f32.mrb[0].mxu0
      %v4692 = vadd.f32 0.0, %v4691
      %v4693 = vpop.f32.mrb[0].mxu0
      %v4694 = vpop.f32.mrb[0].mxu0
      %v4695 = vadd.f32 0.0, %v4694
      %v4696 = vpop.f32.mrb[0].mxu0
      %4697 = vmatprep.mubr.bf16.mxu0 0
      %4698 = vmatmul.mubr.bf16.gmra.mrb[0].mxu0 %v4477
      %v4699 = vpop.f32.mrb[0].mxu0
      %v4700 = vadd.f32 0.0, %v4699
      %v4701 = vpop.f32.mrb[0].mxu0
      %v4702 = vpop.f32.mrb[0].mxu0
      %v4703 = vadd.f32 0.0, %v4702
      %v4704 = vpop.f32.mrb[0].mxu0
      %4705 = vmatprep.mubr.bf16.mxu0 0
      %4706 = vmatmul.mubr.bf16.gmra.mrb[0].mxu0 %v4480
      %v4707 = vpop.f32.mrb[0].mxu0
      %v4708 = vadd.f32 0.0, %v4707
      %v4709 = vpop.f32.mrb[0].mxu0
      %v4710 = vpop.f32.mrb[0].mxu0
      %v4711 = vadd.f32 0.0, %v4710
      %v4712 = vpop.f32.mrb[0].mxu0
      %4713 = vmatprep.mubr.bf16.mxu0 0
      %4714 = vmatmul.mubr.bf16.gmra.mrb[0].mxu0 %v4483
      %v4715 = vpop.f32.mrb[0].mxu0
      %v4716 = vadd.f32 0.0, %v4715
      %v4717 = vpop.f32.mrb[0].mxu0
      %v4718 = vpop.f32.mrb[0].mxu0
      %v4719 = vadd.f32 0.0, %v4718
      %v4720 = vpop.f32.mrb[0].mxu0
      %4721 = vmatprep.mubr.bf16.mxu0 0
      %4722 = vmatmul.mubr.bf16.gmra.mrb[0].mxu0 %v4486
      %v4723 = vpop.f32.mrb[0].mxu0
      %v4724 = vadd.f32 0.0, %v4723
      %v4725 = vpop.f32.mrb[0].mxu0
      %v4726 = vpop.f32.mrb[0].mxu0
      %v4727 = vadd.f32 0.0, %v4726
      %v4728 = vpop.f32.mrb[0].mxu0
      %4729 = vmatprep.mubr.bf16.mxu0 0
      %4730 = vmatmul.mubr.bf16.gmra.mrb[0].mxu0 %v4489
      %v4731 = vpop.f32.mrb[0].mxu0
      %v4732 = vadd.f32 0.0, %v4731
      %v4733 = vpop.f32.mrb[0].mxu0
      %v4734 = vpop.f32.mrb[0].mxu0
      %v4735 = vadd.f32 0.0, %v4734
      %v4736 = vpop.f32.mrb[0].mxu0
      %4737 = vmatprep.mubr.bf16.mxu0 0
      %4738 = vmatmul.mubr.bf16.gmra.mrb[0].mxu0 %v4492
      %v4739 = vpop.f32.mrb[0].mxu0
      %v4740 = vadd.f32 0.0, %v4739
      %v4741 = vpop.f32.mrb[0].mxu0
      %v4742 = vpop.f32.mrb[0].mxu0
      %v4743 = vadd.f32 0.0, %v4742
      %v4744 = vpop.f32.mrb[0].mxu0
      %4745 = vmatprep.mubr.bf16.mxu0 0
      %4746 = vmatmul.mubr.bf16.gmra.mrb[0].mxu0 %v4495
      %v4747 = vpop.f32.mrb[0].mxu0
      %v4748 = vadd.f32 0.0, %v4747
      %v4749 = vpop.f32.mrb[0].mxu0
      %v4750 = vpop.f32.mrb[0].mxu0
      %v4751 = vadd.f32 0.0, %v4750
      %v4752 = vpop.f32.mrb[0].mxu0
      %4753 = vmatprep.mubr.bf16.mxu0 0
      %4754 = vmatmul.mubr.bf16.gmra.mrb[0].mxu0 %v4498
      %v4755 = vpop.f32.mrb[0].mxu0
      %v4756 = vadd.f32 0.0, %v4755
      %v4757 = vpop.f32.mrb[0].mxu0
      %v4758 = vpop.f32.mrb[0].mxu0
      %v4759 = vadd.f32 0.0, %v4758
      %v4760 = vpop.f32.mrb[0].mxu0
      %4761 = vmatprep.mubr.bf16.mxu0 0
      %4762 = vmatmul.mubr.bf16.gmra.mrb[0].mxu0 %v4501
      %v4763 = vpop.f32.mrb[0].mxu0
      %v4764 = vadd.f32 0.0, %v4763
      %v4765 = vpop.f32.mrb[0].mxu0
      %v4766 = vpop.f32.mrb[0].mxu0
      %v4767 = vadd.f32 0.0, %v4766
      %v4768 = vpop.f32.mrb[0].mxu0
      %4769 = vmatprep.mubr.bf16.mxu0 0
      %4770 = vmatmul.mubr.bf16.gmra.mrb[0].mxu0 %v4504
      %v4771 = vpop.f32.mrb[0].mxu0
      %v4772 = vadd.f32 0.0, %v4771
      %v4773 = vpop.f32.mrb[0].mxu0
      %v4774 = vpop.f32.mrb[0].mxu0
      %v4775 = vadd.f32 0.0, %v4774
      %v4776 = vpop.f32.mrb[0].mxu0
      %4777 = vmatprep.mubr.bf16.mxu0 0
      %4778 = vmatmul.mubr.bf16.gmra.mrb[0].mxu0 %v4507
      %v4779 = vpop.f32.mrb[0].mxu0
      %v4780 = vadd.f32 0.0, %v4779
      %v4781 = vpop.f32.mrb[0].mxu0
      %v4782 = vpop.f32.mrb[0].mxu0
      %v4783 = vadd.f32 0.0, %v4782
      %v4784 = vpop.f32.mrb[0].mxu0
      %4785 = vmatprep.mubr.bf16.mxu0 0
      %4786 = vmatmul.mubr.bf16.gmra.mrb[0].mxu0 %v4510
      %v4787 = vpop.f32.mrb[0].mxu0
      %v4788 = vadd.f32 0.0, %v4787
      %v4789 = vpop.f32.mrb[0].mxu0
      %v4790 = vpop.f32.mrb[0].mxu0
      %v4791 = vadd.f32 0.0, %v4790
      %v4792 = vpop.f32.mrb[0].mxu0
      %4793 = vmatprep.mubr.bf16.mxu0 0
      %4794 = vmatmul.mubr.bf16.gmra.mrb[0].mxu0 %v4513
      %v4795 = vpop.f32.mrb[0].mxu0
      %v4796 = vadd.f32 0.0, %v4795
      %v4797 = vpop.f32.mrb[0].mxu0
      %v4798 = vpop.f32.mrb[0].mxu0
      %v4799 = vadd.f32 0.0, %v4798
      %v4800 = vpop.f32.mrb[0].mxu0
      %4801 = vmatprep.mubr.bf16.mxu0 0
      %4802 = vmatmul.mubr.bf16.gmra.mrb[0].mxu0 %v4516
      %v4803 = vpop.f32.mrb[0].mxu0
      %v4804 = vadd.f32 0.0, %v4803
      %v4805 = vpop.f32.mrb[0].mxu0
      %v4806 = vpop.f32.mrb[0].mxu0
      %v4807 = vadd.f32 0.0, %v4806
      %v4808 = vpop.f32.mrb[0].mxu0
      %4809 = vdwg.mxu0
      %v4810 = vadd.f32 %v4290, %v4556
      %v4811 = vadd.f32 %v4291, %v4559
      %v4812 = vadd.f32 %v4292, %v4564
      %v4813 = vadd.f32 %v4293, %v4567
      %v4814 = vadd.f32 %v4294, %v4572
      %v4815 = vadd.f32 %v4295, %v4575
      %v4816 = vadd.f32 %v4296, %v4580
      %v4817 = vadd.f32 %v4297, %v4583
      %v4818 = vadd.f32 %v4298, %v4588
      %v4819 = vadd.f32 %v4299, %v4591
      %v4820 = vadd.f32 %v4300, %v4596
      %v4821 = vadd.f32 %v4301, %v4599
      %v4822 = vadd.f32 %v4302, %v4604
      %v4823 = vadd.f32 %v4303, %v4607
      %v4824 = vadd.f32 %v4304, %v4612
      %v4825 = vadd.f32 %v4305, %v4615
      %v4826 = vadd.f32 %v4306, %v4620
      %v4827 = vadd.f32 %v4307, %v4623
      %v4828 = vadd.f32 %v4308, %v4628
      %v4829 = vadd.f32 %v4309, %v4631
      %v4830 = vadd.f32 %v4310, %v4636
      %v4831 = vadd.f32 %v4311, %v4639
      %v4832 = vadd.f32 %v4312, %v4644
      %v4833 = vadd.f32 %v4313, %v4647
      %v4834 = vadd.f32 %v4314, %v4652
      %v4835 = vadd.f32 %v4315, %v4655
      %v4836 = vadd.f32 %v4316, %v4660
      %v4837 = vadd.f32 %v4317, %v4663
      %v4838 = vadd.f32 %v4318, %v4668
      %v4839 = vadd.f32 %v4319, %v4671
      %v4840 = vadd.f32 %v4320, %v4676
      %v4841 = vadd.f32 %v4321, %v4679
      %v4842 = vadd.f32 %v4322, %v4684
      %v4843 = vadd.f32 %v4323, %v4687
      %v4844 = vadd.f32 %v4324, %v4692
      %v4845 = vadd.f32 %v4325, %v4695
      %v4846 = vadd.f32 %v4326, %v4700
      %v4847 = vadd.f32 %v4327, %v4703
      %v4848 = vadd.f32 %v4328, %v4708
      %v4849 = vadd.f32 %v4329, %v4711
      %v4850 = vadd.f32 %v4330, %v4716
      %v4851 = vadd.f32 %v4331, %v4719
      %v4852 = vadd.f32 %v4332, %v4724
      %v4853 = vadd.f32 %v4333, %v4727
      %v4854 = vadd.f32 %v4334, %v4732
      %v4855 = vadd.f32 %v4335, %v4735
      %v4856 = vadd.f32 %v4336, %v4740
      %v4857 = vadd.f32 %v4337, %v4743
      %v4858 = vadd.f32 %v4338, %v4748
      %v4859 = vadd.f32 %v4339, %v4751
      %v4860 = vadd.f32 %v4340, %v4756
      %v4861 = vadd.f32 %v4341, %v4759
      %v4862 = vadd.f32 %v4342, %v4764
      %v4863 = vadd.f32 %v4343, %v4767
      %v4864 = vadd.f32 %v4344, %v4772
      %v4865 = vadd.f32 %v4345, %v4775
      %v4866 = vadd.f32 %v4346, %v4780
      %v4867 = vadd.f32 %v4347, %v4783
      %v4868 = vadd.f32 %v4348, %v4788
      %v4869 = vadd.f32 %v4349, %v4791
      %v4870 = vadd.f32 %v4350, %v4796
      %v4871 = vadd.f32 %v4351, %v4799
      %v4872 = vadd.f32 %v4352, %v4804
      %v4873 = vadd.f32 %v4353, %v4807
      %v4874 = vld [vmem:[%s215] sm:$0xff]
      %v4875 = vld [vmem:[%s215 + $0x8] sm:$0xff]
      %v4876 = vld [vmem:[%s215 + $0x10] sm:$0xff]
      %v4877 = vld [vmem:[%s215 + $0x18] sm:$0xff]
      %v4878 = vld [vmem:[%s215 + $0x20] sm:$0xff]
      %v4879 = vld [vmem:[%s215 + $0x28] sm:$0xff]
      %v4880 = vld [vmem:[%s215 + $0x30] sm:$0xff]
      %v4881 = vld [vmem:[%s215 + $0x38] sm:$0xff]
      %v4882 = vld [vmem:[%s215 + $0x40] sm:$0xff]
      %v4883 = vld [vmem:[%s215 + $0x48] sm:$0xff]
      %v4884 = vld [vmem:[%s215 + $0x50] sm:$0xff]
      %v4885 = vld [vmem:[%s215 + $0x58] sm:$0xff]
      %v4886 = vld [vmem:[%s215 + $0x60] sm:$0xff]
      %v4887 = vld [vmem:[%s215 + $0x68] sm:$0xff]
      %v4888 = vld [vmem:[%s215 + $0x70] sm:$0xff]
      %v4889 = vld [vmem:[%s215 + $0x78] sm:$0xff]
      %v4890 = vld [vmem:[%s215 + $0x80] sm:$0xff]
      %v4891 = vld [vmem:[%s215 + $0x88] sm:$0xff]
      %v4892 = vld [vmem:[%s215 + $0x90] sm:$0xff]
      %v4893 = vld [vmem:[%s215 + $0x98] sm:$0xff]
      %v4894 = vld [vmem:[%s215 + $0xa0] sm:$0xff]
      %v4895 = vld [vmem:[%s215 + $0xa8] sm:$0xff]
      %v4896 = vld [vmem:[%s215 + $0xb0] sm:$0xff]
      %v4897 = vld [vmem:[%s215 + $0xb8] sm:$0xff]
      %v4898 = vld [vmem:[%s215 + $0xc0] sm:$0xff]
      %v4899 = vld [vmem:[%s215 + $0xc8] sm:$0xff]
      %v4900 = vld [vmem:[%s215 + $0xd0] sm:$0xff]
      %v4901 = vld [vmem:[%s215 + $0xd8] sm:$0xff]
      %v4902 = vld [vmem:[%s215 + $0xe0] sm:$0xff]
      %v4903 = vld [vmem:[%s215 + $0xe8] sm:$0xff]
      %v4904 = vld [vmem:[%s215 + $0xf0] sm:$0xff]
      %v4905 = vld [vmem:[%s215 + $0xf8] sm:$0xff]
      %v4906 = vld [vmem:[%s215 + $0x100] sm:$0xff]
      %v4907 = vld [vmem:[%s215 + $0x108] sm:$0xff]
      %v4908 = vld [vmem:[%s215 + $0x110] sm:$0xff]
      %v4909 = vld [vmem:[%s215 + $0x118] sm:$0xff]
      %v4910 = vld [vmem:[%s215 + $0x120] sm:$0xff]
      %v4911 = vld [vmem:[%s215 + $0x128] sm:$0xff]
      %v4912 = vld [vmem:[%s215 + $0x130] sm:$0xff]
      %v4913 = vld [vmem:[%s215 + $0x138] sm:$0xff]
      %v4914 = vld [vmem:[%s215 + $0x140] sm:$0xff]
      %v4915 = vld [vmem:[%s215 + $0x148] sm:$0xff]
      %v4916 = vld [vmem:[%s215 + $0x150] sm:$0xff]
      %v4917 = vld [vmem:[%s215 + $0x158] sm:$0xff]
      %v4918 = vld [vmem:[%s215 + $0x160] sm:$0xff]
      %v4919 = vld [vmem:[%s215 + $0x168] sm:$0xff]
      %v4920 = vld [vmem:[%s215 + $0x170] sm:$0xff]
      %v4921 = vld [vmem:[%s215 + $0x178] sm:$0xff]
      %v4922 = vld [vmem:[%s215 + $0x180] sm:$0xff]
      %v4923 = vld [vmem:[%s215 + $0x188] sm:$0xff]
      %v4924 = vld [vmem:[%s215 + $0x190] sm:$0xff]
      %v4925 = vld [vmem:[%s215 + $0x198] sm:$0xff]
      %v4926 = vld [vmem:[%s215 + $0x1a0] sm:$0xff]
      %v4927 = vld [vmem:[%s215 + $0x1a8] sm:$0xff]
      %v4928 = vld [vmem:[%s215 + $0x1b0] sm:$0xff]
      %v4929 = vld [vmem:[%s215 + $0x1b8] sm:$0xff]
      %v4930 = vld [vmem:[%s215 + $0x1c0] sm:$0xff]
      %v4931 = vld [vmem:[%s215 + $0x1c8] sm:$0xff]
      %v4932 = vld [vmem:[%s215 + $0x1d0] sm:$0xff]
      %v4933 = vld [vmem:[%s215 + $0x1d8] sm:$0xff]
      %v4934 = vld [vmem:[%s215 + $0x1e0] sm:$0xff]
      %v4935 = vld [vmem:[%s215 + $0x1e8] sm:$0xff]
      %v4936 = vld [vmem:[%s215 + $0x1f0] sm:$0xff]
      %v4937 = vld [vmem:[%s215 + $0x1f8] sm:$0xff]
      %4939 = vset.pattern.permute.xlu0 0
      %4940 = vperm.xlu0 %4939, %v4874
      %v4941 = vpop.permute.xlu0 %4940
      %4944 = vset.pattern.permute.xlu0 0
      %4945 = vperm.xlu0 %4944, %v4875
      %v4946 = vpop.permute.xlu0 %4945
      %4949 = vset.pattern.permute.xlu0 0
      %4950 = vperm.xlu0 %4949, %v4876
      %v4951 = vpop.permute.xlu0 %4950
      %4954 = vset.pattern.permute.xlu0 0
      %4955 = vperm.xlu0 %4954, %v4877
      %v4956 = vpop.permute.xlu0 %4955
      %4959 = vset.pattern.permute.xlu0 0
      %4960 = vperm.xlu0 %4959, %v4878
      %v4961 = vpop.permute.xlu0 %4960
      %4964 = vset.pattern.permute.xlu0 0
      %4965 = vperm.xlu0 %4964, %v4879
      %v4966 = vpop.permute.xlu0 %4965
      %4969 = vset.pattern.permute.xlu0 0
      %4970 = vperm.xlu0 %4969, %v4880
      %v4971 = vpop.permute.xlu0 %4970
      %4974 = vset.pattern.permute.xlu0 0
      %4975 = vperm.xlu0 %4974, %v4881
      %v4976 = vpop.permute.xlu0 %4975
      %4979 = vset.pattern.permute.xlu0 0
      %4980 = vperm.xlu0 %4979, %v4882
      %v4981 = vpop.permute.xlu0 %4980
      %4984 = vset.pattern.permute.xlu0 0
      %4985 = vperm.xlu0 %4984, %v4883
      %v4986 = vpop.permute.xlu0 %4985
      %4989 = vset.pattern.permute.xlu0 0
      %4990 = vperm.xlu0 %4989, %v4884
      %v4991 = vpop.permute.xlu0 %4990
      %4994 = vset.pattern.permute.xlu0 0
      %4995 = vperm.xlu0 %4994, %v4885
      %v4996 = vpop.permute.xlu0 %4995
      %4999 = vset.pattern.permute.xlu0 0
      %5000 = vperm.xlu0 %4999, %v4886
      %v5001 = vpop.permute.xlu0 %5000
      %5004 = vset.pattern.permute.xlu0 0
      %5005 = vperm.xlu0 %5004, %v4887
      %v5006 = vpop.permute.xlu0 %5005
      %5009 = vset.pattern.permute.xlu0 0
      %5010 = vperm.xlu0 %5009, %v4888
      %v5011 = vpop.permute.xlu0 %5010
      %5014 = vset.pattern.permute.xlu0 0
      %5015 = vperm.xlu0 %5014, %v4889
      %v5016 = vpop.permute.xlu0 %5015
      %5019 = vset.pattern.permute.xlu0 0
      %5020 = vperm.xlu0 %5019, %v4890
      %v5021 = vpop.permute.xlu0 %5020
      %5024 = vset.pattern.permute.xlu0 0
      %5025 = vperm.xlu0 %5024, %v4891
      %v5026 = vpop.permute.xlu0 %5025
      %5029 = vset.pattern.permute.xlu0 0
      %5030 = vperm.xlu0 %5029, %v4892
      %v5031 = vpop.permute.xlu0 %5030
      %5034 = vset.pattern.permute.xlu0 0
      %5035 = vperm.xlu0 %5034, %v4893
      %v5036 = vpop.permute.xlu0 %5035
      %5039 = vset.pattern.permute.xlu0 0
      %5040 = vperm.xlu0 %5039, %v4894
      %v5041 = vpop.permute.xlu0 %5040
      %5044 = vset.pattern.permute.xlu0 0
      %5045 = vperm.xlu0 %5044, %v4895
      %v5046 = vpop.permute.xlu0 %5045
      %5049 = vset.pattern.permute.xlu0 0
      %5050 = vperm.xlu0 %5049, %v4896
      %v5051 = vpop.permute.xlu0 %5050
      %5054 = vset.pattern.permute.xlu0 0
      %5055 = vperm.xlu0 %5054, %v4897
      %v5056 = vpop.permute.xlu0 %5055
      %5059 = vset.pattern.permute.xlu0 0
      %5060 = vperm.xlu0 %5059, %v4898
      %v5061 = vpop.permute.xlu0 %5060
      %5064 = vset.pattern.permute.xlu0 0
      %5065 = vperm.xlu0 %5064, %v4899
      %v5066 = vpop.permute.xlu0 %5065
      %5069 = vset.pattern.permute.xlu0 0
      %5070 = vperm.xlu0 %5069, %v4900
      %v5071 = vpop.permute.xlu0 %5070
      %5074 = vset.pattern.permute.xlu0 0
      %5075 = vperm.xlu0 %5074, %v4901
      %v5076 = vpop.permute.xlu0 %5075
      %5079 = vset.pattern.permute.xlu0 0
      %5080 = vperm.xlu0 %5079, %v4902
      %v5081 = vpop.permute.xlu0 %5080
      %5084 = vset.pattern.permute.xlu0 0
      %5085 = vperm.xlu0 %5084, %v4903
      %v5086 = vpop.permute.xlu0 %5085
      %5089 = vset.pattern.permute.xlu0 0
      %5090 = vperm.xlu0 %5089, %v4904
      %v5091 = vpop.permute.xlu0 %5090
      %5094 = vset.pattern.permute.xlu0 0
      %5095 = vperm.xlu0 %5094, %v4905
      %v5096 = vpop.permute.xlu0 %5095
      %5099 = vset.pattern.permute.xlu0 0
      %5100 = vperm.xlu0 %5099, %v4906
      %v5101 = vpop.permute.xlu0 %5100
      %5104 = vset.pattern.permute.xlu0 0
      %5105 = vperm.xlu0 %5104, %v4907
      %v5106 = vpop.permute.xlu0 %5105
      %5109 = vset.pattern.permute.xlu0 0
      %5110 = vperm.xlu0 %5109, %v4908
      %v5111 = vpop.permute.xlu0 %5110
      %5114 = vset.pattern.permute.xlu0 0
      %5115 = vperm.xlu0 %5114, %v4909
      %v5116 = vpop.permute.xlu0 %5115
      %5119 = vset.pattern.permute.xlu0 0
      %5120 = vperm.xlu0 %5119, %v4910
      %v5121 = vpop.permute.xlu0 %5120
      %5124 = vset.pattern.permute.xlu0 0
      %5125 = vperm.xlu0 %5124, %v4911
      %v5126 = vpop.permute.xlu0 %5125
      %5129 = vset.pattern.permute.xlu0 0
      %5130 = vperm.xlu0 %5129, %v4912
      %v5131 = vpop.permute.xlu0 %5130
      %5134 = vset.pattern.permute.xlu0 0
      %5135 = vperm.xlu0 %5134, %v4913
      %v5136 = vpop.permute.xlu0 %5135
      %5139 = vset.pattern.permute.xlu0 0
      %5140 = vperm.xlu0 %5139, %v4914
      %v5141 = vpop.permute.xlu0 %5140
      %5144 = vset.pattern.permute.xlu0 0
      %5145 = vperm.xlu0 %5144, %v4915
      %v5146 = vpop.permute.xlu0 %5145
      %5149 = vset.pattern.permute.xlu0 0
      %5150 = vperm.xlu0 %5149, %v4916
      %v5151 = vpop.permute.xlu0 %5150
      %5154 = vset.pattern.permute.xlu0 0
      %5155 = vperm.xlu0 %5154, %v4917
      %v5156 = vpop.permute.xlu0 %5155
      %5159 = vset.pattern.permute.xlu0 0
      %5160 = vperm.xlu0 %5159, %v4918
      %v5161 = vpop.permute.xlu0 %5160
      %5164 = vset.pattern.permute.xlu0 0
      %5165 = vperm.xlu0 %5164, %v4919
      %v5166 = vpop.permute.xlu0 %5165
      %5169 = vset.pattern.permute.xlu0 0
      %5170 = vperm.xlu0 %5169, %v4920
      %v5171 = vpop.permute.xlu0 %5170
      %5174 = vset.pattern.permute.xlu0 0
      %5175 = vperm.xlu0 %5174, %v4921
      %v5176 = vpop.permute.xlu0 %5175
      %5179 = vset.pattern.permute.xlu0 0
      %5180 = vperm.xlu0 %5179, %v4922
      %v5181 = vpop.permute.xlu0 %5180
      %5184 = vset.pattern.permute.xlu0 0
      %5185 = vperm.xlu0 %5184, %v4923
      %v5186 = vpop.permute.xlu0 %5185
      %5189 = vset.pattern.permute.xlu0 0
      %5190 = vperm.xlu0 %5189, %v4924
      %v5191 = vpop.permute.xlu0 %5190
      %5194 = vset.pattern.permute.xlu0 0
      %5195 = vperm.xlu0 %5194, %v4925
      %v5196 = vpop.permute.xlu0 %5195
      %5199 = vset.pattern.permute.xlu0 0
      %5200 = vperm.xlu0 %5199, %v4926
      %v5201 = vpop.permute.xlu0 %5200
      %5204 = vset.pattern.permute.xlu0 0
      %5205 = vperm.xlu0 %5204, %v4927
      %v5206 = vpop.permute.xlu0 %5205
      %5209 = vset.pattern.permute.xlu0 0
      %5210 = vperm.xlu0 %5209, %v4928
      %v5211 = vpop.permute.xlu0 %5210
      %5214 = vset.pattern.permute.xlu0 0
      %5215 = vperm.xlu0 %5214, %v4929
      %v5216 = vpop.permute.xlu0 %5215
      %5219 = vset.pattern.permute.xlu0 0
      %5220 = vperm.xlu0 %5219, %v4930
      %v5221 = vpop.permute.xlu0 %5220
      %5224 = vset.pattern.permute.xlu0 0
      %5225 = vperm.xlu0 %5224, %v4931
      %v5226 = vpop.permute.xlu0 %5225
      %5229 = vset.pattern.permute.xlu0 0
      %5230 = vperm.xlu0 %5229, %v4932
      %v5231 = vpop.permute.xlu0 %5230
      %5234 = vset.pattern.permute.xlu0 0
      %5235 = vperm.xlu0 %5234, %v4933
      %v5236 = vpop.permute.xlu0 %5235
      %5239 = vset.pattern.permute.xlu0 0
      %5240 = vperm.xlu0 %5239, %v4934
      %v5241 = vpop.permute.xlu0 %5240
      %5244 = vset.pattern.permute.xlu0 0
      %5245 = vperm.xlu0 %5244, %v4935
      %v5246 = vpop.permute.xlu0 %5245
      %5249 = vset.pattern.permute.xlu0 0
      %5250 = vperm.xlu0 %5249, %v4936
      %v5251 = vpop.permute.xlu0 %5250
      %5254 = vset.pattern.permute.xlu0 0
      %5255 = vperm.xlu0 %5254, %v4937
      %v5256 = vpop.permute.xlu0 %5255
      %v5258 = vmul.f32 %v4810, %v4941
      %v5259 = vmul.f32 %v4811, %v4946
      %v5260 = vmul.f32 %v4812, %v4951
      %v5261 = vmul.f32 %v4813, %v4956
      %v5262 = vmul.f32 %v4814, %v4961
      %v5263 = vmul.f32 %v4815, %v4966
      %v5264 = vmul.f32 %v4816, %v4971
      %v5265 = vmul.f32 %v4817, %v4976
      %v5266 = vmul.f32 %v4818, %v4981
      %v5267 = vmul.f32 %v4819, %v4986
      %v5268 = vmul.f32 %v4820, %v4991
      %v5269 = vmul.f32 %v4821, %v4996
      %v5270 = vmul.f32 %v4822, %v5001
      %v5271 = vmul.f32 %v4823, %v5006
      %v5272 = vmul.f32 %v4824, %v5011
      %v5273 = vmul.f32 %v4825, %v5016
      %v5274 = vmul.f32 %v4826, %v5021
      %v5275 = vmul.f32 %v4827, %v5026
      %v5276 = vmul.f32 %v4828, %v5031
      %v5277 = vmul.f32 %v4829, %v5036
      %v5278 = vmul.f32 %v4830, %v5041
      %v5279 = vmul.f32 %v4831, %v5046
      %v5280 = vmul.f32 %v4832, %v5051
      %v5281 = vmul.f32 %v4833, %v5056
      %v5282 = vmul.f32 %v4834, %v5061
      %v5283 = vmul.f32 %v4835, %v5066
      %v5284 = vmul.f32 %v4836, %v5071
      %v5285 = vmul.f32 %v4837, %v5076
      %v5286 = vmul.f32 %v4838, %v5081
      %v5287 = vmul.f32 %v4839, %v5086
      %v5288 = vmul.f32 %v4840, %v5091
      %v5289 = vmul.f32 %v4841, %v5096
      %v5290 = vmul.f32 %v4842, %v5101
      %v5291 = vmul.f32 %v4843, %v5106
      %v5292 = vmul.f32 %v4844, %v5111
      %v5293 = vmul.f32 %v4845, %v5116
      %v5294 = vmul.f32 %v4846, %v5121
      %v5295 = vmul.f32 %v4847, %v5126
      %v5296 = vmul.f32 %v4848, %v5131
      %v5297 = vmul.f32 %v4849, %v5136
      %v5298 = vmul.f32 %v4850, %v5141
      %v5299 = vmul.f32 %v4851, %v5146
      %v5300 = vmul.f32 %v4852, %v5151
      %v5301 = vmul.f32 %v4853, %v5156
      %v5302 = vmul.f32 %v4854, %v5161
      %v5303 = vmul.f32 %v4855, %v5166
      %v5304 = vmul.f32 %v4856, %v5171
      %v5305 = vmul.f32 %v4857, %v5176
      %v5306 = vmul.f32 %v4858, %v5181
      %v5307 = vmul.f32 %v4859, %v5186
      %v5308 = vmul.f32 %v4860, %v5191
      %v5309 = vmul.f32 %v4861, %v5196
      %v5310 = vmul.f32 %v4862, %v5201
      %v5311 = vmul.f32 %v4863, %v5206
      %v5312 = vmul.f32 %v4864, %v5211
      %v5313 = vmul.f32 %v4865, %v5216
      %v5314 = vmul.f32 %v4866, %v5221
      %v5315 = vmul.f32 %v4867, %v5226
      %v5316 = vmul.f32 %v4868, %v5231
      %v5317 = vmul.f32 %v4869, %v5236
      %v5318 = vmul.f32 %v4870, %v5241
      %v5319 = vmul.f32 %v4871, %v5246
      %v5320 = vmul.f32 %v4872, %v5251
      %v5321 = vmul.f32 %v4873, %v5256
      %vm5322 = vcmask 261120
      %5323 = vst.msk [vmem:[%s221] sm:$0xff] %vm5322, %v5258
      %5324 = vst.msk [vmem:[%s221 + $0x8] sm:$0xff] %vm5322, %v5259
      %5325 = vst.msk [vmem:[%s221 + $0x10] sm:$0xff] %vm5322, %v5260
      %5326 = vst.msk [vmem:[%s221 + $0x18] sm:$0xff] %vm5322, %v5261
      %5327 = vst.msk [vmem:[%s221 + $0x20] sm:$0xff] %vm5322, %v5262
      %5328 = vst.msk [vmem:[%s221 + $0x28] sm:$0xff] %vm5322, %v5263
      %5329 = vst.msk [vmem:[%s221 + $0x30] sm:$0xff] %vm5322, %v5264
      %5330 = vst.msk [vmem:[%s221 + $0x38] sm:$0xff] %vm5322, %v5265
      %5331 = vst.msk [vmem:[%s221 + $0x40] sm:$0xff] %vm5322, %v5266
      %5332 = vst.msk [vmem:[%s221 + $0x48] sm:$0xff] %vm5322, %v5267
      %5333 = vst.msk [vmem:[%s221 + $0x50] sm:$0xff] %vm5322, %v5268
      %5334 = vst.msk [vmem:[%s221 + $0x58] sm:$0xff] %vm5322, %v5269
      %5335 = vst.msk [vmem:[%s221 + $0x60] sm:$0xff] %vm5322, %v5270
      %5336 = vst.msk [vmem:[%s221 + $0x68] sm:$0xff] %vm5322, %v5271
      %5337 = vst.msk [vmem:[%s221 + $0x70] sm:$0xff] %vm5322, %v5272
      %5338 = vst.msk [vmem:[%s221 + $0x78] sm:$0xff] %vm5322, %v5273
      %5339 = vst.msk [vmem:[%s221 + $0x80] sm:$0xff] %vm5322, %v5274
      %5340 = vst.msk [vmem:[%s221 + $0x88] sm:$0xff] %vm5322, %v5275
      %5341 = vst.msk [vmem:[%s221 + $0x90] sm:$0xff] %vm5322, %v5276
      %5342 = vst.msk [vmem:[%s221 + $0x98] sm:$0xff] %vm5322, %v5277
      %5343 = vst.msk [vmem:[%s221 + $0xa0] sm:$0xff] %vm5322, %v5278
      %5344 = vst.msk [vmem:[%s221 + $0xa8] sm:$0xff] %vm5322, %v5279
      %5345 = vst.msk [vmem:[%s221 + $0xb0] sm:$0xff] %vm5322, %v5280
      %5346 = vst.msk [vmem:[%s221 + $0xb8] sm:$0xff] %vm5322, %v5281
      %5347 = vst.msk [vmem:[%s221 + $0xc0] sm:$0xff] %vm5322, %v5282
      %5348 = vst.msk [vmem:[%s221 + $0xc8] sm:$0xff] %vm5322, %v5283
      %5349 = vst.msk [vmem:[%s221 + $0xd0] sm:$0xff] %vm5322, %v5284
      %5350 = vst.msk [vmem:[%s221 + $0xd8] sm:$0xff] %vm5322, %v5285
      %5351 = vst.msk [vmem:[%s221 + $0xe0] sm:$0xff] %vm5322, %v5286
      %5352 = vst.msk [vmem:[%s221 + $0xe8] sm:$0xff] %vm5322, %v5287
      %5353 = vst.msk [vmem:[%s221 + $0xf0] sm:$0xff] %vm5322, %v5288
      %5354 = vst.msk [vmem:[%s221 + $0xf8] sm:$0xff] %vm5322, %v5289
      %5355 = vst.msk [vmem:[%s221 + $0x100] sm:$0xff] %vm5322, %v5290
      %5356 = vst.msk [vmem:[%s221 + $0x108] sm:$0xff] %vm5322, %v5291
      %5357 = vst.msk [vmem:[%s221 + $0x110] sm:$0xff] %vm5322, %v5292
      %5358 = vst.msk [vmem:[%s221 + $0x118] sm:$0xff] %vm5322, %v5293
      %5359 = vst.msk [vmem:[%s221 + $0x120] sm:$0xff] %vm5322, %v5294
      %5360 = vst.msk [vmem:[%s221 + $0x128] sm:$0xff] %vm5322, %v5295
      %5361 = vst.msk [vmem:[%s221 + $0x130] sm:$0xff] %vm5322, %v5296
      %5362 = vst.msk [vmem:[%s221 + $0x138] sm:$0xff] %vm5322, %v5297
      %5363 = vst.msk [vmem:[%s221 + $0x140] sm:$0xff] %vm5322, %v5298
      %5364 = vst.msk [vmem:[%s221 + $0x148] sm:$0xff] %vm5322, %v5299
      %5365 = vst.msk [vmem:[%s221 + $0x150] sm:$0xff] %vm5322, %v5300
      %5366 = vst.msk [vmem:[%s221 + $0x158] sm:$0xff] %vm5322, %v5301
      %5367 = vst.msk [vmem:[%s221 + $0x160] sm:$0xff] %vm5322, %v5302
      %5368 = vst.msk [vmem:[%s221 + $0x168] sm:$0xff] %vm5322, %v5303
      %5369 = vst.msk [vmem:[%s221 + $0x170] sm:$0xff] %vm5322, %v5304
      %5370 = vst.msk [vmem:[%s221 + $0x178] sm:$0xff] %vm5322, %v5305
      %5371 = vst.msk [vmem:[%s221 + $0x180] sm:$0xff] %vm5322, %v5306
      %5372 = vst.msk [vmem:[%s221 + $0x188] sm:$0xff] %vm5322, %v5307
      %5373 = vst.msk [vmem:[%s221 + $0x190] sm:$0xff] %vm5322, %v5308
      %5374 = vst.msk [vmem:[%s221 + $0x198] sm:$0xff] %vm5322, %v5309
      %5375 = vst.msk [vmem:[%s221 + $0x1a0] sm:$0xff] %vm5322, %v5310
      %5376 = vst.msk [vmem:[%s221 + $0x1a8] sm:$0xff] %vm5322, %v5311
      %5377 = vst.msk [vmem:[%s221 + $0x1b0] sm:$0xff] %vm5322, %v5312
      %5378 = vst.msk [vmem:[%s221 + $0x1b8] sm:$0xff] %vm5322, %v5313
      %5379 = vst.msk [vmem:[%s221 + $0x1c0] sm:$0xff] %vm5322, %v5314
      %5380 = vst.msk [vmem:[%s221 + $0x1c8] sm:$0xff] %vm5322, %v5315
      %5381 = vst.msk [vmem:[%s221 + $0x1d0] sm:$0xff] %vm5322, %v5316
      %5382 = vst.msk [vmem:[%s221 + $0x1d8] sm:$0xff] %vm5322, %v5317
      %5383 = vst.msk [vmem:[%s221 + $0x1e0] sm:$0xff] %vm5322, %v5318
      %5384 = vst.msk [vmem:[%s221 + $0x1e8] sm:$0xff] %vm5322, %v5319
      %5385 = vst.msk [vmem:[%s221 + $0x1f0] sm:$0xff] %vm5322, %v5320
      %5386 = vst.msk [vmem:[%s221 + $0x1f8] sm:$0xff] %vm5322, %v5321
      %v5387 = vld [vmem:[%s4] sm:$0x1]
      %v5388 = vsel %vm5322, %v5258, 0.0
      %v5389 = vsel %vm5322, %v5259, 0.0
      %v5390 = vadd.f32 %v5388, %v5389
      %v5391 = vsel %vm5322, %v5260, 0.0
      %v5392 = vadd.f32 %v5390, %v5391
      %v5393 = vsel %vm5322, %v5261, 0.0
      %v5394 = vadd.f32 %v5392, %v5393
      %v5395 = vsel %vm5322, %v5262, 0.0
      %v5396 = vadd.f32 %v5394, %v5395
      %v5397 = vsel %vm5322, %v5263, 0.0
      %v5398 = vadd.f32 %v5396, %v5397
      %v5399 = vsel %vm5322, %v5264, 0.0
      %v5400 = vadd.f32 %v5398, %v5399
      %v5401 = vsel %vm5322, %v5265, 0.0
      %v5402 = vadd.f32 %v5400, %v5401
      %v5403 = vsel %vm5322, %v5266, 0.0
      %v5404 = vadd.f32 %v5402, %v5403
      %v5405 = vsel %vm5322, %v5267, 0.0
      %v5406 = vadd.f32 %v5404, %v5405
      %v5407 = vsel %vm5322, %v5268, 0.0
      %v5408 = vadd.f32 %v5406, %v5407
      %v5409 = vsel %vm5322, %v5269, 0.0
      %v5410 = vadd.f32 %v5408, %v5409
      %v5411 = vsel %vm5322, %v5270, 0.0
      %v5412 = vadd.f32 %v5410, %v5411
      %v5413 = vsel %vm5322, %v5271, 0.0
      %v5414 = vadd.f32 %v5412, %v5413
      %v5415 = vsel %vm5322, %v5272, 0.0
      %v5416 = vadd.f32 %v5414, %v5415
      %v5417 = vsel %vm5322, %v5273, 0.0
      %v5418 = vadd.f32 %v5416, %v5417
      %v5419 = vsel %vm5322, %v5274, 0.0
      %v5420 = vadd.f32 %v5418, %v5419
      %v5421 = vsel %vm5322, %v5275, 0.0
      %v5422 = vadd.f32 %v5420, %v5421
      %v5423 = vsel %vm5322, %v5276, 0.0
      %v5424 = vadd.f32 %v5422, %v5423
      %v5425 = vsel %vm5322, %v5277, 0.0
      %v5426 = vadd.f32 %v5424, %v5425
      %v5427 = vsel %vm5322, %v5278, 0.0
      %v5428 = vadd.f32 %v5426, %v5427
      %v5429 = vsel %vm5322, %v5279, 0.0
      %v5430 = vadd.f32 %v5428, %v5429
      %v5431 = vsel %vm5322, %v5280, 0.0
      %v5432 = vadd.f32 %v5430, %v5431
      %v5433 = vsel %vm5322, %v5281, 0.0
      %v5434 = vadd.f32 %v5432, %v5433
      %v5435 = vsel %vm5322, %v5282, 0.0
      %v5436 = vadd.f32 %v5434, %v5435
      %v5437 = vsel %vm5322, %v5283, 0.0
      %v5438 = vadd.f32 %v5436, %v5437
      %v5439 = vsel %vm5322, %v5284, 0.0
      %v5440 = vadd.f32 %v5438, %v5439
      %v5441 = vsel %vm5322, %v5285, 0.0
      %v5442 = vadd.f32 %v5440, %v5441
      %v5443 = vsel %vm5322, %v5286, 0.0
      %v5444 = vadd.f32 %v5442, %v5443
      %v5445 = vsel %vm5322, %v5287, 0.0
      %v5446 = vadd.f32 %v5444, %v5445
      %v5447 = vsel %vm5322, %v5288, 0.0
      %v5448 = vadd.f32 %v5446, %v5447
      %v5449 = vsel %vm5322, %v5289, 0.0
      %v5450 = vadd.f32 %v5448, %v5449
      %v5451 = vsel %vm5322, %v5290, 0.0
      %v5452 = vadd.f32 %v5450, %v5451
      %v5453 = vsel %vm5322, %v5291, 0.0
      %v5454 = vadd.f32 %v5452, %v5453
      %v5455 = vsel %vm5322, %v5292, 0.0
      %v5456 = vadd.f32 %v5454, %v5455
      %v5457 = vsel %vm5322, %v5293, 0.0
      %v5458 = vadd.f32 %v5456, %v5457
      %v5459 = vsel %vm5322, %v5294, 0.0
      %v5460 = vadd.f32 %v5458, %v5459
      %v5461 = vsel %vm5322, %v5295, 0.0
      %v5462 = vadd.f32 %v5460, %v5461
      %v5463 = vsel %vm5322, %v5296, 0.0
      %v5464 = vadd.f32 %v5462, %v5463
      %v5465 = vsel %vm5322, %v5297, 0.0
      %v5466 = vadd.f32 %v5464, %v5465
      %v5467 = vsel %vm5322, %v5298, 0.0
      %v5468 = vadd.f32 %v5466, %v5467
      %v5469 = vsel %vm5322, %v5299, 0.0
      %v5470 = vadd.f32 %v5468, %v5469
      %v5471 = vsel %vm5322, %v5300, 0.0
      %v5472 = vadd.f32 %v5470, %v5471
      %v5473 = vsel %vm5322, %v5301, 0.0
      %v5474 = vadd.f32 %v5472, %v5473
      %v5475 = vsel %vm5322, %v5302, 0.0
      %v5476 = vadd.f32 %v5474, %v5475
      %v5477 = vsel %vm5322, %v5303, 0.0
      %v5478 = vadd.f32 %v5476, %v5477
      %v5479 = vsel %vm5322, %v5304, 0.0
      %v5480 = vadd.f32 %v5478, %v5479
      %v5481 = vsel %vm5322, %v5305, 0.0
      %v5482 = vadd.f32 %v5480, %v5481
      %v5483 = vsel %vm5322, %v5306, 0.0
      %v5484 = vadd.f32 %v5482, %v5483
      %v5485 = vsel %vm5322, %v5307, 0.0
      %v5486 = vadd.f32 %v5484, %v5485
      %v5487 = vsel %vm5322, %v5308, 0.0
      %v5488 = vadd.f32 %v5486, %v5487
      %v5489 = vsel %vm5322, %v5309, 0.0
      %v5490 = vadd.f32 %v5488, %v5489
      %v5491 = vsel %vm5322, %v5310, 0.0
      %v5492 = vadd.f32 %v5490, %v5491
      %v5493 = vsel %vm5322, %v5311, 0.0
      %v5494 = vadd.f32 %v5492, %v5493
      %v5495 = vsel %vm5322, %v5312, 0.0
      %v5496 = vadd.f32 %v5494, %v5495
      %v5497 = vsel %vm5322, %v5313, 0.0
      %v5498 = vadd.f32 %v5496, %v5497
      %v5499 = vsel %vm5322, %v5314, 0.0
      %v5500 = vadd.f32 %v5498, %v5499
      %v5501 = vsel %vm5322, %v5315, 0.0
      %v5502 = vadd.f32 %v5500, %v5501
      %v5503 = vsel %vm5322, %v5316, 0.0
      %v5504 = vadd.f32 %v5502, %v5503
      %v5505 = vsel %vm5322, %v5317, 0.0
      %v5506 = vadd.f32 %v5504, %v5505
      %v5507 = vsel %vm5322, %v5318, 0.0
      %v5508 = vadd.f32 %v5506, %v5507
      %v5509 = vsel %vm5322, %v5319, 0.0
      %v5510 = vadd.f32 %v5508, %v5509
      %v5511 = vsel %vm5322, %v5320, 0.0
      %v5512 = vadd.f32 %v5510, %v5511
      %v5513 = vsel %vm5322, %v5321, 0.0
      %v5514 = vadd.f32 %v5512, %v5513
      %v5515 = vrot.slane %v5514, 4
      %v5516 = vadd.f32 %v5514, %v5515
      %v5517 = vrot.slane %v5516, 2
      %v5518 = vadd.f32 %v5516, %v5517
      %v5519 = vrot.slane %v5518, 1
      %v5520 = vadd.f32 %v5518, %v5519
      %v5521 = vadd.f32 %v5387, %v5520
      %vm5522 = vcmask 253952
      %5523 = vst.msk [vmem:[%s4] sm:$0x1] %vm5522, %v5521
      %v5524 = vld [vmem:[%s5] sm:$0x1]
      %v5525 = vmul.f32 %v5258, %v5258
      %v5526 = vmul.f32 %v5259, %v5259
      %v5527 = vmul.f32 %v5260, %v5260
      %v5528 = vmul.f32 %v5261, %v5261
      %v5529 = vmul.f32 %v5262, %v5262
      %v5530 = vmul.f32 %v5263, %v5263
      %v5531 = vmul.f32 %v5264, %v5264
      %v5532 = vmul.f32 %v5265, %v5265
      %v5533 = vmul.f32 %v5266, %v5266
      %v5534 = vmul.f32 %v5267, %v5267
      %v5535 = vmul.f32 %v5268, %v5268
      %v5536 = vmul.f32 %v5269, %v5269
      %v5537 = vmul.f32 %v5270, %v5270
      %v5538 = vmul.f32 %v5271, %v5271
      %v5539 = vmul.f32 %v5272, %v5272
      %v5540 = vmul.f32 %v5273, %v5273
      %v5541 = vmul.f32 %v5274, %v5274
      %v5542 = vmul.f32 %v5275, %v5275
      %v5543 = vmul.f32 %v5276, %v5276
      %v5544 = vmul.f32 %v5277, %v5277
      %v5545 = vmul.f32 %v5278, %v5278
      %v5546 = vmul.f32 %v5279, %v5279
      %v5547 = vmul.f32 %v5280, %v5280
      %v5548 = vmul.f32 %v5281, %v5281
      %v5549 = vmul.f32 %v5282, %v5282
      %v5550 = vmul.f32 %v5283, %v5283
      %v5551 = vmul.f32 %v5284, %v5284
      %v5552 = vmul.f32 %v5285, %v5285
      %v5553 = vmul.f32 %v5286, %v5286
      %v5554 = vmul.f32 %v5287, %v5287
      %v5555 = vmul.f32 %v5288, %v5288
      %v5556 = vmul.f32 %v5289, %v5289
      %v5557 = vmul.f32 %v5290, %v5290
      %v5558 = vmul.f32 %v5291, %v5291
      %v5559 = vmul.f32 %v5292, %v5292
      %v5560 = vmul.f32 %v5293, %v5293
      %v5561 = vmul.f32 %v5294, %v5294
      %v5562 = vmul.f32 %v5295, %v5295
      %v5563 = vmul.f32 %v5296, %v5296
      %v5564 = vmul.f32 %v5297, %v5297
      %v5565 = vmul.f32 %v5298, %v5298
      %v5566 = vmul.f32 %v5299, %v5299
      %v5567 = vmul.f32 %v5300, %v5300
      %v5568 = vmul.f32 %v5301, %v5301
      %v5569 = vmul.f32 %v5302, %v5302
      %v5570 = vmul.f32 %v5303, %v5303
      %v5571 = vmul.f32 %v5304, %v5304
      %v5572 = vmul.f32 %v5305, %v5305
      %v5573 = vmul.f32 %v5306, %v5306
      %v5574 = vmul.f32 %v5307, %v5307
      %v5575 = vmul.f32 %v5308, %v5308
      %v5576 = vmul.f32 %v5309, %v5309
      %v5577 = vmul.f32 %v5310, %v5310
      %v5578 = vmul.f32 %v5311, %v5311
      %v5579 = vmul.f32 %v5312, %v5312
      %v5580 = vmul.f32 %v5313, %v5313
      %v5581 = vmul.f32 %v5314, %v5314
      %v5582 = vmul.f32 %v5315, %v5315
      %v5583 = vmul.f32 %v5316, %v5316
      %v5584 = vmul.f32 %v5317, %v5317
      %v5585 = vmul.f32 %v5318, %v5318
      %v5586 = vmul.f32 %v5319, %v5319
      %v5587 = vmul.f32 %v5320, %v5320
      %v5588 = vmul.f32 %v5321, %v5321
      %v5589 = vsel %vm5322, %v5525, 0.0
      %v5590 = vsel %vm5322, %v5526, 0.0
      %v5591 = vadd.f32 %v5589, %v5590
      %v5592 = vsel %vm5322, %v5527, 0.0
      %v5593 = vadd.f32 %v5591, %v5592
      %v5594 = vsel %vm5322, %v5528, 0.0
      %v5595 = vadd.f32 %v5593, %v5594
      %v5596 = vsel %vm5322, %v5529, 0.0
      %v5597 = vadd.f32 %v5595, %v5596
      %v5598 = vsel %vm5322, %v5530, 0.0
      %v5599 = vadd.f32 %v5597, %v5598
      %v5600 = vsel %vm5322, %v5531, 0.0
      %v5601 = vadd.f32 %v5599, %v5600
      %v5602 = vsel %vm5322, %v5532, 0.0
      %v5603 = vadd.f32 %v5601, %v5602
      %v5604 = vsel %vm5322, %v5533, 0.0
      %v5605 = vadd.f32 %v5603, %v5604
      %v5606 = vsel %vm5322, %v5534, 0.0
      %v5607 = vadd.f32 %v5605, %v5606
      %v5608 = vsel %vm5322, %v5535, 0.0
      %v5609 = vadd.f32 %v5607, %v5608
      %v5610 = vsel %vm5322, %v5536, 0.0
      %v5611 = vadd.f32 %v5609, %v5610
      %v5612 = vsel %vm5322, %v5537, 0.0
      %v5613 = vadd.f32 %v5611, %v5612
      %v5614 = vsel %vm5322, %v5538, 0.0
      %v5615 = vadd.f32 %v5613, %v5614
      %v5616 = vsel %vm5322, %v5539, 0.0
      %v5617 = vadd.f32 %v5615, %v5616
      %v5618 = vsel %vm5322, %v5540, 0.0
      %v5619 = vadd.f32 %v5617, %v5618
      %v5620 = vsel %vm5322, %v5541, 0.0
      %v5621 = vadd.f32 %v5619, %v5620
      %v5622 = vsel %vm5322, %v5542, 0.0
      %v5623 = vadd.f32 %v5621, %v5622
      %v5624 = vsel %vm5322, %v5543, 0.0
      %v5625 = vadd.f32 %v5623, %v5624
      %v5626 = vsel %vm5322, %v5544, 0.0
      %v5627 = vadd.f32 %v5625, %v5626
      %v5628 = vsel %vm5322, %v5545, 0.0
      %v5629 = vadd.f32 %v5627, %v5628
      %v5630 = vsel %vm5322, %v5546, 0.0
      %v5631 = vadd.f32 %v5629, %v5630
      %v5632 = vsel %vm5322, %v5547, 0.0
      %v5633 = vadd.f32 %v5631, %v5632
      %v5634 = vsel %vm5322, %v5548, 0.0
      %v5635 = vadd.f32 %v5633, %v5634
      %v5636 = vsel %vm5322, %v5549, 0.0
      %v5637 = vadd.f32 %v5635, %v5636
      %v5638 = vsel %vm5322, %v5550, 0.0
      %v5639 = vadd.f32 %v5637, %v5638
      %v5640 = vsel %vm5322, %v5551, 0.0
      %v5641 = vadd.f32 %v5639, %v5640
      %v5642 = vsel %vm5322, %v5552, 0.0
      %v5643 = vadd.f32 %v5641, %v5642
      %v5644 = vsel %vm5322, %v5553, 0.0
      %v5645 = vadd.f32 %v5643, %v5644
      %v5646 = vsel %vm5322, %v5554, 0.0
      %v5647 = vadd.f32 %v5645, %v5646
      %v5648 = vsel %vm5322, %v5555, 0.0
      %v5649 = vadd.f32 %v5647, %v5648
      %v5650 = vsel %vm5322, %v5556, 0.0
      %v5651 = vadd.f32 %v5649, %v5650
      %v5652 = vsel %vm5322, %v5557, 0.0
      %v5653 = vadd.f32 %v5651, %v5652
      %v5654 = vsel %vm5322, %v5558, 0.0
      %v5655 = vadd.f32 %v5653, %v5654
      %v5656 = vsel %vm5322, %v5559, 0.0
      %v5657 = vadd.f32 %v5655, %v5656
      %v5658 = vsel %vm5322, %v5560, 0.0
      %v5659 = vadd.f32 %v5657, %v5658
      %v5660 = vsel %vm5322, %v5561, 0.0
      %v5661 = vadd.f32 %v5659, %v5660
      %v5662 = vsel %vm5322, %v5562, 0.0
      %v5663 = vadd.f32 %v5661, %v5662
      %v5664 = vsel %vm5322, %v5563, 0.0
      %v5665 = vadd.f32 %v5663, %v5664
      %v5666 = vsel %vm5322, %v5564, 0.0
      %v5667 = vadd.f32 %v5665, %v5666
      %v5668 = vsel %vm5322, %v5565, 0.0
      %v5669 = vadd.f32 %v5667, %v5668
      %v5670 = vsel %vm5322, %v5566, 0.0
      %v5671 = vadd.f32 %v5669, %v5670
      %v5672 = vsel %vm5322, %v5567, 0.0
      %v5673 = vadd.f32 %v5671, %v5672
      %v5674 = vsel %vm5322, %v5568, 0.0
      %v5675 = vadd.f32 %v5673, %v5674
      %v5676 = vsel %vm5322, %v5569, 0.0
      %v5677 = vadd.f32 %v5675, %v5676
      %v5678 = vsel %vm5322, %v5570, 0.0
      %v5679 = vadd.f32 %v5677, %v5678
      %v5680 = vsel %vm5322, %v5571, 0.0
      %v5681 = vadd.f32 %v5679, %v5680
      %v5682 = vsel %vm5322, %v5572, 0.0
      %v5683 = vadd.f32 %v5681, %v5682
      %v5684 = vsel %vm5322, %v5573, 0.0
      %v5685 = vadd.f32 %v5683, %v5684
      %v5686 = vsel %vm5322, %v5574, 0.0
      %v5687 = vadd.f32 %v5685, %v5686
      %v5688 = vsel %vm5322, %v5575, 0.0
      %v5689 = vadd.f32 %v5687, %v5688
      %v5690 = vsel %vm5322, %v5576, 0.0
      %v5691 = vadd.f32 %v5689, %v5690
      %v5692 = vsel %vm5322, %v5577, 0.0
      %v5693 = vadd.f32 %v5691, %v5692
      %v5694 = vsel %vm5322, %v5578, 0.0
      %v5695 = vadd.f32 %v5693, %v5694
      %v5696 = vsel %vm5322, %v5579, 0.0
      %v5697 = vadd.f32 %v5695, %v5696
      %v5698 = vsel %vm5322, %v5580, 0.0
      %v5699 = vadd.f32 %v5697, %v5698
      %v5700 = vsel %vm5322, %v5581, 0.0
      %v5701 = vadd.f32 %v5699, %v5700
      %v5702 = vsel %vm5322, %v5582, 0.0
      %v5703 = vadd.f32 %v5701, %v5702
      %v5704 = vsel %vm5322, %v5583, 0.0
      %v5705 = vadd.f32 %v5703, %v5704
      %v5706 = vsel %vm5322, %v5584, 0.0
      %v5707 = vadd.f32 %v5705, %v5706
      %v5708 = vsel %vm5322, %v5585, 0.0
      %v5709 = vadd.f32 %v5707, %v5708
      %v5710 = vsel %vm5322, %v5586, 0.0
      %v5711 = vadd.f32 %v5709, %v5710
      %v5712 = vsel %vm5322, %v5587, 0.0
      %v5713 = vadd.f32 %v5711, %v5712
      %v5714 = vsel %vm5322, %v5588, 0.0
      %v5715 = vadd.f32 %v5713, %v5714
      %v5716 = vrot.slane %v5715, 4
      %v5717 = vadd.f32 %v5715, %v5716
      %v5718 = vrot.slane %v5717, 2
      %v5719 = vadd.f32 %v5717, %v5718
      %v5720 = vrot.slane %v5719, 1
      %v5721 = vadd.f32 %v5719, %v5720
      %v5722 = vadd.f32 %v5524, %v5721
      %5723 = vst.msk [vmem:[%s5] sm:$0x1] %vm5522, %v5722
      %s5724 = smul.u32 64, %s17
      %p5725 = scmp.lt.s32.totalorder %s5724, 127
      %s5726 = scalar_select %p5725, %s5724, 127
      %s5727 = smul.addr %s5726, 8
      %s5728 = scalar_lea.vmem %s3, %s5727
      // Predicated region
      $region37: #{model_forward.16} parent=31 // pred_check
        %p5729 = pneg %p103
      $region38: #{model_forward.16} parent=31 // pred_check_branch
        %5731 = sbr.rel (%p5729) target = $region40
      $region39: #{model_forward.16} parent=31 // pred_region
        %s5732 = smul.u32 64, %s17
      $region40: #{model_forward.16} parent=31 // pred_fallthru
        _
      // Predicated region
      $region41: #{model_forward.16} parent=31 // pred_check
        %p5733 = pneg %p124
      $region42: #{model_forward.16} parent=31 // pred_check_branch
        %5735 = sbr.rel (%p5733) target = $region44
      $region43: #{model_forward.16} parent=31 // pred_region
        _
      $region44: #{model_forward.16} parent=31 // pred_fallthru
        _
      // Predicated region
      $region45: #{model_forward.16} parent=31 // pred_check
        %p5736 = pneg %p145
      $region46: #{model_forward.16} parent=31 // pred_check_branch
        %5738 = sbr.rel (%p5736) target = $region48
      $region47: #{model_forward.16} parent=31 // pred_region
        _
      $region48: #{model_forward.16} parent=31 // pred_fallthru
        _
      // Predicated region
      $region49: #{model_forward.16} parent=31 // pred_check
        %p5739 = pneg %p124
      $region50: #{model_forward.16} parent=31 // pred_check_branch
        %5741 = sbr.rel (%p5739) target = $region52
      $region51: #{model_forward.16} parent=31 // pred_region
        _
      $region52: #{model_forward.16} parent=31 // pred_fallthru
        _
      // Predicated region
      $region53: #{model_forward.16} parent=31 // pred_check
        %p5742 = pneg %p145
      $region54: #{model_forward.16} parent=31 // pred_check_branch
        %5744 = sbr.rel (%p5742) target = $region56
      $region55: #{model_forward.16} parent=31 // pred_region
        _
      $region56: #{model_forward.16} parent=31 // pred_fallthru
        _
    $region32: #{model_forward.16} parent=5 // pred_fallthru
      _
    %p5745 = scmp.le.s32.totalorder 2, %s12
    // Predicated region
    $region57: #{model_forward.16} parent=5 // pred_check
      %p5746 = pneg %p5745
    $region58: #{model_forward.16} parent=5 // pred_check_branch
      %5748 = sbr.rel (%p5746) target = $region60
    $region59: #{model_forward.16} parent=5 // pred_region
      %s5749 = ssub.s32 %s12, 2
      // Predicated region
      $region61: #{model_forward.16} parent=59 // pred_check
        %p5750 = pneg %p109
      $region62: #{model_forward.16} parent=59 // pred_check_branch
        %5752 = sbr.rel (%p5750) target = $region64
      $region63: #{model_forward.16} parent=59 // pred_region
        %s5753 = smul.u32 64, %s18
        %p5754 = scmp.lt.s32.totalorder %s5753, 127
        %s5755 = scalar_select %p5754, %s5753, 127
        %s5756 = smul.addr %s5755, 8
        %s5757 = scalar_lea.vmem %s3, %s5756
      $region64: #{model_forward.16} parent=59 // pred_fallthru
        _
    $region60: #{model_forward.16} parent=5 // pred_fallthru
      _
  $region6: #{model_forward.16} parent=0 // loop_footer
    %s16 = sadd.s32 1, %s12
  $region7: #{model_forward.16} parent=0 // loop_footer_branch
    %11 = sbr.rel target = $region3
  $region8: #{model_forward.16} parent=0 // loop_exit
    _

// kernel: model_forward.20
$region0: #{model_forward.20}
  #allocation0 [shape = 'u32[]', space=smem, size = 0x4, offset = 0x4, fixed_abs, tag = 'smem constant byte address 0x4 - core index']
  #allocation1 [shape = 'u32[144,128]{1,0:T(1,128)}', space=vmem, size = 0x12000, scoped, tag = 'internal scratch']
  %s0 = inlined_call_operand.vmem [shape: f32[32,32], index: 0, kind: input, shape index: {}]
  %s1 = inlined_call_operand.vmem [shape: f32[1,32], index: 1, kind: input, shape index: {}]
  %s2 = inlined_call_operand.vmem [shape: f32[1,32], index: 2, kind: input, shape index: {}]
  %s3 = inlined_call_operand.vmem [shape: f32[1,32], index: 3, kind: input, shape index: {}]
  %s4 = inlined_call_operand.vmem [shape: f32[1,32], index: 4, kind: input, shape index: {}]
  %s5 = inlined_call_operand.vmem [shape: f32[32,32], index: 5, kind: output, shape index: {}]
  %s6 = sld [smem:[#allocation0]]
  $region30: #{model_forward.20} parent=0
    _
  %s8 = ssub.s32 1, %s6
  %s9 = scalar_select 0, %s8, %s6
  // Predicated region
  $region2: #{model_forward.20} parent=0 // pred_check
    _
  $region3: #{model_forward.20} parent=0 // pred_check_branch
    %11 = sbr.rel (0) target = $region5
  $region4: #{model_forward.20} parent=0 // pred_region
    _
  $region5: #{model_forward.20} parent=0 // pred_fallthru
    _
  // Predicated region
  $region6: #{model_forward.20} parent=0 // pred_check
    _
  $region7: #{model_forward.20} parent=0 // pred_check_branch
    %13 = sbr.rel (0) target = $region9
  $region8: #{model_forward.20} parent=0 // pred_region
    _
  $region9: #{model_forward.20} parent=0 // pred_fallthru
    _
  // Predicated region
  $region10: #{model_forward.20} parent=0 // pred_check
    _
  $region11: #{model_forward.20} parent=0 // pred_check_branch
    %15 = sbr.rel (0) target = $region13
  $region12: #{model_forward.20} parent=0 // pred_region
    _
  $region13: #{model_forward.20} parent=0 // pred_fallthru
    _
  // Predicated region
  $region14: #{model_forward.20} parent=0 // pred_check
    _
  $region15: #{model_forward.20} parent=0 // pred_check_branch
    %17 = sbr.rel (0) target = $region17
  $region16: #{model_forward.20} parent=0 // pred_region
    _
  $region17: #{model_forward.20} parent=0 // pred_fallthru
    _
  // Predicated region
  $region18: #{model_forward.20} parent=0 // pred_check
    _
  $region19: #{model_forward.20} parent=0 // pred_check_branch
    %19 = sbr.rel (0) target = $region21
  $region20: #{model_forward.20} parent=0 // pred_region
    _
  $region21: #{model_forward.20} parent=0 // pred_fallthru
    _
  %v20 = vld [vmem:[%s1] sm:$0x1]
  %v21 = vmul.f32 %v20, 0.03125
  %v22 = vld [vmem:[%s2] sm:$0x1]
  %v23 = vmul.f32 %v22, 0.03125
  %v24 = vmul.f32 %v21, %v21
  %v25 = vsub.f32 %v23, %v24
  %v26 = vmax.f32 %v25, 0.0
  %v27 = vld [vmem:[%s3] sm:$0x1]
  %v28 = vadd.f32 %v26, 1e-05
  %v29 = vrsqrt.pop %v28
  %v30 = vmul.f32 %v27, %v29
  %v31 = vld [vmem:[%s4] sm:$0x1]
  %v32 = vmul.f32 %v21, %v30
  %v33 = vsub.f32 %v31, %v32
  %v34 = vld [vmem:[%s0] sm:$0xff]
  %v35 = vld [vmem:[%s0 + $0x8] sm:$0xff]
  %v36 = vld [vmem:[%s0 + $0x10] sm:$0xff]
  %v37 = vld [vmem:[%s0 + $0x18] sm:$0xff]
  %v39 = vlaneseq
  %v40 = vshrl.u32 %v39, 7
  %v41 = vsub.s32 0, %v40
  %v42 = vrot.slane %v30, %v41
  %v44 = vmul.f32 %v34, %v42
  %v45 = vmul.f32 %v35, %v42
  %v46 = vmul.f32 %v36, %v42
  %v47 = vmul.f32 %v37, %v42
  %v49 = vlaneseq
  %v50 = vshrl.u32 %v49, 7
  %v51 = vsub.s32 0, %v50
  %v52 = vrot.slane %v33, %v51
  %v54 = vadd.f32 %v44, %v52
  %v55 = vadd.f32 %v45, %v52
  %v56 = vadd.f32 %v46, %v52
  %v57 = vadd.f32 %v47, %v52
  %v58 = vmax.f32 %v54, 0.0
  %v59 = vmax.f32 %v55, 0.0
  %v60 = vmax.f32 %v56, 0.0
  %v61 = vmax.f32 %v57, 0.0
  %vm62 = vcmask 261120
  %63 = vst.msk [vmem:[%s5] sm:$0xff] %vm62, %v58
  %64 = vst.msk [vmem:[%s5 + $0x8] sm:$0xff] %vm62, %v59
  %65 = vst.msk [vmem:[%s5 + $0x10] sm:$0xff] %vm62, %v60
  %66 = vst.msk [vmem:[%s5 + $0x18] sm:$0xff] %vm62, %v61
  // Predicated region
  $region22: #{model_forward.20} parent=0 // pred_check
    _
  $region23: #{model_forward.20} parent=0 // pred_check_branch
    %68 = sbr.rel (0) target = $region25
  $region24: #{model_forward.20} parent=0 // pred_region
    _
  $region25: #{model_forward.20} parent=0 // pred_fallthru
    _
  // Predicated region
  $region26: #{model_forward.20} parent=0 // pred_check
    _
  $region27: #{model_forward.20} parent=0 // pred_check_branch
    %70 = sbr.rel (0) target = $region29
  $region28: #{model_forward.20} parent=0 // pred_region
    _
  $region29: #{model_forward.20} parent=0 // pred_fallthru
    _

// kernel: model_forward.19
$region0: #{model_forward.19}
  #allocation0 [shape = 'u32[]', space=smem, size = 0x4, offset = 0x4, fixed_abs, tag = 'smem constant byte address 0x4 - core index']
  #allocation1 [shape = 'u32[144,128]{1,0:T(1,128)}', space=vmem, size = 0x12000, scoped, tag = 'internal scratch']
  %s0 = inlined_call_operand.vmem [shape: f32[86,32], index: 0, kind: input, shape index: {}]
  %s1 = inlined_call_operand.vmem [shape: bf16[9,32,32], index: 1, kind: input, shape index: {}]
  %s2 = inlined_call_operand.vmem [shape: f32[72,1], index: 2, kind: input, shape index: {}]
  %s3 = inlined_call_operand.vmem [shape: f32[72,32], index: 3, kind: output, shape index: {0}]
  %s4 = inlined_call_operand.vmem [shape: f32[1,32], index: 4, kind: output, shape index: {1}]
  %s5 = inlined_call_operand.vmem [shape: f32[1,32], index: 5, kind: output, shape index: {2}]
  %6 = xla_tuple %s3, %s4, %s5
  %s7 = sld [smem:[#allocation0]]
  $region42: #{model_forward.19} parent=0
    _
  %s9 = ssub.s32 1, %s7
  %s10 = scalar_select 0, %s9, %s7
  // Predicated region
  $region2: #{model_forward.19} parent=0 // pred_check
    _
  $region3: #{model_forward.19} parent=0 // pred_check_branch
    %12 = sbr.rel (0) target = $region5
  $region4: #{model_forward.19} parent=0 // pred_region
    _
  $region5: #{model_forward.19} parent=0 // pred_fallthru
    _
  // Predicated region
  $region6: #{model_forward.19} parent=0 // pred_check
    _
  $region7: #{model_forward.19} parent=0 // pred_check_branch
    %14 = sbr.rel (0) target = $region9
  $region8: #{model_forward.19} parent=0 // pred_region
    _
  $region9: #{model_forward.19} parent=0 // pred_fallthru
    _
  // Predicated region
  $region10: #{model_forward.19} parent=0 // pred_check
    _
  $region11: #{model_forward.19} parent=0 // pred_check_branch
    %16 = sbr.rel (0) target = $region13
  $region12: #{model_forward.19} parent=0 // pred_region
    _
  $region13: #{model_forward.19} parent=0 // pred_fallthru
    _
  %p18 = scmp.eq.s32.totalorder 0, 0
  // Predicated region
  $region14: #{model_forward.19} parent=0 // pred_check
    %p19 = pneg %p18
  $region15: #{model_forward.19} parent=0 // pred_check_branch
    %21 = sbr.rel (%p19) target = $region17
  $region16: #{model_forward.19} parent=0 // pred_region
    %vm22 = vcmask 253952
    %23 = vst.msk [vmem:[%s4] sm:$0x1] %vm22, 0.0
    %24 = vst.msk [vmem:[%s5] sm:$0x1] %vm22, 0.0
  $region17: #{model_forward.19} parent=0 // pred_fallthru
    _
  %s25 = smul.u32 0, 72
  %s26 = scalar_lea.vmem %s0, %s25
  %v27 = vld [vmem:[%s26] sm:$0xff]
  %v28 = vld [vmem:[%s26 + $0x8] sm:$0xff]
  %v29 = vld [vmem:[%s26 + $0x10] sm:$0xff]
  %v30 = vld [vmem:[%s26 + $0x18] sm:$0xff]
  %v31 = vld [vmem:[%s26 + $0x20] sm:$0xff]
  %v32 = vld [vmem:[%s26 + $0x28] sm:$0xff]
  %v33 = vld [vmem:[%s26 + $0x30] sm:$0xff]
  %v34 = vld [vmem:[%s26 + $0x38] sm:$0xff]
  %v35 = vld [vmem:[%s26 + $0x40] sm:$0xff]
  %v36 = vld [vmem:[%s26 + $0x48] sm:$0xff]
  %v37 = vld [vmem:[%s26 + $0x50] sm:$0x3f]
  %v38 = vpack.c.bf16 %v28, %v27
  %v39 = vpack.c.bf16 %v30, %v29
  %v40 = vpack.c.bf16 %v32, %v31
  %v41 = vpack.c.bf16 %v34, %v33
  %v42 = vpack.c.bf16 %v35, %v35
  %v43 = vld [vmem:[%s1] sm:$0xf]
  %v44 = vld [vmem:[%s1 + $0x4] sm:$0xf]
  %v45 = vld [vmem:[%s1 + $0x8] sm:$0xf]
  %v46 = vld [vmem:[%s1 + $0xc] sm:$0xf]
  %v47 = vpack.c.bf16 %v36, %v35
  %s48 = scalar_lea.vmem %s1, 16
  %v49 = vld [vmem:[%s48] sm:$0xf]
  %v50 = vld [vmem:[%s48 + $0x4] sm:$0xf]
  %v51 = vld [vmem:[%s48 + $0x8] sm:$0xf]
  %v52 = vld [vmem:[%s48 + $0xc] sm:$0xf]
  %vm53 = vsmask.f32 7424
  %v55 = vshrl.u32 %v38, 16
  %v57 = vshll.u32 %v38, 16
  %v59 = vrot.slane %v57, 1
  %v60 = vor.u32 %v55, %v59
  %v62 = vshll.u32 %v39, 16
  %v64 = vrot.slane %v62, 1
  %v65 = vsel %vm53, %v60, %v64
  %v66 = vshrl.u32 %v39, 16
  %v68 = vor.u32 %v66, %v64
  %v70 = vshll.u32 %v40, 16
  %v72 = vrot.slane %v70, 1
  %v73 = vsel %vm53, %v68, %v72
  %v74 = vshrl.u32 %v40, 16
  %v76 = vor.u32 %v74, %v72
  %v78 = vshll.u32 %v41, 16
  %v80 = vrot.slane %v78, 1
  %v81 = vsel %vm53, %v76, %v80
  %v82 = vshrl.u32 %v41, 16
  %v84 = vor.u32 %v82, %v80
  %v86 = vshll.u32 %v47, 16
  %v88 = vrot.slane %v86, 1
  %v89 = vsel %vm53, %v84, %v88
  %v90 = vshrl.u32 %v47, 16
  %v92 = vor.u32 %v90, %v88
  %v97 = vunpack.c.l.b16 %v49
  %v98 = vunpack.c.l.b16 %v50
  %v99 = vunpack.c.l.b16 %v51
  %v100 = vunpack.c.l.b16 %v52
  %v101 = vpack.c.b16 %v98, %v97
  %v102 = vpack.c.b16 %v100, %v99
  %vm105 = vcmask 261120
  %v107 = vsel %vm105, %v65, 0
  %v110 = vsel %vm105, %v73, 0
  %v113 = vsel %vm105, %v81, 0
  %v116 = vsel %vm105, %v89, 0
  %v119 = vsel %vm105, %v92, 0
  %121 = vmatprep.subr.bf16.mxu0 0
  %122 = vmatpush1.bf16.msra.mxu0 %v101
  %123 = vmatprep.subr.bf16.mxu0 0
  %124 = vmatpush1.bf16.msra.mxu0 %v102
  %125 = vmatprep.subr.bf16.mxu0 0
  %126 = vmatpush1.bf16.msra.mxu0 0
  %127 = vmatprep.subr.bf16.mxu0 0
  %128 = vmatpush1.bf16.msra.mxu0 0
  %129 = vmatprep.subr.bf16.mxu0 0
  %130 = vmatpush1.bf16.msra.mxu0 0
  %131 = vmatprep.subr.bf16.mxu0 0
  %132 = vmatpush1.bf16.msra.mxu0 0
  %133 = vmatprep.subr.bf16.mxu0 0
  %134 = vmatpush1.bf16.msra.mxu0 0
  %135 = vmatprep.subr.bf16.mxu0 0
  %136 = vmatpush1.bf16.msra.mxu0 0
  %137 = vmatprep.subr.bf16.mxu0 0
  %138 = vmatpush1.bf16.msra.mxu0 0
  %139 = vmatprep.subr.bf16.mxu0 0
  %140 = vmatpush1.bf16.msra.mxu0 0
  %141 = vmatprep.subr.bf16.mxu0 0
  %142 = vmatpush1.bf16.msra.mxu0 0
  %143 = vmatprep.subr.bf16.mxu0 0
  %144 = vmatpush1.bf16.msra.mxu0 0
  %145 = vmatprep.subr.bf16.mxu0 0
  %146 = vmatpush1.bf16.msra.mxu0 0
  %147 = vmatprep.subr.bf16.mxu0 0
  %148 = vmatpush1.bf16.msra.mxu0 0
  %149 = vmatprep.subr.bf16.mxu0 0
  %150 = vmatpush1.bf16.msra.mxu0 0
  %151 = vmatprep.subr.bf16.mxu0 0
  %152 = vmatpush1.bf16.msra.mxu0 0
  %153 = vmatprep.mubr.bf16.mxu0 0
  %154 = vmatmul.mubr.bf16.gmra.mrb[0].mxu0 %v107
  %v155 = vpop.f32.mrb[0].mxu0
  %v156 = vadd.f32 0.0, %v155
  %v157 = vpop.f32.mrb[0].mxu0
  %v158 = vpop.f32.mrb[0].mxu0
  %v159 = vadd.f32 0.0, %v158
  %v160 = vpop.f32.mrb[0].mxu0
  %161 = vmatprep.mubr.bf16.mxu0 0
  %162 = vmatmul.mubr.bf16.gmra.mrb[0].mxu0 %v110
  %v163 = vpop.f32.mrb[0].mxu0
  %v164 = vadd.f32 0.0, %v163
  %v165 = vpop.f32.mrb[0].mxu0
  %v166 = vpop.f32.mrb[0].mxu0
  %v167 = vadd.f32 0.0, %v166
  %v168 = vpop.f32.mrb[0].mxu0
  %169 = vmatprep.mubr.bf16.mxu0 0
  %170 = vmatmul.mubr.bf16.gmra.mrb[0].mxu0 %v113
  %v171 = vpop.f32.mrb[0].mxu0
  %v172 = vadd.f32 0.0, %v171
  %v173 = vpop.f32.mrb[0].mxu0
  %v174 = vpop.f32.mrb[0].mxu0
  %v175 = vadd.f32 0.0, %v174
  %v176 = vpop.f32.mrb[0].mxu0
  %177 = vmatprep.mubr.bf16.mxu0 0
  %178 = vmatmul.mubr.bf16.gmra.mrb[0].mxu0 %v116
  %v179 = vpop.f32.mrb[0].mxu0
  %v180 = vadd.f32 0.0, %v179
  %v181 = vpop.f32.mrb[0].mxu0
  %v182 = vpop.f32.mrb[0].mxu0
  %v183 = vadd.f32 0.0, %v182
  %v184 = vpop.f32.mrb[0].mxu0
  %185 = vmatprep.mubr.bf16.mxu0 0
  %186 = vmatmul.mubr.bf16.gmra.mrb[0].mxu0 %v119
  %v187 = vpop.f32.mrb[0].mxu0
  %v188 = vadd.f32 0.0, %v187
  %v189 = vpop.f32.mrb[0].mxu0
  %v190 = vpop.f32.mrb[0].mxu0
  %v191 = vpop.f32.mrb[0].mxu0
  %192 = vdwg.mxu0
  %v197 = vunpack.c.l.b16 %v43
  %v198 = vunpack.c.l.b16 %v44
  %v199 = vunpack.c.l.b16 %v45
  %v200 = vunpack.c.l.b16 %v46
  %v201 = vpack.c.b16 %v198, %v197
  %v202 = vpack.c.b16 %v200, %v199
  %v205 = vsel %vm105, %v38, 0
  %v207 = vsel %vm105, %v39, 0
  %v209 = vsel %vm105, %v40, 0
  %v211 = vsel %vm105, %v41, 0
  %v214 = vsel %vm105, %v42, 0
  %216 = vmatprep.subr.bf16.mxu0 0
  %217 = vmatpush1.bf16.msra.mxu0 %v201
  %218 = vmatprep.subr.bf16.mxu0 0
  %219 = vmatpush1.bf16.msra.mxu0 %v202
  %220 = vmatprep.subr.bf16.mxu0 0
  %221 = vmatpush1.bf16.msra.mxu0 0
  %222 = vmatprep.subr.bf16.mxu0 0
  %223 = vmatpush1.bf16.msra.mxu0 0
  %224 = vmatprep.subr.bf16.mxu0 0
  %225 = vmatpush1.bf16.msra.mxu0 0
  %226 = vmatprep.subr.bf16.mxu0 0
  %227 = vmatpush1.bf16.msra.mxu0 0
  %228 = vmatprep.subr.bf16.mxu0 0
  %229 = vmatpush1.bf16.msra.mxu0 0
  %230 = vmatprep.subr.bf16.mxu0 0
  %231 = vmatpush1.bf16.msra.mxu0 0
  %232 = vmatprep.subr.bf16.mxu0 0
  %233 = vmatpush1.bf16.msra.mxu0 0
  %234 = vmatprep.subr.bf16.mxu0 0
  %235 = vmatpush1.bf16.msra.mxu0 0
  %236 = vmatprep.subr.bf16.mxu0 0
  %237 = vmatpush1.bf16.msra.mxu0 0
  %238 = vmatprep.subr.bf16.mxu0 0
  %239 = vmatpush1.bf16.msra.mxu0 0
  %240 = vmatprep.subr.bf16.mxu0 0
  %241 = vmatpush1.bf16.msra.mxu0 0
  %242 = vmatprep.subr.bf16.mxu0 0
  %243 = vmatpush1.bf16.msra.mxu0 0
  %244 = vmatprep.subr.bf16.mxu0 0
  %245 = vmatpush1.bf16.msra.mxu0 0
  %246 = vmatprep.subr.bf16.mxu0 0
  %247 = vmatpush1.bf16.msra.mxu0 0
  %248 = vmatprep.mubr.bf16.mxu0 0
  %249 = vmatmul.mubr.bf16.gmra.mrb[0].mxu0 %v205
  %v250 = vpop.f32.mrb[0].mxu0
  %v251 = vadd.f32 %v156, %v250
  %v252 = vpop.f32.mrb[0].mxu0
  %v253 = vpop.f32.mrb[0].mxu0
  %v254 = vadd.f32 %v159, %v253
  %v255 = vpop.f32.mrb[0].mxu0
  %256 = vmatprep.mubr.bf16.mxu0 0
  %257 = vmatmul.mubr.bf16.gmra.mrb[0].mxu0 %v207
  %v258 = vpop.f32.mrb[0].mxu0
  %v259 = vadd.f32 %v164, %v258
  %v260 = vpop.f32.mrb[0].mxu0
  %v261 = vpop.f32.mrb[0].mxu0
  %v262 = vadd.f32 %v167, %v261
  %v263 = vpop.f32.mrb[0].mxu0
  %264 = vmatprep.mubr.bf16.mxu0 0
  %265 = vmatmul.mubr.bf16.gmra.mrb[0].mxu0 %v209
  %v266 = vpop.f32.mrb[0].mxu0
  %v267 = vadd.f32 %v172, %v266
  %v268 = vpop.f32.mrb[0].mxu0
  %v269 = vpop.f32.mrb[0].mxu0
  %v270 = vadd.f32 %v175, %v269
  %v271 = vpop.f32.mrb[0].mxu0
  %272 = vmatprep.mubr.bf16.mxu0 0
  %273 = vmatmul.mubr.bf16.gmra.mrb[0].mxu0 %v211
  %v274 = vpop.f32.mrb[0].mxu0
  %v275 = vadd.f32 %v180, %v274
  %v276 = vpop.f32.mrb[0].mxu0
  %v277 = vpop.f32.mrb[0].mxu0
  %v278 = vadd.f32 %v183, %v277
  %v279 = vpop.f32.mrb[0].mxu0
  %280 = vmatprep.mubr.bf16.mxu0 0
  %281 = vmatmul.mubr.bf16.gmra.mrb[0].mxu0 %v214
  %v282 = vpop.f32.mrb[0].mxu0
  %v283 = vadd.f32 %v188, %v282
  %v284 = vpop.f32.mrb[0].mxu0
  %v285 = vpop.f32.mrb[0].mxu0
  %v286 = vpop.f32.mrb[0].mxu0
  %287 = vdwg.mxu0
  %s288 = scalar_lea.vmem %s1, 32
  %v289 = vld [vmem:[%s288] sm:$0xf]
  %v290 = vld [vmem:[%s288 + $0x4] sm:$0xf]
  %v291 = vld [vmem:[%s288 + $0x8] sm:$0xf]
  %v292 = vld [vmem:[%s288 + $0xc] sm:$0xf]
  %vm298 = vcmask 1046528
  %v299 = vrot.slane %v38, 1
  %v300 = vrot.slane %v39, 1
  %v301 = vsel %vm298, %v299, %v300
  %v302 = vrot.slane %v40, 1
  %v303 = vsel %vm298, %v300, %v302
  %v304 = vrot.slane %v41, 1
  %v305 = vsel %vm298, %v302, %v304
  %v306 = vrot.slane %v47, 1
  %v307 = vsel %vm298, %v304, %v306
  %v312 = vunpack.c.l.b16 %v289
  %v313 = vunpack.c.l.b16 %v290
  %v314 = vunpack.c.l.b16 %v291
  %v315 = vunpack.c.l.b16 %v292
  %v316 = vpack.c.b16 %v313, %v312
  %v317 = vpack.c.b16 %v315, %v314
  %v321 = vsel %vm105, %v301, 0
  %v324 = vsel %vm105, %v303, 0
  %v327 = vsel %vm105, %v305, 0
  %v330 = vsel %vm105, %v307, 0
  %v333 = vsel %vm105, %v306, 0
  %335 = vmatprep.subr.bf16.mxu0 0
  %336 = vmatpush1.bf16.msra.mxu0 %v316
  %337 = vmatprep.subr.bf16.mxu0 0
  %338 = vmatpush1.bf16.msra.mxu0 %v317
  %339 = vmatprep.subr.bf16.mxu0 0
  %340 = vmatpush1.bf16.msra.mxu0 0
  %341 = vmatprep.subr.bf16.mxu0 0
  %342 = vmatpush1.bf16.msra.mxu0 0
  %343 = vmatprep.subr.bf16.mxu0 0
  %344 = vmatpush1.bf16.msra.mxu0 0
  %345 = vmatprep.subr.bf16.mxu0 0
  %346 = vmatpush1.bf16.msra.mxu0 0
  %347 = vmatprep.subr.bf16.mxu0 0
  %348 = vmatpush1.bf16.msra.mxu0 0
  %349 = vmatprep.subr.bf16.mxu0 0
  %350 = vmatpush1.bf16.msra.mxu0 0
  %351 = vmatprep.subr.bf16.mxu0 0
  %352 = vmatpush1.bf16.msra.mxu0 0
  %353 = vmatprep.subr.bf16.mxu0 0
  %354 = vmatpush1.bf16.msra.mxu0 0
  %355 = vmatprep.subr.bf16.mxu0 0
  %356 = vmatpush1.bf16.msra.mxu0 0
  %357 = vmatprep.subr.bf16.mxu0 0
  %358 = vmatpush1.bf16.msra.mxu0 0
  %359 = vmatprep.subr.bf16.mxu0 0
  %360 = vmatpush1.bf16.msra.mxu0 0
  %361 = vmatprep.subr.bf16.mxu0 0
  %362 = vmatpush1.bf16.msra.mxu0 0
  %363 = vmatprep.subr.bf16.mxu0 0
  %364 = vmatpush1.bf16.msra.mxu0 0
  %365 = vmatprep.subr.bf16.mxu0 0
  %366 = vmatpush1.bf16.msra.mxu0 0
  %367 = vmatprep.mubr.bf16.mxu0 0
  %368 = vmatmul.mubr.bf16.gmra.mrb[0].mxu0 %v321
  %v369 = vpop.f32.mrb[0].mxu0
  %v370 = vadd.f32 0.0, %v369
  %v371 = vpop.f32.mrb[0].mxu0
  %v372 = vpop.f32.mrb[0].mxu0
  %v373 = vadd.f32 0.0, %v372
  %v374 = vpop.f32.mrb[0].mxu0
  %375 = vmatprep.mubr.bf16.mxu0 0
  %376 = vmatmul.mubr.bf16.gmra.mrb[0].mxu0 %v324
  %v377 = vpop.f32.mrb[0].mxu0
  %v378 = vadd.f32 0.0, %v377
  %v379 = vpop.f32.mrb[0].mxu0
  %v380 = vpop.f32.mrb[0].mxu0
  %v381 = vadd.f32 0.0, %v380
  %v382 = vpop.f32.mrb[0].mxu0
  %383 = vmatprep.mubr.bf16.mxu0 0
  %384 = vmatmul.mubr.bf16.gmra.mrb[0].mxu0 %v327
  %v385 = vpop.f32.mrb[0].mxu0
  %v386 = vadd.f32 0.0, %v385
  %v387 = vpop.f32.mrb[0].mxu0
  %v388 = vpop.f32.mrb[0].mxu0
  %v389 = vadd.f32 0.0, %v388
  %v390 = vpop.f32.mrb[0].mxu0
  %391 = vmatprep.mubr.bf16.mxu0 0
  %392 = vmatmul.mubr.bf16.gmra.mrb[0].mxu0 %v330
  %v393 = vpop.f32.mrb[0].mxu0
  %v394 = vadd.f32 0.0, %v393
  %v395 = vpop.f32.mrb[0].mxu0
  %v396 = vpop.f32.mrb[0].mxu0
  %v397 = vadd.f32 0.0, %v396
  %v398 = vpop.f32.mrb[0].mxu0
  %399 = vmatprep.mubr.bf16.mxu0 0
  %400 = vmatmul.mubr.bf16.gmra.mrb[0].mxu0 %v333
  %v401 = vpop.f32.mrb[0].mxu0
  %v402 = vadd.f32 0.0, %v401
  %v403 = vpop.f32.mrb[0].mxu0
  %v404 = vpop.f32.mrb[0].mxu0
  %v405 = vpop.f32.mrb[0].mxu0
  %406 = vdwg.mxu0
  %v407 = vadd.f32 %v251, %v370
  %v408 = vadd.f32 %v254, %v373
  %v409 = vadd.f32 %v259, %v378
  %v410 = vadd.f32 %v262, %v381
  %v411 = vadd.f32 %v267, %v386
  %v412 = vadd.f32 %v270, %v389
  %v413 = vadd.f32 %v275, %v394
  %v414 = vadd.f32 %v278, %v397
  %v415 = vadd.f32 %v283, %v402
  %s416 = scalar_lea.vmem %s1, 48
  %v417 = vld [vmem:[%s416] sm:$0xf]
  %v418 = vld [vmem:[%s416 + $0x4] sm:$0xf]
  %v419 = vld [vmem:[%s416 + $0x8] sm:$0xf]
  %v420 = vld [vmem:[%s416 + $0xc] sm:$0xf]
  %vm421 = vcmask 1044480
  %v422 = vrot.slane %v38, 3
  %v423 = vrot.slane %v39, 3
  %v424 = vsel %vm421, %v422, %v423
  %v425 = vrot.slane %v40, 3
  %v426 = vsel %vm421, %v423, %v425
  %v427 = vrot.slane %v41, 3
  %v428 = vsel %vm421, %v425, %v427
  %v429 = vrot.slane %v47, 3
  %v430 = vsel %vm421, %v427, %v429
  %v435 = vunpack.c.l.b16 %v417
  %v436 = vunpack.c.l.b16 %v418
  %v437 = vunpack.c.l.b16 %v419
  %v438 = vunpack.c.l.b16 %v420
  %v439 = vpack.c.b16 %v436, %v435
  %v440 = vpack.c.b16 %v438, %v437
  %v444 = vsel %vm105, %v424, 0
  %v447 = vsel %vm105, %v426, 0
  %v450 = vsel %vm105, %v428, 0
  %v453 = vsel %vm105, %v430, 0
  %v456 = vsel %vm105, %v429, 0
  %458 = vmatprep.subr.bf16.mxu0 0
  %459 = vmatpush1.bf16.msra.mxu0 %v439
  %460 = vmatprep.subr.bf16.mxu0 0
  %461 = vmatpush1.bf16.msra.mxu0 %v440
  %462 = vmatprep.subr.bf16.mxu0 0
  %463 = vmatpush1.bf16.msra.mxu0 0
  %464 = vmatprep.subr.bf16.mxu0 0
  %465 = vmatpush1.bf16.msra.mxu0 0
  %466 = vmatprep.subr.bf16.mxu0 0
  %467 = vmatpush1.bf16.msra.mxu0 0
  %468 = vmatprep.subr.bf16.mxu0 0
  %469 = vmatpush1.bf16.msra.mxu0 0
  %470 = vmatprep.subr.bf16.mxu0 0
  %471 = vmatpush1.bf16.msra.mxu0 0
  %472 = vmatprep.subr.bf16.mxu0 0
  %473 = vmatpush1.bf16.msra.mxu0 0
  %474 = vmatprep.subr.bf16.mxu0 0
  %475 = vmatpush1.bf16.msra.mxu0 0
  %476 = vmatprep.subr.bf16.mxu0 0
  %477 = vmatpush1.bf16.msra.mxu0 0
  %478 = vmatprep.subr.bf16.mxu0 0
  %479 = vmatpush1.bf16.msra.mxu0 0
  %480 = vmatprep.subr.bf16.mxu0 0
  %481 = vmatpush1.bf16.msra.mxu0 0
  %482 = vmatprep.subr.bf16.mxu0 0
  %483 = vmatpush1.bf16.msra.mxu0 0
  %484 = vmatprep.subr.bf16.mxu0 0
  %485 = vmatpush1.bf16.msra.mxu0 0
  %486 = vmatprep.subr.bf16.mxu0 0
  %487 = vmatpush1.bf16.msra.mxu0 0
  %488 = vmatprep.subr.bf16.mxu0 0
  %489 = vmatpush1.bf16.msra.mxu0 0
  %490 = vmatprep.mubr.bf16.mxu0 0
  %491 = vmatmul.mubr.bf16.gmra.mrb[0].mxu0 %v444
  %v492 = vpop.f32.mrb[0].mxu0
  %v493 = vadd.f32 0.0, %v492
  %v494 = vpop.f32.mrb[0].mxu0
  %v495 = vpop.f32.mrb[0].mxu0
  %v496 = vadd.f32 0.0, %v495
  %v497 = vpop.f32.mrb[0].mxu0
  %498 = vmatprep.mubr.bf16.mxu0 0
  %499 = vmatmul.mubr.bf16.gmra.mrb[0].mxu0 %v447
  %v500 = vpop.f32.mrb[0].mxu0
  %v501 = vadd.f32 0.0, %v500
  %v502 = vpop.f32.mrb[0].mxu0
  %v503 = vpop.f32.mrb[0].mxu0
  %v504 = vadd.f32 0.0, %v503
  %v505 = vpop.f32.mrb[0].mxu0
  %506 = vmatprep.mubr.bf16.mxu0 0
  %507 = vmatmul.mubr.bf16.gmra.mrb[0].mxu0 %v450
  %v508 = vpop.f32.mrb[0].mxu0
  %v509 = vadd.f32 0.0, %v508
  %v510 = vpop.f32.mrb[0].mxu0
  %v511 = vpop.f32.mrb[0].mxu0
  %v512 = vadd.f32 0.0, %v511
  %v513 = vpop.f32.mrb[0].mxu0
  %514 = vmatprep.mubr.bf16.mxu0 0
  %515 = vmatmul.mubr.bf16.gmra.mrb[0].mxu0 %v453
  %v516 = vpop.f32.mrb[0].mxu0
  %v517 = vadd.f32 0.0, %v516
  %v518 = vpop.f32.mrb[0].mxu0
  %v519 = vpop.f32.mrb[0].mxu0
  %v520 = vadd.f32 0.0, %v519
  %v521 = vpop.f32.mrb[0].mxu0
  %522 = vmatprep.mubr.bf16.mxu0 0
  %523 = vmatmul.mubr.bf16.gmra.mrb[0].mxu0 %v456
  %v524 = vpop.f32.mrb[0].mxu0
  %v525 = vadd.f32 0.0, %v524
  %v526 = vpop.f32.mrb[0].mxu0
  %v527 = vpop.f32.mrb[0].mxu0
  %v528 = vpop.f32.mrb[0].mxu0
  %529 = vdwg.mxu0
  %v530 = vadd.f32 %v407, %v493
  %v531 = vadd.f32 %v408, %v496
  %v532 = vadd.f32 %v409, %v501
  %v533 = vadd.f32 %v410, %v504
  %v534 = vadd.f32 %v411, %v509
  %v535 = vadd.f32 %v412, %v512
  %v536 = vadd.f32 %v413, %v517
  %v537 = vadd.f32 %v414, %v520
  %v538 = vadd.f32 %v415, %v525
  %s539 = scalar_lea.vmem %s1, 64
  %v540 = vld [vmem:[%s539] sm:$0xf]
  %v541 = vld [vmem:[%s539 + $0x4] sm:$0xf]
  %v542 = vld [vmem:[%s539 + $0x8] sm:$0xf]
  %v543 = vld [vmem:[%s539 + $0xc] sm:$0xf]
  %vm544 = vsmask.f32 4352
  %v545 = vrot.slane %v55, 3
  %v546 = vrot.slane %v57, 4
  %v547 = vor.u32 %v545, %v546
  %v548 = vrot.slane %v66, 3
  %v549 = vrot.slane %v62, 4
  %v550 = vor.u32 %v548, %v549
  %v551 = vsel %vm544, %v547, %v550
  %v552 = vrot.slane %v74, 3
  %v553 = vrot.slane %v70, 4
  %v554 = vor.u32 %v552, %v553
  %v555 = vsel %vm544, %v550, %v554
  %v556 = vrot.slane %v82, 3
  %v557 = vrot.slane %v78, 4
  %v558 = vor.u32 %v556, %v557
  %v559 = vsel %vm544, %v554, %v558
  %v560 = vrot.slane %v90, 3
  %v561 = vrot.slane %v86, 4
  %v562 = vor.u32 %v560, %v561
  %v563 = vsel %vm544, %v558, %v562
  %v568 = vunpack.c.l.b16 %v540
  %v569 = vunpack.c.l.b16 %v541
  %v570 = vunpack.c.l.b16 %v542
  %v571 = vunpack.c.l.b16 %v543
  %v572 = vpack.c.b16 %v569, %v568
  %v573 = vpack.c.b16 %v571, %v570
  %v577 = vsel %vm105, %v551, 0
  %v580 = vsel %vm105, %v555, 0
  %v583 = vsel %vm105, %v559, 0
  %v586 = vsel %vm105, %v563, 0
  %v589 = vsel %vm105, %v562, 0
  %591 = vmatprep.subr.bf16.mxu0 0
  %592 = vmatpush1.bf16.msra.mxu0 %v572
  %593 = vmatprep.subr.bf16.mxu0 0
  %594 = vmatpush1.bf16.msra.mxu0 %v573
  %595 = vmatprep.subr.bf16.mxu0 0
  %596 = vmatpush1.bf16.msra.mxu0 0
  %597 = vmatprep.subr.bf16.mxu0 0
  %598 = vmatpush1.bf16.msra.mxu0 0
  %599 = vmatprep.subr.bf16.mxu0 0
  %600 = vmatpush1.bf16.msra.mxu0 0
  %601 = vmatprep.subr.bf16.mxu0 0
  %602 = vmatpush1.bf16.msra.mxu0 0
  %603 = vmatprep.subr.bf16.mxu0 0
  %604 = vmatpush1.bf16.msra.mxu0 0
  %605 = vmatprep.subr.bf16.mxu0 0
  %606 = vmatpush1.bf16.msra.mxu0 0
  %607 = vmatprep.subr.bf16.mxu0 0
  %608 = vmatpush1.bf16.msra.mxu0 0
  %609 = vmatprep.subr.bf16.mxu0 0
  %610 = vmatpush1.bf16.msra.mxu0 0
  %611 = vmatprep.subr.bf16.mxu0 0
  %612 = vmatpush1.bf16.msra.mxu0 0
  %613 = vmatprep.subr.bf16.mxu0 0
  %614 = vmatpush1.bf16.msra.mxu0 0
  %615 = vmatprep.subr.bf16.mxu0 0
  %616 = vmatpush1.bf16.msra.mxu0 0
  %617 = vmatprep.subr.bf16.mxu0 0
  %618 = vmatpush1.bf16.msra.mxu0 0
  %619 = vmatprep.subr.bf16.mxu0 0
  %620 = vmatpush1.bf16.msra.mxu0 0
  %621 = vmatprep.subr.bf16.mxu0 0
  %622 = vmatpush1.bf16.msra.mxu0 0
  %623 = vmatprep.mubr.bf16.mxu0 0
  %624 = vmatmul.mubr.bf16.gmra.mrb[0].mxu0 %v577
  %v625 = vpop.f32.mrb[0].mxu0
  %v626 = vadd.f32 0.0, %v625
  %v627 = vpop.f32.mrb[0].mxu0
  %v628 = vpop.f32.mrb[0].mxu0
  %v629 = vadd.f32 0.0, %v628
  %v630 = vpop.f32.mrb[0].mxu0
  %631 = vmatprep.mubr.bf16.mxu0 0
  %632 = vmatmul.mubr.bf16.gmra.mrb[0].mxu0 %v580
  %v633 = vpop.f32.mrb[0].mxu0
  %v634 = vadd.f32 0.0, %v633
  %v635 = vpop.f32.mrb[0].mxu0
  %v636 = vpop.f32.mrb[0].mxu0
  %v637 = vadd.f32 0.0, %v636
  %v638 = vpop.f32.mrb[0].mxu0
  %639 = vmatprep.mubr.bf16.mxu0 0
  %640 = vmatmul.mubr.bf16.gmra.mrb[0].mxu0 %v583
  %v641 = vpop.f32.mrb[0].mxu0
  %v642 = vadd.f32 0.0, %v641
  %v643 = vpop.f32.mrb[0].mxu0
  %v644 = vpop.f32.mrb[0].mxu0
  %v645 = vadd.f32 0.0, %v644
  %v646 = vpop.f32.mrb[0].mxu0
  %647 = vmatprep.mubr.bf16.mxu0 0
  %648 = vmatmul.mubr.bf16.gmra.mrb[0].mxu0 %v586
  %v649 = vpop.f32.mrb[0].mxu0
  %v650 = vadd.f32 0.0, %v649
  %v651 = vpop.f32.mrb[0].mxu0
  %v652 = vpop.f32.mrb[0].mxu0
  %v653 = vadd.f32 0.0, %v652
  %v654 = vpop.f32.mrb[0].mxu0
  %655 = vmatprep.mubr.bf16.mxu0 0
  %656 = vmatmul.mubr.bf16.gmra.mrb[0].mxu0 %v589
  %v657 = vpop.f32.mrb[0].mxu0
  %v658 = vadd.f32 0.0, %v657
  %v659 = vpop.f32.mrb[0].mxu0
  %v660 = vpop.f32.mrb[0].mxu0
  %v661 = vpop.f32.mrb[0].mxu0
  %662 = vdwg.mxu0
  %v663 = vadd.f32 %v530, %v626
  %v664 = vadd.f32 %v531, %v629
  %v665 = vadd.f32 %v532, %v634
  %v666 = vadd.f32 %v533, %v637
  %v667 = vadd.f32 %v534, %v642
  %v668 = vadd.f32 %v535, %v645
  %v669 = vadd.f32 %v536, %v650
  %v670 = vadd.f32 %v537, %v653
  %v671 = vadd.f32 %v538, %v658
  %v672 = vpack.c.bf16 %v29, %v28
  %v673 = vpack.c.bf16 %v31, %v30
  %v674 = vpack.c.bf16 %v33, %v32
  %v675 = vpack.c.bf16 %v35, %v34
  %v676 = vpack.c.bf16 %v36, %v36
  %s677 = scalar_lea.vmem %s1, 80
  %v678 = vld [vmem:[%s677] sm:$0xf]
  %v679 = vld [vmem:[%s677 + $0x4] sm:$0xf]
  %v680 = vld [vmem:[%s677 + $0x8] sm:$0xf]
  %v681 = vld [vmem:[%s677 + $0xc] sm:$0xf]
  %v686 = vunpack.c.l.b16 %v678
  %v687 = vunpack.c.l.b16 %v679
  %v688 = vunpack.c.l.b16 %v680
  %v689 = vunpack.c.l.b16 %v681
  %v690 = vpack.c.b16 %v687, %v686
  %v691 = vpack.c.b16 %v689, %v688
  %v695 = vsel %vm105, %v672, 0
  %v698 = vsel %vm105, %v673, 0
  %v701 = vsel %vm105, %v674, 0
  %v704 = vsel %vm105, %v675, 0
  %v707 = vsel %vm105, %v676, 0
  %709 = vmatprep.subr.bf16.mxu0 0
  %710 = vmatpush1.bf16.msra.mxu0 %v690
  %711 = vmatprep.subr.bf16.mxu0 0
  %712 = vmatpush1.bf16.msra.mxu0 %v691
  %713 = vmatprep.subr.bf16.mxu0 0
  %714 = vmatpush1.bf16.msra.mxu0 0
  %715 = vmatprep.subr.bf16.mxu0 0
  %716 = vmatpush1.bf16.msra.mxu0 0
  %717 = vmatprep.subr.bf16.mxu0 0
  %718 = vmatpush1.bf16.msra.mxu0 0
  %719 = vmatprep.subr.bf16.mxu0 0
  %720 = vmatpush1.bf16.msra.mxu0 0
  %721 = vmatprep.subr.bf16.mxu0 0
  %722 = vmatpush1.bf16.msra.mxu0 0
  %723 = vmatprep.subr.bf16.mxu0 0
  %724 = vmatpush1.bf16.msra.mxu0 0
  %725 = vmatprep.subr.bf16.mxu0 0
  %726 = vmatpush1.bf16.msra.mxu0 0
  %727 = vmatprep.subr.bf16.mxu0 0
  %728 = vmatpush1.bf16.msra.mxu0 0
  %729 = vmatprep.subr.bf16.mxu0 0
  %730 = vmatpush1.bf16.msra.mxu0 0
  %731 = vmatprep.subr.bf16.mxu0 0
  %732 = vmatpush1.bf16.msra.mxu0 0
  %733 = vmatprep.subr.bf16.mxu0 0
  %734 = vmatpush1.bf16.msra.mxu0 0
  %735 = vmatprep.subr.bf16.mxu0 0
  %736 = vmatpush1.bf16.msra.mxu0 0
  %737 = vmatprep.subr.bf16.mxu0 0
  %738 = vmatpush1.bf16.msra.mxu0 0
  %739 = vmatprep.subr.bf16.mxu0 0
  %740 = vmatpush1.bf16.msra.mxu0 0
  %741 = vmatprep.mubr.bf16.mxu0 0
  %742 = vmatmul.mubr.bf16.gmra.mrb[0].mxu0 %v695
  %v743 = vpop.f32.mrb[0].mxu0
  %v744 = vadd.f32 0.0, %v743
  %v745 = vpop.f32.mrb[0].mxu0
  %v746 = vpop.f32.mrb[0].mxu0
  %v747 = vadd.f32 0.0, %v746
  %v748 = vpop.f32.mrb[0].mxu0
  %749 = vmatprep.mubr.bf16.mxu0 0
  %750 = vmatmul.mubr.bf16.gmra.mrb[0].mxu0 %v698
  %v751 = vpop.f32.mrb[0].mxu0
  %v752 = vadd.f32 0.0, %v751
  %v753 = vpop.f32.mrb[0].mxu0
  %v754 = vpop.f32.mrb[0].mxu0
  %v755 = vadd.f32 0.0, %v754
  %v756 = vpop.f32.mrb[0].mxu0
  %757 = vmatprep.mubr.bf16.mxu0 0
  %758 = vmatmul.mubr.bf16.gmra.mrb[0].mxu0 %v701
  %v759 = vpop.f32.mrb[0].mxu0
  %v760 = vadd.f32 0.0, %v759
  %v761 = vpop.f32.mrb[0].mxu0
  %v762 = vpop.f32.mrb[0].mxu0
  %v763 = vadd.f32 0.0, %v762
  %v764 = vpop.f32.mrb[0].mxu0
  %765 = vmatprep.mubr.bf16.mxu0 0
  %766 = vmatmul.mubr.bf16.gmra.mrb[0].mxu0 %v704
  %v767 = vpop.f32.mrb[0].mxu0
  %v768 = vadd.f32 0.0, %v767
  %v769 = vpop.f32.mrb[0].mxu0
  %v770 = vpop.f32.mrb[0].mxu0
  %v771 = vadd.f32 0.0, %v770
  %v772 = vpop.f32.mrb[0].mxu0
  %773 = vmatprep.mubr.bf16.mxu0 0
  %774 = vmatmul.mubr.bf16.gmra.mrb[0].mxu0 %v707
  %v775 = vpop.f32.mrb[0].mxu0
  %v776 = vadd.f32 0.0, %v775
  %v777 = vpop.f32.mrb[0].mxu0
  %v778 = vpop.f32.mrb[0].mxu0
  %v779 = vpop.f32.mrb[0].mxu0
  %780 = vdwg.mxu0
  %v781 = vadd.f32 %v663, %v744
  %v782 = vadd.f32 %v664, %v747
  %v783 = vadd.f32 %v665, %v752
  %v784 = vadd.f32 %v666, %v755
  %v785 = vadd.f32 %v667, %v760
  %v786 = vadd.f32 %v668, %v763
  %v787 = vadd.f32 %v669, %v768
  %v788 = vadd.f32 %v670, %v771
  %v789 = vadd.f32 %v671, %v776
  %v790 = vpack.c.bf16 %v37, %v36
  %s791 = scalar_lea.vmem %s1, 96
  %v792 = vld [vmem:[%s791] sm:$0xf]
  %v793 = vld [vmem:[%s791 + $0x4] sm:$0xf]
  %v794 = vld [vmem:[%s791 + $0x8] sm:$0xf]
  %v795 = vld [vmem:[%s791 + $0xc] sm:$0xf]
  %vm801 = vcmask 1045504
  %v802 = vrot.slane %v672, 2
  %v803 = vrot.slane %v673, 2
  %v804 = vsel %vm801, %v802, %v803
  %v805 = vrot.slane %v674, 2
  %v806 = vsel %vm801, %v803, %v805
  %v807 = vrot.slane %v675, 2
  %v808 = vsel %vm801, %v805, %v807
  %v809 = vrot.slane %v790, 2
  %v810 = vsel %vm801, %v807, %v809
  %v815 = vunpack.c.l.b16 %v792
  %v816 = vunpack.c.l.b16 %v793
  %v817 = vunpack.c.l.b16 %v794
  %v818 = vunpack.c.l.b16 %v795
  %v819 = vpack.c.b16 %v816, %v815
  %v820 = vpack.c.b16 %v818, %v817
  %v824 = vsel %vm105, %v804, 0
  %v827 = vsel %vm105, %v806, 0
  %v830 = vsel %vm105, %v808, 0
  %v833 = vsel %vm105, %v810, 0
  %v836 = vsel %vm105, %v809, 0
  %838 = vmatprep.subr.bf16.mxu0 0
  %839 = vmatpush1.bf16.msra.mxu0 %v819
  %840 = vmatprep.subr.bf16.mxu0 0
  %841 = vmatpush1.bf16.msra.mxu0 %v820
  %842 = vmatprep.subr.bf16.mxu0 0
  %843 = vmatpush1.bf16.msra.mxu0 0
  %844 = vmatprep.subr.bf16.mxu0 0
  %845 = vmatpush1.bf16.msra.mxu0 0
  %846 = vmatprep.subr.bf16.mxu0 0
  %847 = vmatpush1.bf16.msra.mxu0 0
  %848 = vmatprep.subr.bf16.mxu0 0
  %849 = vmatpush1.bf16.msra.mxu0 0
  %850 = vmatprep.subr.bf16.mxu0 0
  %851 = vmatpush1.bf16.msra.mxu0 0
  %852 = vmatprep.subr.bf16.mxu0 0
  %853 = vmatpush1.bf16.msra.mxu0 0
  %854 = vmatprep.subr.bf16.mxu0 0
  %855 = vmatpush1.bf16.msra.mxu0 0
  %856 = vmatprep.subr.bf16.mxu0 0
  %857 = vmatpush1.bf16.msra.mxu0 0
  %858 = vmatprep.subr.bf16.mxu0 0
  %859 = vmatpush1.bf16.msra.mxu0 0
  %860 = vmatprep.subr.bf16.mxu0 0
  %861 = vmatpush1.bf16.msra.mxu0 0
  %862 = vmatprep.subr.bf16.mxu0 0
  %863 = vmatpush1.bf16.msra.mxu0 0
  %864 = vmatprep.subr.bf16.mxu0 0
  %865 = vmatpush1.bf16.msra.mxu0 0
  %866 = vmatprep.subr.bf16.mxu0 0
  %867 = vmatpush1.bf16.msra.mxu0 0
  %868 = vmatprep.subr.bf16.mxu0 0
  %869 = vmatpush1.bf16.msra.mxu0 0
  %870 = vmatprep.mubr.bf16.mxu0 0
  %871 = vmatmul.mubr.bf16.gmra.mrb[0].mxu0 %v824
  %v872 = vpop.f32.mrb[0].mxu0
  %v873 = vadd.f32 0.0, %v872
  %v874 = vpop.f32.mrb[0].mxu0
  %v875 = vpop.f32.mrb[0].mxu0
  %v876 = vadd.f32 0.0, %v875
  %v877 = vpop.f32.mrb[0].mxu0
  %878 = vmatprep.mubr.bf16.mxu0 0
  %879 = vmatmul.mubr.bf16.gmra.mrb[0].mxu0 %v827
  %v880 = vpop.f32.mrb[0].mxu0
  %v881 = vadd.f32 0.0, %v880
  %v882 = vpop.f32.mrb[0].mxu0
  %v883 = vpop.f32.mrb[0].mxu0
  %v884 = vadd.f32 0.0, %v883
  %v885 = vpop.f32.mrb[0].mxu0
  %886 = vmatprep.mubr.bf16.mxu0 0
  %887 = vmatmul.mubr.bf16.gmra.mrb[0].mxu0 %v830
  %v888 = vpop.f32.mrb[0].mxu0
  %v889 = vadd.f32 0.0, %v888
  %v890 = vpop.f32.mrb[0].mxu0
  %v891 = vpop.f32.mrb[0].mxu0
  %v892 = vadd.f32 0.0, %v891
  %v893 = vpop.f32.mrb[0].mxu0
  %894 = vmatprep.mubr.bf16.mxu0 0
  %895 = vmatmul.mubr.bf16.gmra.mrb[0].mxu0 %v833
  %v896 = vpop.f32.mrb[0].mxu0
  %v897 = vadd.f32 0.0, %v896
  %v898 = vpop.f32.mrb[0].mxu0
  %v899 = vpop.f32.mrb[0].mxu0
  %v900 = vadd.f32 0.0, %v899
  %v901 = vpop.f32.mrb[0].mxu0
  %902 = vmatprep.mubr.bf16.mxu0 0
  %903 = vmatmul.mubr.bf16.gmra.mrb[0].mxu0 %v836
  %v904 = vpop.f32.mrb[0].mxu0
  %v905 = vadd.f32 0.0, %v904
  %v906 = vpop.f32.mrb[0].mxu0
  %v907 = vpop.f32.mrb[0].mxu0
  %v908 = vpop.f32.mrb[0].mxu0
  %909 = vdwg.mxu0
  %v910 = vadd.f32 %v781, %v873
  %v911 = vadd.f32 %v782, %v876
  %v912 = vadd.f32 %v783, %v881
  %v913 = vadd.f32 %v784, %v884
  %v914 = vadd.f32 %v785, %v889
  %v915 = vadd.f32 %v786, %v892
  %v916 = vadd.f32 %v787, %v897
  %v917 = vadd.f32 %v788, %v900
  %v918 = vadd.f32 %v789, %v905
  %s919 = scalar_lea.vmem %s1, 112
  %v920 = vld [vmem:[%s919] sm:$0xf]
  %v921 = vld [vmem:[%s919 + $0x4] sm:$0xf]
  %v922 = vld [vmem:[%s919 + $0x8] sm:$0xf]
  %v923 = vld [vmem:[%s919 + $0xc] sm:$0xf]
  %vm924 = vsmask.f32 5376
  %v925 = vshrl.u32 %v672, 16
  %v927 = vrot.slane %v925, 2
  %v928 = vshll.u32 %v672, 16
  %v930 = vrot.slane %v928, 3
  %v931 = vor.u32 %v927, %v930
  %v932 = vshrl.u32 %v673, 16
  %v934 = vrot.slane %v932, 2
  %v935 = vshll.u32 %v673, 16
  %v937 = vrot.slane %v935, 3
  %v938 = vor.u32 %v934, %v937
  %v939 = vsel %vm924, %v931, %v938
  %v940 = vshrl.u32 %v674, 16
  %v942 = vrot.slane %v940, 2
  %v943 = vshll.u32 %v674, 16
  %v945 = vrot.slane %v943, 3
  %v946 = vor.u32 %v942, %v945
  %v947 = vsel %vm924, %v938, %v946
  %v948 = vshrl.u32 %v675, 16
  %v950 = vrot.slane %v948, 2
  %v951 = vshll.u32 %v675, 16
  %v953 = vrot.slane %v951, 3
  %v954 = vor.u32 %v950, %v953
  %v955 = vsel %vm924, %v946, %v954
  %v957 = vshrl.u32 %v790, 16
  %v959 = vrot.slane %v957, 2
  %v960 = vshll.u32 %v790, 16
  %v962 = vrot.slane %v960, 3
  %v963 = vor.u32 %v959, %v962
  %v964 = vsel %vm924, %v954, %v963
  %v969 = vunpack.c.l.b16 %v920
  %v970 = vunpack.c.l.b16 %v921
  %v971 = vunpack.c.l.b16 %v922
  %v972 = vunpack.c.l.b16 %v923
  %v973 = vpack.c.b16 %v970, %v969
  %v974 = vpack.c.b16 %v972, %v971
  %v978 = vsel %vm105, %v939, 0
  %v981 = vsel %vm105, %v947, 0
  %v984 = vsel %vm105, %v955, 0
  %v987 = vsel %vm105, %v964, 0
  %v990 = vsel %vm105, %v963, 0
  %992 = vmatprep.subr.bf16.mxu0 0
  %993 = vmatpush1.bf16.msra.mxu0 %v973
  %994 = vmatprep.subr.bf16.mxu0 0
  %995 = vmatpush1.bf16.msra.mxu0 %v974
  %996 = vmatprep.subr.bf16.mxu0 0
  %997 = vmatpush1.bf16.msra.mxu0 0
  %998 = vmatprep.subr.bf16.mxu0 0
  %999 = vmatpush1.bf16.msra.mxu0 0
  %1000 = vmatprep.subr.bf16.mxu0 0
  %1001 = vmatpush1.bf16.msra.mxu0 0
  %1002 = vmatprep.subr.bf16.mxu0 0
  %1003 = vmatpush1.bf16.msra.mxu0 0
  %1004 = vmatprep.subr.bf16.mxu0 0
  %1005 = vmatpush1.bf16.msra.mxu0 0
  %1006 = vmatprep.subr.bf16.mxu0 0
  %1007 = vmatpush1.bf16.msra.mxu0 0
  %1008 = vmatprep.subr.bf16.mxu0 0
  %1009 = vmatpush1.bf16.msra.mxu0 0
  %1010 = vmatprep.subr.bf16.mxu0 0
  %1011 = vmatpush1.bf16.msra.mxu0 0
  %1012 = vmatprep.subr.bf16.mxu0 0
  %1013 = vmatpush1.bf16.msra.mxu0 0
  %1014 = vmatprep.subr.bf16.mxu0 0
  %1015 = vmatpush1.bf16.msra.mxu0 0
  %1016 = vmatprep.subr.bf16.mxu0 0
  %1017 = vmatpush1.bf16.msra.mxu0 0
  %1018 = vmatprep.subr.bf16.mxu0 0
  %1019 = vmatpush1.bf16.msra.mxu0 0
  %1020 = vmatprep.subr.bf16.mxu0 0
  %1021 = vmatpush1.bf16.msra.mxu0 0
  %1022 = vmatprep.subr.bf16.mxu0 0
  %1023 = vmatpush1.bf16.msra.mxu0 0
  %1024 = vmatprep.mubr.bf16.mxu0 0
  %1025 = vmatmul.mubr.bf16.gmra.mrb[0].mxu0 %v978
  %v1026 = vpop.f32.mrb[0].mxu0
  %v1027 = vadd.f32 0.0, %v1026
  %v1028 = vpop.f32.mrb[0].mxu0
  %v1029 = vpop.f32.mrb[0].mxu0
  %v1030 = vadd.f32 0.0, %v1029
  %v1031 = vpop.f32.mrb[0].mxu0
  %1032 = vmatprep.mubr.bf16.mxu0 0
  %1033 = vmatmul.mubr.bf16.gmra.mrb[0].mxu0 %v981
  %v1034 = vpop.f32.mrb[0].mxu0
  %v1035 = vadd.f32 0.0, %v1034
  %v1036 = vpop.f32.mrb[0].mxu0
  %v1037 = vpop.f32.mrb[0].mxu0
  %v1038 = vadd.f32 0.0, %v1037
  %v1039 = vpop.f32.mrb[0].mxu0
  %1040 = vmatprep.mubr.bf16.mxu0 0
  %1041 = vmatmul.mubr.bf16.gmra.mrb[0].mxu0 %v984
  %v1042 = vpop.f32.mrb[0].mxu0
  %v1043 = vadd.f32 0.0, %v1042
  %v1044 = vpop.f32.mrb[0].mxu0
  %v1045 = vpop.f32.mrb[0].mxu0
  %v1046 = vadd.f32 0.0, %v1045
  %v1047 = vpop.f32.mrb[0].mxu0
  %1048 = vmatprep.mubr.bf16.mxu0 0
  %1049 = vmatmul.mubr.bf16.gmra.mrb[0].mxu0 %v987
  %v1050 = vpop.f32.mrb[0].mxu0
  %v1051 = vadd.f32 0.0, %v1050
  %v1052 = vpop.f32.mrb[0].mxu0
  %v1053 = vpop.f32.mrb[0].mxu0
  %v1054 = vadd.f32 0.0, %v1053
  %v1055 = vpop.f32.mrb[0].mxu0
  %1056 = vmatprep.mubr.bf16.mxu0 0
  %1057 = vmatmul.mubr.bf16.gmra.mrb[0].mxu0 %v990
  %v1058 = vpop.f32.mrb[0].mxu0
  %v1059 = vadd.f32 0.0, %v1058
  %v1060 = vpop.f32.mrb[0].mxu0
  %v1061 = vpop.f32.mrb[0].mxu0
  %v1062 = vpop.f32.mrb[0].mxu0
  %1063 = vdwg.mxu0
  %v1064 = vadd.f32 %v910, %v1027
  %v1065 = vadd.f32 %v911, %v1030
  %v1066 = vadd.f32 %v912, %v1035
  %v1067 = vadd.f32 %v913, %v1038
  %v1068 = vadd.f32 %v914, %v1043
  %v1069 = vadd.f32 %v915, %v1046
  %v1070 = vadd.f32 %v916, %v1051
  %v1071 = vadd.f32 %v917, %v1054
  %v1072 = vadd.f32 %v918, %v1059
  %s1073 = scalar_lea.vmem %s1, 128
  %v1074 = vld [vmem:[%s1073] sm:$0xf]
  %v1075 = vld [vmem:[%s1073 + $0x4] sm:$0xf]
  %v1076 = vld [vmem:[%s1073 + $0x8] sm:$0xf]
  %v1077 = vld [vmem:[%s1073 + $0xc] sm:$0xf]
  %v1078 = vrot.slane %v672, 3
  %v1079 = vrot.slane %v673, 3
  %v1080 = vsel %vm421, %v1078, %v1079
  %v1081 = vrot.slane %v674, 3
  %v1082 = vsel %vm421, %v1079, %v1081
  %v1083 = vrot.slane %v675, 3
  %v1084 = vsel %vm421, %v1081, %v1083
  %v1085 = vrot.slane %v790, 3
  %v1086 = vsel %vm421, %v1083, %v1085
  %v1091 = vunpack.c.l.b16 %v1074
  %v1092 = vunpack.c.l.b16 %v1075
  %v1093 = vunpack.c.l.b16 %v1076
  %v1094 = vunpack.c.l.b16 %v1077
  %v1095 = vpack.c.b16 %v1092, %v1091
  %v1096 = vpack.c.b16 %v1094, %v1093
  %v1100 = vsel %vm105, %v1080, 0
  %v1103 = vsel %vm105, %v1082, 0
  %v1106 = vsel %vm105, %v1084, 0
  %v1109 = vsel %vm105, %v1086, 0
  %v1112 = vsel %vm105, %v1085, 0
  %1114 = vmatprep.subr.bf16.mxu0 0
  %1115 = vmatpush1.bf16.msra.mxu0 %v1095
  %1116 = vmatprep.subr.bf16.mxu0 0
  %1117 = vmatpush1.bf16.msra.mxu0 %v1096
  %1118 = vmatprep.subr.bf16.mxu0 0
  %1119 = vmatpush1.bf16.msra.mxu0 0
  %1120 = vmatprep.subr.bf16.mxu0 0
  %1121 = vmatpush1.bf16.msra.mxu0 0
  %1122 = vmatprep.subr.bf16.mxu0 0
  %1123 = vmatpush1.bf16.msra.mxu0 0
  %1124 = vmatprep.subr.bf16.mxu0 0
  %1125 = vmatpush1.bf16.msra.mxu0 0
  %1126 = vmatprep.subr.bf16.mxu0 0
  %1127 = vmatpush1.bf16.msra.mxu0 0
  %1128 = vmatprep.subr.bf16.mxu0 0
  %1129 = vmatpush1.bf16.msra.mxu0 0
  %1130 = vmatprep.subr.bf16.mxu0 0
  %1131 = vmatpush1.bf16.msra.mxu0 0
  %1132 = vmatprep.subr.bf16.mxu0 0
  %1133 = vmatpush1.bf16.msra.mxu0 0
  %1134 = vmatprep.subr.bf16.mxu0 0
  %1135 = vmatpush1.bf16.msra.mxu0 0
  %1136 = vmatprep.subr.bf16.mxu0 0
  %1137 = vmatpush1.bf16.msra.mxu0 0
  %1138 = vmatprep.subr.bf16.mxu0 0
  %1139 = vmatpush1.bf16.msra.mxu0 0
  %1140 = vmatprep.subr.bf16.mxu0 0
  %1141 = vmatpush1.bf16.msra.mxu0 0
  %1142 = vmatprep.subr.bf16.mxu0 0
  %1143 = vmatpush1.bf16.msra.mxu0 0
  %1144 = vmatprep.subr.bf16.mxu0 0
  %1145 = vmatpush1.bf16.msra.mxu0 0
  %1146 = vmatprep.mubr.bf16.mxu0 0
  %1147 = vmatmul.mubr.bf16.gmra.mrb[0].mxu0 %v1100
  %v1148 = vpop.f32.mrb[0].mxu0
  %v1149 = vadd.f32 0.0, %v1148
  %v1150 = vpop.f32.mrb[0].mxu0
  %v1151 = vpop.f32.mrb[0].mxu0
  %v1152 = vadd.f32 0.0, %v1151
  %v1153 = vpop.f32.mrb[0].mxu0
  %1154 = vmatprep.mubr.bf16.mxu0 0
  %1155 = vmatmul.mubr.bf16.gmra.mrb[0].mxu0 %v1103
  %v1156 = vpop.f32.mrb[0].mxu0
  %v1157 = vadd.f32 0.0, %v1156
  %v1158 = vpop.f32.mrb[0].mxu0
  %v1159 = vpop.f32.mrb[0].mxu0
  %v1160 = vadd.f32 0.0, %v1159
  %v1161 = vpop.f32.mrb[0].mxu0
  %1162 = vmatprep.mubr.bf16.mxu0 0
  %1163 = vmatmul.mubr.bf16.gmra.mrb[0].mxu0 %v1106
  %v1164 = vpop.f32.mrb[0].mxu0
  %v1165 = vadd.f32 0.0, %v1164
  %v1166 = vpop.f32.mrb[0].mxu0
  %v1167 = vpop.f32.mrb[0].mxu0
  %v1168 = vadd.f32 0.0, %v1167
  %v1169 = vpop.f32.mrb[0].mxu0
  %1170 = vmatprep.mubr.bf16.mxu0 0
  %1171 = vmatmul.mubr.bf16.gmra.mrb[0].mxu0 %v1109
  %v1172 = vpop.f32.mrb[0].mxu0
  %v1173 = vadd.f32 0.0, %v1172
  %v1174 = vpop.f32.mrb[0].mxu0
  %v1175 = vpop.f32.mrb[0].mxu0
  %v1176 = vadd.f32 0.0, %v1175
  %v1177 = vpop.f32.mrb[0].mxu0
  %1178 = vmatprep.mubr.bf16.mxu0 0
  %1179 = vmatmul.mubr.bf16.gmra.mrb[0].mxu0 %v1112
  %v1180 = vpop.f32.mrb[0].mxu0
  %v1181 = vadd.f32 0.0, %v1180
  %v1182 = vpop.f32.mrb[0].mxu0
  %v1183 = vpop.f32.mrb[0].mxu0
  %v1184 = vpop.f32.mrb[0].mxu0
  %1185 = vdwg.mxu0
  %v1186 = vadd.f32 %v1064, %v1149
  %v1187 = vadd.f32 %v1065, %v1152
  %v1188 = vadd.f32 %v1066, %v1157
  %v1189 = vadd.f32 %v1067, %v1160
  %v1190 = vadd.f32 %v1068, %v1165
  %v1191 = vadd.f32 %v1069, %v1168
  %v1192 = vadd.f32 %v1070, %v1173
  %v1193 = vadd.f32 %v1071, %v1176
  %v1194 = vadd.f32 %v1072, %v1181
  %v1195 = vld [vmem:[%s2] sm:$0xff]
  %v1196 = vld [vmem:[%s2 + $0x8] sm:$0xff]
  %v1197 = vld [vmem:[%s2 + $0x10] sm:$0xff]
  %v1198 = vld [vmem:[%s2 + $0x18] sm:$0xff]
  %v1199 = vld [vmem:[%s2 + $0x20] sm:$0xff]
  %v1200 = vld [vmem:[%s2 + $0x28] sm:$0xff]
  %v1201 = vld [vmem:[%s2 + $0x30] sm:$0xff]
  %v1202 = vld [vmem:[%s2 + $0x38] sm:$0xff]
  %v1203 = vld [vmem:[%s2 + $0x40] sm:$0xff]
  %1205 = vset.pattern.permute.xlu0 0
  %1206 = vperm.xlu0 %1205, %v1195
  %v1207 = vpop.permute.xlu0 %1206
  %1210 = vset.pattern.permute.xlu0 0
  %1211 = vperm.xlu0 %1210, %v1196
  %v1212 = vpop.permute.xlu0 %1211
  %1215 = vset.pattern.permute.xlu0 0
  %1216 = vperm.xlu0 %1215, %v1197
  %v1217 = vpop.permute.xlu0 %1216
  %1220 = vset.pattern.permute.xlu0 0
  %1221 = vperm.xlu0 %1220, %v1198
  %v1222 = vpop.permute.xlu0 %1221
  %1225 = vset.pattern.permute.xlu0 0
  %1226 = vperm.xlu0 %1225, %v1199
  %v1227 = vpop.permute.xlu0 %1226
  %1230 = vset.pattern.permute.xlu0 0
  %1231 = vperm.xlu0 %1230, %v1200
  %v1232 = vpop.permute.xlu0 %1231
  %1235 = vset.pattern.permute.xlu0 0
  %1236 = vperm.xlu0 %1235, %v1201
  %v1237 = vpop.permute.xlu0 %1236
  %1240 = vset.pattern.permute.xlu0 0
  %1241 = vperm.xlu0 %1240, %v1202
  %v1242 = vpop.permute.xlu0 %1241
  %1245 = vset.pattern.permute.xlu0 0
  %1246 = vperm.xlu0 %1245, %v1203
  %v1247 = vpop.permute.xlu0 %1246
  %v1249 = vmul.f32 %v1186, %v1207
  %v1250 = vmul.f32 %v1187, %v1212
  %v1251 = vmul.f32 %v1188, %v1217
  %v1252 = vmul.f32 %v1189, %v1222
  %v1253 = vmul.f32 %v1190, %v1227
  %v1254 = vmul.f32 %v1191, %v1232
  %v1255 = vmul.f32 %v1192, %v1237
  %v1256 = vmul.f32 %v1193, %v1242
  %v1257 = vmul.f32 %v1194, %v1247
  %1258 = vst.msk [vmem:[%s3] sm:$0xff] %vm105, %v1249
  %1259 = vst.msk [vmem:[%s3 + $0x8] sm:$0xff] %vm105, %v1250
  %1260 = vst.msk [vmem:[%s3 + $0x10] sm:$0xff] %vm105, %v1251
  %1261 = vst.msk [vmem:[%s3 + $0x18] sm:$0xff] %vm105, %v1252
  %1262 = vst.msk [vmem:[%s3 + $0x20] sm:$0xff] %vm105, %v1253
  %1263 = vst.msk [vmem:[%s3 + $0x28] sm:$0xff] %vm105, %v1254
  %1264 = vst.msk [vmem:[%s3 + $0x30] sm:$0xff] %vm105, %v1255
  %1265 = vst.msk [vmem:[%s3 + $0x38] sm:$0xff] %vm105, %v1256
  %1266 = vst.msk [vmem:[%s3 + $0x40] sm:$0xff] %vm105, %v1257
  %v1267 = vld [vmem:[%s4] sm:$0x1]
  %v1268 = vsel %vm105, %v1249, 0.0
  %v1269 = vsel %vm105, %v1250, 0.0
  %v1270 = vadd.f32 %v1268, %v1269
  %v1271 = vsel %vm105, %v1251, 0.0
  %v1272 = vadd.f32 %v1270, %v1271
  %v1273 = vsel %vm105, %v1252, 0.0
  %v1274 = vadd.f32 %v1272, %v1273
  %v1275 = vsel %vm105, %v1253, 0.0
  %v1276 = vadd.f32 %v1274, %v1275
  %v1277 = vsel %vm105, %v1254, 0.0
  %v1278 = vadd.f32 %v1276, %v1277
  %v1279 = vsel %vm105, %v1255, 0.0
  %v1280 = vadd.f32 %v1278, %v1279
  %v1281 = vsel %vm105, %v1256, 0.0
  %v1282 = vadd.f32 %v1280, %v1281
  %v1283 = vsel %vm105, %v1257, 0.0
  %v1284 = vadd.f32 %v1282, %v1283
  %v1285 = vrot.slane %v1284, 4
  %v1286 = vadd.f32 %v1284, %v1285
  %v1287 = vrot.slane %v1286, 2
  %v1288 = vadd.f32 %v1286, %v1287
  %v1289 = vrot.slane %v1288, 1
  %v1290 = vadd.f32 %v1288, %v1289
  %v1291 = vadd.f32 %v1267, %v1290
  %vm1292 = vcmask 253952
  %1293 = vst.msk [vmem:[%s4] sm:$0x1] %vm1292, %v1291
  %v1294 = vld [vmem:[%s5] sm:$0x1]
  %v1295 = vmul.f32 %v1249, %v1249
  %v1296 = vmul.f32 %v1250, %v1250
  %v1297 = vmul.f32 %v1251, %v1251
  %v1298 = vmul.f32 %v1252, %v1252
  %v1299 = vmul.f32 %v1253, %v1253
  %v1300 = vmul.f32 %v1254, %v1254
  %v1301 = vmul.f32 %v1255, %v1255
  %v1302 = vmul.f32 %v1256, %v1256
  %v1303 = vmul.f32 %v1257, %v1257
  %v1304 = vsel %vm105, %v1295, 0.0
  %v1305 = vsel %vm105, %v1296, 0.0
  %v1306 = vadd.f32 %v1304, %v1305
  %v1307 = vsel %vm105, %v1297, 0.0
  %v1308 = vadd.f32 %v1306, %v1307
  %v1309 = vsel %vm105, %v1298, 0.0
  %v1310 = vadd.f32 %v1308, %v1309
  %v1311 = vsel %vm105, %v1299, 0.0
  %v1312 = vadd.f32 %v1310, %v1311
  %v1313 = vsel %vm105, %v1300, 0.0
  %v1314 = vadd.f32 %v1312, %v1313
  %v1315 = vsel %vm105, %v1301, 0.0
  %v1316 = vadd.f32 %v1314, %v1315
  %v1317 = vsel %vm105, %v1302, 0.0
  %v1318 = vadd.f32 %v1316, %v1317
  %v1319 = vsel %vm105, %v1303, 0.0
  %v1320 = vadd.f32 %v1318, %v1319
  %v1321 = vrot.slane %v1320, 4
  %v1322 = vadd.f32 %v1320, %v1321
  %v1323 = vrot.slane %v1322, 2
  %v1324 = vadd.f32 %v1322, %v1323
  %v1325 = vrot.slane %v1324, 1
  %v1326 = vadd.f32 %v1324, %v1325
  %v1327 = vadd.f32 %v1294, %v1326
  %1328 = vst.msk [vmem:[%s5] sm:$0x1] %vm1292, %v1327
  // Predicated region
  $region18: #{model_forward.19} parent=0 // pred_check
    _
  $region19: #{model_forward.19} parent=0 // pred_check_branch
    %1330 = sbr.rel (0) target = $region21
  $region20: #{model_forward.19} parent=0 // pred_region
    _
  $region21: #{model_forward.19} parent=0 // pred_fallthru
    _
  // Predicated region
  $region22: #{model_forward.19} parent=0 // pred_check
    _
  $region23: #{model_forward.19} parent=0 // pred_check_branch
    %1332 = sbr.rel (0) target = $region25
  $region24: #{model_forward.19} parent=0 // pred_region
    _
  $region25: #{model_forward.19} parent=0 // pred_fallthru
    _
  // Predicated region
  $region26: #{model_forward.19} parent=0 // pred_check
    _
  $region27: #{model_forward.19} parent=0 // pred_check_branch
    %1334 = sbr.rel (0) target = $region29
  $region28: #{model_forward.19} parent=0 // pred_region
    _
  $region29: #{model_forward.19} parent=0 // pred_fallthru
    _
  // Predicated region
  $region30: #{model_forward.19} parent=0 // pred_check
    _
  $region31: #{model_forward.19} parent=0 // pred_check_branch
    %1336 = sbr.rel (0) target = $region33
  $region32: #{model_forward.19} parent=0 // pred_region
    _
  $region33: #{model_forward.19} parent=0 // pred_fallthru
    _
  // Predicated region
  $region34: #{model_forward.19} parent=0 // pred_check
    _
  $region35: #{model_forward.19} parent=0 // pred_check_branch
    %1338 = sbr.rel (0) target = $region37
  $region36: #{model_forward.19} parent=0 // pred_region
    _
  $region37: #{model_forward.19} parent=0 // pred_fallthru
    _
  // Predicated region
  $region38: #{model_forward.19} parent=0 // pred_check
    _
  $region39: #{model_forward.19} parent=0 // pred_check_branch
    %1340 = sbr.rel (0) target = $region41
  $region40: #{model_forward.19} parent=0 // pred_region
    _
  $region41: #{model_forward.19} parent=0 // pred_fallthru
    _

// kernel: model_forward.31
$region0: #{model_forward.31}
  #allocation0 [shape = 'u32[]', space=smem, size = 0x4, offset = 0x4, fixed_abs, tag = 'smem constant byte address 0x4 - core index']
  #allocation1 [shape = 'u32[144,128]{1,0:T(1,128)}', space=vmem, size = 0x12000, scoped, tag = 'internal scratch']
  %s0 = inlined_call_operand.vmem [shape: f32[2,16,32], index: 0, kind: input, shape index: {}]
  %s1 = inlined_call_operand.vmem [shape: f32[32,16], index: 1, kind: input, shape index: {}]
  %s2 = inlined_call_operand.vmem [shape: f32[1,16], index: 2, kind: input, shape index: {}]
  %s3 = inlined_call_operand.vmem [shape: f32[1,16], index: 3, kind: input, shape index: {}]
  %s4 = inlined_call_operand.vmem [shape: f32[16,2], index: 4, kind: input, shape index: {}]
  %s5 = inlined_call_operand.vmem [shape: f32[1,2], index: 5, kind: input, shape index: {}]
  %s6 = inlined_call_operand.hbm [shape: f32[2,2], index: 6, kind: output, shape index: {}]
  %s7 = sld [smem:[#allocation0]]
  $region34: #{model_forward.31} parent=0
    _
  %s9 = ssub.s32 1, %s7
  %s10 = scalar_select 0, %s9, %s7
  $region1: #{model_forward.31} parent=0
    #allocation2 [shape = 'u8[1024]{0}', space=vmem, size = 0x400, scoped, tag = 'output window, operand 0, single buffered']
    #allocation3 [shape = 's32[1]{0}', space=sflag, size = 0x4, scoped, tag = 'scoped memory for model_forward.31']
    %11 = vsyncpa [#allocation3], 0
    // Predicated region
    $region2: #{model_forward.31} parent=1 // pred_check
      _
    $region3: #{model_forward.31} parent=1 // pred_check_branch
      %13 = sbr.rel (0) target = $region5
    $region4: #{model_forward.31} parent=1 // pred_region
      _
    $region5: #{model_forward.31} parent=1 // pred_fallthru
      _
    // Predicated region
    $region6: #{model_forward.31} parent=1 // pred_check
      _
    $region7: #{model_forward.31} parent=1 // pred_check_branch
      %15 = sbr.rel (0) target = $region9
    $region8: #{model_forward.31} parent=1 // pred_region
      _
    $region9: #{model_forward.31} parent=1 // pred_fallthru
      _
    // Predicated region
    $region10: #{model_forward.31} parent=1 // pred_check
      _
    $region11: #{model_forward.31} parent=1 // pred_check_branch
      %17 = sbr.rel (0) target = $region13
    $region12: #{model_forward.31} parent=1 // pred_region
      _
    $region13: #{model_forward.31} parent=1 // pred_fallthru
      _
    // Predicated region
    $region14: #{model_forward.31} parent=1 // pred_check
      _
    $region15: #{model_forward.31} parent=1 // pred_check_branch
      %19 = sbr.rel (0) target = $region17
    $region16: #{model_forward.31} parent=1 // pred_region
      _
    $region17: #{model_forward.31} parent=1 // pred_fallthru
      _
    // Predicated region
    $region18: #{model_forward.31} parent=1 // pred_check
      _
    $region19: #{model_forward.31} parent=1 // pred_check_branch
      %21 = sbr.rel (0) target = $region21
    $region20: #{model_forward.31} parent=1 // pred_region
      _
    $region21: #{model_forward.31} parent=1 // pred_fallthru
      _
    // Predicated region
    $region22: #{model_forward.31} parent=1 // pred_check
      _
    $region23: #{model_forward.31} parent=1 // pred_check_branch
      %23 = sbr.rel (0) target = $region25
    $region24: #{model_forward.31} parent=1 // pred_region
      _
    $region25: #{model_forward.31} parent=1 // pred_fallthru
      _
    %v24 = vld [vmem:[%s0] sm:$0xff]
    %v25 = vld [vmem:[%s0 + $0x8] sm:$0xff]
    %v26 = vld [vmem:[%s0 + $0x10] sm:$0xff]
    %v27 = vld [vmem:[%s0 + $0x18] sm:$0xff]
    %vm28 = vcmask 261120
    %v29 = vsel %vm28, %v24, 0.0
    %v30 = vsel %vm28, %v25, 0.0
    %v31 = vadd.f32 %v29, %v30
    %v32 = vrot.slane %v31, 4
    %v33 = vadd.f32 %v31, %v32
    %v34 = vrot.slane %v33, 2
    %v35 = vadd.f32 %v33, %v34
    %v36 = vrot.slane %v35, 1
    %v37 = vadd.f32 %v35, %v36
    %v38 = vsel %vm28, %v26, 0.0
    %v39 = vsel %vm28, %v27, 0.0
    %v40 = vadd.f32 %v38, %v39
    %v41 = vrot.slane %v40, 4
    %v42 = vadd.f32 %v40, %v41
    %v43 = vrot.slane %v42, 2
    %v44 = vadd.f32 %v42, %v43
    %v45 = vrot.slane %v44, 1
    %v46 = vadd.f32 %v44, %v45
    %v47 = vrcp.pop 16.0
    %v48 = vmul.f32 %v37, %v47
    %v49 = vmul.f32 %v46, %v47
    %v50 = vld [vmem:[%s1] sm:$0xff]
    %v51 = vld [vmem:[%s1 + $0x8] sm:$0xff]
    %v52 = vld [vmem:[%s1 + $0x10] sm:$0xff]
    %v53 = vld [vmem:[%s1 + $0x18] sm:$0xff]
    %vm56 = vcmask 1041409
    %v57 = vsel %vm56, %v49, %v48
    %v58 = vsel %vm28, %v57, 0
    %60 = vmatprep.subr.mxu0 0.0
    %61 = vmatpush1.msra.mxu0 %v50
    %62 = vmatprep.subr.mxu0 0.0
    %63 = vmatpush1.msra.mxu0 %v51
    %64 = vmatprep.subr.mxu0 0.0
    %65 = vmatpush1.msra.mxu0 %v52
    %66 = vmatprep.subr.mxu0 0.0
    %67 = vmatpush1.msra.mxu0 %v53
    %68 = vmatprep.subr.mxu0 0.0
    %69 = vmatpush1.msra.mxu0 0.0
    %70 = vmatprep.subr.mxu0 0.0
    %71 = vmatpush1.msra.mxu0 0.0
    %72 = vmatprep.subr.mxu0 0.0
    %73 = vmatpush1.msra.mxu0 0.0
    %74 = vmatprep.subr.mxu0 0.0
    %75 = vmatpush1.msra.mxu0 0.0
    %76 = vmatprep.subr.mxu0 0.0
    %77 = vmatpush1.msra.mxu0 0.0
    %78 = vmatprep.subr.mxu0 0.0
    %79 = vmatpush1.msra.mxu0 0.0
    %80 = vmatprep.subr.mxu0 0.0
    %81 = vmatpush1.msra.mxu0 0.0
    %82 = vmatprep.subr.mxu0 0.0
    %83 = vmatpush1.msra.mxu0 0.0
    %84 = vmatprep.subr.mxu0 0.0
    %85 = vmatpush1.msra.mxu0 0.0
    %86 = vmatprep.subr.mxu0 0.0
    %87 = vmatpush1.msra.mxu0 0.0
    %88 = vmatprep.subr.mxu0 0.0
    %89 = vmatpush1.msra.mxu0 0.0
    %90 = vmatprep.subr.mxu0 0.0
    %91 = vmatpush1.msra.mxu0 0.0
    %92 = vmatprep.subr.mxu0 0.0
    %93 = vmatpush1.msra.mxu0 0.0
    %94 = vmatprep.subr.mxu0 0.0
    %95 = vmatpush1.msra.mxu0 0.0
    %96 = vmatprep.subr.mxu0 0.0
    %97 = vmatpush1.msra.mxu0 0.0
    %98 = vmatprep.subr.mxu0 0.0
    %99 = vmatpush1.msra.mxu0 0.0
    %100 = vmatprep.subr.mxu0 0.0
    %101 = vmatpush1.msra.mxu0 0.0
    %102 = vmatprep.subr.mxu0 0.0
    %103 = vmatpush1.msra.mxu0 0.0
    %104 = vmatprep.subr.mxu0 0.0
    %105 = vmatpush1.msra.mxu0 0.0
    %106 = vmatprep.subr.mxu0 0.0
    %107 = vmatpush1.msra.mxu0 0.0
    %108 = vmatprep.subr.mxu0 0.0
    %109 = vmatpush1.msra.mxu0 0.0
    %110 = vmatprep.subr.mxu0 0.0
    %111 = vmatpush1.msra.mxu0 0.0
    %112 = vmatprep.subr.mxu0 0.0
    %113 = vmatpush1.msra.mxu0 0.0
    %114 = vmatprep.subr.mxu0 0.0
    %115 = vmatpush1.msra.mxu0 0.0
    %116 = vmatprep.subr.mxu0 0.0
    %117 = vmatpush1.msra.mxu0 0.0
    %118 = vmatprep.subr.mxu0 0.0
    %119 = vmatpush1.msra.mxu0 0.0
    %120 = vmatprep.subr.mxu0 0.0
    %121 = vmatpush1.msra.mxu0 0.0
    %122 = vmatprep.subr.mxu0 0.0
    %123 = vmatpush1.msra.mxu0 0.0
    %124 = vmatprep.mubr.f32.mxu0 0.0
    %125 = vmatmul.mubr.f32.gmra.mrb[0].mxu0 %v58
    %v126 = vpop.f32.mrb[0].mxu0
    %v127 = vadd.f32 0.0, %v126
    %v128 = vpop.f32.mrb[0].mxu0
    %129 = vdwg.mxu0
    %vm130 = vcmask 123904
    %v131 = vsel %vm130, %v127, 0.0
    %v132 = vrot.slane %v131, 4
    %v133 = vadd.f32 %v131, %v132
    %v134 = vrot.slane %v133, 2
    %v135 = vadd.f32 %v133, %v134
    %v136 = vrot.slane %v135, 1
    %v137 = vadd.f32 %v135, %v136
    %v138 = vrcp.pop 2.0
    %v139 = vmul.f32 %v137, %v138
    %v140 = vmul.f32 %v127, %v127
    %v141 = vsel %vm130, %v140, 0.0
    %v142 = vrot.slane %v141, 4
    %v143 = vadd.f32 %v141, %v142
    %v144 = vrot.slane %v143, 2
    %v145 = vadd.f32 %v143, %v144
    %v146 = vrot.slane %v145, 1
    %v147 = vadd.f32 %v145, %v146
    %v148 = vmul.f32 %v147, %v138
    %v149 = vmul.f32 %v139, %v139
    %v150 = vsub.f32 %v148, %v149
    %v151 = vmax.f32 %v150, 0.0
    %v152 = vsub.f32 %v127, %v139
    %v153 = vadd.f32 %v151, 1e-05
    %v154 = vrsqrt.pop %v153
    %v155 = vmul.f32 %v152, %v154
    %v156 = vld [vmem:[%s2] sm:$0x1]
    %v158 = vlaneseq
    %v159 = vshrl.u32 %v158, 7
    %v160 = vsub.s32 0, %v159
    %v161 = vrot.slane %v156, %v160
    %v163 = vmul.f32 %v155, %v161
    %v164 = vld [vmem:[%s3] sm:$0x1]
    %v166 = vlaneseq
    %v167 = vshrl.u32 %v166, 7
    %v168 = vsub.s32 0, %v167
    %v169 = vrot.slane %v164, %v168
    %v171 = vadd.f32 %v163, %v169
    %v172 = vmax.f32 %v171, 0.0
    %v173 = vld [vmem:[%s4] sm:$0xff]
    %v174 = vld [vmem:[%s4 + $0x8] sm:$0xff]
    %v175 = vld [vmem:[%s5] sm:$0x1]
    %v177 = vlaneseq
    %v178 = vshrl.u32 %v177, 7
    %v179 = vsub.s32 0, %v178
    %v180 = vrot.slane %v175, %v179
    %vm182 = vcmask 130048
    %v184 = vsel %vm182, %v172, 0
    %186 = vmatprep.subr.mxu0 0.0
    %187 = vmatpush1.msra.mxu0 %v173
    %188 = vmatprep.subr.mxu0 0.0
    %189 = vmatpush1.msra.mxu0 %v174
    %190 = vmatprep.subr.mxu0 0.0
    %191 = vmatpush1.msra.mxu0 0.0
    %192 = vmatprep.subr.mxu0 0.0
    %193 = vmatpush1.msra.mxu0 0.0
    %194 = vmatprep.subr.mxu0 0.0
    %195 = vmatpush1.msra.mxu0 0.0
    %196 = vmatprep.subr.mxu0 0.0
    %197 = vmatpush1.msra.mxu0 0.0
    %198 = vmatprep.subr.mxu0 0.0
    %199 = vmatpush1.msra.mxu0 0.0
    %200 = vmatprep.subr.mxu0 0.0
    %201 = vmatpush1.msra.mxu0 0.0
    %202 = vmatprep.subr.mxu0 0.0
    %203 = vmatpush1.msra.mxu0 0.0
    %204 = vmatprep.subr.mxu0 0.0
    %205 = vmatpush1.msra.mxu0 0.0
    %206 = vmatprep.subr.mxu0 0.0
    %207 = vmatpush1.msra.mxu0 0.0
    %208 = vmatprep.subr.mxu0 0.0
    %209 = vmatpush1.msra.mxu0 0.0
    %210 = vmatprep.subr.mxu0 0.0
    %211 = vmatpush1.msra.mxu0 0.0
    %212 = vmatprep.subr.mxu0 0.0
    %213 = vmatpush1.msra.mxu0 0.0
    %214 = vmatprep.subr.mxu0 0.0
    %215 = vmatpush1.msra.mxu0 0.0
    %216 = vmatprep.subr.mxu0 0.0
    %217 = vmatpush1.msra.mxu0 0.0
    %218 = vmatprep.subr.mxu0 0.0
    %219 = vmatpush1.msra.mxu0 0.0
    %220 = vmatprep.subr.mxu0 0.0
    %221 = vmatpush1.msra.mxu0 0.0
    %222 = vmatprep.subr.mxu0 0.0
    %223 = vmatpush1.msra.mxu0 0.0
    %224 = vmatprep.subr.mxu0 0.0
    %225 = vmatpush1.msra.mxu0 0.0
    %226 = vmatprep.subr.mxu0 0.0
    %227 = vmatpush1.msra.mxu0 0.0
    %228 = vmatprep.subr.mxu0 0.0
    %229 = vmatpush1.msra.mxu0 0.0
    %230 = vmatprep.subr.mxu0 0.0
    %231 = vmatpush1.msra.mxu0 0.0
    %232 = vmatprep.subr.mxu0 0.0
    %233 = vmatpush1.msra.mxu0 0.0
    %234 = vmatprep.subr.mxu0 0.0
    %235 = vmatpush1.msra.mxu0 0.0
    %236 = vmatprep.subr.mxu0 0.0
    %237 = vmatpush1.msra.mxu0 0.0
    %238 = vmatprep.subr.mxu0 0.0
    %239 = vmatpush1.msra.mxu0 0.0
    %240 = vmatprep.subr.mxu0 0.0
    %241 = vmatpush1.msra.mxu0 0.0
    %242 = vmatprep.subr.mxu0 0.0
    %243 = vmatpush1.msra.mxu0 0.0
    %244 = vmatprep.subr.mxu0 0.0
    %245 = vmatpush1.msra.mxu0 0.0
    %246 = vmatprep.subr.mxu0 0.0
    %247 = vmatpush1.msra.mxu0 0.0
    %248 = vmatprep.subr.mxu0 0.0
    %249 = vmatpush1.msra.mxu0 0.0
    %250 = vmatprep.mubr.f32.mxu0 0.0
    %251 = vmatmul.mubr.f32.gmra.mrb[0].mxu0 %v184
    %v252 = vpop.f32.mrb[0].mxu0
    %v253 = vadd.f32 %v180, %v252
    %v254 = vpop.f32.mrb[0].mxu0
    %255 = vdwg.mxu0
    %vm256 = vcmask 9216
    %257 = vst.msk [vmem:[#allocation2] sm:$0x3] %vm256, %v253
    // Predicated region
    $region26: #{model_forward.31} parent=1 // pred_check
      _
    $region27: #{model_forward.31} parent=1 // pred_check_branch
      %259 = sbr.rel (0) target = $region29
    $region28: #{model_forward.31} parent=1 // pred_region
      %s261 = ssub.s32 32, 32
      %262 = vsyncadd [#allocation3], %s261
      %s264 = sshll.u32 [#allocation2], 4
      %s265 = int_to_ptr.vmem [resolvable:$true] %s264
      %267 = dma.vmem_to_hbm [thread:$0]  %s265, 32, %s6, [#allocation3]
    $region29: #{model_forward.31} parent=1 // pred_fallthru
      _
    // Predicated region
    $region30: #{model_forward.31} parent=1 // pred_check
      _
    $region31: #{model_forward.31} parent=1 // pred_check_branch
      %269 = sbr.rel (0) target = $region33
    $region32: #{model_forward.31} parent=1 // pred_region
      %270 = dma.done [#allocation3], 32
    $region33: #{model_forward.31} parent=1 // pred_fallthru
      _
    %271 = vsyncpa [#allocation3], 1

</llo_original>
